<compile_context>
chip_gen: v7x
topology: tpu7x:2x2x1
jax: 0.10.0
libtpu: 0.0.40
codegen_flags: <defaults>
</compile_context>

<pallas_src>
import jax
import jax.numpy as jnp
from jax.experimental import pallas as pl
from jax.experimental.pallas import tpu as pltpu

D_IN, D_H1, D_H2, D_OUT = 1536, 512, 64, 1
D_H2_PAD = 128            # pad hidden dim 2 to the native 128-lane width
BN_EPS = 1e-5


def _round_up(n, m):
    return (n + m - 1) // m * m


def _siamese_head_kernel(x1_ref, x2_ref,
                         w1_ref, b1_ref,
                         w2_ref, b2_ref,
                         w3_ref, b3_ref,
                         o_ref):
    # Elementwise feature combination (VPU); operands already bf16.
    x = x1_ref[...] * x2_ref[...]                                # (TB, 1536)

    # Linear 1 (+ folded BatchNorm) -> ReLU.  bf16 x bf16, f32 accumulate.
    h1 = jnp.dot(x, w1_ref[...], preferred_element_type=jnp.float32)
    h1 = jnp.maximum(h1 + b1_ref[...], 0.0)                      # (TB, 512)

    # Linear 2 (+ folded BatchNorm) -> ReLU, hidden dim padded 64 -> 128.
    h2 = jnp.dot(h1.astype(jnp.bfloat16), w2_ref[...],
                 preferred_element_type=jnp.float32)
    h2 = jnp.maximum(h2 + b2_ref[...], 0.0)                      # (TB, 128)

    # Linear 3 (out_features = 1) as a VPU/XLU reduction instead of a
    # degenerate 1-column MXU matmul, then Sigmoid.
    logit = jnp.sum(h2 * w3_ref[...], axis=-1, keepdims=True) + b3_ref[...]
    o_ref[...] = jax.nn.sigmoid(logit).astype(o_ref.dtype)       # (TB, 1)


def siamese_forward(x1, x2, kparams, *, tile_b=256):
    """x1, x2: (B, 1536) f32. kparams: output of prepare_params()."""
    (w1, b1, w2, b2, w3row, b3) = kparams
    B = x1.shape[0]

    # Batch tile: large enough to fill the MXU rows, never larger than the
    # (8-aligned) batch itself.
    tb = min(tile_b, _round_up(B, 8))
    padded_b = _round_up(B, tb)
    if padded_b != B:
        pad = ((0, padded_b - B), (0, 0))
        x1 = jnp.pad(x1, pad)
        x2 = jnp.pad(x2, pad)

    # bf16 inputs: halves HBM traffic of the dominant operands; accumulation
    # stays f32 inside the kernel.
    x1 = x1.astype(jnp.bfloat16)
    x2 = x2.astype(jnp.bfloat16)

    row = lambda i: (i, 0)       # batch-tiled operands
    rep = lambda i: (0, 0)       # grid-invariant (weights/bias) operands
    # NOTE: on v7x (64 MiB VMEM) the grid-invariant weight specs could use
    # pipeline_mode=pl.Buffered(1) to reclaim the duplicate weight buffers if
    # tile_b is pushed higher; not needed at tile_b=256.

    in_specs = [
        pl.BlockSpec((tb, D_IN), row),         # x1   (bf16)
        pl.BlockSpec((tb, D_IN), row),         # x2   (bf16)
        pl.BlockSpec((D_IN, D_H1), rep),       # w1   (BN-folded, bf16)
        pl.BlockSpec((1, D_H1), rep),          # b1   (BN-folded, f32)
        pl.BlockSpec((D_H1, D_H2_PAD), rep),   # w2   (BN-folded, padded, bf16)
        pl.BlockSpec((1, D_H2_PAD), rep),      # b2
        pl.BlockSpec((1, D_H2_PAD), rep),      # w3 as a row (f32, padded)
        pl.BlockSpec((1, D_OUT), rep),         # b3
    ]

    flops = 2 * padded_b * (D_IN * D_H1 + D_H1 * D_H2_PAD + D_H2_PAD)
    bytes_accessed = (2 * padded_b * D_IN * 2               # bf16 inputs
                      + (D_IN * D_H1 + D_H1 * D_H2_PAD) * 2  # bf16 weights
                      + padded_b * D_OUT * 4)                # f32 output

    out = pl.pallas_call(
        _siamese_head_kernel,
        out_shape=jax.ShapeDtypeStruct((padded_b, D_OUT), jnp.float32),
        grid_spec=pltpu.PrefetchScalarGridSpec(
            num_scalar_prefetch=0,
            grid=(padded_b // tb,),
            in_specs=in_specs,
            out_specs=pl.BlockSpec((tb, D_OUT), row),
        ),
        compiler_params=pltpu.CompilerParams(
            dimension_semantics=("parallel",),
            # Large batch tiles + resident weights exceed v5e's 16 MiB scoped
            # default; 48 MiB fits every generation (v7x physical is 64 MiB).
            vmem_limit_bytes=48 * 1024 * 1024,
        ),
        cost_estimate=pl.CostEstimate(
            flops=flops,
            transcendentals=padded_b,           # sigmoid
            bytes_accessed=bytes_accessed),
    )(x1, x2, w1, b1, w2, b2, w3row, b3)

    return out[:B]


def prepare_params(raw):
    """Fold eval-mode BatchNorm into the Linear layers, pad hidden dim 2 to
    128 lanes, cast matmul weights to bf16. Runs once at parameter-prep time."""
    (w1, b1, s1, t1, w2, b2, s2, t2, w3, b3) = raw

    w1f = w1 * s1                          # (1536, 512) * (1, 512)
    b1f = b1 * s1 + t1
    w2f = w2 * s2                          # (512, 64) * (1, 64)
    b2f = b2 * s2 + t2

    w2p = jnp.pad(w2f, ((0, 0), (0, D_H2_PAD - D_H2)))
    b2p = jnp.pad(b2f, ((0, 0), (0, D_H2_PAD - D_H2)))
    w3row = jnp.pad(w3.reshape(1, D_H2), ((0, 0), (0, D_H2_PAD - D_H2)))

    return (w1f.astype(jnp.bfloat16), b1f.astype(jnp.float32),
            w2p.astype(jnp.bfloat16), b2p.astype(jnp.float32),
            w3row.astype(jnp.float32), b3.astype(jnp.float32))


def init_params(key):
    """Deterministic synthetic parameters matching the torch module shapes."""
    ks = jax.random.split(key, 14)

    def linear(kw, kb, fan_in, fan_out):
        lim = 1.0 / jnp.sqrt(fan_in)
        # torch weight is (out, in); store transposed (in, out) for x @ W
        w = jax.random.uniform(kw, (fan_in, fan_out), jnp.float32, -lim, lim)
        b = jax.random.uniform(kb, (1, fan_out), jnp.float32, -lim, lim)
        return w, b

    def bn_fold(kg, kb, km, kv, n):
        gamma = 1.0 + 0.1 * jax.random.normal(kg, (1, n), jnp.float32)
        beta = 0.1 * jax.random.normal(kb, (1, n), jnp.float32)
        mean = 0.1 * jax.random.normal(km, (1, n), jnp.float32)
        var = jnp.abs(1.0 + 0.1 * jax.random.normal(kv, (1, n), jnp.float32))
        scale = gamma * jax.lax.rsqrt(var + BN_EPS)
        shift = beta - mean * scale
        return scale, shift

    w1, b1 = linear(ks[0], ks[1], D_IN, D_H1)
    s1, t1 = bn_fold(ks[2], ks[3], ks[4], ks[5], D_H1)
    w2, b2 = linear(ks[6], ks[7], D_H1, D_H2)
    s2, t2 = bn_fold(ks[8], ks[9], ks[10], ks[11], D_H2)
    w3, b3 = linear(ks[12], ks[13], D_H2, D_OUT)
    return (w1, b1, s1, t1, w2, b2, s2, t2, w3, b3)


def reference_forward(x1, x2, raw):
    """Pure-JAX f32 reference on the un-folded parameters."""
    (w1, b1, s1, t1, w2, b2, s2, t2, w3, b3) = raw
    x = x1 * x2
    h = jnp.maximum((x @ w1 + b1) * s1 + t1, 0.0)
    h = jnp.maximum((h @ w2 + b2) * s2 + t2, 0.0)
    return jax.nn.sigmoid(h @ w3 + b3)


if __name__ == "__main__":
    key = jax.random.PRNGKey(0)
    kx1, kx2, kp = jax.random.split(key, 3)

    B = 300   # deliberately not a multiple of the batch tile (exercises padding)
    x1 = jax.random.normal(kx1, (B, D_IN), jnp.float32)
    x2 = jax.random.normal(kx2, (B, D_IN), jnp.float32)

    raw = init_params(kp)
    kparams = prepare_params(raw)

    out = siamese_forward(x1, x2, kparams)
    out = jax.block_until_ready(out)

    ref = reference_forward(x1, x2, raw)
    assert out.shape == (B, D_OUT)
    # bf16 MXU operands (f32 accumulation) -> loosened tolerance vs. f32 ref.
    assert jnp.allclose(out, ref, atol=2e-2, rtol=2e-2), \
        float(jnp.max(jnp.abs(out - ref)))

    print("KERNEL_OK")
</pallas_src>

<mosaic_0001>
module attributes {stable_mosaic.version = 11 : i64} {
  func.func @_siamese_head_kernel(%arg0: i32, %arg1: memref<256x1536xbf16, #tpu.memory_space<vmem>>, %arg2: memref<256x1536xbf16, #tpu.memory_space<vmem>>, %arg3: memref<1536x512xbf16, #tpu.memory_space<vmem>>, %arg4: memref<1x512xf32, #tpu.memory_space<vmem>>, %arg5: memref<512x128xbf16, #tpu.memory_space<vmem>>, %arg6: memref<1x128xf32, #tpu.memory_space<vmem>>, %arg7: memref<1x128xf32, #tpu.memory_space<vmem>>, %arg8: memref<1x1xf32, #tpu.memory_space<vmem>>, %arg9: memref<256x1xf32, #tpu.memory_space<vmem>>) attributes {dimension_semantics = [#tpu.dimension_semantics<parallel>], iteration_bounds = array<i64: 2>, scalar_prefetch = 0 : i64, scratch_operands = 0 : i64, tpu.core_type = #tpu.core_type<tc>, window_params = [{transform_indices = @transform_0, window_bounds = array<i64: 256, 1536>}, {transform_indices = @transform_1, window_bounds = array<i64: 256, 1536>}, {pipeline_mode = #tpu.pipeline_mode<synchronous>, transform_indices = @transform_2, window_bounds = array<i64: 1536, 512>}, {pipeline_mode = #tpu.pipeline_mode<synchronous>, transform_indices = @transform_3, window_bounds = array<i64: 1, 512>}, {pipeline_mode = #tpu.pipeline_mode<synchronous>, transform_indices = @transform_4, window_bounds = array<i64: 512, 128>}, {pipeline_mode = #tpu.pipeline_mode<synchronous>, transform_indices = @transform_5, window_bounds = array<i64: 1, 128>}, {pipeline_mode = #tpu.pipeline_mode<synchronous>, transform_indices = @transform_6, window_bounds = array<i64: 1, 128>}, {pipeline_mode = #tpu.pipeline_mode<synchronous>, transform_indices = @transform_7, window_bounds = array<i64: 1, 1>}, {transform_indices = @transform_8, window_bounds = array<i64: 256, 1>}]} {
    %c0 = arith.constant 0 : index
    %c0_0 = arith.constant 0 : index
    %0 = vector.load %arg1[%c0, %c0_0] : memref<256x1536xbf16, #tpu.memory_space<vmem>>, vector<256x1536xbf16>
    %c0_1 = arith.constant 0 : index
    %c0_2 = arith.constant 0 : index
    %1 = vector.load %arg2[%c0_1, %c0_2] : memref<256x1536xbf16, #tpu.memory_space<vmem>>, vector<256x1536xbf16>
    %2 = arith.mulf %0, %1 : vector<256x1536xbf16>
    %c0_3 = arith.constant 0 : index
    %c0_4 = arith.constant 0 : index
    %3 = vector.load %arg3[%c0_3, %c0_4] : memref<1536x512xbf16, #tpu.memory_space<vmem>>, vector<1536x512xbf16>
    %cst = arith.constant dense<0.000000e+00> : vector<256x512xf32>
    %4 = tpu.matmul %2, %3, %cst {dimension_numbers = #tpu.dot_dimension_numbers<[1], [0], [0], [1], [0, 0, 1, 1], [], []>} : vector<256x1536xbf16>, vector<1536x512xbf16>, vector<256x512xf32> -> vector<256x512xf32>
    %c0_5 = arith.constant 0 : index
    %c0_6 = arith.constant 0 : index
    %5 = vector.load %arg4[%c0_5, %c0_6] : memref<1x512xf32, #tpu.memory_space<vmem>>, vector<1x512xf32>
    %6 = vector.broadcast %5 : vector<1x512xf32> to vector<256x512xf32>
    %7 = arith.addf %4, %6 : vector<256x512xf32>
    %cst_7 = arith.constant 0.000000e+00 : f32
    %8 = vector.broadcast %cst_7 : f32 to vector<256x512xf32>
    %9 = arith.maximumf %7, %8 : vector<256x512xf32>
    %10 = arith.truncf %9 : vector<256x512xf32> to vector<256x512xbf16>
    %c0_8 = arith.constant 0 : index
    %c0_9 = arith.constant 0 : index
    %11 = vector.load %arg5[%c0_8, %c0_9] : memref<512x128xbf16, #tpu.memory_space<vmem>>, vector<512x128xbf16>
    %cst_10 = arith.constant dense<0.000000e+00> : vector<256x128xf32>
    %12 = tpu.matmul %10, %11, %cst_10 {dimension_numbers = #tpu.dot_dimension_numbers<[1], [0], [0], [1], [0, 0, 1, 1], [], []>} : vector<256x512xbf16>, vector<512x128xbf16>, vector<256x128xf32> -> vector<256x128xf32>
    %c0_11 = arith.constant 0 : index
    %c0_12 = arith.constant 0 : index
    %13 = vector.load %arg6[%c0_11, %c0_12] : memref<1x128xf32, #tpu.memory_space<vmem>>, vector<1x128xf32>
    %14 = vector.broadcast %13 : vector<1x128xf32> to vector<256x128xf32>
    %15 = arith.addf %12, %14 : vector<256x128xf32>
    %cst_13 = arith.constant 0.000000e+00 : f32
    %16 = vector.broadcast %cst_13 : f32 to vector<256x128xf32>
    %17 = arith.maximumf %15, %16 : vector<256x128xf32>
    %c0_14 = arith.constant 0 : index
    %c0_15 = arith.constant 0 : index
    %18 = vector.load %arg7[%c0_14, %c0_15] : memref<1x128xf32, #tpu.memory_space<vmem>>, vector<1x128xf32>
    %19 = vector.broadcast %18 : vector<1x128xf32> to vector<256x128xf32>
    %20 = arith.mulf %17, %19 : vector<256x128xf32>
    %cst_16 = arith.constant dense<0.000000e+00> : vector<256xf32>
    %21 = vector.multi_reduction <add>, %20, %cst_16 [1] : vector<256x128xf32> to vector<256xf32>
    %22 = vector.shape_cast %21 : vector<256xf32> to vector<256x1xf32>
    %c0_17 = arith.constant 0 : index
    %c0_18 = arith.constant 0 : index
    %23 = vector.load %arg8[%c0_17, %c0_18] : memref<1x1xf32, #tpu.memory_space<vmem>>, vector<1x1xf32>
    %24 = vector.broadcast %23 : vector<1x1xf32> to vector<256x1xf32>
    %25 = arith.addf %22, %24 : vector<256x1xf32>
    %26 = arith.negf %25 : vector<256x1xf32>
    %27 = math.exp %26 : vector<256x1xf32>
    %cst_19 = arith.constant 1.000000e+00 : f32
    %28 = vector.broadcast %cst_19 : f32 to vector<256x1xf32>
    %29 = arith.addf %28, %27 : vector<256x1xf32>
    %30 = arith.divf %28, %29 : vector<256x1xf32>
    %c0_20 = arith.constant 0 : index
    %c0_21 = arith.constant 0 : index
    %31 = vector.load %arg9[%c0_20, %c0_21] : memref<256x1xf32, #tpu.memory_space<vmem>>, vector<256x1xf32>
    tpu.vector_store %arg9[%c0_20, %c0_21], %30 {strides = array<i32>} : memref<256x1xf32, #tpu.memory_space<vmem>>, vector<256x1xf32>,
    return
  }
  func.func @transform_0(%arg0: i32) -> (i32, i32) {
    %c0_i32 = arith.constant 0 : i32
    %c0_i32_0 = arith.constant 0 : i32
    return %arg0, %c0_i32 : i32, i32
  }
  func.func @transform_1(%arg0: i32) -> (i32, i32) {
    %c0_i32 = arith.constant 0 : i32
    %c0_i32_0 = arith.constant 0 : i32
    return %arg0, %c0_i32 : i32, i32
  }
  func.func @transform_2(%arg0: i32) -> (i32, i32) {
    %c0_i32 = arith.constant 0 : i32
    %c0_i32_0 = arith.constant 0 : i32
    %c0_i32_1 = arith.constant 0 : i32
    return %c0_i32, %c0_i32_0 : i32, i32
  }
  func.func @transform_3(%arg0: i32) -> (i32, i32) {
    %c0_i32 = arith.constant 0 : i32
    %c0_i32_0 = arith.constant 0 : i32
    %c0_i32_1 = arith.constant 0 : i32
    return %c0_i32, %c0_i32_0 : i32, i32
  }
  func.func @transform_4(%arg0: i32) -> (i32, i32) {
    %c0_i32 = arith.constant 0 : i32
    %c0_i32_0 = arith.constant 0 : i32
    %c0_i32_1 = arith.constant 0 : i32
    return %c0_i32, %c0_i32_0 : i32, i32
  }
  func.func @transform_5(%arg0: i32) -> (i32, i32) {
    %c0_i32 = arith.constant 0 : i32
    %c0_i32_0 = arith.constant 0 : i32
    %c0_i32_1 = arith.constant 0 : i32
    return %c0_i32, %c0_i32_0 : i32, i32
  }
  func.func @transform_6(%arg0: i32) -> (i32, i32) {
    %c0_i32 = arith.constant 0 : i32
    %c0_i32_0 = arith.constant 0 : i32
    %c0_i32_1 = arith.constant 0 : i32
    return %c0_i32, %c0_i32_0 : i32, i32
  }
  func.func @transform_7(%arg0: i32) -> (i32, i32) {
    %c0_i32 = arith.constant 0 : i32
    %c0_i32_0 = arith.constant 0 : i32
    %c0_i32_1 = arith.constant 0 : i32
    return %c0_i32, %c0_i32_0 : i32, i32
  }
  func.func @transform_8(%arg0: i32) -> (i32, i32) {
    %c0_i32 = arith.constant 0 : i32
    %c0_i32_0 = arith.constant 0 : i32
    return %arg0, %c0_i32 : i32, i32
  }
}

</mosaic_0001>

<llo_original>
// kernel: tpu_custom_call.1
$region0: #{tpu_custom_call.1}
  #allocation0 [shape = 'u32[]', space=smem, size = 0x4, offset = 0x4, fixed_abs, tag = 'smem constant byte address 0x4 - core index']
  #allocation1 [shape = 'u32[144,128]{1,0:T(1,128)}', space=vmem, size = 0x12000, scoped, tag = 'internal scratch']
  #allocation2 [shape = 'f32[1,1]{1,0:T(1,128)S(1)}', space=vmem, size = 0x200, scoped, tag = 'scoped memory for tpu_custom_call.1']
  %s0 = inlined_call_operand.hbm [shape: bf16[512,1536], index: 0, kind: input, shape index: {}]
  %s1 = inlined_call_operand.hbm [shape: bf16[512,1536], index: 1, kind: input, shape index: {}]
  %s2 = inlined_call_operand.hbm [shape: bf16[1536,512], index: 2, kind: input, shape index: {}]
  %s3 = inlined_call_operand.hbm [shape: f32[1,512], index: 3, kind: input, shape index: {}]
  %s4 = inlined_call_operand.hbm [shape: bf16[512,128], index: 4, kind: input, shape index: {}]
  %s5 = inlined_call_operand.hbm [shape: f32[1,128], index: 5, kind: input, shape index: {}]
  %s6 = inlined_call_operand.hbm [shape: f32[1,128], index: 6, kind: input, shape index: {}]
  %s7 = inlined_call_operand.<no memory space> [shape: f32[1,1], index: 7, kind: input, shape index: {}]
  %s8 = inlined_call_operand.vmem [shape: f32[512,1], index: 8, kind: output, shape index: {}]
  %s9 = sld [smem:[#allocation0]]
  $region93: #{tpu_custom_call.1} parent=0
    _
  %s11 = ssub.s32 1, %s9
  %s12 = scalar_select 0, %s11, %s9
  %v13 = vstv %s7
  %14 = vst [vmem:[#allocation2] sm:$0x1] %v13
  $region1: #{tpu_custom_call.1} parent=0
    #allocation3 [shape = 'u8[1572864]{0}', space=vmem, size = 0x180000, scoped, tag = 'input window, operand 0']
    #allocation4 [shape = 's32[2]{0}', space=sflag, size = 0x8, scoped, tag = 'scoped memory for tpu_custom_call.1']
    #allocation5 [shape = 'u8[1572864]{0}', space=vmem, size = 0x180000, scoped, tag = 'input window, operand 1']
    #allocation6 [shape = 's32[2]{0}', space=sflag, size = 0x8, scoped, tag = 'scoped memory for tpu_custom_call.1']
    #allocation7 [shape = 'u8[1572864]{0}', space=vmem, size = 0x180000, scoped, tag = 'input window, operand 2, single buffered']
    #allocation8 [shape = 'u8[2048]{0}', space=vmem, size = 0x800, scoped, tag = 'input window, operand 3, single buffered']
    #allocation9 [shape = 's32[1]{0}', space=sflag, size = 0x4, scoped, tag = 'scoped memory for tpu_custom_call.1']
    #allocation10 [shape = 'u8[131072]{0}', space=vmem, size = 0x20000, scoped, tag = 'input window, operand 4, single buffered']
    #allocation11 [shape = 'u8[512]{0}', space=vmem, size = 0x400, scoped, tag = 'input window, operand 5, single buffered']
    #allocation12 [shape = 's32[1]{0}', space=sflag, size = 0x4, scoped, tag = 'scoped memory for tpu_custom_call.1']
    #allocation13 [shape = 'u8[512]{0}', space=vmem, size = 0x400, scoped, tag = 'input window, operand 6, single buffered']
    %15 = vsyncpa [#allocation4], 0
    %s16 = scalar_lea.sflag [#allocation4], 1
    %17 = vsyncpa %s16, 0
    %18 = vsyncpa [#allocation6], 0
    %s19 = scalar_lea.sflag [#allocation6], 1
    %20 = vsyncpa %s19, 0
    %21 = vsyncpa [#allocation9], 0
    %22 = vsyncpa [#allocation12], 0
    loop: start=0, step=1, limit=4
    $region2: #{tpu_custom_call.1} parent=1 // loop_pre_header
      _
    $region3: #{tpu_custom_call.1} parent=1 // loop_header
      %s24 = sphi 0, %s28
      %p25 = scmp.ge.s32.totalorder %s24, 4
      %s34 = sphi 0, %s36
      %s37 = sphi 0, %s34
      %s38 = sphi 0, %s37
      %s54 = sphi 0, %s38
      %s60 = sphi 0, %s62
      %s63 = sphi 0, %s60
      %s64 = sphi 0, %s63
      %s80 = sphi 0, %s64
      %s84 = sphi 0, %s84
      %s86 = sphi 0, %s84
      %s87 = sphi 0, %s86
      %s101 = sphi 0, %s87
      %s105 = sphi 0, %s105
      %s107 = sphi 0, %s105
      %s108 = sphi 0, %s107
      %s122 = sphi 0, %s108
      %s126 = sphi 0, %s126
      %s128 = sphi 0, %s126
      %s129 = sphi 0, %s128
      %s143 = sphi 0, %s129
      %s147 = sphi 0, %s147
      %s149 = sphi 0, %s147
      %s150 = sphi 0, %s149
      %s164 = sphi 0, %s150
      %s168 = sphi 0, %s168
      %s170 = sphi 0, %s168
      %s171 = sphi 0, %s170
      %s185 = sphi 0, %s171
      %s189 = sphi 0, %s189
      %s191 = sphi 0, %s189
      %s192 = sphi 0, %s191
      %s206 = sphi 0, %s192
      %s212 = sphi 0, %s214
      %s215 = sphi 0, %s212
      %s216 = sphi 0, %s215
      %s232 = sphi 0, %s216
    $region4: #{tpu_custom_call.1} parent=1 // loop_header_branch
      %27 = sbr.rel (%p25) target = $region8
    $region5: #{tpu_custom_call.1} parent=1 // loop_body
      %s29 = ssub.s32 %s24, 1
      %s30 = ssub.s32 %s24, 2
      %s31 = sadd.s32 %s24, 1
      %s32 = ssub.s32 %s24, %s31
      %p33 = scmp.eq.s32.totalorder %s32, 0
      %s35 = sadd.s32 %s34, 1
      %s36 = scalar_select %p33, %s34, %s35
      %p39 = pneg %p33
      %p40 = scmp.eq.s32.totalorder %s24, 1
      %p41 = por %p39, %p40
      %p42 = scmp.ne.s32.totalorder %s34, %s37
      %p43 = scmp.eq.s32.totalorder %s24, 0
      %p44 = por %p42, %p43
      %p45 = scmp.ne.s32.totalorder %s34, %s37
      %p46 = scmp.eq.s32.totalorder %s29, 1
      %p47 = por %p45, %p46
      %p48 = scmp.ne.s32.totalorder %s37, %s38
      %p49 = scmp.eq.s32.totalorder %s29, 0
      %p50 = por %p48, %p49
      %p51 = scmp.ne.s32.totalorder %s37, %s38
      %p52 = scmp.eq.s32.totalorder %s30, 1
      %p53 = por %p51, %p52
      %p55 = scmp.ne.s32.totalorder %s38, %s54
      %p56 = scmp.eq.s32.totalorder %s30, 0
      %p57 = por %p55, %p56
      %s58 = ssub.s32 %s24, %s31
      %p59 = scmp.eq.s32.totalorder %s58, 0
      %s61 = sadd.s32 %s60, 1
      %s62 = scalar_select %p59, %s60, %s61
      %p65 = pneg %p59
      %p66 = scmp.eq.s32.totalorder %s24, 1
      %p67 = por %p65, %p66
      %p68 = scmp.ne.s32.totalorder %s60, %s63
      %p69 = scmp.eq.s32.totalorder %s24, 0
      %p70 = por %p68, %p69
      %p71 = scmp.ne.s32.totalorder %s60, %s63
      %p72 = scmp.eq.s32.totalorder %s29, 1
      %p73 = por %p71, %p72
      %p74 = scmp.ne.s32.totalorder %s63, %s64
      %p75 = scmp.eq.s32.totalorder %s29, 0
      %p76 = por %p74, %p75
      %p77 = scmp.ne.s32.totalorder %s63, %s64
      %p78 = scmp.eq.s32.totalorder %s30, 1
      %p79 = por %p77, %p78
      %p81 = scmp.ne.s32.totalorder %s64, %s80
      %p82 = scmp.eq.s32.totalorder %s30, 0
      %p83 = por %p81, %p82
      %s85 = sadd.s32 %s84, 1
      %p88 = scmp.eq.s32.totalorder %s24, 1
      %p89 = scmp.ne.s32.totalorder %s84, %s86
      %p90 = scmp.eq.s32.totalorder %s24, 0
      %p91 = por %p89, %p90
      %p92 = scmp.ne.s32.totalorder %s84, %s86
      %p93 = scmp.eq.s32.totalorder %s29, 1
      %p94 = por %p92, %p93
      %p95 = scmp.ne.s32.totalorder %s86, %s87
      %p96 = scmp.eq.s32.totalorder %s29, 0
      %p97 = por %p95, %p96
      %p98 = scmp.ne.s32.totalorder %s86, %s87
      %p99 = scmp.eq.s32.totalorder %s30, 1
      %p100 = por %p98, %p99
      %p102 = scmp.ne.s32.totalorder %s87, %s101
      %p103 = scmp.eq.s32.totalorder %s30, 0
      %p104 = por %p102, %p103
      %s106 = sadd.s32 %s105, 1
      %p109 = scmp.eq.s32.totalorder %s24, 1
      %p110 = scmp.ne.s32.totalorder %s105, %s107
      %p111 = scmp.eq.s32.totalorder %s24, 0
      %p112 = por %p110, %p111
      %p113 = scmp.ne.s32.totalorder %s105, %s107
      %p114 = scmp.eq.s32.totalorder %s29, 1
      %p115 = por %p113, %p114
      %p116 = scmp.ne.s32.totalorder %s107, %s108
      %p117 = scmp.eq.s32.totalorder %s29, 0
      %p118 = por %p116, %p117
      %p119 = scmp.ne.s32.totalorder %s107, %s108
      %p120 = scmp.eq.s32.totalorder %s30, 1
      %p121 = por %p119, %p120
      %p123 = scmp.ne.s32.totalorder %s108, %s122
      %p124 = scmp.eq.s32.totalorder %s30, 0
      %p125 = por %p123, %p124
      %s127 = sadd.s32 %s126, 1
      %p130 = scmp.eq.s32.totalorder %s24, 1
      %p131 = scmp.ne.s32.totalorder %s126, %s128
      %p132 = scmp.eq.s32.totalorder %s24, 0
      %p133 = por %p131, %p132
      %p134 = scmp.ne.s32.totalorder %s126, %s128
      %p135 = scmp.eq.s32.totalorder %s29, 1
      %p136 = por %p134, %p135
      %p137 = scmp.ne.s32.totalorder %s128, %s129
      %p138 = scmp.eq.s32.totalorder %s29, 0
      %p139 = por %p137, %p138
      %p140 = scmp.ne.s32.totalorder %s128, %s129
      %p141 = scmp.eq.s32.totalorder %s30, 1
      %p142 = por %p140, %p141
      %p144 = scmp.ne.s32.totalorder %s129, %s143
      %p145 = scmp.eq.s32.totalorder %s30, 0
      %p146 = por %p144, %p145
      %s148 = sadd.s32 %s147, 1
      %p151 = scmp.eq.s32.totalorder %s24, 1
      %p152 = scmp.ne.s32.totalorder %s147, %s149
      %p153 = scmp.eq.s32.totalorder %s24, 0
      %p154 = por %p152, %p153
      %p155 = scmp.ne.s32.totalorder %s147, %s149
      %p156 = scmp.eq.s32.totalorder %s29, 1
      %p157 = por %p155, %p156
      %p158 = scmp.ne.s32.totalorder %s149, %s150
      %p159 = scmp.eq.s32.totalorder %s29, 0
      %p160 = por %p158, %p159
      %p161 = scmp.ne.s32.totalorder %s149, %s150
      %p162 = scmp.eq.s32.totalorder %s30, 1
      %p163 = por %p161, %p162
      %p165 = scmp.ne.s32.totalorder %s150, %s164
      %p166 = scmp.eq.s32.totalorder %s30, 0
      %p167 = por %p165, %p166
      %s169 = sadd.s32 %s168, 1
      %p172 = scmp.eq.s32.totalorder %s24, 1
      %p173 = scmp.ne.s32.totalorder %s168, %s170
      %p174 = scmp.eq.s32.totalorder %s24, 0
      %p175 = por %p173, %p174
      %p176 = scmp.ne.s32.totalorder %s168, %s170
      %p177 = scmp.eq.s32.totalorder %s29, 1
      %p178 = por %p176, %p177
      %p179 = scmp.ne.s32.totalorder %s170, %s171
      %p180 = scmp.eq.s32.totalorder %s29, 0
      %p181 = por %p179, %p180
      %p182 = scmp.ne.s32.totalorder %s170, %s171
      %p183 = scmp.eq.s32.totalorder %s30, 1
      %p184 = por %p182, %p183
      %p186 = scmp.ne.s32.totalorder %s171, %s185
      %p187 = scmp.eq.s32.totalorder %s30, 0
      %p188 = por %p186, %p187
      %s190 = sadd.s32 %s189, 1
      %p193 = scmp.eq.s32.totalorder %s24, 1
      %p194 = scmp.ne.s32.totalorder %s189, %s191
      %p195 = scmp.eq.s32.totalorder %s24, 0
      %p196 = por %p194, %p195
      %p197 = scmp.ne.s32.totalorder %s189, %s191
      %p198 = scmp.eq.s32.totalorder %s29, 1
      %p199 = por %p197, %p198
      %p200 = scmp.ne.s32.totalorder %s191, %s192
      %p201 = scmp.eq.s32.totalorder %s29, 0
      %p202 = por %p200, %p201
      %p203 = scmp.ne.s32.totalorder %s191, %s192
      %p204 = scmp.eq.s32.totalorder %s30, 1
      %p205 = por %p203, %p204
      %p207 = scmp.ne.s32.totalorder %s192, %s206
      %p208 = scmp.eq.s32.totalorder %s30, 0
      %p209 = por %p207, %p208
      %s210 = ssub.s32 %s24, %s31
      %p211 = scmp.eq.s32.totalorder %s210, 0
      %s213 = sadd.s32 %s212, 1
      %s214 = scalar_select %p211, %s212, %s213
      %p217 = pneg %p211
      %p218 = scmp.eq.s32.totalorder %s24, 1
      %p219 = por %p217, %p218
      %p220 = scmp.ne.s32.totalorder %s212, %s215
      %p221 = scmp.eq.s32.totalorder %s24, 0
      %p222 = por %p220, %p221
      %p223 = scmp.ne.s32.totalorder %s212, %s215
      %p224 = scmp.eq.s32.totalorder %s29, 1
      %p225 = por %p223, %p224
      %p226 = scmp.ne.s32.totalorder %s215, %s216
      %p227 = scmp.eq.s32.totalorder %s29, 0
      %p228 = por %p226, %p227
      %p229 = scmp.ne.s32.totalorder %s215, %s216
      %p230 = scmp.eq.s32.totalorder %s30, 1
      %p231 = por %p229, %p230
      %p233 = scmp.ne.s32.totalorder %s216, %s232
      %p234 = scmp.eq.s32.totalorder %s30, 0
      %p235 = por %p233, %p234
      %p236 = scmp.le.s32.totalorder 1, %s24
      %p237 = scmp.lt.s32.totalorder %s24, 3
      %p238 = pnand %p236, %p237
      %p239 = pneg %p238
      // Predicated region
      $region9: #{tpu_custom_call.1} parent=5 // pred_check
        _
      $region10: #{tpu_custom_call.1} parent=5 // pred_check_branch
        %241 = sbr.rel (%p238) target = $region12
      $region11: #{tpu_custom_call.1} parent=5 // pred_region
        %s242 = ssub.s32 %s24, 1
        // Predicated region
        $region13: #{tpu_custom_call.1} parent=11 // pred_check
          %p243 = pneg %p97
        $region14: #{tpu_custom_call.1} parent=11 // pred_check_branch
          %245 = sbr.rel (%p243) target = $region16
        $region15: #{tpu_custom_call.1} parent=11 // pred_region
          %s247 = ssub.s32 49152, 49152
          %248 = vsyncadd [#allocation6], %s247
          %s249 = sshll.u32 [#allocation7], 4
          %s250 = int_to_ptr.vmem [resolvable:$true] %s249
          %255 = dma.hbm_to_vmem [thread:$0]  %s2, 49152, %s250, [#allocation6], 256, 256, 16
        $region16: #{tpu_custom_call.1} parent=11 // pred_fallthru
          _
        // Predicated region
        $region17: #{tpu_custom_call.1} parent=11 // pred_check
          %p256 = pneg %p118
        $region18: #{tpu_custom_call.1} parent=11 // pred_check_branch
          %258 = sbr.rel (%p256) target = $region20
        $region19: #{tpu_custom_call.1} parent=11 // pred_region
          %s260 = ssub.s32 64, 64
          %261 = vsyncadd [#allocation9], %s260
          %s263 = sshll.u32 [#allocation8], 4
          %s264 = int_to_ptr.vmem [resolvable:$true] %s263
          %266 = dma.hbm_to_vmem [thread:$0]  %s3, 64, %s264, [#allocation9]
        $region20: #{tpu_custom_call.1} parent=11 // pred_fallthru
          _
        // Predicated region
        $region21: #{tpu_custom_call.1} parent=11 // pred_check
          %p267 = pneg %p139
        $region22: #{tpu_custom_call.1} parent=11 // pred_check_branch
          %269 = sbr.rel (%p267) target = $region24
        $region23: #{tpu_custom_call.1} parent=11 // pred_region
          %s271 = ssub.s32 4096, 4096
          %272 = vsyncadd [#allocation9], %s271
          %s273 = sshll.u32 [#allocation10], 4
          %s274 = int_to_ptr.vmem [resolvable:$true] %s273
          %279 = dma.hbm_to_vmem [thread:$0]  %s4, 4096, %s274, [#allocation9], 64, 64, 4
        $region24: #{tpu_custom_call.1} parent=11 // pred_fallthru
          _
        // Predicated region
        $region25: #{tpu_custom_call.1} parent=11 // pred_check
          %p280 = pneg %p160
        $region26: #{tpu_custom_call.1} parent=11 // pred_check_branch
          %282 = sbr.rel (%p280) target = $region28
        $region27: #{tpu_custom_call.1} parent=11 // pred_region
          %s284 = ssub.s32 16, 16
          %285 = vsyncadd [#allocation12], %s284
          %s287 = sshll.u32 [#allocation11], 4
          %s288 = int_to_ptr.vmem [resolvable:$true] %s287
          %290 = dma.hbm_to_vmem [thread:$0]  %s5, 16, %s288, [#allocation12]
        $region28: #{tpu_custom_call.1} parent=11 // pred_fallthru
          _
        // Predicated region
        $region29: #{tpu_custom_call.1} parent=11 // pred_check
          %p291 = pneg %p181
        $region30: #{tpu_custom_call.1} parent=11 // pred_check_branch
          %293 = sbr.rel (%p291) target = $region32
        $region31: #{tpu_custom_call.1} parent=11 // pred_region
          %s295 = ssub.s32 16, 16
          %296 = vsyncadd [#allocation12], %s295
          %s298 = sshll.u32 [#allocation13], 4
          %s299 = int_to_ptr.vmem [resolvable:$true] %s298
          %301 = dma.hbm_to_vmem [thread:$0]  %s6, 16, %s299, [#allocation12]
        $region32: #{tpu_custom_call.1} parent=11 // pred_fallthru
          _
        // Predicated region
        $region33: #{tpu_custom_call.1} parent=11 // pred_check
          %p302 = pneg %p202
        $region34: #{tpu_custom_call.1} parent=11 // pred_check_branch
          %304 = sbr.rel (%p302) target = $region36
        $region35: #{tpu_custom_call.1} parent=11 // pred_region
          _
        $region36: #{tpu_custom_call.1} parent=11 // pred_fallthru
          _
      $region12: #{tpu_custom_call.1} parent=5 // pred_fallthru
        _
      %p305 = scmp.lt.s32.totalorder %s24, 2
      // Predicated region
      $region37: #{tpu_custom_call.1} parent=5 // pred_check
        %p306 = pneg %p305
      $region38: #{tpu_custom_call.1} parent=5 // pred_check_branch
        %308 = sbr.rel (%p306) target = $region40
      $region39: #{tpu_custom_call.1} parent=5 // pred_region
        // Predicated region
        $region41: #{tpu_custom_call.1} parent=39 // pred_check
          %p309 = pneg %p44
        $region42: #{tpu_custom_call.1} parent=39 // pred_check_branch
          %311 = sbr.rel (%p309) target = $region44
        $region43: #{tpu_custom_call.1} parent=39 // pred_region
          %s312 = sand.u32 %s34, 1
          %s313 = scalar_lea.sflag [#allocation4], %s312
          %s314 = sand.u32 %s34, 1
          %s315 = smul.addr %s314, 1536
          %s316 = scalar_lea.vmem [#allocation3], %s315
          %s317 = smul.u32 32, %s24
          %s319 = ssub.s32 24576, 24576
          %320 = vsyncadd %s313, %s319
          %s321 = smul.addr %s317, 12
          %s322 = smul.addr %s321, 64
          %s323 = scalar_lea.hbm %s0, %s322
          %s324 = sshll.u32 %s316, 4
          %s325 = int_to_ptr.vmem [resolvable:$true] %s324
          %330 = dma.hbm_to_vmem [thread:$0]  %s323, 24576, %s325, %s313, 768, 768, 48
        $region44: #{tpu_custom_call.1} parent=39 // pred_fallthru
          _
        // Predicated region
        $region45: #{tpu_custom_call.1} parent=39 // pred_check
          %p331 = pneg %p70
        $region46: #{tpu_custom_call.1} parent=39 // pred_check_branch
          %333 = sbr.rel (%p331) target = $region48
        $region47: #{tpu_custom_call.1} parent=39 // pred_region
          %s334 = sand.u32 %s24, 1
          %s335 = scalar_lea.sflag [#allocation6], %s334
          %s336 = sand.u32 %s60, 1
          %s337 = smul.addr %s336, 1536
          %s338 = scalar_lea.vmem [#allocation5], %s337
          %s339 = smul.u32 32, %s24
          %s341 = ssub.s32 24576, 24576
          %342 = vsyncadd %s335, %s341
          %s343 = smul.addr %s339, 12
          %s344 = smul.addr %s343, 64
          %s345 = scalar_lea.hbm %s1, %s344
          %s346 = sshll.u32 %s338, 4
          %s347 = int_to_ptr.vmem [resolvable:$true] %s346
          %352 = dma.hbm_to_vmem [thread:$0]  %s345, 24576, %s347, %s335, 768, 768, 48
        $region48: #{tpu_custom_call.1} parent=39 // pred_fallthru
          _
      $region40: #{tpu_custom_call.1} parent=5 // pred_fallthru
        _
      %p353 = scmp.le.s32.totalorder 1, %s24
      %p354 = scmp.lt.s32.totalorder %s24, 3
      %p355 = pnand %p353, %p354
      %p356 = pneg %p355
      // Predicated region
      $region49: #{tpu_custom_call.1} parent=5 // pred_check
        _
      $region50: #{tpu_custom_call.1} parent=5 // pred_check_branch
        %358 = sbr.rel (%p355) target = $region52
      $region51: #{tpu_custom_call.1} parent=5 // pred_region
        %s359 = ssub.s32 %s24, 1
        %s360 = sand.u32 %s37, 1
        %s361 = scalar_lea.sflag [#allocation4], %s360
        %s362 = sand.u32 %s37, 1
        %s363 = smul.addr %s362, 1536
        %s364 = scalar_lea.vmem [#allocation3], %s363
        // Predicated region
        $region53: #{tpu_custom_call.1} parent=51 // pred_check
          %p365 = pneg %p50
        $region54: #{tpu_custom_call.1} parent=51 // pred_check_branch
          %367 = sbr.rel (%p365) target = $region56
        $region55: #{tpu_custom_call.1} parent=51 // pred_region
          %368 = dma.done %s361, 24576
        $region56: #{tpu_custom_call.1} parent=51 // pred_fallthru
          _
        %s369 = sand.u32 %s29, 1
        %s370 = scalar_lea.sflag [#allocation6], %s369
        %s371 = sand.u32 %s63, 1
        %s372 = smul.addr %s371, 1536
        %s373 = scalar_lea.vmem [#allocation5], %s372
        // Predicated region
        $region57: #{tpu_custom_call.1} parent=51 // pred_check
          %p374 = pneg %p76
        $region58: #{tpu_custom_call.1} parent=51 // pred_check_branch
          %376 = sbr.rel (%p374) target = $region60
        $region59: #{tpu_custom_call.1} parent=51 // pred_region
          %377 = dma.done %s370, 24576
        $region60: #{tpu_custom_call.1} parent=51 // pred_fallthru
          _
        // Predicated region
        $region61: #{tpu_custom_call.1} parent=51 // pred_check
          %p378 = pneg %p97
        $region62: #{tpu_custom_call.1} parent=51 // pred_check_branch
          %380 = sbr.rel (%p378) target = $region64
        $region63: #{tpu_custom_call.1} parent=51 // pred_region
          %381 = dma.done [#allocation6], 49152
        $region64: #{tpu_custom_call.1} parent=51 // pred_fallthru
          _
        // Predicated region
        $region65: #{tpu_custom_call.1} parent=51 // pred_check
          %p382 = pneg %p118
        $region66: #{tpu_custom_call.1} parent=51 // pred_check_branch
          %384 = sbr.rel (%p382) target = $region68
        $region67: #{tpu_custom_call.1} parent=51 // pred_region
          %385 = dma.done [#allocation9], 64
        $region68: #{tpu_custom_call.1} parent=51 // pred_fallthru
          _
        // Predicated region
        $region69: #{tpu_custom_call.1} parent=51 // pred_check
          %p386 = pneg %p139
        $region70: #{tpu_custom_call.1} parent=51 // pred_check_branch
          %388 = sbr.rel (%p386) target = $region72
        $region71: #{tpu_custom_call.1} parent=51 // pred_region
          %389 = dma.done [#allocation9], 4096
        $region72: #{tpu_custom_call.1} parent=51 // pred_fallthru
          _
        // Predicated region
        $region73: #{tpu_custom_call.1} parent=51 // pred_check
          %p390 = pneg %p160
        $region74: #{tpu_custom_call.1} parent=51 // pred_check_branch
          %392 = sbr.rel (%p390) target = $region76
        $region75: #{tpu_custom_call.1} parent=51 // pred_region
          %393 = dma.done [#allocation12], 16
        $region76: #{tpu_custom_call.1} parent=51 // pred_fallthru
          _
        // Predicated region
        $region77: #{tpu_custom_call.1} parent=51 // pred_check
          %p394 = pneg %p181
        $region78: #{tpu_custom_call.1} parent=51 // pred_check_branch
          %396 = sbr.rel (%p394) target = $region80
        $region79: #{tpu_custom_call.1} parent=51 // pred_region
          %397 = dma.done [#allocation12], 16
        $region80: #{tpu_custom_call.1} parent=51 // pred_fallthru
          _
        %s398 = sand.u32 %s37, 1
        %s399 = scalar_lea.sflag [#allocation4], %s398
        %s400 = sand.u32 %s37, 1
        %s401 = smul.addr %s400, 1536
        %s402 = scalar_lea.vmem [#allocation3], %s401
        %p403 = pneg %p50
        %p404 = pneg %p47
        %s405 = sand.u32 %s29, 1
        %s406 = scalar_lea.sflag [#allocation6], %s405
        %s407 = sand.u32 %s63, 1
        %s408 = smul.addr %s407, 1536
        %s409 = scalar_lea.vmem [#allocation5], %s408
        %p410 = pneg %p76
        %p411 = pneg %p73
        %p412 = pneg %p97
        %p413 = pneg %p94
        %p414 = pneg %p118
        %p415 = pneg %p115
        %p416 = pneg %p139
        %p417 = pneg %p136
        %p418 = pneg %p160
        %p419 = pneg %p157
        %p420 = pneg %p181
        %p421 = pneg %p178
        %p422 = pneg %p202
        %p423 = pneg %p199
        %p424 = pneg %p228
        %p425 = pneg %p225
        %s426 = smul.u32 32, %s29
        %p427 = scmp.lt.s32.totalorder %s426, 63
        %s428 = scalar_select %p427, %s426, 63
        %s429 = smul.addr %s428, 8
        %s430 = scalar_lea.vmem %s8, %s429
        %s431 = smul.u32 32, %s29
        %s432 = smul.u32 32, %s29
        %s433 = smul.u32 32, %s29
        %p434 = scmp.lt.s32.totalorder %s433, 63
        %s435 = scalar_select %p434, %s433, 63
        %s436 = smul.addr %s435, 8
        %s437 = scalar_lea.vmem %s8, %s436
        %s438 = smul.u32 32, %s29
        %v440 = vld [vmem:[%s364] sm:$0xff]
        %v441 = vld [vmem:[%s364 + $0x8] sm:$0xff]
        %v442 = vld [vmem:[%s364 + $0x10] sm:$0xff]
        %v443 = vld [vmem:[%s364 + $0x18] sm:$0xff]
        %v444 = vld [vmem:[%s364 + $0x20] sm:$0xff]
        %v445 = vld [vmem:[%s364 + $0x28] sm:$0xff]
        %v446 = vld [vmem:[%s364 + $0x30] sm:$0xff]
        %v447 = vld [vmem:[%s364 + $0x38] sm:$0xff]
        %v448 = vld [vmem:[%s364 + $0x40] sm:$0xff]
        %v449 = vld [vmem:[%s364 + $0x48] sm:$0xff]
        %v450 = vld [vmem:[%s364 + $0x50] sm:$0xff]
        %v451 = vld [vmem:[%s364 + $0x58] sm:$0xff]
        %v452 = vld [vmem:[%s364 + $0x60] sm:$0xff]
        %v453 = vld [vmem:[%s364 + $0x68] sm:$0xff]
        %v454 = vld [vmem:[%s364 + $0x70] sm:$0xff]
        %v455 = vld [vmem:[%s364 + $0x78] sm:$0xff]
        %v456 = vld [vmem:[%s364 + $0x80] sm:$0xff]
        %v457 = vld [vmem:[%s364 + $0x88] sm:$0xff]
        %v458 = vld [vmem:[%s364 + $0x90] sm:$0xff]
        %v459 = vld [vmem:[%s364 + $0x98] sm:$0xff]
        %v460 = vld [vmem:[%s364 + $0xa0] sm:$0xff]
        %v461 = vld [vmem:[%s364 + $0xa8] sm:$0xff]
        %v462 = vld [vmem:[%s364 + $0xb0] sm:$0xff]
        %v463 = vld [vmem:[%s364 + $0xb8] sm:$0xff]
        %v464 = vld [vmem:[%s364 + $0xc0] sm:$0xff]
        %v465 = vld [vmem:[%s364 + $0xc8] sm:$0xff]
        %v466 = vld [vmem:[%s364 + $0xd0] sm:$0xff]
        %v467 = vld [vmem:[%s364 + $0xd8] sm:$0xff]
        %v468 = vld [vmem:[%s364 + $0xe0] sm:$0xff]
        %v469 = vld [vmem:[%s364 + $0xe8] sm:$0xff]
        %v470 = vld [vmem:[%s364 + $0xf0] sm:$0xff]
        %v471 = vld [vmem:[%s364 + $0xf8] sm:$0xff]
        %v472 = vld [vmem:[%s364 + $0x100] sm:$0xff]
        %v473 = vld [vmem:[%s364 + $0x108] sm:$0xff]
        %v474 = vld [vmem:[%s364 + $0x110] sm:$0xff]
        %v475 = vld [vmem:[%s364 + $0x118] sm:$0xff]
        %v476 = vld [vmem:[%s364 + $0x120] sm:$0xff]
        %v477 = vld [vmem:[%s364 + $0x128] sm:$0xff]
        %v478 = vld [vmem:[%s364 + $0x130] sm:$0xff]
        %v479 = vld [vmem:[%s364 + $0x138] sm:$0xff]
        %v480 = vld [vmem:[%s364 + $0x140] sm:$0xff]
        %v481 = vld [vmem:[%s364 + $0x148] sm:$0xff]
        %v482 = vld [vmem:[%s364 + $0x150] sm:$0xff]
        %v483 = vld [vmem:[%s364 + $0x158] sm:$0xff]
        %v484 = vld [vmem:[%s364 + $0x160] sm:$0xff]
        %v485 = vld [vmem:[%s364 + $0x168] sm:$0xff]
        %v486 = vld [vmem:[%s364 + $0x170] sm:$0xff]
        %v487 = vld [vmem:[%s364 + $0x178] sm:$0xff]
        %v488 = vld [vmem:[%s364 + $0x180] sm:$0xff]
        %v489 = vld [vmem:[%s364 + $0x188] sm:$0xff]
        %v490 = vld [vmem:[%s364 + $0x190] sm:$0xff]
        %v491 = vld [vmem:[%s364 + $0x198] sm:$0xff]
        %v492 = vld [vmem:[%s364 + $0x1a0] sm:$0xff]
        %v493 = vld [vmem:[%s364 + $0x1a8] sm:$0xff]
        %v494 = vld [vmem:[%s364 + $0x1b0] sm:$0xff]
        %v495 = vld [vmem:[%s364 + $0x1b8] sm:$0xff]
        %v496 = vld [vmem:[%s364 + $0x1c0] sm:$0xff]
        %v497 = vld [vmem:[%s364 + $0x1c8] sm:$0xff]
        %v498 = vld [vmem:[%s364 + $0x1d0] sm:$0xff]
        %v499 = vld [vmem:[%s364 + $0x1d8] sm:$0xff]
        %v500 = vld [vmem:[%s364 + $0x1e0] sm:$0xff]
        %v501 = vld [vmem:[%s364 + $0x1e8] sm:$0xff]
        %v502 = vld [vmem:[%s364 + $0x1f0] sm:$0xff]
        %v503 = vld [vmem:[%s364 + $0x1f8] sm:$0xff]
        %v504 = vld [vmem:[%s364 + $0x200] sm:$0xff]
        %v505 = vld [vmem:[%s364 + $0x208] sm:$0xff]
        %v506 = vld [vmem:[%s364 + $0x210] sm:$0xff]
        %v507 = vld [vmem:[%s364 + $0x218] sm:$0xff]
        %v508 = vld [vmem:[%s364 + $0x220] sm:$0xff]
        %v509 = vld [vmem:[%s364 + $0x228] sm:$0xff]
        %v510 = vld [vmem:[%s364 + $0x230] sm:$0xff]
        %v511 = vld [vmem:[%s364 + $0x238] sm:$0xff]
        %v512 = vld [vmem:[%s364 + $0x240] sm:$0xff]
        %v513 = vld [vmem:[%s364 + $0x248] sm:$0xff]
        %v514 = vld [vmem:[%s364 + $0x250] sm:$0xff]
        %v515 = vld [vmem:[%s364 + $0x258] sm:$0xff]
        %v516 = vld [vmem:[%s364 + $0x260] sm:$0xff]
        %v517 = vld [vmem:[%s364 + $0x268] sm:$0xff]
        %v518 = vld [vmem:[%s364 + $0x270] sm:$0xff]
        %v519 = vld [vmem:[%s364 + $0x278] sm:$0xff]
        %v520 = vld [vmem:[%s364 + $0x280] sm:$0xff]
        %v521 = vld [vmem:[%s364 + $0x288] sm:$0xff]
        %v522 = vld [vmem:[%s364 + $0x290] sm:$0xff]
        %v523 = vld [vmem:[%s364 + $0x298] sm:$0xff]
        %v524 = vld [vmem:[%s364 + $0x2a0] sm:$0xff]
        %v525 = vld [vmem:[%s364 + $0x2a8] sm:$0xff]
        %v526 = vld [vmem:[%s364 + $0x2b0] sm:$0xff]
        %v527 = vld [vmem:[%s364 + $0x2b8] sm:$0xff]
        %v528 = vld [vmem:[%s364 + $0x2c0] sm:$0xff]
        %v529 = vld [vmem:[%s364 + $0x2c8] sm:$0xff]
        %v530 = vld [vmem:[%s364 + $0x2d0] sm:$0xff]
        %v531 = vld [vmem:[%s364 + $0x2d8] sm:$0xff]
        %v532 = vld [vmem:[%s364 + $0x2e0] sm:$0xff]
        %v533 = vld [vmem:[%s364 + $0x2e8] sm:$0xff]
        %v534 = vld [vmem:[%s364 + $0x2f0] sm:$0xff]
        %v535 = vld [vmem:[%s364 + $0x2f8] sm:$0xff]
        %v536 = vld [vmem:[%s364 + $0x300] sm:$0xff]
        %v537 = vld [vmem:[%s364 + $0x308] sm:$0xff]
        %v538 = vld [vmem:[%s364 + $0x310] sm:$0xff]
        %v539 = vld [vmem:[%s364 + $0x318] sm:$0xff]
        %v540 = vld [vmem:[%s364 + $0x320] sm:$0xff]
        %v541 = vld [vmem:[%s364 + $0x328] sm:$0xff]
        %v542 = vld [vmem:[%s364 + $0x330] sm:$0xff]
        %v543 = vld [vmem:[%s364 + $0x338] sm:$0xff]
        %v544 = vld [vmem:[%s364 + $0x340] sm:$0xff]
        %v545 = vld [vmem:[%s364 + $0x348] sm:$0xff]
        %v546 = vld [vmem:[%s364 + $0x350] sm:$0xff]
        %v547 = vld [vmem:[%s364 + $0x358] sm:$0xff]
        %v548 = vld [vmem:[%s364 + $0x360] sm:$0xff]
        %v549 = vld [vmem:[%s364 + $0x368] sm:$0xff]
        %v550 = vld [vmem:[%s364 + $0x370] sm:$0xff]
        %v551 = vld [vmem:[%s364 + $0x378] sm:$0xff]
        %v552 = vld [vmem:[%s364 + $0x380] sm:$0xff]
        %v553 = vld [vmem:[%s364 + $0x388] sm:$0xff]
        %v554 = vld [vmem:[%s364 + $0x390] sm:$0xff]
        %v555 = vld [vmem:[%s364 + $0x398] sm:$0xff]
        %v556 = vld [vmem:[%s364 + $0x3a0] sm:$0xff]
        %v557 = vld [vmem:[%s364 + $0x3a8] sm:$0xff]
        %v558 = vld [vmem:[%s364 + $0x3b0] sm:$0xff]
        %v559 = vld [vmem:[%s364 + $0x3b8] sm:$0xff]
        %v560 = vld [vmem:[%s364 + $0x3c0] sm:$0xff]
        %v561 = vld [vmem:[%s364 + $0x3c8] sm:$0xff]
        %v562 = vld [vmem:[%s364 + $0x3d0] sm:$0xff]
        %v563 = vld [vmem:[%s364 + $0x3d8] sm:$0xff]
        %v564 = vld [vmem:[%s364 + $0x3e0] sm:$0xff]
        %v565 = vld [vmem:[%s364 + $0x3e8] sm:$0xff]
        %v566 = vld [vmem:[%s364 + $0x3f0] sm:$0xff]
        %v567 = vld [vmem:[%s364 + $0x3f8] sm:$0xff]
        %v568 = vld [vmem:[%s364 + $0x400] sm:$0xff]
        %v569 = vld [vmem:[%s364 + $0x408] sm:$0xff]
        %v570 = vld [vmem:[%s364 + $0x410] sm:$0xff]
        %v571 = vld [vmem:[%s364 + $0x418] sm:$0xff]
        %v572 = vld [vmem:[%s364 + $0x420] sm:$0xff]
        %v573 = vld [vmem:[%s364 + $0x428] sm:$0xff]
        %v574 = vld [vmem:[%s364 + $0x430] sm:$0xff]
        %v575 = vld [vmem:[%s364 + $0x438] sm:$0xff]
        %v576 = vld [vmem:[%s364 + $0x440] sm:$0xff]
        %v577 = vld [vmem:[%s364 + $0x448] sm:$0xff]
        %v578 = vld [vmem:[%s364 + $0x450] sm:$0xff]
        %v579 = vld [vmem:[%s364 + $0x458] sm:$0xff]
        %v580 = vld [vmem:[%s364 + $0x460] sm:$0xff]
        %v581 = vld [vmem:[%s364 + $0x468] sm:$0xff]
        %v582 = vld [vmem:[%s364 + $0x470] sm:$0xff]
        %v583 = vld [vmem:[%s364 + $0x478] sm:$0xff]
        %v584 = vld [vmem:[%s364 + $0x480] sm:$0xff]
        %v585 = vld [vmem:[%s364 + $0x488] sm:$0xff]
        %v586 = vld [vmem:[%s364 + $0x490] sm:$0xff]
        %v587 = vld [vmem:[%s364 + $0x498] sm:$0xff]
        %v588 = vld [vmem:[%s364 + $0x4a0] sm:$0xff]
        %v589 = vld [vmem:[%s364 + $0x4a8] sm:$0xff]
        %v590 = vld [vmem:[%s364 + $0x4b0] sm:$0xff]
        %v591 = vld [vmem:[%s364 + $0x4b8] sm:$0xff]
        %v592 = vld [vmem:[%s364 + $0x4c0] sm:$0xff]
        %v593 = vld [vmem:[%s364 + $0x4c8] sm:$0xff]
        %v594 = vld [vmem:[%s364 + $0x4d0] sm:$0xff]
        %v595 = vld [vmem:[%s364 + $0x4d8] sm:$0xff]
        %v596 = vld [vmem:[%s364 + $0x4e0] sm:$0xff]
        %v597 = vld [vmem:[%s364 + $0x4e8] sm:$0xff]
        %v598 = vld [vmem:[%s364 + $0x4f0] sm:$0xff]
        %v599 = vld [vmem:[%s364 + $0x4f8] sm:$0xff]
        %v600 = vld [vmem:[%s364 + $0x500] sm:$0xff]
        %v601 = vld [vmem:[%s364 + $0x508] sm:$0xff]
        %v602 = vld [vmem:[%s364 + $0x510] sm:$0xff]
        %v603 = vld [vmem:[%s364 + $0x518] sm:$0xff]
        %v604 = vld [vmem:[%s364 + $0x520] sm:$0xff]
        %v605 = vld [vmem:[%s364 + $0x528] sm:$0xff]
        %v606 = vld [vmem:[%s364 + $0x530] sm:$0xff]
        %v607 = vld [vmem:[%s364 + $0x538] sm:$0xff]
        %v608 = vld [vmem:[%s364 + $0x540] sm:$0xff]
        %v609 = vld [vmem:[%s364 + $0x548] sm:$0xff]
        %v610 = vld [vmem:[%s364 + $0x550] sm:$0xff]
        %v611 = vld [vmem:[%s364 + $0x558] sm:$0xff]
        %v612 = vld [vmem:[%s364 + $0x560] sm:$0xff]
        %v613 = vld [vmem:[%s364 + $0x568] sm:$0xff]
        %v614 = vld [vmem:[%s364 + $0x570] sm:$0xff]
        %v615 = vld [vmem:[%s364 + $0x578] sm:$0xff]
        %v616 = vld [vmem:[%s364 + $0x580] sm:$0xff]
        %v617 = vld [vmem:[%s364 + $0x588] sm:$0xff]
        %v618 = vld [vmem:[%s364 + $0x590] sm:$0xff]
        %v619 = vld [vmem:[%s364 + $0x598] sm:$0xff]
        %v620 = vld [vmem:[%s364 + $0x5a0] sm:$0xff]
        %v621 = vld [vmem:[%s364 + $0x5a8] sm:$0xff]
        %v622 = vld [vmem:[%s364 + $0x5b0] sm:$0xff]
        %v623 = vld [vmem:[%s364 + $0x5b8] sm:$0xff]
        %v624 = vld [vmem:[%s364 + $0x5c0] sm:$0xff]
        %v625 = vld [vmem:[%s364 + $0x5c8] sm:$0xff]
        %v626 = vld [vmem:[%s364 + $0x5d0] sm:$0xff]
        %v627 = vld [vmem:[%s364 + $0x5d8] sm:$0xff]
        %v628 = vld [vmem:[%s364 + $0x5e0] sm:$0xff]
        %v629 = vld [vmem:[%s364 + $0x5e8] sm:$0xff]
        %v630 = vld [vmem:[%s364 + $0x5f0] sm:$0xff]
        %v631 = vld [vmem:[%s364 + $0x5f8] sm:$0xff]
        %v632 = vld [vmem:[%s373] sm:$0xff]
        %v633 = vld [vmem:[%s373 + $0x8] sm:$0xff]
        %v634 = vld [vmem:[%s373 + $0x10] sm:$0xff]
        %v635 = vld [vmem:[%s373 + $0x18] sm:$0xff]
        %v636 = vld [vmem:[%s373 + $0x20] sm:$0xff]
        %v637 = vld [vmem:[%s373 + $0x28] sm:$0xff]
        %v638 = vld [vmem:[%s373 + $0x30] sm:$0xff]
        %v639 = vld [vmem:[%s373 + $0x38] sm:$0xff]
        %v640 = vld [vmem:[%s373 + $0x40] sm:$0xff]
        %v641 = vld [vmem:[%s373 + $0x48] sm:$0xff]
        %v642 = vld [vmem:[%s373 + $0x50] sm:$0xff]
        %v643 = vld [vmem:[%s373 + $0x58] sm:$0xff]
        %v644 = vld [vmem:[%s373 + $0x60] sm:$0xff]
        %v645 = vld [vmem:[%s373 + $0x68] sm:$0xff]
        %v646 = vld [vmem:[%s373 + $0x70] sm:$0xff]
        %v647 = vld [vmem:[%s373 + $0x78] sm:$0xff]
        %v648 = vld [vmem:[%s373 + $0x80] sm:$0xff]
        %v649 = vld [vmem:[%s373 + $0x88] sm:$0xff]
        %v650 = vld [vmem:[%s373 + $0x90] sm:$0xff]
        %v651 = vld [vmem:[%s373 + $0x98] sm:$0xff]
        %v652 = vld [vmem:[%s373 + $0xa0] sm:$0xff]
        %v653 = vld [vmem:[%s373 + $0xa8] sm:$0xff]
        %v654 = vld [vmem:[%s373 + $0xb0] sm:$0xff]
        %v655 = vld [vmem:[%s373 + $0xb8] sm:$0xff]
        %v656 = vld [vmem:[%s373 + $0xc0] sm:$0xff]
        %v657 = vld [vmem:[%s373 + $0xc8] sm:$0xff]
        %v658 = vld [vmem:[%s373 + $0xd0] sm:$0xff]
        %v659 = vld [vmem:[%s373 + $0xd8] sm:$0xff]
        %v660 = vld [vmem:[%s373 + $0xe0] sm:$0xff]
        %v661 = vld [vmem:[%s373 + $0xe8] sm:$0xff]
        %v662 = vld [vmem:[%s373 + $0xf0] sm:$0xff]
        %v663 = vld [vmem:[%s373 + $0xf8] sm:$0xff]
        %v664 = vld [vmem:[%s373 + $0x100] sm:$0xff]
        %v665 = vld [vmem:[%s373 + $0x108] sm:$0xff]
        %v666 = vld [vmem:[%s373 + $0x110] sm:$0xff]
        %v667 = vld [vmem:[%s373 + $0x118] sm:$0xff]
        %v668 = vld [vmem:[%s373 + $0x120] sm:$0xff]
        %v669 = vld [vmem:[%s373 + $0x128] sm:$0xff]
        %v670 = vld [vmem:[%s373 + $0x130] sm:$0xff]
        %v671 = vld [vmem:[%s373 + $0x138] sm:$0xff]
        %v672 = vld [vmem:[%s373 + $0x140] sm:$0xff]
        %v673 = vld [vmem:[%s373 + $0x148] sm:$0xff]
        %v674 = vld [vmem:[%s373 + $0x150] sm:$0xff]
        %v675 = vld [vmem:[%s373 + $0x158] sm:$0xff]
        %v676 = vld [vmem:[%s373 + $0x160] sm:$0xff]
        %v677 = vld [vmem:[%s373 + $0x168] sm:$0xff]
        %v678 = vld [vmem:[%s373 + $0x170] sm:$0xff]
        %v679 = vld [vmem:[%s373 + $0x178] sm:$0xff]
        %v680 = vld [vmem:[%s373 + $0x180] sm:$0xff]
        %v681 = vld [vmem:[%s373 + $0x188] sm:$0xff]
        %v682 = vld [vmem:[%s373 + $0x190] sm:$0xff]
        %v683 = vld [vmem:[%s373 + $0x198] sm:$0xff]
        %v684 = vld [vmem:[%s373 + $0x1a0] sm:$0xff]
        %v685 = vld [vmem:[%s373 + $0x1a8] sm:$0xff]
        %v686 = vld [vmem:[%s373 + $0x1b0] sm:$0xff]
        %v687 = vld [vmem:[%s373 + $0x1b8] sm:$0xff]
        %v688 = vld [vmem:[%s373 + $0x1c0] sm:$0xff]
        %v689 = vld [vmem:[%s373 + $0x1c8] sm:$0xff]
        %v690 = vld [vmem:[%s373 + $0x1d0] sm:$0xff]
        %v691 = vld [vmem:[%s373 + $0x1d8] sm:$0xff]
        %v692 = vld [vmem:[%s373 + $0x1e0] sm:$0xff]
        %v693 = vld [vmem:[%s373 + $0x1e8] sm:$0xff]
        %v694 = vld [vmem:[%s373 + $0x1f0] sm:$0xff]
        %v695 = vld [vmem:[%s373 + $0x1f8] sm:$0xff]
        %v696 = vld [vmem:[%s373 + $0x200] sm:$0xff]
        %v697 = vld [vmem:[%s373 + $0x208] sm:$0xff]
        %v698 = vld [vmem:[%s373 + $0x210] sm:$0xff]
        %v699 = vld [vmem:[%s373 + $0x218] sm:$0xff]
        %v700 = vld [vmem:[%s373 + $0x220] sm:$0xff]
        %v701 = vld [vmem:[%s373 + $0x228] sm:$0xff]
        %v702 = vld [vmem:[%s373 + $0x230] sm:$0xff]
        %v703 = vld [vmem:[%s373 + $0x238] sm:$0xff]
        %v704 = vld [vmem:[%s373 + $0x240] sm:$0xff]
        %v705 = vld [vmem:[%s373 + $0x248] sm:$0xff]
        %v706 = vld [vmem:[%s373 + $0x250] sm:$0xff]
        %v707 = vld [vmem:[%s373 + $0x258] sm:$0xff]
        %v708 = vld [vmem:[%s373 + $0x260] sm:$0xff]
        %v709 = vld [vmem:[%s373 + $0x268] sm:$0xff]
        %v710 = vld [vmem:[%s373 + $0x270] sm:$0xff]
        %v711 = vld [vmem:[%s373 + $0x278] sm:$0xff]
        %v712 = vld [vmem:[%s373 + $0x280] sm:$0xff]
        %v713 = vld [vmem:[%s373 + $0x288] sm:$0xff]
        %v714 = vld [vmem:[%s373 + $0x290] sm:$0xff]
        %v715 = vld [vmem:[%s373 + $0x298] sm:$0xff]
        %v716 = vld [vmem:[%s373 + $0x2a0] sm:$0xff]
        %v717 = vld [vmem:[%s373 + $0x2a8] sm:$0xff]
        %v718 = vld [vmem:[%s373 + $0x2b0] sm:$0xff]
        %v719 = vld [vmem:[%s373 + $0x2b8] sm:$0xff]
        %v720 = vld [vmem:[%s373 + $0x2c0] sm:$0xff]
        %v721 = vld [vmem:[%s373 + $0x2c8] sm:$0xff]
        %v722 = vld [vmem:[%s373 + $0x2d0] sm:$0xff]
        %v723 = vld [vmem:[%s373 + $0x2d8] sm:$0xff]
        %v724 = vld [vmem:[%s373 + $0x2e0] sm:$0xff]
        %v725 = vld [vmem:[%s373 + $0x2e8] sm:$0xff]
        %v726 = vld [vmem:[%s373 + $0x2f0] sm:$0xff]
        %v727 = vld [vmem:[%s373 + $0x2f8] sm:$0xff]
        %v728 = vld [vmem:[%s373 + $0x300] sm:$0xff]
        %v729 = vld [vmem:[%s373 + $0x308] sm:$0xff]
        %v730 = vld [vmem:[%s373 + $0x310] sm:$0xff]
        %v731 = vld [vmem:[%s373 + $0x318] sm:$0xff]
        %v732 = vld [vmem:[%s373 + $0x320] sm:$0xff]
        %v733 = vld [vmem:[%s373 + $0x328] sm:$0xff]
        %v734 = vld [vmem:[%s373 + $0x330] sm:$0xff]
        %v735 = vld [vmem:[%s373 + $0x338] sm:$0xff]
        %v736 = vld [vmem:[%s373 + $0x340] sm:$0xff]
        %v737 = vld [vmem:[%s373 + $0x348] sm:$0xff]
        %v738 = vld [vmem:[%s373 + $0x350] sm:$0xff]
        %v739 = vld [vmem:[%s373 + $0x358] sm:$0xff]
        %v740 = vld [vmem:[%s373 + $0x360] sm:$0xff]
        %v741 = vld [vmem:[%s373 + $0x368] sm:$0xff]
        %v742 = vld [vmem:[%s373 + $0x370] sm:$0xff]
        %v743 = vld [vmem:[%s373 + $0x378] sm:$0xff]
        %v744 = vld [vmem:[%s373 + $0x380] sm:$0xff]
        %v745 = vld [vmem:[%s373 + $0x388] sm:$0xff]
        %v746 = vld [vmem:[%s373 + $0x390] sm:$0xff]
        %v747 = vld [vmem:[%s373 + $0x398] sm:$0xff]
        %v748 = vld [vmem:[%s373 + $0x3a0] sm:$0xff]
        %v749 = vld [vmem:[%s373 + $0x3a8] sm:$0xff]
        %v750 = vld [vmem:[%s373 + $0x3b0] sm:$0xff]
        %v751 = vld [vmem:[%s373 + $0x3b8] sm:$0xff]
        %v752 = vld [vmem:[%s373 + $0x3c0] sm:$0xff]
        %v753 = vld [vmem:[%s373 + $0x3c8] sm:$0xff]
        %v754 = vld [vmem:[%s373 + $0x3d0] sm:$0xff]
        %v755 = vld [vmem:[%s373 + $0x3d8] sm:$0xff]
        %v756 = vld [vmem:[%s373 + $0x3e0] sm:$0xff]
        %v757 = vld [vmem:[%s373 + $0x3e8] sm:$0xff]
        %v758 = vld [vmem:[%s373 + $0x3f0] sm:$0xff]
        %v759 = vld [vmem:[%s373 + $0x3f8] sm:$0xff]
        %v760 = vld [vmem:[%s373 + $0x400] sm:$0xff]
        %v761 = vld [vmem:[%s373 + $0x408] sm:$0xff]
        %v762 = vld [vmem:[%s373 + $0x410] sm:$0xff]
        %v763 = vld [vmem:[%s373 + $0x418] sm:$0xff]
        %v764 = vld [vmem:[%s373 + $0x420] sm:$0xff]
        %v765 = vld [vmem:[%s373 + $0x428] sm:$0xff]
        %v766 = vld [vmem:[%s373 + $0x430] sm:$0xff]
        %v767 = vld [vmem:[%s373 + $0x438] sm:$0xff]
        %v768 = vld [vmem:[%s373 + $0x440] sm:$0xff]
        %v769 = vld [vmem:[%s373 + $0x448] sm:$0xff]
        %v770 = vld [vmem:[%s373 + $0x450] sm:$0xff]
        %v771 = vld [vmem:[%s373 + $0x458] sm:$0xff]
        %v772 = vld [vmem:[%s373 + $0x460] sm:$0xff]
        %v773 = vld [vmem:[%s373 + $0x468] sm:$0xff]
        %v774 = vld [vmem:[%s373 + $0x470] sm:$0xff]
        %v775 = vld [vmem:[%s373 + $0x478] sm:$0xff]
        %v776 = vld [vmem:[%s373 + $0x480] sm:$0xff]
        %v777 = vld [vmem:[%s373 + $0x488] sm:$0xff]
        %v778 = vld [vmem:[%s373 + $0x490] sm:$0xff]
        %v779 = vld [vmem:[%s373 + $0x498] sm:$0xff]
        %v780 = vld [vmem:[%s373 + $0x4a0] sm:$0xff]
        %v781 = vld [vmem:[%s373 + $0x4a8] sm:$0xff]
        %v782 = vld [vmem:[%s373 + $0x4b0] sm:$0xff]
        %v783 = vld [vmem:[%s373 + $0x4b8] sm:$0xff]
        %v784 = vld [vmem:[%s373 + $0x4c0] sm:$0xff]
        %v785 = vld [vmem:[%s373 + $0x4c8] sm:$0xff]
        %v786 = vld [vmem:[%s373 + $0x4d0] sm:$0xff]
        %v787 = vld [vmem:[%s373 + $0x4d8] sm:$0xff]
        %v788 = vld [vmem:[%s373 + $0x4e0] sm:$0xff]
        %v789 = vld [vmem:[%s373 + $0x4e8] sm:$0xff]
        %v790 = vld [vmem:[%s373 + $0x4f0] sm:$0xff]
        %v791 = vld [vmem:[%s373 + $0x4f8] sm:$0xff]
        %v792 = vld [vmem:[%s373 + $0x500] sm:$0xff]
        %v793 = vld [vmem:[%s373 + $0x508] sm:$0xff]
        %v794 = vld [vmem:[%s373 + $0x510] sm:$0xff]
        %v795 = vld [vmem:[%s373 + $0x518] sm:$0xff]
        %v796 = vld [vmem:[%s373 + $0x520] sm:$0xff]
        %v797 = vld [vmem:[%s373 + $0x528] sm:$0xff]
        %v798 = vld [vmem:[%s373 + $0x530] sm:$0xff]
        %v799 = vld [vmem:[%s373 + $0x538] sm:$0xff]
        %v800 = vld [vmem:[%s373 + $0x540] sm:$0xff]
        %v801 = vld [vmem:[%s373 + $0x548] sm:$0xff]
        %v802 = vld [vmem:[%s373 + $0x550] sm:$0xff]
        %v803 = vld [vmem:[%s373 + $0x558] sm:$0xff]
        %v804 = vld [vmem:[%s373 + $0x560] sm:$0xff]
        %v805 = vld [vmem:[%s373 + $0x568] sm:$0xff]
        %v806 = vld [vmem:[%s373 + $0x570] sm:$0xff]
        %v807 = vld [vmem:[%s373 + $0x578] sm:$0xff]
        %v808 = vld [vmem:[%s373 + $0x580] sm:$0xff]
        %v809 = vld [vmem:[%s373 + $0x588] sm:$0xff]
        %v810 = vld [vmem:[%s373 + $0x590] sm:$0xff]
        %v811 = vld [vmem:[%s373 + $0x598] sm:$0xff]
        %v812 = vld [vmem:[%s373 + $0x5a0] sm:$0xff]
        %v813 = vld [vmem:[%s373 + $0x5a8] sm:$0xff]
        %v814 = vld [vmem:[%s373 + $0x5b0] sm:$0xff]
        %v815 = vld [vmem:[%s373 + $0x5b8] sm:$0xff]
        %v816 = vld [vmem:[%s373 + $0x5c0] sm:$0xff]
        %v817 = vld [vmem:[%s373 + $0x5c8] sm:$0xff]
        %v818 = vld [vmem:[%s373 + $0x5d0] sm:$0xff]
        %v819 = vld [vmem:[%s373 + $0x5d8] sm:$0xff]
        %v820 = vld [vmem:[%s373 + $0x5e0] sm:$0xff]
        %v821 = vld [vmem:[%s373 + $0x5e8] sm:$0xff]
        %v822 = vld [vmem:[%s373 + $0x5f0] sm:$0xff]
        %v823 = vld [vmem:[%s373 + $0x5f8] sm:$0xff]
        %v824 = vmul.bf16 %v440, %v632
        %v825 = vmul.bf16 %v441, %v633
        %v826 = vmul.bf16 %v442, %v634
        %v827 = vmul.bf16 %v443, %v635
        %v828 = vmul.bf16 %v444, %v636
        %v829 = vmul.bf16 %v445, %v637
        %v830 = vmul.bf16 %v446, %v638
        %v831 = vmul.bf16 %v447, %v639
        %v832 = vmul.bf16 %v448, %v640
        %v833 = vmul.bf16 %v449, %v641
        %v834 = vmul.bf16 %v450, %v642
        %v835 = vmul.bf16 %v451, %v643
        %v836 = vmul.bf16 %v452, %v644
        %v837 = vmul.bf16 %v453, %v645
        %v838 = vmul.bf16 %v454, %v646
        %v839 = vmul.bf16 %v455, %v647
        %v840 = vmul.bf16 %v456, %v648
        %v841 = vmul.bf16 %v457, %v649
        %v842 = vmul.bf16 %v458, %v650
        %v843 = vmul.bf16 %v459, %v651
        %v844 = vmul.bf16 %v460, %v652
        %v845 = vmul.bf16 %v461, %v653
        %v846 = vmul.bf16 %v462, %v654
        %v847 = vmul.bf16 %v463, %v655
        %v848 = vmul.bf16 %v464, %v656
        %v849 = vmul.bf16 %v465, %v657
        %v850 = vmul.bf16 %v466, %v658
        %v851 = vmul.bf16 %v467, %v659
        %v852 = vmul.bf16 %v468, %v660
        %v853 = vmul.bf16 %v469, %v661
        %v854 = vmul.bf16 %v470, %v662
        %v855 = vmul.bf16 %v471, %v663
        %v856 = vmul.bf16 %v472, %v664
        %v857 = vmul.bf16 %v473, %v665
        %v858 = vmul.bf16 %v474, %v666
        %v859 = vmul.bf16 %v475, %v667
        %v860 = vmul.bf16 %v476, %v668
        %v861 = vmul.bf16 %v477, %v669
        %v862 = vmul.bf16 %v478, %v670
        %v863 = vmul.bf16 %v479, %v671
        %v864 = vmul.bf16 %v480, %v672
        %v865 = vmul.bf16 %v481, %v673
        %v866 = vmul.bf16 %v482, %v674
        %v867 = vmul.bf16 %v483, %v675
        %v868 = vmul.bf16 %v484, %v676
        %v869 = vmul.bf16 %v485, %v677
        %v870 = vmul.bf16 %v486, %v678
        %v871 = vmul.bf16 %v487, %v679
        %v872 = vmul.bf16 %v488, %v680
        %v873 = vmul.bf16 %v489, %v681
        %v874 = vmul.bf16 %v490, %v682
        %v875 = vmul.bf16 %v491, %v683
        %v876 = vmul.bf16 %v492, %v684
        %v877 = vmul.bf16 %v493, %v685
        %v878 = vmul.bf16 %v494, %v686
        %v879 = vmul.bf16 %v495, %v687
        %v880 = vmul.bf16 %v496, %v688
        %v881 = vmul.bf16 %v497, %v689
        %v882 = vmul.bf16 %v498, %v690
        %v883 = vmul.bf16 %v499, %v691
        %v884 = vmul.bf16 %v500, %v692
        %v885 = vmul.bf16 %v501, %v693
        %v886 = vmul.bf16 %v502, %v694
        %v887 = vmul.bf16 %v503, %v695
        %v888 = vmul.bf16 %v504, %v696
        %v889 = vmul.bf16 %v505, %v697
        %v890 = vmul.bf16 %v506, %v698
        %v891 = vmul.bf16 %v507, %v699
        %v892 = vmul.bf16 %v508, %v700
        %v893 = vmul.bf16 %v509, %v701
        %v894 = vmul.bf16 %v510, %v702
        %v895 = vmul.bf16 %v511, %v703
        %v896 = vmul.bf16 %v512, %v704
        %v897 = vmul.bf16 %v513, %v705
        %v898 = vmul.bf16 %v514, %v706
        %v899 = vmul.bf16 %v515, %v707
        %v900 = vmul.bf16 %v516, %v708
        %v901 = vmul.bf16 %v517, %v709
        %v902 = vmul.bf16 %v518, %v710
        %v903 = vmul.bf16 %v519, %v711
        %v904 = vmul.bf16 %v520, %v712
        %v905 = vmul.bf16 %v521, %v713
        %v906 = vmul.bf16 %v522, %v714
        %v907 = vmul.bf16 %v523, %v715
        %v908 = vmul.bf16 %v524, %v716
        %v909 = vmul.bf16 %v525, %v717
        %v910 = vmul.bf16 %v526, %v718
        %v911 = vmul.bf16 %v527, %v719
        %v912 = vmul.bf16 %v528, %v720
        %v913 = vmul.bf16 %v529, %v721
        %v914 = vmul.bf16 %v530, %v722
        %v915 = vmul.bf16 %v531, %v723
        %v916 = vmul.bf16 %v532, %v724
        %v917 = vmul.bf16 %v533, %v725
        %v918 = vmul.bf16 %v534, %v726
        %v919 = vmul.bf16 %v535, %v727
        %v920 = vmul.bf16 %v536, %v728
        %v921 = vmul.bf16 %v537, %v729
        %v922 = vmul.bf16 %v538, %v730
        %v923 = vmul.bf16 %v539, %v731
        %v924 = vmul.bf16 %v540, %v732
        %v925 = vmul.bf16 %v541, %v733
        %v926 = vmul.bf16 %v542, %v734
        %v927 = vmul.bf16 %v543, %v735
        %v928 = vmul.bf16 %v544, %v736
        %v929 = vmul.bf16 %v545, %v737
        %v930 = vmul.bf16 %v546, %v738
        %v931 = vmul.bf16 %v547, %v739
        %v932 = vmul.bf16 %v548, %v740
        %v933 = vmul.bf16 %v549, %v741
        %v934 = vmul.bf16 %v550, %v742
        %v935 = vmul.bf16 %v551, %v743
        %v936 = vmul.bf16 %v552, %v744
        %v937 = vmul.bf16 %v553, %v745
        %v938 = vmul.bf16 %v554, %v746
        %v939 = vmul.bf16 %v555, %v747
        %v940 = vmul.bf16 %v556, %v748
        %v941 = vmul.bf16 %v557, %v749
        %v942 = vmul.bf16 %v558, %v750
        %v943 = vmul.bf16 %v559, %v751
        %v944 = vmul.bf16 %v560, %v752
        %v945 = vmul.bf16 %v561, %v753
        %v946 = vmul.bf16 %v562, %v754
        %v947 = vmul.bf16 %v563, %v755
        %v948 = vmul.bf16 %v564, %v756
        %v949 = vmul.bf16 %v565, %v757
        %v950 = vmul.bf16 %v566, %v758
        %v951 = vmul.bf16 %v567, %v759
        %v952 = vmul.bf16 %v568, %v760
        %v953 = vmul.bf16 %v569, %v761
        %v954 = vmul.bf16 %v570, %v762
        %v955 = vmul.bf16 %v571, %v763
        %v956 = vmul.bf16 %v572, %v764
        %v957 = vmul.bf16 %v573, %v765
        %v958 = vmul.bf16 %v574, %v766
        %v959 = vmul.bf16 %v575, %v767
        %v960 = vmul.bf16 %v576, %v768
        %v961 = vmul.bf16 %v577, %v769
        %v962 = vmul.bf16 %v578, %v770
        %v963 = vmul.bf16 %v579, %v771
        %v964 = vmul.bf16 %v580, %v772
        %v965 = vmul.bf16 %v581, %v773
        %v966 = vmul.bf16 %v582, %v774
        %v967 = vmul.bf16 %v583, %v775
        %v968 = vmul.bf16 %v584, %v776
        %v969 = vmul.bf16 %v585, %v777
        %v970 = vmul.bf16 %v586, %v778
        %v971 = vmul.bf16 %v587, %v779
        %v972 = vmul.bf16 %v588, %v780
        %v973 = vmul.bf16 %v589, %v781
        %v974 = vmul.bf16 %v590, %v782
        %v975 = vmul.bf16 %v591, %v783
        %v976 = vmul.bf16 %v592, %v784
        %v977 = vmul.bf16 %v593, %v785
        %v978 = vmul.bf16 %v594, %v786
        %v979 = vmul.bf16 %v595, %v787
        %v980 = vmul.bf16 %v596, %v788
        %v981 = vmul.bf16 %v597, %v789
        %v982 = vmul.bf16 %v598, %v790
        %v983 = vmul.bf16 %v599, %v791
        %v984 = vmul.bf16 %v600, %v792
        %v985 = vmul.bf16 %v601, %v793
        %v986 = vmul.bf16 %v602, %v794
        %v987 = vmul.bf16 %v603, %v795
        %v988 = vmul.bf16 %v604, %v796
        %v989 = vmul.bf16 %v605, %v797
        %v990 = vmul.bf16 %v606, %v798
        %v991 = vmul.bf16 %v607, %v799
        %v992 = vmul.bf16 %v608, %v800
        %v993 = vmul.bf16 %v609, %v801
        %v994 = vmul.bf16 %v610, %v802
        %v995 = vmul.bf16 %v611, %v803
        %v996 = vmul.bf16 %v612, %v804
        %v997 = vmul.bf16 %v613, %v805
        %v998 = vmul.bf16 %v614, %v806
        %v999 = vmul.bf16 %v615, %v807
        %v1000 = vmul.bf16 %v616, %v808
        %v1001 = vmul.bf16 %v617, %v809
        %v1002 = vmul.bf16 %v618, %v810
        %v1003 = vmul.bf16 %v619, %v811
        %v1004 = vmul.bf16 %v620, %v812
        %v1005 = vmul.bf16 %v621, %v813
        %v1006 = vmul.bf16 %v622, %v814
        %v1007 = vmul.bf16 %v623, %v815
        %v1008 = vmul.bf16 %v624, %v816
        %v1009 = vmul.bf16 %v625, %v817
        %v1010 = vmul.bf16 %v626, %v818
        %v1011 = vmul.bf16 %v627, %v819
        %v1012 = vmul.bf16 %v628, %v820
        %v1013 = vmul.bf16 %v629, %v821
        %v1014 = vmul.bf16 %v630, %v822
        %v1015 = vmul.bf16 %v631, %v823
        %v1016 = vld [vmem:[#allocation7] sm:$0xff]
        %v1017 = vld [vmem:[#allocation7 + $0x8] sm:$0xff]
        %v1018 = vld [vmem:[#allocation7 + $0x10] sm:$0xff]
        %v1019 = vld [vmem:[#allocation7 + $0x18] sm:$0xff]
        %v1020 = vld [vmem:[#allocation7 + $0x20] sm:$0xff]
        %v1021 = vld [vmem:[#allocation7 + $0x28] sm:$0xff]
        %v1022 = vld [vmem:[#allocation7 + $0x30] sm:$0xff]
        %v1023 = vld [vmem:[#allocation7 + $0x38] sm:$0xff]
        %v1024 = vld [vmem:[#allocation7 + $0x40] sm:$0xff]
        %v1025 = vld [vmem:[#allocation7 + $0x48] sm:$0xff]
        %v1026 = vld [vmem:[#allocation7 + $0x50] sm:$0xff]
        %v1027 = vld [vmem:[#allocation7 + $0x58] sm:$0xff]
        %v1028 = vld [vmem:[#allocation7 + $0x60] sm:$0xff]
        %v1029 = vld [vmem:[#allocation7 + $0x68] sm:$0xff]
        %v1030 = vld [vmem:[#allocation7 + $0x70] sm:$0xff]
        %v1031 = vld [vmem:[#allocation7 + $0x78] sm:$0xff]
        %v1032 = vld [vmem:[#allocation7 + $0x80] sm:$0xff]
        %v1033 = vld [vmem:[#allocation7 + $0x88] sm:$0xff]
        %v1034 = vld [vmem:[#allocation7 + $0x90] sm:$0xff]
        %v1035 = vld [vmem:[#allocation7 + $0x98] sm:$0xff]
        %v1036 = vld [vmem:[#allocation7 + $0xa0] sm:$0xff]
        %v1037 = vld [vmem:[#allocation7 + $0xa8] sm:$0xff]
        %v1038 = vld [vmem:[#allocation7 + $0xb0] sm:$0xff]
        %v1039 = vld [vmem:[#allocation7 + $0xb8] sm:$0xff]
        %v1040 = vld [vmem:[#allocation7 + $0xc0] sm:$0xff]
        %v1041 = vld [vmem:[#allocation7 + $0xc8] sm:$0xff]
        %v1042 = vld [vmem:[#allocation7 + $0xd0] sm:$0xff]
        %v1043 = vld [vmem:[#allocation7 + $0xd8] sm:$0xff]
        %v1044 = vld [vmem:[#allocation7 + $0xe0] sm:$0xff]
        %v1045 = vld [vmem:[#allocation7 + $0xe8] sm:$0xff]
        %v1046 = vld [vmem:[#allocation7 + $0xf0] sm:$0xff]
        %v1047 = vld [vmem:[#allocation7 + $0xf8] sm:$0xff]
        %v1048 = vld [vmem:[#allocation7 + $0x100] sm:$0xff]
        %v1049 = vld [vmem:[#allocation7 + $0x108] sm:$0xff]
        %v1050 = vld [vmem:[#allocation7 + $0x110] sm:$0xff]
        %v1051 = vld [vmem:[#allocation7 + $0x118] sm:$0xff]
        %v1052 = vld [vmem:[#allocation7 + $0x120] sm:$0xff]
        %v1053 = vld [vmem:[#allocation7 + $0x128] sm:$0xff]
        %v1054 = vld [vmem:[#allocation7 + $0x130] sm:$0xff]
        %v1055 = vld [vmem:[#allocation7 + $0x138] sm:$0xff]
        %v1056 = vld [vmem:[#allocation7 + $0x140] sm:$0xff]
        %v1057 = vld [vmem:[#allocation7 + $0x148] sm:$0xff]
        %v1058 = vld [vmem:[#allocation7 + $0x150] sm:$0xff]
        %v1059 = vld [vmem:[#allocation7 + $0x158] sm:$0xff]
        %v1060 = vld [vmem:[#allocation7 + $0x160] sm:$0xff]
        %v1061 = vld [vmem:[#allocation7 + $0x168] sm:$0xff]
        %v1062 = vld [vmem:[#allocation7 + $0x170] sm:$0xff]
        %v1063 = vld [vmem:[#allocation7 + $0x178] sm:$0xff]
        %v1064 = vld [vmem:[#allocation7 + $0x180] sm:$0xff]
        %v1065 = vld [vmem:[#allocation7 + $0x188] sm:$0xff]
        %v1066 = vld [vmem:[#allocation7 + $0x190] sm:$0xff]
        %v1067 = vld [vmem:[#allocation7 + $0x198] sm:$0xff]
        %v1068 = vld [vmem:[#allocation7 + $0x1a0] sm:$0xff]
        %v1069 = vld [vmem:[#allocation7 + $0x1a8] sm:$0xff]
        %v1070 = vld [vmem:[#allocation7 + $0x1b0] sm:$0xff]
        %v1071 = vld [vmem:[#allocation7 + $0x1b8] sm:$0xff]
        %v1072 = vld [vmem:[#allocation7 + $0x1c0] sm:$0xff]
        %v1073 = vld [vmem:[#allocation7 + $0x1c8] sm:$0xff]
        %v1074 = vld [vmem:[#allocation7 + $0x1d0] sm:$0xff]
        %v1075 = vld [vmem:[#allocation7 + $0x1d8] sm:$0xff]
        %v1076 = vld [vmem:[#allocation7 + $0x1e0] sm:$0xff]
        %v1077 = vld [vmem:[#allocation7 + $0x1e8] sm:$0xff]
        %v1078 = vld [vmem:[#allocation7 + $0x1f0] sm:$0xff]
        %v1079 = vld [vmem:[#allocation7 + $0x1f8] sm:$0xff]
        %v1080 = vld [vmem:[#allocation7 + $0x200] sm:$0xff]
        %v1081 = vld [vmem:[#allocation7 + $0x208] sm:$0xff]
        %v1082 = vld [vmem:[#allocation7 + $0x210] sm:$0xff]
        %v1083 = vld [vmem:[#allocation7 + $0x218] sm:$0xff]
        %v1084 = vld [vmem:[#allocation7 + $0x220] sm:$0xff]
        %v1085 = vld [vmem:[#allocation7 + $0x228] sm:$0xff]
        %v1086 = vld [vmem:[#allocation7 + $0x230] sm:$0xff]
        %v1087 = vld [vmem:[#allocation7 + $0x238] sm:$0xff]
        %v1088 = vld [vmem:[#allocation7 + $0x240] sm:$0xff]
        %v1089 = vld [vmem:[#allocation7 + $0x248] sm:$0xff]
        %v1090 = vld [vmem:[#allocation7 + $0x250] sm:$0xff]
        %v1091 = vld [vmem:[#allocation7 + $0x258] sm:$0xff]
        %v1092 = vld [vmem:[#allocation7 + $0x260] sm:$0xff]
        %v1093 = vld [vmem:[#allocation7 + $0x268] sm:$0xff]
        %v1094 = vld [vmem:[#allocation7 + $0x270] sm:$0xff]
        %v1095 = vld [vmem:[#allocation7 + $0x278] sm:$0xff]
        %v1096 = vld [vmem:[#allocation7 + $0x280] sm:$0xff]
        %v1097 = vld [vmem:[#allocation7 + $0x288] sm:$0xff]
        %v1098 = vld [vmem:[#allocation7 + $0x290] sm:$0xff]
        %v1099 = vld [vmem:[#allocation7 + $0x298] sm:$0xff]
        %v1100 = vld [vmem:[#allocation7 + $0x2a0] sm:$0xff]
        %v1101 = vld [vmem:[#allocation7 + $0x2a8] sm:$0xff]
        %v1102 = vld [vmem:[#allocation7 + $0x2b0] sm:$0xff]
        %v1103 = vld [vmem:[#allocation7 + $0x2b8] sm:$0xff]
        %v1104 = vld [vmem:[#allocation7 + $0x2c0] sm:$0xff]
        %v1105 = vld [vmem:[#allocation7 + $0x2c8] sm:$0xff]
        %v1106 = vld [vmem:[#allocation7 + $0x2d0] sm:$0xff]
        %v1107 = vld [vmem:[#allocation7 + $0x2d8] sm:$0xff]
        %v1108 = vld [vmem:[#allocation7 + $0x2e0] sm:$0xff]
        %v1109 = vld [vmem:[#allocation7 + $0x2e8] sm:$0xff]
        %v1110 = vld [vmem:[#allocation7 + $0x2f0] sm:$0xff]
        %v1111 = vld [vmem:[#allocation7 + $0x2f8] sm:$0xff]
        %v1112 = vld [vmem:[#allocation7 + $0x300] sm:$0xff]
        %v1113 = vld [vmem:[#allocation7 + $0x308] sm:$0xff]
        %v1114 = vld [vmem:[#allocation7 + $0x310] sm:$0xff]
        %v1115 = vld [vmem:[#allocation7 + $0x318] sm:$0xff]
        %v1116 = vld [vmem:[#allocation7 + $0x320] sm:$0xff]
        %v1117 = vld [vmem:[#allocation7 + $0x328] sm:$0xff]
        %v1118 = vld [vmem:[#allocation7 + $0x330] sm:$0xff]
        %v1119 = vld [vmem:[#allocation7 + $0x338] sm:$0xff]
        %v1120 = vld [vmem:[#allocation7 + $0x340] sm:$0xff]
        %v1121 = vld [vmem:[#allocation7 + $0x348] sm:$0xff]
        %v1122 = vld [vmem:[#allocation7 + $0x350] sm:$0xff]
        %v1123 = vld [vmem:[#allocation7 + $0x358] sm:$0xff]
        %v1124 = vld [vmem:[#allocation7 + $0x360] sm:$0xff]
        %v1125 = vld [vmem:[#allocation7 + $0x368] sm:$0xff]
        %v1126 = vld [vmem:[#allocation7 + $0x370] sm:$0xff]
        %v1127 = vld [vmem:[#allocation7 + $0x378] sm:$0xff]
        %v1128 = vld [vmem:[#allocation7 + $0x380] sm:$0xff]
        %v1129 = vld [vmem:[#allocation7 + $0x388] sm:$0xff]
        %v1130 = vld [vmem:[#allocation7 + $0x390] sm:$0xff]
        %v1131 = vld [vmem:[#allocation7 + $0x398] sm:$0xff]
        %v1132 = vld [vmem:[#allocation7 + $0x3a0] sm:$0xff]
        %v1133 = vld [vmem:[#allocation7 + $0x3a8] sm:$0xff]
        %v1134 = vld [vmem:[#allocation7 + $0x3b0] sm:$0xff]
        %v1135 = vld [vmem:[#allocation7 + $0x3b8] sm:$0xff]
        %v1136 = vld [vmem:[#allocation7 + $0x3c0] sm:$0xff]
        %v1137 = vld [vmem:[#allocation7 + $0x3c8] sm:$0xff]
        %v1138 = vld [vmem:[#allocation7 + $0x3d0] sm:$0xff]
        %v1139 = vld [vmem:[#allocation7 + $0x3d8] sm:$0xff]
        %v1140 = vld [vmem:[#allocation7 + $0x3e0] sm:$0xff]
        %v1141 = vld [vmem:[#allocation7 + $0x3e8] sm:$0xff]
        %v1142 = vld [vmem:[#allocation7 + $0x3f0] sm:$0xff]
        %v1143 = vld [vmem:[#allocation7 + $0x3f8] sm:$0xff]
        %v1144 = vld [vmem:[#allocation7 + $0x400] sm:$0xff]
        %v1145 = vld [vmem:[#allocation7 + $0x408] sm:$0xff]
        %v1146 = vld [vmem:[#allocation7 + $0x410] sm:$0xff]
        %v1147 = vld [vmem:[#allocation7 + $0x418] sm:$0xff]
        %v1148 = vld [vmem:[#allocation7 + $0x420] sm:$0xff]
        %v1149 = vld [vmem:[#allocation7 + $0x428] sm:$0xff]
        %v1150 = vld [vmem:[#allocation7 + $0x430] sm:$0xff]
        %v1151 = vld [vmem:[#allocation7 + $0x438] sm:$0xff]
        %v1152 = vld [vmem:[#allocation7 + $0x440] sm:$0xff]
        %v1153 = vld [vmem:[#allocation7 + $0x448] sm:$0xff]
        %v1154 = vld [vmem:[#allocation7 + $0x450] sm:$0xff]
        %v1155 = vld [vmem:[#allocation7 + $0x458] sm:$0xff]
        %v1156 = vld [vmem:[#allocation7 + $0x460] sm:$0xff]
        %v1157 = vld [vmem:[#allocation7 + $0x468] sm:$0xff]
        %v1158 = vld [vmem:[#allocation7 + $0x470] sm:$0xff]
        %v1159 = vld [vmem:[#allocation7 + $0x478] sm:$0xff]
        %v1160 = vld [vmem:[#allocation7 + $0x480] sm:$0xff]
        %v1161 = vld [vmem:[#allocation7 + $0x488] sm:$0xff]
        %v1162 = vld [vmem:[#allocation7 + $0x490] sm:$0xff]
        %v1163 = vld [vmem:[#allocation7 + $0x498] sm:$0xff]
        %v1164 = vld [vmem:[#allocation7 + $0x4a0] sm:$0xff]
        %v1165 = vld [vmem:[#allocation7 + $0x4a8] sm:$0xff]
        %v1166 = vld [vmem:[#allocation7 + $0x4b0] sm:$0xff]
        %v1167 = vld [vmem:[#allocation7 + $0x4b8] sm:$0xff]
        %v1168 = vld [vmem:[#allocation7 + $0x4c0] sm:$0xff]
        %v1169 = vld [vmem:[#allocation7 + $0x4c8] sm:$0xff]
        %v1170 = vld [vmem:[#allocation7 + $0x4d0] sm:$0xff]
        %v1171 = vld [vmem:[#allocation7 + $0x4d8] sm:$0xff]
        %v1172 = vld [vmem:[#allocation7 + $0x4e0] sm:$0xff]
        %v1173 = vld [vmem:[#allocation7 + $0x4e8] sm:$0xff]
        %v1174 = vld [vmem:[#allocation7 + $0x4f0] sm:$0xff]
        %v1175 = vld [vmem:[#allocation7 + $0x4f8] sm:$0xff]
        %v1176 = vld [vmem:[#allocation7 + $0x500] sm:$0xff]
        %v1177 = vld [vmem:[#allocation7 + $0x508] sm:$0xff]
        %v1178 = vld [vmem:[#allocation7 + $0x510] sm:$0xff]
        %v1179 = vld [vmem:[#allocation7 + $0x518] sm:$0xff]
        %v1180 = vld [vmem:[#allocation7 + $0x520] sm:$0xff]
        %v1181 = vld [vmem:[#allocation7 + $0x528] sm:$0xff]
        %v1182 = vld [vmem:[#allocation7 + $0x530] sm:$0xff]
        %v1183 = vld [vmem:[#allocation7 + $0x538] sm:$0xff]
        %v1184 = vld [vmem:[#allocation7 + $0x540] sm:$0xff]
        %v1185 = vld [vmem:[#allocation7 + $0x548] sm:$0xff]
        %v1186 = vld [vmem:[#allocation7 + $0x550] sm:$0xff]
        %v1187 = vld [vmem:[#allocation7 + $0x558] sm:$0xff]
        %v1188 = vld [vmem:[#allocation7 + $0x560] sm:$0xff]
        %v1189 = vld [vmem:[#allocation7 + $0x568] sm:$0xff]
        %v1190 = vld [vmem:[#allocation7 + $0x570] sm:$0xff]
        %v1191 = vld [vmem:[#allocation7 + $0x578] sm:$0xff]
        %v1192 = vld [vmem:[#allocation7 + $0x580] sm:$0xff]
        %v1193 = vld [vmem:[#allocation7 + $0x588] sm:$0xff]
        %v1194 = vld [vmem:[#allocation7 + $0x590] sm:$0xff]
        %v1195 = vld [vmem:[#allocation7 + $0x598] sm:$0xff]
        %v1196 = vld [vmem:[#allocation7 + $0x5a0] sm:$0xff]
        %v1197 = vld [vmem:[#allocation7 + $0x5a8] sm:$0xff]
        %v1198 = vld [vmem:[#allocation7 + $0x5b0] sm:$0xff]
        %v1199 = vld [vmem:[#allocation7 + $0x5b8] sm:$0xff]
        %v1200 = vld [vmem:[#allocation7 + $0x5c0] sm:$0xff]
        %v1201 = vld [vmem:[#allocation7 + $0x5c8] sm:$0xff]
        %v1202 = vld [vmem:[#allocation7 + $0x5d0] sm:$0xff]
        %v1203 = vld [vmem:[#allocation7 + $0x5d8] sm:$0xff]
        %v1204 = vld [vmem:[#allocation7 + $0x5e0] sm:$0xff]
        %v1205 = vld [vmem:[#allocation7 + $0x5e8] sm:$0xff]
        %v1206 = vld [vmem:[#allocation7 + $0x5f0] sm:$0xff]
        %v1207 = vld [vmem:[#allocation7 + $0x5f8] sm:$0xff]
        %v1208 = vld [vmem:[#allocation7 + $0x600] sm:$0xff]
        %v1209 = vld [vmem:[#allocation7 + $0x608] sm:$0xff]
        %v1210 = vld [vmem:[#allocation7 + $0x610] sm:$0xff]
        %v1211 = vld [vmem:[#allocation7 + $0x618] sm:$0xff]
        %v1212 = vld [vmem:[#allocation7 + $0x620] sm:$0xff]
        %v1213 = vld [vmem:[#allocation7 + $0x628] sm:$0xff]
        %v1214 = vld [vmem:[#allocation7 + $0x630] sm:$0xff]
        %v1215 = vld [vmem:[#allocation7 + $0x638] sm:$0xff]
        %v1216 = vld [vmem:[#allocation7 + $0x640] sm:$0xff]
        %v1217 = vld [vmem:[#allocation7 + $0x648] sm:$0xff]
        %v1218 = vld [vmem:[#allocation7 + $0x650] sm:$0xff]
        %v1219 = vld [vmem:[#allocation7 + $0x658] sm:$0xff]
        %v1220 = vld [vmem:[#allocation7 + $0x660] sm:$0xff]
        %v1221 = vld [vmem:[#allocation7 + $0x668] sm:$0xff]
        %v1222 = vld [vmem:[#allocation7 + $0x670] sm:$0xff]
        %v1223 = vld [vmem:[#allocation7 + $0x678] sm:$0xff]
        %v1224 = vld [vmem:[#allocation7 + $0x680] sm:$0xff]
        %v1225 = vld [vmem:[#allocation7 + $0x688] sm:$0xff]
        %v1226 = vld [vmem:[#allocation7 + $0x690] sm:$0xff]
        %v1227 = vld [vmem:[#allocation7 + $0x698] sm:$0xff]
        %v1228 = vld [vmem:[#allocation7 + $0x6a0] sm:$0xff]
        %v1229 = vld [vmem:[#allocation7 + $0x6a8] sm:$0xff]
        %v1230 = vld [vmem:[#allocation7 + $0x6b0] sm:$0xff]
        %v1231 = vld [vmem:[#allocation7 + $0x6b8] sm:$0xff]
        %v1232 = vld [vmem:[#allocation7 + $0x6c0] sm:$0xff]
        %v1233 = vld [vmem:[#allocation7 + $0x6c8] sm:$0xff]
        %v1234 = vld [vmem:[#allocation7 + $0x6d0] sm:$0xff]
        %v1235 = vld [vmem:[#allocation7 + $0x6d8] sm:$0xff]
        %v1236 = vld [vmem:[#allocation7 + $0x6e0] sm:$0xff]
        %v1237 = vld [vmem:[#allocation7 + $0x6e8] sm:$0xff]
        %v1238 = vld [vmem:[#allocation7 + $0x6f0] sm:$0xff]
        %v1239 = vld [vmem:[#allocation7 + $0x6f8] sm:$0xff]
        %v1240 = vld [vmem:[#allocation7 + $0x700] sm:$0xff]
        %v1241 = vld [vmem:[#allocation7 + $0x708] sm:$0xff]
        %v1242 = vld [vmem:[#allocation7 + $0x710] sm:$0xff]
        %v1243 = vld [vmem:[#allocation7 + $0x718] sm:$0xff]
        %v1244 = vld [vmem:[#allocation7 + $0x720] sm:$0xff]
        %v1245 = vld [vmem:[#allocation7 + $0x728] sm:$0xff]
        %v1246 = vld [vmem:[#allocation7 + $0x730] sm:$0xff]
        %v1247 = vld [vmem:[#allocation7 + $0x738] sm:$0xff]
        %v1248 = vld [vmem:[#allocation7 + $0x740] sm:$0xff]
        %v1249 = vld [vmem:[#allocation7 + $0x748] sm:$0xff]
        %v1250 = vld [vmem:[#allocation7 + $0x750] sm:$0xff]
        %v1251 = vld [vmem:[#allocation7 + $0x758] sm:$0xff]
        %v1252 = vld [vmem:[#allocation7 + $0x760] sm:$0xff]
        %v1253 = vld [vmem:[#allocation7 + $0x768] sm:$0xff]
        %v1254 = vld [vmem:[#allocation7 + $0x770] sm:$0xff]
        %v1255 = vld [vmem:[#allocation7 + $0x778] sm:$0xff]
        %v1256 = vld [vmem:[#allocation7 + $0x780] sm:$0xff]
        %v1257 = vld [vmem:[#allocation7 + $0x788] sm:$0xff]
        %v1258 = vld [vmem:[#allocation7 + $0x790] sm:$0xff]
        %v1259 = vld [vmem:[#allocation7 + $0x798] sm:$0xff]
        %v1260 = vld [vmem:[#allocation7 + $0x7a0] sm:$0xff]
        %v1261 = vld [vmem:[#allocation7 + $0x7a8] sm:$0xff]
        %v1262 = vld [vmem:[#allocation7 + $0x7b0] sm:$0xff]
        %v1263 = vld [vmem:[#allocation7 + $0x7b8] sm:$0xff]
        %v1264 = vld [vmem:[#allocation7 + $0x7c0] sm:$0xff]
        %v1265 = vld [vmem:[#allocation7 + $0x7c8] sm:$0xff]
        %v1266 = vld [vmem:[#allocation7 + $0x7d0] sm:$0xff]
        %v1267 = vld [vmem:[#allocation7 + $0x7d8] sm:$0xff]
        %v1268 = vld [vmem:[#allocation7 + $0x7e0] sm:$0xff]
        %v1269 = vld [vmem:[#allocation7 + $0x7e8] sm:$0xff]
        %v1270 = vld [vmem:[#allocation7 + $0x7f0] sm:$0xff]
        %v1271 = vld [vmem:[#allocation7 + $0x7f8] sm:$0xff]
        %v1272 = vld [vmem:[#allocation7 + $0x800] sm:$0xff]
        %v1273 = vld [vmem:[#allocation7 + $0x808] sm:$0xff]
        %v1274 = vld [vmem:[#allocation7 + $0x810] sm:$0xff]
        %v1275 = vld [vmem:[#allocation7 + $0x818] sm:$0xff]
        %v1276 = vld [vmem:[#allocation7 + $0x820] sm:$0xff]
        %v1277 = vld [vmem:[#allocation7 + $0x828] sm:$0xff]
        %v1278 = vld [vmem:[#allocation7 + $0x830] sm:$0xff]
        %v1279 = vld [vmem:[#allocation7 + $0x838] sm:$0xff]
        %v1280 = vld [vmem:[#allocation7 + $0x840] sm:$0xff]
        %v1281 = vld [vmem:[#allocation7 + $0x848] sm:$0xff]
        %v1282 = vld [vmem:[#allocation7 + $0x850] sm:$0xff]
        %v1283 = vld [vmem:[#allocation7 + $0x858] sm:$0xff]
        %v1284 = vld [vmem:[#allocation7 + $0x860] sm:$0xff]
        %v1285 = vld [vmem:[#allocation7 + $0x868] sm:$0xff]
        %v1286 = vld [vmem:[#allocation7 + $0x870] sm:$0xff]
        %v1287 = vld [vmem:[#allocation7 + $0x878] sm:$0xff]
        %v1288 = vld [vmem:[#allocation7 + $0x880] sm:$0xff]
        %v1289 = vld [vmem:[#allocation7 + $0x888] sm:$0xff]
        %v1290 = vld [vmem:[#allocation7 + $0x890] sm:$0xff]
        %v1291 = vld [vmem:[#allocation7 + $0x898] sm:$0xff]
        %v1292 = vld [vmem:[#allocation7 + $0x8a0] sm:$0xff]
        %v1293 = vld [vmem:[#allocation7 + $0x8a8] sm:$0xff]
        %v1294 = vld [vmem:[#allocation7 + $0x8b0] sm:$0xff]
        %v1295 = vld [vmem:[#allocation7 + $0x8b8] sm:$0xff]
        %v1296 = vld [vmem:[#allocation7 + $0x8c0] sm:$0xff]
        %v1297 = vld [vmem:[#allocation7 + $0x8c8] sm:$0xff]
        %v1298 = vld [vmem:[#allocation7 + $0x8d0] sm:$0xff]
        %v1299 = vld [vmem:[#allocation7 + $0x8d8] sm:$0xff]
        %v1300 = vld [vmem:[#allocation7 + $0x8e0] sm:$0xff]
        %v1301 = vld [vmem:[#allocation7 + $0x8e8] sm:$0xff]
        %v1302 = vld [vmem:[#allocation7 + $0x8f0] sm:$0xff]
        %v1303 = vld [vmem:[#allocation7 + $0x8f8] sm:$0xff]
        %v1304 = vld [vmem:[#allocation7 + $0x900] sm:$0xff]
        %v1305 = vld [vmem:[#allocation7 + $0x908] sm:$0xff]
        %v1306 = vld [vmem:[#allocation7 + $0x910] sm:$0xff]
        %v1307 = vld [vmem:[#allocation7 + $0x918] sm:$0xff]
        %v1308 = vld [vmem:[#allocation7 + $0x920] sm:$0xff]
        %v1309 = vld [vmem:[#allocation7 + $0x928] sm:$0xff]
        %v1310 = vld [vmem:[#allocation7 + $0x930] sm:$0xff]
        %v1311 = vld [vmem:[#allocation7 + $0x938] sm:$0xff]
        %v1312 = vld [vmem:[#allocation7 + $0x940] sm:$0xff]
        %v1313 = vld [vmem:[#allocation7 + $0x948] sm:$0xff]
        %v1314 = vld [vmem:[#allocation7 + $0x950] sm:$0xff]
        %v1315 = vld [vmem:[#allocation7 + $0x958] sm:$0xff]
        %v1316 = vld [vmem:[#allocation7 + $0x960] sm:$0xff]
        %v1317 = vld [vmem:[#allocation7 + $0x968] sm:$0xff]
        %v1318 = vld [vmem:[#allocation7 + $0x970] sm:$0xff]
        %v1319 = vld [vmem:[#allocation7 + $0x978] sm:$0xff]
        %v1320 = vld [vmem:[#allocation7 + $0x980] sm:$0xff]
        %v1321 = vld [vmem:[#allocation7 + $0x988] sm:$0xff]
        %v1322 = vld [vmem:[#allocation7 + $0x990] sm:$0xff]
        %v1323 = vld [vmem:[#allocation7 + $0x998] sm:$0xff]
        %v1324 = vld [vmem:[#allocation7 + $0x9a0] sm:$0xff]
        %v1325 = vld [vmem:[#allocation7 + $0x9a8] sm:$0xff]
        %v1326 = vld [vmem:[#allocation7 + $0x9b0] sm:$0xff]
        %v1327 = vld [vmem:[#allocation7 + $0x9b8] sm:$0xff]
        %v1328 = vld [vmem:[#allocation7 + $0x9c0] sm:$0xff]
        %v1329 = vld [vmem:[#allocation7 + $0x9c8] sm:$0xff]
        %v1330 = vld [vmem:[#allocation7 + $0x9d0] sm:$0xff]
        %v1331 = vld [vmem:[#allocation7 + $0x9d8] sm:$0xff]
        %v1332 = vld [vmem:[#allocation7 + $0x9e0] sm:$0xff]
        %v1333 = vld [vmem:[#allocation7 + $0x9e8] sm:$0xff]
        %v1334 = vld [vmem:[#allocation7 + $0x9f0] sm:$0xff]
        %v1335 = vld [vmem:[#allocation7 + $0x9f8] sm:$0xff]
        %v1336 = vld [vmem:[#allocation7 + $0xa00] sm:$0xff]
        %v1337 = vld [vmem:[#allocation7 + $0xa08] sm:$0xff]
        %v1338 = vld [vmem:[#allocation7 + $0xa10] sm:$0xff]
        %v1339 = vld [vmem:[#allocation7 + $0xa18] sm:$0xff]
        %v1340 = vld [vmem:[#allocation7 + $0xa20] sm:$0xff]
        %v1341 = vld [vmem:[#allocation7 + $0xa28] sm:$0xff]
        %v1342 = vld [vmem:[#allocation7 + $0xa30] sm:$0xff]
        %v1343 = vld [vmem:[#allocation7 + $0xa38] sm:$0xff]
        %v1344 = vld [vmem:[#allocation7 + $0xa40] sm:$0xff]
        %v1345 = vld [vmem:[#allocation7 + $0xa48] sm:$0xff]
        %v1346 = vld [vmem:[#allocation7 + $0xa50] sm:$0xff]
        %v1347 = vld [vmem:[#allocation7 + $0xa58] sm:$0xff]
        %v1348 = vld [vmem:[#allocation7 + $0xa60] sm:$0xff]
        %v1349 = vld [vmem:[#allocation7 + $0xa68] sm:$0xff]
        %v1350 = vld [vmem:[#allocation7 + $0xa70] sm:$0xff]
        %v1351 = vld [vmem:[#allocation7 + $0xa78] sm:$0xff]
        %v1352 = vld [vmem:[#allocation7 + $0xa80] sm:$0xff]
        %v1353 = vld [vmem:[#allocation7 + $0xa88] sm:$0xff]
        %v1354 = vld [vmem:[#allocation7 + $0xa90] sm:$0xff]
        %v1355 = vld [vmem:[#allocation7 + $0xa98] sm:$0xff]
        %v1356 = vld [vmem:[#allocation7 + $0xaa0] sm:$0xff]
        %v1357 = vld [vmem:[#allocation7 + $0xaa8] sm:$0xff]
        %v1358 = vld [vmem:[#allocation7 + $0xab0] sm:$0xff]
        %v1359 = vld [vmem:[#allocation7 + $0xab8] sm:$0xff]
        %v1360 = vld [vmem:[#allocation7 + $0xac0] sm:$0xff]
        %v1361 = vld [vmem:[#allocation7 + $0xac8] sm:$0xff]
        %v1362 = vld [vmem:[#allocation7 + $0xad0] sm:$0xff]
        %v1363 = vld [vmem:[#allocation7 + $0xad8] sm:$0xff]
        %v1364 = vld [vmem:[#allocation7 + $0xae0] sm:$0xff]
        %v1365 = vld [vmem:[#allocation7 + $0xae8] sm:$0xff]
        %v1366 = vld [vmem:[#allocation7 + $0xaf0] sm:$0xff]
        %v1367 = vld [vmem:[#allocation7 + $0xaf8] sm:$0xff]
        %v1368 = vld [vmem:[#allocation7 + $0xb00] sm:$0xff]
        %v1369 = vld [vmem:[#allocation7 + $0xb08] sm:$0xff]
        %v1370 = vld [vmem:[#allocation7 + $0xb10] sm:$0xff]
        %v1371 = vld [vmem:[#allocation7 + $0xb18] sm:$0xff]
        %v1372 = vld [vmem:[#allocation7 + $0xb20] sm:$0xff]
        %v1373 = vld [vmem:[#allocation7 + $0xb28] sm:$0xff]
        %v1374 = vld [vmem:[#allocation7 + $0xb30] sm:$0xff]
        %v1375 = vld [vmem:[#allocation7 + $0xb38] sm:$0xff]
        %v1376 = vld [vmem:[#allocation7 + $0xb40] sm:$0xff]
        %v1377 = vld [vmem:[#allocation7 + $0xb48] sm:$0xff]
        %v1378 = vld [vmem:[#allocation7 + $0xb50] sm:$0xff]
        %v1379 = vld [vmem:[#allocation7 + $0xb58] sm:$0xff]
        %v1380 = vld [vmem:[#allocation7 + $0xb60] sm:$0xff]
        %v1381 = vld [vmem:[#allocation7 + $0xb68] sm:$0xff]
        %v1382 = vld [vmem:[#allocation7 + $0xb70] sm:$0xff]
        %v1383 = vld [vmem:[#allocation7 + $0xb78] sm:$0xff]
        %v1384 = vld [vmem:[#allocation7 + $0xb80] sm:$0xff]
        %v1385 = vld [vmem:[#allocation7 + $0xb88] sm:$0xff]
        %v1386 = vld [vmem:[#allocation7 + $0xb90] sm:$0xff]
        %v1387 = vld [vmem:[#allocation7 + $0xb98] sm:$0xff]
        %v1388 = vld [vmem:[#allocation7 + $0xba0] sm:$0xff]
        %v1389 = vld [vmem:[#allocation7 + $0xba8] sm:$0xff]
        %v1390 = vld [vmem:[#allocation7 + $0xbb0] sm:$0xff]
        %v1391 = vld [vmem:[#allocation7 + $0xbb8] sm:$0xff]
        %v1392 = vld [vmem:[#allocation7 + $0xbc0] sm:$0xff]
        %v1393 = vld [vmem:[#allocation7 + $0xbc8] sm:$0xff]
        %v1394 = vld [vmem:[#allocation7 + $0xbd0] sm:$0xff]
        %v1395 = vld [vmem:[#allocation7 + $0xbd8] sm:$0xff]
        %v1396 = vld [vmem:[#allocation7 + $0xbe0] sm:$0xff]
        %v1397 = vld [vmem:[#allocation7 + $0xbe8] sm:$0xff]
        %v1398 = vld [vmem:[#allocation7 + $0xbf0] sm:$0xff]
        %v1399 = vld [vmem:[#allocation7 + $0xbf8] sm:$0xff]
        %v1400 = vld [vmem:[#allocation8] sm:$0xf]
        %v1402 = vlaneseq
        %v1403 = vshrl.u32 %v1402, 7
        %v1404 = vsub.s32 0, %v1403
        %v1405 = vrot.slane %v1400, %v1404
        %v1406 = vlaneseq
        %v1407 = vshrl.u32 %v1406, 7
        %v1408 = vsub.s32 1, %v1407
        %v1409 = vrot.slane %v1400, %v1408
        %v1410 = vlaneseq
        %v1411 = vshrl.u32 %v1410, 7
        %v1412 = vsub.s32 2, %v1411
        %v1413 = vrot.slane %v1400, %v1412
        %v1414 = vlaneseq
        %v1415 = vshrl.u32 %v1414, 7
        %v1416 = vsub.s32 3, %v1415
        %v1417 = vrot.slane %v1400, %v1416
        %v1614 = vunpack.c.l.b16 %v824
        %v1615 = vunpack.c.h.b16 %v824
        %v1616 = vunpack.c.l.b16 %v825
        %v1617 = vunpack.c.h.b16 %v825
        %v1618 = vunpack.c.l.b16 %v826
        %v1619 = vunpack.c.h.b16 %v826
        %v1620 = vunpack.c.l.b16 %v827
        %v1621 = vunpack.c.h.b16 %v827
        %v1622 = vunpack.c.l.b16 %v828
        %v1623 = vunpack.c.h.b16 %v828
        %v1624 = vunpack.c.l.b16 %v829
        %v1625 = vunpack.c.h.b16 %v829
        %v1626 = vunpack.c.l.b16 %v830
        %v1627 = vunpack.c.h.b16 %v830
        %v1628 = vunpack.c.l.b16 %v831
        %v1629 = vunpack.c.h.b16 %v831
        %v1630 = vunpack.c.l.b16 %v832
        %v1631 = vunpack.c.h.b16 %v832
        %v1632 = vunpack.c.l.b16 %v833
        %v1633 = vunpack.c.h.b16 %v833
        %v1634 = vunpack.c.l.b16 %v834
        %v1635 = vunpack.c.h.b16 %v834
        %v1636 = vunpack.c.l.b16 %v835
        %v1637 = vunpack.c.h.b16 %v835
        %v1638 = vunpack.c.l.b16 %v836
        %v1639 = vunpack.c.h.b16 %v836
        %v1640 = vunpack.c.l.b16 %v837
        %v1641 = vunpack.c.h.b16 %v837
        %v1642 = vunpack.c.l.b16 %v838
        %v1643 = vunpack.c.h.b16 %v838
        %v1644 = vunpack.c.l.b16 %v839
        %v1645 = vunpack.c.h.b16 %v839
        %v1646 = vunpack.c.l.b16 %v840
        %v1647 = vunpack.c.h.b16 %v840
        %v1648 = vunpack.c.l.b16 %v841
        %v1649 = vunpack.c.h.b16 %v841
        %v1650 = vunpack.c.l.b16 %v842
        %v1651 = vunpack.c.h.b16 %v842
        %v1652 = vunpack.c.l.b16 %v843
        %v1653 = vunpack.c.h.b16 %v843
        %v1654 = vunpack.c.l.b16 %v844
        %v1655 = vunpack.c.h.b16 %v844
        %v1656 = vunpack.c.l.b16 %v845
        %v1657 = vunpack.c.h.b16 %v845
        %v1658 = vunpack.c.l.b16 %v846
        %v1659 = vunpack.c.h.b16 %v846
        %v1660 = vunpack.c.l.b16 %v847
        %v1661 = vunpack.c.h.b16 %v847
        %v1662 = vunpack.c.l.b16 %v848
        %v1663 = vunpack.c.h.b16 %v848
        %v1664 = vunpack.c.l.b16 %v849
        %v1665 = vunpack.c.h.b16 %v849
        %v1666 = vunpack.c.l.b16 %v850
        %v1667 = vunpack.c.h.b16 %v850
        %v1668 = vunpack.c.l.b16 %v851
        %v1669 = vunpack.c.h.b16 %v851
        %v1670 = vunpack.c.l.b16 %v852
        %v1671 = vunpack.c.h.b16 %v852
        %v1672 = vunpack.c.l.b16 %v853
        %v1673 = vunpack.c.h.b16 %v853
        %v1674 = vunpack.c.l.b16 %v854
        %v1675 = vunpack.c.h.b16 %v854
        %v1676 = vunpack.c.l.b16 %v855
        %v1677 = vunpack.c.h.b16 %v855
        %v1678 = vunpack.c.l.b16 %v856
        %v1679 = vunpack.c.h.b16 %v856
        %v1680 = vunpack.c.l.b16 %v857
        %v1681 = vunpack.c.h.b16 %v857
        %v1682 = vunpack.c.l.b16 %v858
        %v1683 = vunpack.c.h.b16 %v858
        %v1684 = vunpack.c.l.b16 %v859
        %v1685 = vunpack.c.h.b16 %v859
        %v1686 = vunpack.c.l.b16 %v860
        %v1687 = vunpack.c.h.b16 %v860
        %v1688 = vunpack.c.l.b16 %v861
        %v1689 = vunpack.c.h.b16 %v861
        %v1690 = vunpack.c.l.b16 %v862
        %v1691 = vunpack.c.h.b16 %v862
        %v1692 = vunpack.c.l.b16 %v863
        %v1693 = vunpack.c.h.b16 %v863
        %v1694 = vunpack.c.l.b16 %v864
        %v1695 = vunpack.c.h.b16 %v864
        %v1696 = vunpack.c.l.b16 %v865
        %v1697 = vunpack.c.h.b16 %v865
        %v1698 = vunpack.c.l.b16 %v866
        %v1699 = vunpack.c.h.b16 %v866
        %v1700 = vunpack.c.l.b16 %v867
        %v1701 = vunpack.c.h.b16 %v867
        %v1702 = vunpack.c.l.b16 %v868
        %v1703 = vunpack.c.h.b16 %v868
        %v1704 = vunpack.c.l.b16 %v869
        %v1705 = vunpack.c.h.b16 %v869
        %v1706 = vunpack.c.l.b16 %v870
        %v1707 = vunpack.c.h.b16 %v870
        %v1708 = vunpack.c.l.b16 %v871
        %v1709 = vunpack.c.h.b16 %v871
        %v1710 = vunpack.c.l.b16 %v872
        %v1711 = vunpack.c.h.b16 %v872
        %v1712 = vunpack.c.l.b16 %v873
        %v1713 = vunpack.c.h.b16 %v873
        %v1714 = vunpack.c.l.b16 %v874
        %v1715 = vunpack.c.h.b16 %v874
        %v1716 = vunpack.c.l.b16 %v875
        %v1717 = vunpack.c.h.b16 %v875
        %v1718 = vunpack.c.l.b16 %v876
        %v1719 = vunpack.c.h.b16 %v876
        %v1720 = vunpack.c.l.b16 %v877
        %v1721 = vunpack.c.h.b16 %v877
        %v1722 = vunpack.c.l.b16 %v878
        %v1723 = vunpack.c.h.b16 %v878
        %v1724 = vunpack.c.l.b16 %v879
        %v1725 = vunpack.c.h.b16 %v879
        %v1726 = vunpack.c.l.b16 %v880
        %v1727 = vunpack.c.h.b16 %v880
        %v1728 = vunpack.c.l.b16 %v881
        %v1729 = vunpack.c.h.b16 %v881
        %v1730 = vunpack.c.l.b16 %v882
        %v1731 = vunpack.c.h.b16 %v882
        %v1732 = vunpack.c.l.b16 %v883
        %v1733 = vunpack.c.h.b16 %v883
        %v1734 = vunpack.c.l.b16 %v884
        %v1735 = vunpack.c.h.b16 %v884
        %v1736 = vunpack.c.l.b16 %v885
        %v1737 = vunpack.c.h.b16 %v885
        %v1738 = vunpack.c.l.b16 %v886
        %v1739 = vunpack.c.h.b16 %v886
        %v1740 = vunpack.c.l.b16 %v887
        %v1741 = vunpack.c.h.b16 %v887
        %v1742 = vunpack.c.l.b16 %v888
        %v1743 = vunpack.c.h.b16 %v888
        %v1744 = vunpack.c.l.b16 %v889
        %v1745 = vunpack.c.h.b16 %v889
        %v1746 = vunpack.c.l.b16 %v890
        %v1747 = vunpack.c.h.b16 %v890
        %v1748 = vunpack.c.l.b16 %v891
        %v1749 = vunpack.c.h.b16 %v891
        %v1750 = vunpack.c.l.b16 %v892
        %v1751 = vunpack.c.h.b16 %v892
        %v1752 = vunpack.c.l.b16 %v893
        %v1753 = vunpack.c.h.b16 %v893
        %v1754 = vunpack.c.l.b16 %v894
        %v1755 = vunpack.c.h.b16 %v894
        %v1756 = vunpack.c.l.b16 %v895
        %v1757 = vunpack.c.h.b16 %v895
        %v1758 = vunpack.c.l.b16 %v896
        %v1759 = vunpack.c.h.b16 %v896
        %v1760 = vunpack.c.l.b16 %v897
        %v1761 = vunpack.c.h.b16 %v897
        %v1762 = vunpack.c.l.b16 %v898
        %v1763 = vunpack.c.h.b16 %v898
        %v1764 = vunpack.c.l.b16 %v899
        %v1765 = vunpack.c.h.b16 %v899
        %v1766 = vunpack.c.l.b16 %v900
        %v1767 = vunpack.c.h.b16 %v900
        %v1768 = vunpack.c.l.b16 %v901
        %v1769 = vunpack.c.h.b16 %v901
        %v1770 = vunpack.c.l.b16 %v902
        %v1771 = vunpack.c.h.b16 %v902
        %v1772 = vunpack.c.l.b16 %v903
        %v1773 = vunpack.c.h.b16 %v903
        %v1774 = vunpack.c.l.b16 %v904
        %v1775 = vunpack.c.h.b16 %v904
        %v1776 = vunpack.c.l.b16 %v905
        %v1777 = vunpack.c.h.b16 %v905
        %v1778 = vunpack.c.l.b16 %v906
        %v1779 = vunpack.c.h.b16 %v906
        %v1780 = vunpack.c.l.b16 %v907
        %v1781 = vunpack.c.h.b16 %v907
        %v1782 = vunpack.c.l.b16 %v908
        %v1783 = vunpack.c.h.b16 %v908
        %v1784 = vunpack.c.l.b16 %v909
        %v1785 = vunpack.c.h.b16 %v909
        %v1786 = vunpack.c.l.b16 %v910
        %v1787 = vunpack.c.h.b16 %v910
        %v1788 = vunpack.c.l.b16 %v911
        %v1789 = vunpack.c.h.b16 %v911
        %v1790 = vunpack.c.l.b16 %v912
        %v1791 = vunpack.c.h.b16 %v912
        %v1792 = vunpack.c.l.b16 %v913
        %v1793 = vunpack.c.h.b16 %v913
        %v1794 = vunpack.c.l.b16 %v914
        %v1795 = vunpack.c.h.b16 %v914
        %v1796 = vunpack.c.l.b16 %v915
        %v1797 = vunpack.c.h.b16 %v915
        %v1798 = vunpack.c.l.b16 %v916
        %v1799 = vunpack.c.h.b16 %v916
        %v1800 = vunpack.c.l.b16 %v917
        %v1801 = vunpack.c.h.b16 %v917
        %v1802 = vunpack.c.l.b16 %v918
        %v1803 = vunpack.c.h.b16 %v918
        %v1804 = vunpack.c.l.b16 %v919
        %v1805 = vunpack.c.h.b16 %v919
        %v1806 = vunpack.c.l.b16 %v920
        %v1807 = vunpack.c.h.b16 %v920
        %v1808 = vunpack.c.l.b16 %v921
        %v1809 = vunpack.c.h.b16 %v921
        %v1810 = vunpack.c.l.b16 %v922
        %v1811 = vunpack.c.h.b16 %v922
        %v1812 = vunpack.c.l.b16 %v923
        %v1813 = vunpack.c.h.b16 %v923
        %v1814 = vunpack.c.l.b16 %v924
        %v1815 = vunpack.c.h.b16 %v924
        %v1816 = vunpack.c.l.b16 %v925
        %v1817 = vunpack.c.h.b16 %v925
        %v1818 = vunpack.c.l.b16 %v926
        %v1819 = vunpack.c.h.b16 %v926
        %v1820 = vunpack.c.l.b16 %v927
        %v1821 = vunpack.c.h.b16 %v927
        %v1822 = vunpack.c.l.b16 %v928
        %v1823 = vunpack.c.h.b16 %v928
        %v1824 = vunpack.c.l.b16 %v929
        %v1825 = vunpack.c.h.b16 %v929
        %v1826 = vunpack.c.l.b16 %v930
        %v1827 = vunpack.c.h.b16 %v930
        %v1828 = vunpack.c.l.b16 %v931
        %v1829 = vunpack.c.h.b16 %v931
        %v1830 = vunpack.c.l.b16 %v932
        %v1831 = vunpack.c.h.b16 %v932
        %v1832 = vunpack.c.l.b16 %v933
        %v1833 = vunpack.c.h.b16 %v933
        %v1834 = vunpack.c.l.b16 %v934
        %v1835 = vunpack.c.h.b16 %v934
        %v1836 = vunpack.c.l.b16 %v935
        %v1837 = vunpack.c.h.b16 %v935
        %v1838 = vunpack.c.l.b16 %v936
        %v1839 = vunpack.c.h.b16 %v936
        %v1840 = vunpack.c.l.b16 %v937
        %v1841 = vunpack.c.h.b16 %v937
        %v1842 = vunpack.c.l.b16 %v938
        %v1843 = vunpack.c.h.b16 %v938
        %v1844 = vunpack.c.l.b16 %v939
        %v1845 = vunpack.c.h.b16 %v939
        %v1846 = vunpack.c.l.b16 %v940
        %v1847 = vunpack.c.h.b16 %v940
        %v1848 = vunpack.c.l.b16 %v941
        %v1849 = vunpack.c.h.b16 %v941
        %v1850 = vunpack.c.l.b16 %v942
        %v1851 = vunpack.c.h.b16 %v942
        %v1852 = vunpack.c.l.b16 %v943
        %v1853 = vunpack.c.h.b16 %v943
        %v1854 = vunpack.c.l.b16 %v944
        %v1855 = vunpack.c.h.b16 %v944
        %v1856 = vunpack.c.l.b16 %v945
        %v1857 = vunpack.c.h.b16 %v945
        %v1858 = vunpack.c.l.b16 %v946
        %v1859 = vunpack.c.h.b16 %v946
        %v1860 = vunpack.c.l.b16 %v947
        %v1861 = vunpack.c.h.b16 %v947
        %v1862 = vunpack.c.l.b16 %v948
        %v1863 = vunpack.c.h.b16 %v948
        %v1864 = vunpack.c.l.b16 %v949
        %v1865 = vunpack.c.h.b16 %v949
        %v1866 = vunpack.c.l.b16 %v950
        %v1867 = vunpack.c.h.b16 %v950
        %v1868 = vunpack.c.l.b16 %v951
        %v1869 = vunpack.c.h.b16 %v951
        %v1870 = vunpack.c.l.b16 %v952
        %v1871 = vunpack.c.h.b16 %v952
        %v1872 = vunpack.c.l.b16 %v953
        %v1873 = vunpack.c.h.b16 %v953
        %v1874 = vunpack.c.l.b16 %v954
        %v1875 = vunpack.c.h.b16 %v954
        %v1876 = vunpack.c.l.b16 %v955
        %v1877 = vunpack.c.h.b16 %v955
        %v1878 = vunpack.c.l.b16 %v956
        %v1879 = vunpack.c.h.b16 %v956
        %v1880 = vunpack.c.l.b16 %v957
        %v1881 = vunpack.c.h.b16 %v957
        %v1882 = vunpack.c.l.b16 %v958
        %v1883 = vunpack.c.h.b16 %v958
        %v1884 = vunpack.c.l.b16 %v959
        %v1885 = vunpack.c.h.b16 %v959
        %v1886 = vunpack.c.l.b16 %v960
        %v1887 = vunpack.c.h.b16 %v960
        %v1888 = vunpack.c.l.b16 %v961
        %v1889 = vunpack.c.h.b16 %v961
        %v1890 = vunpack.c.l.b16 %v962
        %v1891 = vunpack.c.h.b16 %v962
        %v1892 = vunpack.c.l.b16 %v963
        %v1893 = vunpack.c.h.b16 %v963
        %v1894 = vunpack.c.l.b16 %v964
        %v1895 = vunpack.c.h.b16 %v964
        %v1896 = vunpack.c.l.b16 %v965
        %v1897 = vunpack.c.h.b16 %v965
        %v1898 = vunpack.c.l.b16 %v966
        %v1899 = vunpack.c.h.b16 %v966
        %v1900 = vunpack.c.l.b16 %v967
        %v1901 = vunpack.c.h.b16 %v967
        %v1902 = vunpack.c.l.b16 %v968
        %v1903 = vunpack.c.h.b16 %v968
        %v1904 = vunpack.c.l.b16 %v969
        %v1905 = vunpack.c.h.b16 %v969
        %v1906 = vunpack.c.l.b16 %v970
        %v1907 = vunpack.c.h.b16 %v970
        %v1908 = vunpack.c.l.b16 %v971
        %v1909 = vunpack.c.h.b16 %v971
        %v1910 = vunpack.c.l.b16 %v972
        %v1911 = vunpack.c.h.b16 %v972
        %v1912 = vunpack.c.l.b16 %v973
        %v1913 = vunpack.c.h.b16 %v973
        %v1914 = vunpack.c.l.b16 %v974
        %v1915 = vunpack.c.h.b16 %v974
        %v1916 = vunpack.c.l.b16 %v975
        %v1917 = vunpack.c.h.b16 %v975
        %v1918 = vunpack.c.l.b16 %v976
        %v1919 = vunpack.c.h.b16 %v976
        %v1920 = vunpack.c.l.b16 %v977
        %v1921 = vunpack.c.h.b16 %v977
        %v1922 = vunpack.c.l.b16 %v978
        %v1923 = vunpack.c.h.b16 %v978
        %v1924 = vunpack.c.l.b16 %v979
        %v1925 = vunpack.c.h.b16 %v979
        %v1926 = vunpack.c.l.b16 %v980
        %v1927 = vunpack.c.h.b16 %v980
        %v1928 = vunpack.c.l.b16 %v981
        %v1929 = vunpack.c.h.b16 %v981
        %v1930 = vunpack.c.l.b16 %v982
        %v1931 = vunpack.c.h.b16 %v982
        %v1932 = vunpack.c.l.b16 %v983
        %v1933 = vunpack.c.h.b16 %v983
        %v1934 = vunpack.c.l.b16 %v984
        %v1935 = vunpack.c.h.b16 %v984
        %v1936 = vunpack.c.l.b16 %v985
        %v1937 = vunpack.c.h.b16 %v985
        %v1938 = vunpack.c.l.b16 %v986
        %v1939 = vunpack.c.h.b16 %v986
        %v1940 = vunpack.c.l.b16 %v987
        %v1941 = vunpack.c.h.b16 %v987
        %v1942 = vunpack.c.l.b16 %v988
        %v1943 = vunpack.c.h.b16 %v988
        %v1944 = vunpack.c.l.b16 %v989
        %v1945 = vunpack.c.h.b16 %v989
        %v1946 = vunpack.c.l.b16 %v990
        %v1947 = vunpack.c.h.b16 %v990
        %v1948 = vunpack.c.l.b16 %v991
        %v1949 = vunpack.c.h.b16 %v991
        %v1950 = vunpack.c.l.b16 %v992
        %v1951 = vunpack.c.h.b16 %v992
        %v1952 = vunpack.c.l.b16 %v993
        %v1953 = vunpack.c.h.b16 %v993
        %v1954 = vunpack.c.l.b16 %v994
        %v1955 = vunpack.c.h.b16 %v994
        %v1956 = vunpack.c.l.b16 %v995
        %v1957 = vunpack.c.h.b16 %v995
        %v1958 = vunpack.c.l.b16 %v996
        %v1959 = vunpack.c.h.b16 %v996
        %v1960 = vunpack.c.l.b16 %v997
        %v1961 = vunpack.c.h.b16 %v997
        %v1962 = vunpack.c.l.b16 %v998
        %v1963 = vunpack.c.h.b16 %v998
        %v1964 = vunpack.c.l.b16 %v999
        %v1965 = vunpack.c.h.b16 %v999
        %v1966 = vunpack.c.l.b16 %v1000
        %v1967 = vunpack.c.h.b16 %v1000
        %v1968 = vunpack.c.l.b16 %v1001
        %v1969 = vunpack.c.h.b16 %v1001
        %v1970 = vunpack.c.l.b16 %v1002
        %v1971 = vunpack.c.h.b16 %v1002
        %v1972 = vunpack.c.l.b16 %v1003
        %v1973 = vunpack.c.h.b16 %v1003
        %v1974 = vunpack.c.l.b16 %v1004
        %v1975 = vunpack.c.h.b16 %v1004
        %v1976 = vunpack.c.l.b16 %v1005
        %v1977 = vunpack.c.h.b16 %v1005
        %v1978 = vunpack.c.l.b16 %v1006
        %v1979 = vunpack.c.h.b16 %v1006
        %v1980 = vunpack.c.l.b16 %v1007
        %v1981 = vunpack.c.h.b16 %v1007
        %v1982 = vunpack.c.l.b16 %v1008
        %v1983 = vunpack.c.h.b16 %v1008
        %v1984 = vunpack.c.l.b16 %v1009
        %v1985 = vunpack.c.h.b16 %v1009
        %v1986 = vunpack.c.l.b16 %v1010
        %v1987 = vunpack.c.h.b16 %v1010
        %v1988 = vunpack.c.l.b16 %v1011
        %v1989 = vunpack.c.h.b16 %v1011
        %v1990 = vunpack.c.l.b16 %v1012
        %v1991 = vunpack.c.h.b16 %v1012
        %v1992 = vunpack.c.l.b16 %v1013
        %v1993 = vunpack.c.h.b16 %v1013
        %v1994 = vunpack.c.l.b16 %v1014
        %v1995 = vunpack.c.h.b16 %v1014
        %v1996 = vunpack.c.l.b16 %v1015
        %v1997 = vunpack.c.h.b16 %v1015
        %v1998 = vpack.c.b16 %v1626, %v1614
        %v1999 = vpack.c.b16 %v1627, %v1615
        %v2000 = vpack.c.b16 %v1628, %v1616
        %v2001 = vpack.c.b16 %v1629, %v1617
        %v2002 = vpack.c.b16 %v1630, %v1618
        %v2003 = vpack.c.b16 %v1631, %v1619
        %v2004 = vpack.c.b16 %v1632, %v1620
        %v2005 = vpack.c.b16 %v1633, %v1621
        %v2006 = vpack.c.b16 %v1634, %v1622
        %v2007 = vpack.c.b16 %v1635, %v1623
        %v2008 = vpack.c.b16 %v1636, %v1624
        %v2009 = vpack.c.b16 %v1637, %v1625
        %v2010 = vpack.c.b16 %v1650, %v1638
        %v2011 = vpack.c.b16 %v1651, %v1639
        %v2012 = vpack.c.b16 %v1652, %v1640
        %v2013 = vpack.c.b16 %v1653, %v1641
        %v2014 = vpack.c.b16 %v1654, %v1642
        %v2015 = vpack.c.b16 %v1655, %v1643
        %v2016 = vpack.c.b16 %v1656, %v1644
        %v2017 = vpack.c.b16 %v1657, %v1645
        %v2018 = vpack.c.b16 %v1658, %v1646
        %v2019 = vpack.c.b16 %v1659, %v1647
        %v2020 = vpack.c.b16 %v1660, %v1648
        %v2021 = vpack.c.b16 %v1661, %v1649
        %v2022 = vpack.c.b16 %v1674, %v1662
        %v2023 = vpack.c.b16 %v1675, %v1663
        %v2024 = vpack.c.b16 %v1676, %v1664
        %v2025 = vpack.c.b16 %v1677, %v1665
        %v2026 = vpack.c.b16 %v1678, %v1666
        %v2027 = vpack.c.b16 %v1679, %v1667
        %v2028 = vpack.c.b16 %v1680, %v1668
        %v2029 = vpack.c.b16 %v1681, %v1669
        %v2030 = vpack.c.b16 %v1682, %v1670
        %v2031 = vpack.c.b16 %v1683, %v1671
        %v2032 = vpack.c.b16 %v1684, %v1672
        %v2033 = vpack.c.b16 %v1685, %v1673
        %v2034 = vpack.c.b16 %v1698, %v1686
        %v2035 = vpack.c.b16 %v1699, %v1687
        %v2036 = vpack.c.b16 %v1700, %v1688
        %v2037 = vpack.c.b16 %v1701, %v1689
        %v2038 = vpack.c.b16 %v1702, %v1690
        %v2039 = vpack.c.b16 %v1703, %v1691
        %v2040 = vpack.c.b16 %v1704, %v1692
        %v2041 = vpack.c.b16 %v1705, %v1693
        %v2042 = vpack.c.b16 %v1706, %v1694
        %v2043 = vpack.c.b16 %v1707, %v1695
        %v2044 = vpack.c.b16 %v1708, %v1696
        %v2045 = vpack.c.b16 %v1709, %v1697
        %v2046 = vpack.c.b16 %v1722, %v1710
        %v2047 = vpack.c.b16 %v1723, %v1711
        %v2048 = vpack.c.b16 %v1724, %v1712
        %v2049 = vpack.c.b16 %v1725, %v1713
        %v2050 = vpack.c.b16 %v1726, %v1714
        %v2051 = vpack.c.b16 %v1727, %v1715
        %v2052 = vpack.c.b16 %v1728, %v1716
        %v2053 = vpack.c.b16 %v1729, %v1717
        %v2054 = vpack.c.b16 %v1730, %v1718
        %v2055 = vpack.c.b16 %v1731, %v1719
        %v2056 = vpack.c.b16 %v1732, %v1720
        %v2057 = vpack.c.b16 %v1733, %v1721
        %v2058 = vpack.c.b16 %v1746, %v1734
        %v2059 = vpack.c.b16 %v1747, %v1735
        %v2060 = vpack.c.b16 %v1748, %v1736
        %v2061 = vpack.c.b16 %v1749, %v1737
        %v2062 = vpack.c.b16 %v1750, %v1738
        %v2063 = vpack.c.b16 %v1751, %v1739
        %v2064 = vpack.c.b16 %v1752, %v1740
        %v2065 = vpack.c.b16 %v1753, %v1741
        %v2066 = vpack.c.b16 %v1754, %v1742
        %v2067 = vpack.c.b16 %v1755, %v1743
        %v2068 = vpack.c.b16 %v1756, %v1744
        %v2069 = vpack.c.b16 %v1757, %v1745
        %v2070 = vpack.c.b16 %v1770, %v1758
        %v2071 = vpack.c.b16 %v1771, %v1759
        %v2072 = vpack.c.b16 %v1772, %v1760
        %v2073 = vpack.c.b16 %v1773, %v1761
        %v2074 = vpack.c.b16 %v1774, %v1762
        %v2075 = vpack.c.b16 %v1775, %v1763
        %v2076 = vpack.c.b16 %v1776, %v1764
        %v2077 = vpack.c.b16 %v1777, %v1765
        %v2078 = vpack.c.b16 %v1778, %v1766
        %v2079 = vpack.c.b16 %v1779, %v1767
        %v2080 = vpack.c.b16 %v1780, %v1768
        %v2081 = vpack.c.b16 %v1781, %v1769
        %v2082 = vpack.c.b16 %v1794, %v1782
        %v2083 = vpack.c.b16 %v1795, %v1783
        %v2084 = vpack.c.b16 %v1796, %v1784
        %v2085 = vpack.c.b16 %v1797, %v1785
        %v2086 = vpack.c.b16 %v1798, %v1786
        %v2087 = vpack.c.b16 %v1799, %v1787
        %v2088 = vpack.c.b16 %v1800, %v1788
        %v2089 = vpack.c.b16 %v1801, %v1789
        %v2090 = vpack.c.b16 %v1802, %v1790
        %v2091 = vpack.c.b16 %v1803, %v1791
        %v2092 = vpack.c.b16 %v1804, %v1792
        %v2093 = vpack.c.b16 %v1805, %v1793
        %v2094 = vpack.c.b16 %v1818, %v1806
        %v2095 = vpack.c.b16 %v1819, %v1807
        %v2096 = vpack.c.b16 %v1820, %v1808
        %v2097 = vpack.c.b16 %v1821, %v1809
        %v2098 = vpack.c.b16 %v1822, %v1810
        %v2099 = vpack.c.b16 %v1823, %v1811
        %v2100 = vpack.c.b16 %v1824, %v1812
        %v2101 = vpack.c.b16 %v1825, %v1813
        %v2102 = vpack.c.b16 %v1826, %v1814
        %v2103 = vpack.c.b16 %v1827, %v1815
        %v2104 = vpack.c.b16 %v1828, %v1816
        %v2105 = vpack.c.b16 %v1829, %v1817
        %v2106 = vpack.c.b16 %v1842, %v1830
        %v2107 = vpack.c.b16 %v1843, %v1831
        %v2108 = vpack.c.b16 %v1844, %v1832
        %v2109 = vpack.c.b16 %v1845, %v1833
        %v2110 = vpack.c.b16 %v1846, %v1834
        %v2111 = vpack.c.b16 %v1847, %v1835
        %v2112 = vpack.c.b16 %v1848, %v1836
        %v2113 = vpack.c.b16 %v1849, %v1837
        %v2114 = vpack.c.b16 %v1850, %v1838
        %v2115 = vpack.c.b16 %v1851, %v1839
        %v2116 = vpack.c.b16 %v1852, %v1840
        %v2117 = vpack.c.b16 %v1853, %v1841
        %v2118 = vpack.c.b16 %v1866, %v1854
        %v2119 = vpack.c.b16 %v1867, %v1855
        %v2120 = vpack.c.b16 %v1868, %v1856
        %v2121 = vpack.c.b16 %v1869, %v1857
        %v2122 = vpack.c.b16 %v1870, %v1858
        %v2123 = vpack.c.b16 %v1871, %v1859
        %v2124 = vpack.c.b16 %v1872, %v1860
        %v2125 = vpack.c.b16 %v1873, %v1861
        %v2126 = vpack.c.b16 %v1874, %v1862
        %v2127 = vpack.c.b16 %v1875, %v1863
        %v2128 = vpack.c.b16 %v1876, %v1864
        %v2129 = vpack.c.b16 %v1877, %v1865
        %v2130 = vpack.c.b16 %v1890, %v1878
        %v2131 = vpack.c.b16 %v1891, %v1879
        %v2132 = vpack.c.b16 %v1892, %v1880
        %v2133 = vpack.c.b16 %v1893, %v1881
        %v2134 = vpack.c.b16 %v1894, %v1882
        %v2135 = vpack.c.b16 %v1895, %v1883
        %v2136 = vpack.c.b16 %v1896, %v1884
        %v2137 = vpack.c.b16 %v1897, %v1885
        %v2138 = vpack.c.b16 %v1898, %v1886
        %v2139 = vpack.c.b16 %v1899, %v1887
        %v2140 = vpack.c.b16 %v1900, %v1888
        %v2141 = vpack.c.b16 %v1901, %v1889
        %v2142 = vpack.c.b16 %v1914, %v1902
        %v2143 = vpack.c.b16 %v1915, %v1903
        %v2144 = vpack.c.b16 %v1916, %v1904
        %v2145 = vpack.c.b16 %v1917, %v1905
        %v2146 = vpack.c.b16 %v1918, %v1906
        %v2147 = vpack.c.b16 %v1919, %v1907
        %v2148 = vpack.c.b16 %v1920, %v1908
        %v2149 = vpack.c.b16 %v1921, %v1909
        %v2150 = vpack.c.b16 %v1922, %v1910
        %v2151 = vpack.c.b16 %v1923, %v1911
        %v2152 = vpack.c.b16 %v1924, %v1912
        %v2153 = vpack.c.b16 %v1925, %v1913
        %v2154 = vpack.c.b16 %v1938, %v1926
        %v2155 = vpack.c.b16 %v1939, %v1927
        %v2156 = vpack.c.b16 %v1940, %v1928
        %v2157 = vpack.c.b16 %v1941, %v1929
        %v2158 = vpack.c.b16 %v1942, %v1930
        %v2159 = vpack.c.b16 %v1943, %v1931
        %v2160 = vpack.c.b16 %v1944, %v1932
        %v2161 = vpack.c.b16 %v1945, %v1933
        %v2162 = vpack.c.b16 %v1946, %v1934
        %v2163 = vpack.c.b16 %v1947, %v1935
        %v2164 = vpack.c.b16 %v1948, %v1936
        %v2165 = vpack.c.b16 %v1949, %v1937
        %v2166 = vpack.c.b16 %v1962, %v1950
        %v2167 = vpack.c.b16 %v1963, %v1951
        %v2168 = vpack.c.b16 %v1964, %v1952
        %v2169 = vpack.c.b16 %v1965, %v1953
        %v2170 = vpack.c.b16 %v1966, %v1954
        %v2171 = vpack.c.b16 %v1967, %v1955
        %v2172 = vpack.c.b16 %v1968, %v1956
        %v2173 = vpack.c.b16 %v1969, %v1957
        %v2174 = vpack.c.b16 %v1970, %v1958
        %v2175 = vpack.c.b16 %v1971, %v1959
        %v2176 = vpack.c.b16 %v1972, %v1960
        %v2177 = vpack.c.b16 %v1973, %v1961
        %v2178 = vpack.c.b16 %v1986, %v1974
        %v2179 = vpack.c.b16 %v1987, %v1975
        %v2180 = vpack.c.b16 %v1988, %v1976
        %v2181 = vpack.c.b16 %v1989, %v1977
        %v2182 = vpack.c.b16 %v1990, %v1978
        %v2183 = vpack.c.b16 %v1991, %v1979
        %v2184 = vpack.c.b16 %v1992, %v1980
        %v2185 = vpack.c.b16 %v1993, %v1981
        %v2186 = vpack.c.b16 %v1994, %v1982
        %v2187 = vpack.c.b16 %v1995, %v1983
        %v2188 = vpack.c.b16 %v1996, %v1984
        %v2189 = vpack.c.b16 %v1997, %v1985
        %v2766 = vunpack.c.l.b16 %v1016
        %v2767 = vunpack.c.h.b16 %v1016
        %v2768 = vunpack.c.l.b16 %v1017
        %v2769 = vunpack.c.h.b16 %v1017
        %v2770 = vunpack.c.l.b16 %v1018
        %v2771 = vunpack.c.h.b16 %v1018
        %v2772 = vunpack.c.l.b16 %v1019
        %v2773 = vunpack.c.h.b16 %v1019
        %v2774 = vunpack.c.l.b16 %v1020
        %v2775 = vunpack.c.h.b16 %v1020
        %v2776 = vunpack.c.l.b16 %v1021
        %v2777 = vunpack.c.h.b16 %v1021
        %v2778 = vunpack.c.l.b16 %v1022
        %v2779 = vunpack.c.h.b16 %v1022
        %v2780 = vunpack.c.l.b16 %v1023
        %v2781 = vunpack.c.h.b16 %v1023
        %v2782 = vunpack.c.l.b16 %v1024
        %v2783 = vunpack.c.h.b16 %v1024
        %v2784 = vunpack.c.l.b16 %v1025
        %v2785 = vunpack.c.h.b16 %v1025
        %v2786 = vunpack.c.l.b16 %v1026
        %v2787 = vunpack.c.h.b16 %v1026
        %v2788 = vunpack.c.l.b16 %v1027
        %v2789 = vunpack.c.h.b16 %v1027
        %v2790 = vunpack.c.l.b16 %v1028
        %v2791 = vunpack.c.h.b16 %v1028
        %v2792 = vunpack.c.l.b16 %v1029
        %v2793 = vunpack.c.h.b16 %v1029
        %v2794 = vunpack.c.l.b16 %v1030
        %v2795 = vunpack.c.h.b16 %v1030
        %v2796 = vunpack.c.l.b16 %v1031
        %v2797 = vunpack.c.h.b16 %v1031
        %v2798 = vunpack.c.l.b16 %v1032
        %v2799 = vunpack.c.h.b16 %v1032
        %v2800 = vunpack.c.l.b16 %v1033
        %v2801 = vunpack.c.h.b16 %v1033
        %v2802 = vunpack.c.l.b16 %v1034
        %v2803 = vunpack.c.h.b16 %v1034
        %v2804 = vunpack.c.l.b16 %v1035
        %v2805 = vunpack.c.h.b16 %v1035
        %v2806 = vunpack.c.l.b16 %v1036
        %v2807 = vunpack.c.h.b16 %v1036
        %v2808 = vunpack.c.l.b16 %v1037
        %v2809 = vunpack.c.h.b16 %v1037
        %v2810 = vunpack.c.l.b16 %v1038
        %v2811 = vunpack.c.h.b16 %v1038
        %v2812 = vunpack.c.l.b16 %v1039
        %v2813 = vunpack.c.h.b16 %v1039
        %v2814 = vunpack.c.l.b16 %v1040
        %v2815 = vunpack.c.h.b16 %v1040
        %v2816 = vunpack.c.l.b16 %v1041
        %v2817 = vunpack.c.h.b16 %v1041
        %v2818 = vunpack.c.l.b16 %v1042
        %v2819 = vunpack.c.h.b16 %v1042
        %v2820 = vunpack.c.l.b16 %v1043
        %v2821 = vunpack.c.h.b16 %v1043
        %v2822 = vunpack.c.l.b16 %v1044
        %v2823 = vunpack.c.h.b16 %v1044
        %v2824 = vunpack.c.l.b16 %v1045
        %v2825 = vunpack.c.h.b16 %v1045
        %v2826 = vunpack.c.l.b16 %v1046
        %v2827 = vunpack.c.h.b16 %v1046
        %v2828 = vunpack.c.l.b16 %v1047
        %v2829 = vunpack.c.h.b16 %v1047
        %v2830 = vunpack.c.l.b16 %v1048
        %v2831 = vunpack.c.h.b16 %v1048
        %v2832 = vunpack.c.l.b16 %v1049
        %v2833 = vunpack.c.h.b16 %v1049
        %v2834 = vunpack.c.l.b16 %v1050
        %v2835 = vunpack.c.h.b16 %v1050
        %v2836 = vunpack.c.l.b16 %v1051
        %v2837 = vunpack.c.h.b16 %v1051
        %v2838 = vunpack.c.l.b16 %v1052
        %v2839 = vunpack.c.h.b16 %v1052
        %v2840 = vunpack.c.l.b16 %v1053
        %v2841 = vunpack.c.h.b16 %v1053
        %v2842 = vunpack.c.l.b16 %v1054
        %v2843 = vunpack.c.h.b16 %v1054
        %v2844 = vunpack.c.l.b16 %v1055
        %v2845 = vunpack.c.h.b16 %v1055
        %v2846 = vunpack.c.l.b16 %v1056
        %v2847 = vunpack.c.h.b16 %v1056
        %v2848 = vunpack.c.l.b16 %v1057
        %v2849 = vunpack.c.h.b16 %v1057
        %v2850 = vunpack.c.l.b16 %v1058
        %v2851 = vunpack.c.h.b16 %v1058
        %v2852 = vunpack.c.l.b16 %v1059
        %v2853 = vunpack.c.h.b16 %v1059
        %v2854 = vunpack.c.l.b16 %v1060
        %v2855 = vunpack.c.h.b16 %v1060
        %v2856 = vunpack.c.l.b16 %v1061
        %v2857 = vunpack.c.h.b16 %v1061
        %v2858 = vunpack.c.l.b16 %v1062
        %v2859 = vunpack.c.h.b16 %v1062
        %v2860 = vunpack.c.l.b16 %v1063
        %v2861 = vunpack.c.h.b16 %v1063
        %v2862 = vunpack.c.l.b16 %v1064
        %v2863 = vunpack.c.h.b16 %v1064
        %v2864 = vunpack.c.l.b16 %v1065
        %v2865 = vunpack.c.h.b16 %v1065
        %v2866 = vunpack.c.l.b16 %v1066
        %v2867 = vunpack.c.h.b16 %v1066
        %v2868 = vunpack.c.l.b16 %v1067
        %v2869 = vunpack.c.h.b16 %v1067
        %v2870 = vunpack.c.l.b16 %v1068
        %v2871 = vunpack.c.h.b16 %v1068
        %v2872 = vunpack.c.l.b16 %v1069
        %v2873 = vunpack.c.h.b16 %v1069
        %v2874 = vunpack.c.l.b16 %v1070
        %v2875 = vunpack.c.h.b16 %v1070
        %v2876 = vunpack.c.l.b16 %v1071
        %v2877 = vunpack.c.h.b16 %v1071
        %v2878 = vunpack.c.l.b16 %v1072
        %v2879 = vunpack.c.h.b16 %v1072
        %v2880 = vunpack.c.l.b16 %v1073
        %v2881 = vunpack.c.h.b16 %v1073
        %v2882 = vunpack.c.l.b16 %v1074
        %v2883 = vunpack.c.h.b16 %v1074
        %v2884 = vunpack.c.l.b16 %v1075
        %v2885 = vunpack.c.h.b16 %v1075
        %v2886 = vunpack.c.l.b16 %v1076
        %v2887 = vunpack.c.h.b16 %v1076
        %v2888 = vunpack.c.l.b16 %v1077
        %v2889 = vunpack.c.h.b16 %v1077
        %v2890 = vunpack.c.l.b16 %v1078
        %v2891 = vunpack.c.h.b16 %v1078
        %v2892 = vunpack.c.l.b16 %v1079
        %v2893 = vunpack.c.h.b16 %v1079
        %v2894 = vunpack.c.l.b16 %v1080
        %v2895 = vunpack.c.h.b16 %v1080
        %v2896 = vunpack.c.l.b16 %v1081
        %v2897 = vunpack.c.h.b16 %v1081
        %v2898 = vunpack.c.l.b16 %v1082
        %v2899 = vunpack.c.h.b16 %v1082
        %v2900 = vunpack.c.l.b16 %v1083
        %v2901 = vunpack.c.h.b16 %v1083
        %v2902 = vunpack.c.l.b16 %v1084
        %v2903 = vunpack.c.h.b16 %v1084
        %v2904 = vunpack.c.l.b16 %v1085
        %v2905 = vunpack.c.h.b16 %v1085
        %v2906 = vunpack.c.l.b16 %v1086
        %v2907 = vunpack.c.h.b16 %v1086
        %v2908 = vunpack.c.l.b16 %v1087
        %v2909 = vunpack.c.h.b16 %v1087
        %v2910 = vunpack.c.l.b16 %v1088
        %v2911 = vunpack.c.h.b16 %v1088
        %v2912 = vunpack.c.l.b16 %v1089
        %v2913 = vunpack.c.h.b16 %v1089
        %v2914 = vunpack.c.l.b16 %v1090
        %v2915 = vunpack.c.h.b16 %v1090
        %v2916 = vunpack.c.l.b16 %v1091
        %v2917 = vunpack.c.h.b16 %v1091
        %v2918 = vunpack.c.l.b16 %v1092
        %v2919 = vunpack.c.h.b16 %v1092
        %v2920 = vunpack.c.l.b16 %v1093
        %v2921 = vunpack.c.h.b16 %v1093
        %v2922 = vunpack.c.l.b16 %v1094
        %v2923 = vunpack.c.h.b16 %v1094
        %v2924 = vunpack.c.l.b16 %v1095
        %v2925 = vunpack.c.h.b16 %v1095
        %v2926 = vunpack.c.l.b16 %v1096
        %v2927 = vunpack.c.h.b16 %v1096
        %v2928 = vunpack.c.l.b16 %v1097
        %v2929 = vunpack.c.h.b16 %v1097
        %v2930 = vunpack.c.l.b16 %v1098
        %v2931 = vunpack.c.h.b16 %v1098
        %v2932 = vunpack.c.l.b16 %v1099
        %v2933 = vunpack.c.h.b16 %v1099
        %v2934 = vunpack.c.l.b16 %v1100
        %v2935 = vunpack.c.h.b16 %v1100
        %v2936 = vunpack.c.l.b16 %v1101
        %v2937 = vunpack.c.h.b16 %v1101
        %v2938 = vunpack.c.l.b16 %v1102
        %v2939 = vunpack.c.h.b16 %v1102
        %v2940 = vunpack.c.l.b16 %v1103
        %v2941 = vunpack.c.h.b16 %v1103
        %v2942 = vunpack.c.l.b16 %v1104
        %v2943 = vunpack.c.h.b16 %v1104
        %v2944 = vunpack.c.l.b16 %v1105
        %v2945 = vunpack.c.h.b16 %v1105
        %v2946 = vunpack.c.l.b16 %v1106
        %v2947 = vunpack.c.h.b16 %v1106
        %v2948 = vunpack.c.l.b16 %v1107
        %v2949 = vunpack.c.h.b16 %v1107
        %v2950 = vunpack.c.l.b16 %v1108
        %v2951 = vunpack.c.h.b16 %v1108
        %v2952 = vunpack.c.l.b16 %v1109
        %v2953 = vunpack.c.h.b16 %v1109
        %v2954 = vunpack.c.l.b16 %v1110
        %v2955 = vunpack.c.h.b16 %v1110
        %v2956 = vunpack.c.l.b16 %v1111
        %v2957 = vunpack.c.h.b16 %v1111
        %v2958 = vunpack.c.l.b16 %v1112
        %v2959 = vunpack.c.h.b16 %v1112
        %v2960 = vunpack.c.l.b16 %v1113
        %v2961 = vunpack.c.h.b16 %v1113
        %v2962 = vunpack.c.l.b16 %v1114
        %v2963 = vunpack.c.h.b16 %v1114
        %v2964 = vunpack.c.l.b16 %v1115
        %v2965 = vunpack.c.h.b16 %v1115
        %v2966 = vunpack.c.l.b16 %v1116
        %v2967 = vunpack.c.h.b16 %v1116
        %v2968 = vunpack.c.l.b16 %v1117
        %v2969 = vunpack.c.h.b16 %v1117
        %v2970 = vunpack.c.l.b16 %v1118
        %v2971 = vunpack.c.h.b16 %v1118
        %v2972 = vunpack.c.l.b16 %v1119
        %v2973 = vunpack.c.h.b16 %v1119
        %v2974 = vunpack.c.l.b16 %v1120
        %v2975 = vunpack.c.h.b16 %v1120
        %v2976 = vunpack.c.l.b16 %v1121
        %v2977 = vunpack.c.h.b16 %v1121
        %v2978 = vunpack.c.l.b16 %v1122
        %v2979 = vunpack.c.h.b16 %v1122
        %v2980 = vunpack.c.l.b16 %v1123
        %v2981 = vunpack.c.h.b16 %v1123
        %v2982 = vunpack.c.l.b16 %v1124
        %v2983 = vunpack.c.h.b16 %v1124
        %v2984 = vunpack.c.l.b16 %v1125
        %v2985 = vunpack.c.h.b16 %v1125
        %v2986 = vunpack.c.l.b16 %v1126
        %v2987 = vunpack.c.h.b16 %v1126
        %v2988 = vunpack.c.l.b16 %v1127
        %v2989 = vunpack.c.h.b16 %v1127
        %v2990 = vunpack.c.l.b16 %v1128
        %v2991 = vunpack.c.h.b16 %v1128
        %v2992 = vunpack.c.l.b16 %v1129
        %v2993 = vunpack.c.h.b16 %v1129
        %v2994 = vunpack.c.l.b16 %v1130
        %v2995 = vunpack.c.h.b16 %v1130
        %v2996 = vunpack.c.l.b16 %v1131
        %v2997 = vunpack.c.h.b16 %v1131
        %v2998 = vunpack.c.l.b16 %v1132
        %v2999 = vunpack.c.h.b16 %v1132
        %v3000 = vunpack.c.l.b16 %v1133
        %v3001 = vunpack.c.h.b16 %v1133
        %v3002 = vunpack.c.l.b16 %v1134
        %v3003 = vunpack.c.h.b16 %v1134
        %v3004 = vunpack.c.l.b16 %v1135
        %v3005 = vunpack.c.h.b16 %v1135
        %v3006 = vunpack.c.l.b16 %v1136
        %v3007 = vunpack.c.h.b16 %v1136
        %v3008 = vunpack.c.l.b16 %v1137
        %v3009 = vunpack.c.h.b16 %v1137
        %v3010 = vunpack.c.l.b16 %v1138
        %v3011 = vunpack.c.h.b16 %v1138
        %v3012 = vunpack.c.l.b16 %v1139
        %v3013 = vunpack.c.h.b16 %v1139
        %v3014 = vunpack.c.l.b16 %v1140
        %v3015 = vunpack.c.h.b16 %v1140
        %v3016 = vunpack.c.l.b16 %v1141
        %v3017 = vunpack.c.h.b16 %v1141
        %v3018 = vunpack.c.l.b16 %v1142
        %v3019 = vunpack.c.h.b16 %v1142
        %v3020 = vunpack.c.l.b16 %v1143
        %v3021 = vunpack.c.h.b16 %v1143
        %v3022 = vunpack.c.l.b16 %v1144
        %v3023 = vunpack.c.h.b16 %v1144
        %v3024 = vunpack.c.l.b16 %v1145
        %v3025 = vunpack.c.h.b16 %v1145
        %v3026 = vunpack.c.l.b16 %v1146
        %v3027 = vunpack.c.h.b16 %v1146
        %v3028 = vunpack.c.l.b16 %v1147
        %v3029 = vunpack.c.h.b16 %v1147
        %v3030 = vunpack.c.l.b16 %v1148
        %v3031 = vunpack.c.h.b16 %v1148
        %v3032 = vunpack.c.l.b16 %v1149
        %v3033 = vunpack.c.h.b16 %v1149
        %v3034 = vunpack.c.l.b16 %v1150
        %v3035 = vunpack.c.h.b16 %v1150
        %v3036 = vunpack.c.l.b16 %v1151
        %v3037 = vunpack.c.h.b16 %v1151
        %v3038 = vunpack.c.l.b16 %v1152
        %v3039 = vunpack.c.h.b16 %v1152
        %v3040 = vunpack.c.l.b16 %v1153
        %v3041 = vunpack.c.h.b16 %v1153
        %v3042 = vunpack.c.l.b16 %v1154
        %v3043 = vunpack.c.h.b16 %v1154
        %v3044 = vunpack.c.l.b16 %v1155
        %v3045 = vunpack.c.h.b16 %v1155
        %v3046 = vunpack.c.l.b16 %v1156
        %v3047 = vunpack.c.h.b16 %v1156
        %v3048 = vunpack.c.l.b16 %v1157
        %v3049 = vunpack.c.h.b16 %v1157
        %v3050 = vunpack.c.l.b16 %v1158
        %v3051 = vunpack.c.h.b16 %v1158
        %v3052 = vunpack.c.l.b16 %v1159
        %v3053 = vunpack.c.h.b16 %v1159
        %v3054 = vunpack.c.l.b16 %v1160
        %v3055 = vunpack.c.h.b16 %v1160
        %v3056 = vunpack.c.l.b16 %v1161
        %v3057 = vunpack.c.h.b16 %v1161
        %v3058 = vunpack.c.l.b16 %v1162
        %v3059 = vunpack.c.h.b16 %v1162
        %v3060 = vunpack.c.l.b16 %v1163
        %v3061 = vunpack.c.h.b16 %v1163
        %v3062 = vunpack.c.l.b16 %v1164
        %v3063 = vunpack.c.h.b16 %v1164
        %v3064 = vunpack.c.l.b16 %v1165
        %v3065 = vunpack.c.h.b16 %v1165
        %v3066 = vunpack.c.l.b16 %v1166
        %v3067 = vunpack.c.h.b16 %v1166
        %v3068 = vunpack.c.l.b16 %v1167
        %v3069 = vunpack.c.h.b16 %v1167
        %v3070 = vunpack.c.l.b16 %v1168
        %v3071 = vunpack.c.h.b16 %v1168
        %v3072 = vunpack.c.l.b16 %v1169
        %v3073 = vunpack.c.h.b16 %v1169
        %v3074 = vunpack.c.l.b16 %v1170
        %v3075 = vunpack.c.h.b16 %v1170
        %v3076 = vunpack.c.l.b16 %v1171
        %v3077 = vunpack.c.h.b16 %v1171
        %v3078 = vunpack.c.l.b16 %v1172
        %v3079 = vunpack.c.h.b16 %v1172
        %v3080 = vunpack.c.l.b16 %v1173
        %v3081 = vunpack.c.h.b16 %v1173
        %v3082 = vunpack.c.l.b16 %v1174
        %v3083 = vunpack.c.h.b16 %v1174
        %v3084 = vunpack.c.l.b16 %v1175
        %v3085 = vunpack.c.h.b16 %v1175
        %v3086 = vunpack.c.l.b16 %v1176
        %v3087 = vunpack.c.h.b16 %v1176
        %v3088 = vunpack.c.l.b16 %v1177
        %v3089 = vunpack.c.h.b16 %v1177
        %v3090 = vunpack.c.l.b16 %v1178
        %v3091 = vunpack.c.h.b16 %v1178
        %v3092 = vunpack.c.l.b16 %v1179
        %v3093 = vunpack.c.h.b16 %v1179
        %v3094 = vunpack.c.l.b16 %v1180
        %v3095 = vunpack.c.h.b16 %v1180
        %v3096 = vunpack.c.l.b16 %v1181
        %v3097 = vunpack.c.h.b16 %v1181
        %v3098 = vunpack.c.l.b16 %v1182
        %v3099 = vunpack.c.h.b16 %v1182
        %v3100 = vunpack.c.l.b16 %v1183
        %v3101 = vunpack.c.h.b16 %v1183
        %v3102 = vunpack.c.l.b16 %v1184
        %v3103 = vunpack.c.h.b16 %v1184
        %v3104 = vunpack.c.l.b16 %v1185
        %v3105 = vunpack.c.h.b16 %v1185
        %v3106 = vunpack.c.l.b16 %v1186
        %v3107 = vunpack.c.h.b16 %v1186
        %v3108 = vunpack.c.l.b16 %v1187
        %v3109 = vunpack.c.h.b16 %v1187
        %v3110 = vunpack.c.l.b16 %v1188
        %v3111 = vunpack.c.h.b16 %v1188
        %v3112 = vunpack.c.l.b16 %v1189
        %v3113 = vunpack.c.h.b16 %v1189
        %v3114 = vunpack.c.l.b16 %v1190
        %v3115 = vunpack.c.h.b16 %v1190
        %v3116 = vunpack.c.l.b16 %v1191
        %v3117 = vunpack.c.h.b16 %v1191
        %v3118 = vunpack.c.l.b16 %v1192
        %v3119 = vunpack.c.h.b16 %v1192
        %v3120 = vunpack.c.l.b16 %v1193
        %v3121 = vunpack.c.h.b16 %v1193
        %v3122 = vunpack.c.l.b16 %v1194
        %v3123 = vunpack.c.h.b16 %v1194
        %v3124 = vunpack.c.l.b16 %v1195
        %v3125 = vunpack.c.h.b16 %v1195
        %v3126 = vunpack.c.l.b16 %v1196
        %v3127 = vunpack.c.h.b16 %v1196
        %v3128 = vunpack.c.l.b16 %v1197
        %v3129 = vunpack.c.h.b16 %v1197
        %v3130 = vunpack.c.l.b16 %v1198
        %v3131 = vunpack.c.h.b16 %v1198
        %v3132 = vunpack.c.l.b16 %v1199
        %v3133 = vunpack.c.h.b16 %v1199
        %v3134 = vunpack.c.l.b16 %v1200
        %v3135 = vunpack.c.h.b16 %v1200
        %v3136 = vunpack.c.l.b16 %v1201
        %v3137 = vunpack.c.h.b16 %v1201
        %v3138 = vunpack.c.l.b16 %v1202
        %v3139 = vunpack.c.h.b16 %v1202
        %v3140 = vunpack.c.l.b16 %v1203
        %v3141 = vunpack.c.h.b16 %v1203
        %v3142 = vunpack.c.l.b16 %v1204
        %v3143 = vunpack.c.h.b16 %v1204
        %v3144 = vunpack.c.l.b16 %v1205
        %v3145 = vunpack.c.h.b16 %v1205
        %v3146 = vunpack.c.l.b16 %v1206
        %v3147 = vunpack.c.h.b16 %v1206
        %v3148 = vunpack.c.l.b16 %v1207
        %v3149 = vunpack.c.h.b16 %v1207
        %v3150 = vunpack.c.l.b16 %v1208
        %v3151 = vunpack.c.h.b16 %v1208
        %v3152 = vunpack.c.l.b16 %v1209
        %v3153 = vunpack.c.h.b16 %v1209
        %v3154 = vunpack.c.l.b16 %v1210
        %v3155 = vunpack.c.h.b16 %v1210
        %v3156 = vunpack.c.l.b16 %v1211
        %v3157 = vunpack.c.h.b16 %v1211
        %v3158 = vunpack.c.l.b16 %v1212
        %v3159 = vunpack.c.h.b16 %v1212
        %v3160 = vunpack.c.l.b16 %v1213
        %v3161 = vunpack.c.h.b16 %v1213
        %v3162 = vunpack.c.l.b16 %v1214
        %v3163 = vunpack.c.h.b16 %v1214
        %v3164 = vunpack.c.l.b16 %v1215
        %v3165 = vunpack.c.h.b16 %v1215
        %v3166 = vunpack.c.l.b16 %v1216
        %v3167 = vunpack.c.h.b16 %v1216
        %v3168 = vunpack.c.l.b16 %v1217
        %v3169 = vunpack.c.h.b16 %v1217
        %v3170 = vunpack.c.l.b16 %v1218
        %v3171 = vunpack.c.h.b16 %v1218
        %v3172 = vunpack.c.l.b16 %v1219
        %v3173 = vunpack.c.h.b16 %v1219
        %v3174 = vunpack.c.l.b16 %v1220
        %v3175 = vunpack.c.h.b16 %v1220
        %v3176 = vunpack.c.l.b16 %v1221
        %v3177 = vunpack.c.h.b16 %v1221
        %v3178 = vunpack.c.l.b16 %v1222
        %v3179 = vunpack.c.h.b16 %v1222
        %v3180 = vunpack.c.l.b16 %v1223
        %v3181 = vunpack.c.h.b16 %v1223
        %v3182 = vunpack.c.l.b16 %v1224
        %v3183 = vunpack.c.h.b16 %v1224
        %v3184 = vunpack.c.l.b16 %v1225
        %v3185 = vunpack.c.h.b16 %v1225
        %v3186 = vunpack.c.l.b16 %v1226
        %v3187 = vunpack.c.h.b16 %v1226
        %v3188 = vunpack.c.l.b16 %v1227
        %v3189 = vunpack.c.h.b16 %v1227
        %v3190 = vunpack.c.l.b16 %v1228
        %v3191 = vunpack.c.h.b16 %v1228
        %v3192 = vunpack.c.l.b16 %v1229
        %v3193 = vunpack.c.h.b16 %v1229
        %v3194 = vunpack.c.l.b16 %v1230
        %v3195 = vunpack.c.h.b16 %v1230
        %v3196 = vunpack.c.l.b16 %v1231
        %v3197 = vunpack.c.h.b16 %v1231
        %v3198 = vunpack.c.l.b16 %v1232
        %v3199 = vunpack.c.h.b16 %v1232
        %v3200 = vunpack.c.l.b16 %v1233
        %v3201 = vunpack.c.h.b16 %v1233
        %v3202 = vunpack.c.l.b16 %v1234
        %v3203 = vunpack.c.h.b16 %v1234
        %v3204 = vunpack.c.l.b16 %v1235
        %v3205 = vunpack.c.h.b16 %v1235
        %v3206 = vunpack.c.l.b16 %v1236
        %v3207 = vunpack.c.h.b16 %v1236
        %v3208 = vunpack.c.l.b16 %v1237
        %v3209 = vunpack.c.h.b16 %v1237
        %v3210 = vunpack.c.l.b16 %v1238
        %v3211 = vunpack.c.h.b16 %v1238
        %v3212 = vunpack.c.l.b16 %v1239
        %v3213 = vunpack.c.h.b16 %v1239
        %v3214 = vunpack.c.l.b16 %v1240
        %v3215 = vunpack.c.h.b16 %v1240
        %v3216 = vunpack.c.l.b16 %v1241
        %v3217 = vunpack.c.h.b16 %v1241
        %v3218 = vunpack.c.l.b16 %v1242
        %v3219 = vunpack.c.h.b16 %v1242
        %v3220 = vunpack.c.l.b16 %v1243
        %v3221 = vunpack.c.h.b16 %v1243
        %v3222 = vunpack.c.l.b16 %v1244
        %v3223 = vunpack.c.h.b16 %v1244
        %v3224 = vunpack.c.l.b16 %v1245
        %v3225 = vunpack.c.h.b16 %v1245
        %v3226 = vunpack.c.l.b16 %v1246
        %v3227 = vunpack.c.h.b16 %v1246
        %v3228 = vunpack.c.l.b16 %v1247
        %v3229 = vunpack.c.h.b16 %v1247
        %v3230 = vunpack.c.l.b16 %v1248
        %v3231 = vunpack.c.h.b16 %v1248
        %v3232 = vunpack.c.l.b16 %v1249
        %v3233 = vunpack.c.h.b16 %v1249
        %v3234 = vunpack.c.l.b16 %v1250
        %v3235 = vunpack.c.h.b16 %v1250
        %v3236 = vunpack.c.l.b16 %v1251
        %v3237 = vunpack.c.h.b16 %v1251
        %v3238 = vunpack.c.l.b16 %v1252
        %v3239 = vunpack.c.h.b16 %v1252
        %v3240 = vunpack.c.l.b16 %v1253
        %v3241 = vunpack.c.h.b16 %v1253
        %v3242 = vunpack.c.l.b16 %v1254
        %v3243 = vunpack.c.h.b16 %v1254
        %v3244 = vunpack.c.l.b16 %v1255
        %v3245 = vunpack.c.h.b16 %v1255
        %v3246 = vunpack.c.l.b16 %v1256
        %v3247 = vunpack.c.h.b16 %v1256
        %v3248 = vunpack.c.l.b16 %v1257
        %v3249 = vunpack.c.h.b16 %v1257
        %v3250 = vunpack.c.l.b16 %v1258
        %v3251 = vunpack.c.h.b16 %v1258
        %v3252 = vunpack.c.l.b16 %v1259
        %v3253 = vunpack.c.h.b16 %v1259
        %v3254 = vunpack.c.l.b16 %v1260
        %v3255 = vunpack.c.h.b16 %v1260
        %v3256 = vunpack.c.l.b16 %v1261
        %v3257 = vunpack.c.h.b16 %v1261
        %v3258 = vunpack.c.l.b16 %v1262
        %v3259 = vunpack.c.h.b16 %v1262
        %v3260 = vunpack.c.l.b16 %v1263
        %v3261 = vunpack.c.h.b16 %v1263
        %v3262 = vunpack.c.l.b16 %v1264
        %v3263 = vunpack.c.h.b16 %v1264
        %v3264 = vunpack.c.l.b16 %v1265
        %v3265 = vunpack.c.h.b16 %v1265
        %v3266 = vunpack.c.l.b16 %v1266
        %v3267 = vunpack.c.h.b16 %v1266
        %v3268 = vunpack.c.l.b16 %v1267
        %v3269 = vunpack.c.h.b16 %v1267
        %v3270 = vunpack.c.l.b16 %v1268
        %v3271 = vunpack.c.h.b16 %v1268
        %v3272 = vunpack.c.l.b16 %v1269
        %v3273 = vunpack.c.h.b16 %v1269
        %v3274 = vunpack.c.l.b16 %v1270
        %v3275 = vunpack.c.h.b16 %v1270
        %v3276 = vunpack.c.l.b16 %v1271
        %v3277 = vunpack.c.h.b16 %v1271
        %v3278 = vunpack.c.l.b16 %v1272
        %v3279 = vunpack.c.h.b16 %v1272
        %v3280 = vunpack.c.l.b16 %v1273
        %v3281 = vunpack.c.h.b16 %v1273
        %v3282 = vunpack.c.l.b16 %v1274
        %v3283 = vunpack.c.h.b16 %v1274
        %v3284 = vunpack.c.l.b16 %v1275
        %v3285 = vunpack.c.h.b16 %v1275
        %v3286 = vunpack.c.l.b16 %v1276
        %v3287 = vunpack.c.h.b16 %v1276
        %v3288 = vunpack.c.l.b16 %v1277
        %v3289 = vunpack.c.h.b16 %v1277
        %v3290 = vunpack.c.l.b16 %v1278
        %v3291 = vunpack.c.h.b16 %v1278
        %v3292 = vunpack.c.l.b16 %v1279
        %v3293 = vunpack.c.h.b16 %v1279
        %v3294 = vunpack.c.l.b16 %v1280
        %v3295 = vunpack.c.h.b16 %v1280
        %v3296 = vunpack.c.l.b16 %v1281
        %v3297 = vunpack.c.h.b16 %v1281
        %v3298 = vunpack.c.l.b16 %v1282
        %v3299 = vunpack.c.h.b16 %v1282
        %v3300 = vunpack.c.l.b16 %v1283
        %v3301 = vunpack.c.h.b16 %v1283
        %v3302 = vunpack.c.l.b16 %v1284
        %v3303 = vunpack.c.h.b16 %v1284
        %v3304 = vunpack.c.l.b16 %v1285
        %v3305 = vunpack.c.h.b16 %v1285
        %v3306 = vunpack.c.l.b16 %v1286
        %v3307 = vunpack.c.h.b16 %v1286
        %v3308 = vunpack.c.l.b16 %v1287
        %v3309 = vunpack.c.h.b16 %v1287
        %v3310 = vunpack.c.l.b16 %v1288
        %v3311 = vunpack.c.h.b16 %v1288
        %v3312 = vunpack.c.l.b16 %v1289
        %v3313 = vunpack.c.h.b16 %v1289
        %v3314 = vunpack.c.l.b16 %v1290
        %v3315 = vunpack.c.h.b16 %v1290
        %v3316 = vunpack.c.l.b16 %v1291
        %v3317 = vunpack.c.h.b16 %v1291
        %v3318 = vunpack.c.l.b16 %v1292
        %v3319 = vunpack.c.h.b16 %v1292
        %v3320 = vunpack.c.l.b16 %v1293
        %v3321 = vunpack.c.h.b16 %v1293
        %v3322 = vunpack.c.l.b16 %v1294
        %v3323 = vunpack.c.h.b16 %v1294
        %v3324 = vunpack.c.l.b16 %v1295
        %v3325 = vunpack.c.h.b16 %v1295
        %v3326 = vunpack.c.l.b16 %v1296
        %v3327 = vunpack.c.h.b16 %v1296
        %v3328 = vunpack.c.l.b16 %v1297
        %v3329 = vunpack.c.h.b16 %v1297
        %v3330 = vunpack.c.l.b16 %v1298
        %v3331 = vunpack.c.h.b16 %v1298
        %v3332 = vunpack.c.l.b16 %v1299
        %v3333 = vunpack.c.h.b16 %v1299
        %v3334 = vunpack.c.l.b16 %v1300
        %v3335 = vunpack.c.h.b16 %v1300
        %v3336 = vunpack.c.l.b16 %v1301
        %v3337 = vunpack.c.h.b16 %v1301
        %v3338 = vunpack.c.l.b16 %v1302
        %v3339 = vunpack.c.h.b16 %v1302
        %v3340 = vunpack.c.l.b16 %v1303
        %v3341 = vunpack.c.h.b16 %v1303
        %v3342 = vunpack.c.l.b16 %v1304
        %v3343 = vunpack.c.h.b16 %v1304
        %v3344 = vunpack.c.l.b16 %v1305
        %v3345 = vunpack.c.h.b16 %v1305
        %v3346 = vunpack.c.l.b16 %v1306
        %v3347 = vunpack.c.h.b16 %v1306
        %v3348 = vunpack.c.l.b16 %v1307
        %v3349 = vunpack.c.h.b16 %v1307
        %v3350 = vunpack.c.l.b16 %v1308
        %v3351 = vunpack.c.h.b16 %v1308
        %v3352 = vunpack.c.l.b16 %v1309
        %v3353 = vunpack.c.h.b16 %v1309
        %v3354 = vunpack.c.l.b16 %v1310
        %v3355 = vunpack.c.h.b16 %v1310
        %v3356 = vunpack.c.l.b16 %v1311
        %v3357 = vunpack.c.h.b16 %v1311
        %v3358 = vunpack.c.l.b16 %v1312
        %v3359 = vunpack.c.h.b16 %v1312
        %v3360 = vunpack.c.l.b16 %v1313
        %v3361 = vunpack.c.h.b16 %v1313
        %v3362 = vunpack.c.l.b16 %v1314
        %v3363 = vunpack.c.h.b16 %v1314
        %v3364 = vunpack.c.l.b16 %v1315
        %v3365 = vunpack.c.h.b16 %v1315
        %v3366 = vunpack.c.l.b16 %v1316
        %v3367 = vunpack.c.h.b16 %v1316
        %v3368 = vunpack.c.l.b16 %v1317
        %v3369 = vunpack.c.h.b16 %v1317
        %v3370 = vunpack.c.l.b16 %v1318
        %v3371 = vunpack.c.h.b16 %v1318
        %v3372 = vunpack.c.l.b16 %v1319
        %v3373 = vunpack.c.h.b16 %v1319
        %v3374 = vunpack.c.l.b16 %v1320
        %v3375 = vunpack.c.h.b16 %v1320
        %v3376 = vunpack.c.l.b16 %v1321
        %v3377 = vunpack.c.h.b16 %v1321
        %v3378 = vunpack.c.l.b16 %v1322
        %v3379 = vunpack.c.h.b16 %v1322
        %v3380 = vunpack.c.l.b16 %v1323
        %v3381 = vunpack.c.h.b16 %v1323
        %v3382 = vunpack.c.l.b16 %v1324
        %v3383 = vunpack.c.h.b16 %v1324
        %v3384 = vunpack.c.l.b16 %v1325
        %v3385 = vunpack.c.h.b16 %v1325
        %v3386 = vunpack.c.l.b16 %v1326
        %v3387 = vunpack.c.h.b16 %v1326
        %v3388 = vunpack.c.l.b16 %v1327
        %v3389 = vunpack.c.h.b16 %v1327
        %v3390 = vunpack.c.l.b16 %v1328
        %v3391 = vunpack.c.h.b16 %v1328
        %v3392 = vunpack.c.l.b16 %v1329
        %v3393 = vunpack.c.h.b16 %v1329
        %v3394 = vunpack.c.l.b16 %v1330
        %v3395 = vunpack.c.h.b16 %v1330
        %v3396 = vunpack.c.l.b16 %v1331
        %v3397 = vunpack.c.h.b16 %v1331
        %v3398 = vunpack.c.l.b16 %v1332
        %v3399 = vunpack.c.h.b16 %v1332
        %v3400 = vunpack.c.l.b16 %v1333
        %v3401 = vunpack.c.h.b16 %v1333
        %v3402 = vunpack.c.l.b16 %v1334
        %v3403 = vunpack.c.h.b16 %v1334
        %v3404 = vunpack.c.l.b16 %v1335
        %v3405 = vunpack.c.h.b16 %v1335
        %v3406 = vunpack.c.l.b16 %v1336
        %v3407 = vunpack.c.h.b16 %v1336
        %v3408 = vunpack.c.l.b16 %v1337
        %v3409 = vunpack.c.h.b16 %v1337
        %v3410 = vunpack.c.l.b16 %v1338
        %v3411 = vunpack.c.h.b16 %v1338
        %v3412 = vunpack.c.l.b16 %v1339
        %v3413 = vunpack.c.h.b16 %v1339
        %v3414 = vunpack.c.l.b16 %v1340
        %v3415 = vunpack.c.h.b16 %v1340
        %v3416 = vunpack.c.l.b16 %v1341
        %v3417 = vunpack.c.h.b16 %v1341
        %v3418 = vunpack.c.l.b16 %v1342
        %v3419 = vunpack.c.h.b16 %v1342
        %v3420 = vunpack.c.l.b16 %v1343
        %v3421 = vunpack.c.h.b16 %v1343
        %v3422 = vunpack.c.l.b16 %v1344
        %v3423 = vunpack.c.h.b16 %v1344
        %v3424 = vunpack.c.l.b16 %v1345
        %v3425 = vunpack.c.h.b16 %v1345
        %v3426 = vunpack.c.l.b16 %v1346
        %v3427 = vunpack.c.h.b16 %v1346
        %v3428 = vunpack.c.l.b16 %v1347
        %v3429 = vunpack.c.h.b16 %v1347
        %v3430 = vunpack.c.l.b16 %v1348
        %v3431 = vunpack.c.h.b16 %v1348
        %v3432 = vunpack.c.l.b16 %v1349
        %v3433 = vunpack.c.h.b16 %v1349
        %v3434 = vunpack.c.l.b16 %v1350
        %v3435 = vunpack.c.h.b16 %v1350
        %v3436 = vunpack.c.l.b16 %v1351
        %v3437 = vunpack.c.h.b16 %v1351
        %v3438 = vunpack.c.l.b16 %v1352
        %v3439 = vunpack.c.h.b16 %v1352
        %v3440 = vunpack.c.l.b16 %v1353
        %v3441 = vunpack.c.h.b16 %v1353
        %v3442 = vunpack.c.l.b16 %v1354
        %v3443 = vunpack.c.h.b16 %v1354
        %v3444 = vunpack.c.l.b16 %v1355
        %v3445 = vunpack.c.h.b16 %v1355
        %v3446 = vunpack.c.l.b16 %v1356
        %v3447 = vunpack.c.h.b16 %v1356
        %v3448 = vunpack.c.l.b16 %v1357
        %v3449 = vunpack.c.h.b16 %v1357
        %v3450 = vunpack.c.l.b16 %v1358
        %v3451 = vunpack.c.h.b16 %v1358
        %v3452 = vunpack.c.l.b16 %v1359
        %v3453 = vunpack.c.h.b16 %v1359
        %v3454 = vunpack.c.l.b16 %v1360
        %v3455 = vunpack.c.h.b16 %v1360
        %v3456 = vunpack.c.l.b16 %v1361
        %v3457 = vunpack.c.h.b16 %v1361
        %v3458 = vunpack.c.l.b16 %v1362
        %v3459 = vunpack.c.h.b16 %v1362
        %v3460 = vunpack.c.l.b16 %v1363
        %v3461 = vunpack.c.h.b16 %v1363
        %v3462 = vunpack.c.l.b16 %v1364
        %v3463 = vunpack.c.h.b16 %v1364
        %v3464 = vunpack.c.l.b16 %v1365
        %v3465 = vunpack.c.h.b16 %v1365
        %v3466 = vunpack.c.l.b16 %v1366
        %v3467 = vunpack.c.h.b16 %v1366
        %v3468 = vunpack.c.l.b16 %v1367
        %v3469 = vunpack.c.h.b16 %v1367
        %v3470 = vunpack.c.l.b16 %v1368
        %v3471 = vunpack.c.h.b16 %v1368
        %v3472 = vunpack.c.l.b16 %v1369
        %v3473 = vunpack.c.h.b16 %v1369
        %v3474 = vunpack.c.l.b16 %v1370
        %v3475 = vunpack.c.h.b16 %v1370
        %v3476 = vunpack.c.l.b16 %v1371
        %v3477 = vunpack.c.h.b16 %v1371
        %v3478 = vunpack.c.l.b16 %v1372
        %v3479 = vunpack.c.h.b16 %v1372
        %v3480 = vunpack.c.l.b16 %v1373
        %v3481 = vunpack.c.h.b16 %v1373
        %v3482 = vunpack.c.l.b16 %v1374
        %v3483 = vunpack.c.h.b16 %v1374
        %v3484 = vunpack.c.l.b16 %v1375
        %v3485 = vunpack.c.h.b16 %v1375
        %v3486 = vunpack.c.l.b16 %v1376
        %v3487 = vunpack.c.h.b16 %v1376
        %v3488 = vunpack.c.l.b16 %v1377
        %v3489 = vunpack.c.h.b16 %v1377
        %v3490 = vunpack.c.l.b16 %v1378
        %v3491 = vunpack.c.h.b16 %v1378
        %v3492 = vunpack.c.l.b16 %v1379
        %v3493 = vunpack.c.h.b16 %v1379
        %v3494 = vunpack.c.l.b16 %v1380
        %v3495 = vunpack.c.h.b16 %v1380
        %v3496 = vunpack.c.l.b16 %v1381
        %v3497 = vunpack.c.h.b16 %v1381
        %v3498 = vunpack.c.l.b16 %v1382
        %v3499 = vunpack.c.h.b16 %v1382
        %v3500 = vunpack.c.l.b16 %v1383
        %v3501 = vunpack.c.h.b16 %v1383
        %v3502 = vunpack.c.l.b16 %v1384
        %v3503 = vunpack.c.h.b16 %v1384
        %v3504 = vunpack.c.l.b16 %v1385
        %v3505 = vunpack.c.h.b16 %v1385
        %v3506 = vunpack.c.l.b16 %v1386
        %v3507 = vunpack.c.h.b16 %v1386
        %v3508 = vunpack.c.l.b16 %v1387
        %v3509 = vunpack.c.h.b16 %v1387
        %v3510 = vunpack.c.l.b16 %v1388
        %v3511 = vunpack.c.h.b16 %v1388
        %v3512 = vunpack.c.l.b16 %v1389
        %v3513 = vunpack.c.h.b16 %v1389
        %v3514 = vunpack.c.l.b16 %v1390
        %v3515 = vunpack.c.h.b16 %v1390
        %v3516 = vunpack.c.l.b16 %v1391
        %v3517 = vunpack.c.h.b16 %v1391
        %v3518 = vunpack.c.l.b16 %v1392
        %v3519 = vunpack.c.h.b16 %v1392
        %v3520 = vunpack.c.l.b16 %v1393
        %v3521 = vunpack.c.h.b16 %v1393
        %v3522 = vunpack.c.l.b16 %v1394
        %v3523 = vunpack.c.h.b16 %v1394
        %v3524 = vunpack.c.l.b16 %v1395
        %v3525 = vunpack.c.h.b16 %v1395
        %v3526 = vunpack.c.l.b16 %v1396
        %v3527 = vunpack.c.h.b16 %v1396
        %v3528 = vunpack.c.l.b16 %v1397
        %v3529 = vunpack.c.h.b16 %v1397
        %v3530 = vunpack.c.l.b16 %v1398
        %v3531 = vunpack.c.h.b16 %v1398
        %v3532 = vunpack.c.l.b16 %v1399
        %v3533 = vunpack.c.h.b16 %v1399
        %v3534 = vpack.c.b16 %v2770, %v2766
        %v3535 = vpack.c.b16 %v2771, %v2767
        %v3536 = vpack.c.b16 %v2772, %v2768
        %v3537 = vpack.c.b16 %v2773, %v2769
        %v3538 = vpack.c.b16 %v2778, %v2774
        %v3539 = vpack.c.b16 %v2779, %v2775
        %v3540 = vpack.c.b16 %v2780, %v2776
        %v3541 = vpack.c.b16 %v2781, %v2777
        %v3542 = vpack.c.b16 %v2786, %v2782
        %v3543 = vpack.c.b16 %v2787, %v2783
        %v3544 = vpack.c.b16 %v2788, %v2784
        %v3545 = vpack.c.b16 %v2789, %v2785
        %v3546 = vpack.c.b16 %v2794, %v2790
        %v3547 = vpack.c.b16 %v2795, %v2791
        %v3548 = vpack.c.b16 %v2796, %v2792
        %v3549 = vpack.c.b16 %v2797, %v2793
        %v3550 = vpack.c.b16 %v2802, %v2798
        %v3551 = vpack.c.b16 %v2803, %v2799
        %v3552 = vpack.c.b16 %v2804, %v2800
        %v3553 = vpack.c.b16 %v2805, %v2801
        %v3554 = vpack.c.b16 %v2810, %v2806
        %v3555 = vpack.c.b16 %v2811, %v2807
        %v3556 = vpack.c.b16 %v2812, %v2808
        %v3557 = vpack.c.b16 %v2813, %v2809
        %v3558 = vpack.c.b16 %v2818, %v2814
        %v3559 = vpack.c.b16 %v2819, %v2815
        %v3560 = vpack.c.b16 %v2820, %v2816
        %v3561 = vpack.c.b16 %v2821, %v2817
        %v3562 = vpack.c.b16 %v2826, %v2822
        %v3563 = vpack.c.b16 %v2827, %v2823
        %v3564 = vpack.c.b16 %v2828, %v2824
        %v3565 = vpack.c.b16 %v2829, %v2825
        %v3566 = vpack.c.b16 %v2834, %v2830
        %v3567 = vpack.c.b16 %v2835, %v2831
        %v3568 = vpack.c.b16 %v2836, %v2832
        %v3569 = vpack.c.b16 %v2837, %v2833
        %v3570 = vpack.c.b16 %v2842, %v2838
        %v3571 = vpack.c.b16 %v2843, %v2839
        %v3572 = vpack.c.b16 %v2844, %v2840
        %v3573 = vpack.c.b16 %v2845, %v2841
        %v3574 = vpack.c.b16 %v2850, %v2846
        %v3575 = vpack.c.b16 %v2851, %v2847
        %v3576 = vpack.c.b16 %v2852, %v2848
        %v3577 = vpack.c.b16 %v2853, %v2849
        %v3578 = vpack.c.b16 %v2858, %v2854
        %v3579 = vpack.c.b16 %v2859, %v2855
        %v3580 = vpack.c.b16 %v2860, %v2856
        %v3581 = vpack.c.b16 %v2861, %v2857
        %v3582 = vpack.c.b16 %v2866, %v2862
        %v3583 = vpack.c.b16 %v2867, %v2863
        %v3584 = vpack.c.b16 %v2868, %v2864
        %v3585 = vpack.c.b16 %v2869, %v2865
        %v3586 = vpack.c.b16 %v2874, %v2870
        %v3587 = vpack.c.b16 %v2875, %v2871
        %v3588 = vpack.c.b16 %v2876, %v2872
        %v3589 = vpack.c.b16 %v2877, %v2873
        %v3590 = vpack.c.b16 %v2882, %v2878
        %v3591 = vpack.c.b16 %v2883, %v2879
        %v3592 = vpack.c.b16 %v2884, %v2880
        %v3593 = vpack.c.b16 %v2885, %v2881
        %v3594 = vpack.c.b16 %v2890, %v2886
        %v3595 = vpack.c.b16 %v2891, %v2887
        %v3596 = vpack.c.b16 %v2892, %v2888
        %v3597 = vpack.c.b16 %v2893, %v2889
        %v3598 = vpack.c.b16 %v2898, %v2894
        %v3599 = vpack.c.b16 %v2899, %v2895
        %v3600 = vpack.c.b16 %v2900, %v2896
        %v3601 = vpack.c.b16 %v2901, %v2897
        %v3602 = vpack.c.b16 %v2906, %v2902
        %v3603 = vpack.c.b16 %v2907, %v2903
        %v3604 = vpack.c.b16 %v2908, %v2904
        %v3605 = vpack.c.b16 %v2909, %v2905
        %v3606 = vpack.c.b16 %v2914, %v2910
        %v3607 = vpack.c.b16 %v2915, %v2911
        %v3608 = vpack.c.b16 %v2916, %v2912
        %v3609 = vpack.c.b16 %v2917, %v2913
        %v3610 = vpack.c.b16 %v2922, %v2918
        %v3611 = vpack.c.b16 %v2923, %v2919
        %v3612 = vpack.c.b16 %v2924, %v2920
        %v3613 = vpack.c.b16 %v2925, %v2921
        %v3614 = vpack.c.b16 %v2930, %v2926
        %v3615 = vpack.c.b16 %v2931, %v2927
        %v3616 = vpack.c.b16 %v2932, %v2928
        %v3617 = vpack.c.b16 %v2933, %v2929
        %v3618 = vpack.c.b16 %v2938, %v2934
        %v3619 = vpack.c.b16 %v2939, %v2935
        %v3620 = vpack.c.b16 %v2940, %v2936
        %v3621 = vpack.c.b16 %v2941, %v2937
        %v3622 = vpack.c.b16 %v2946, %v2942
        %v3623 = vpack.c.b16 %v2947, %v2943
        %v3624 = vpack.c.b16 %v2948, %v2944
        %v3625 = vpack.c.b16 %v2949, %v2945
        %v3626 = vpack.c.b16 %v2954, %v2950
        %v3627 = vpack.c.b16 %v2955, %v2951
        %v3628 = vpack.c.b16 %v2956, %v2952
        %v3629 = vpack.c.b16 %v2957, %v2953
        %v3630 = vpack.c.b16 %v2962, %v2958
        %v3631 = vpack.c.b16 %v2963, %v2959
        %v3632 = vpack.c.b16 %v2964, %v2960
        %v3633 = vpack.c.b16 %v2965, %v2961
        %v3634 = vpack.c.b16 %v2970, %v2966
        %v3635 = vpack.c.b16 %v2971, %v2967
        %v3636 = vpack.c.b16 %v2972, %v2968
        %v3637 = vpack.c.b16 %v2973, %v2969
        %v3638 = vpack.c.b16 %v2978, %v2974
        %v3639 = vpack.c.b16 %v2979, %v2975
        %v3640 = vpack.c.b16 %v2980, %v2976
        %v3641 = vpack.c.b16 %v2981, %v2977
        %v3642 = vpack.c.b16 %v2986, %v2982
        %v3643 = vpack.c.b16 %v2987, %v2983
        %v3644 = vpack.c.b16 %v2988, %v2984
        %v3645 = vpack.c.b16 %v2989, %v2985
        %v3646 = vpack.c.b16 %v2994, %v2990
        %v3647 = vpack.c.b16 %v2995, %v2991
        %v3648 = vpack.c.b16 %v2996, %v2992
        %v3649 = vpack.c.b16 %v2997, %v2993
        %v3650 = vpack.c.b16 %v3002, %v2998
        %v3651 = vpack.c.b16 %v3003, %v2999
        %v3652 = vpack.c.b16 %v3004, %v3000
        %v3653 = vpack.c.b16 %v3005, %v3001
        %v3654 = vpack.c.b16 %v3010, %v3006
        %v3655 = vpack.c.b16 %v3011, %v3007
        %v3656 = vpack.c.b16 %v3012, %v3008
        %v3657 = vpack.c.b16 %v3013, %v3009
        %v3658 = vpack.c.b16 %v3018, %v3014
        %v3659 = vpack.c.b16 %v3019, %v3015
        %v3660 = vpack.c.b16 %v3020, %v3016
        %v3661 = vpack.c.b16 %v3021, %v3017
        %v3662 = vpack.c.b16 %v3026, %v3022
        %v3663 = vpack.c.b16 %v3027, %v3023
        %v3664 = vpack.c.b16 %v3028, %v3024
        %v3665 = vpack.c.b16 %v3029, %v3025
        %v3666 = vpack.c.b16 %v3034, %v3030
        %v3667 = vpack.c.b16 %v3035, %v3031
        %v3668 = vpack.c.b16 %v3036, %v3032
        %v3669 = vpack.c.b16 %v3037, %v3033
        %v3670 = vpack.c.b16 %v3042, %v3038
        %v3671 = vpack.c.b16 %v3043, %v3039
        %v3672 = vpack.c.b16 %v3044, %v3040
        %v3673 = vpack.c.b16 %v3045, %v3041
        %v3674 = vpack.c.b16 %v3050, %v3046
        %v3675 = vpack.c.b16 %v3051, %v3047
        %v3676 = vpack.c.b16 %v3052, %v3048
        %v3677 = vpack.c.b16 %v3053, %v3049
        %v3678 = vpack.c.b16 %v3058, %v3054
        %v3679 = vpack.c.b16 %v3059, %v3055
        %v3680 = vpack.c.b16 %v3060, %v3056
        %v3681 = vpack.c.b16 %v3061, %v3057
        %v3682 = vpack.c.b16 %v3066, %v3062
        %v3683 = vpack.c.b16 %v3067, %v3063
        %v3684 = vpack.c.b16 %v3068, %v3064
        %v3685 = vpack.c.b16 %v3069, %v3065
        %v3686 = vpack.c.b16 %v3074, %v3070
        %v3687 = vpack.c.b16 %v3075, %v3071
        %v3688 = vpack.c.b16 %v3076, %v3072
        %v3689 = vpack.c.b16 %v3077, %v3073
        %v3690 = vpack.c.b16 %v3082, %v3078
        %v3691 = vpack.c.b16 %v3083, %v3079
        %v3692 = vpack.c.b16 %v3084, %v3080
        %v3693 = vpack.c.b16 %v3085, %v3081
        %v3694 = vpack.c.b16 %v3090, %v3086
        %v3695 = vpack.c.b16 %v3091, %v3087
        %v3696 = vpack.c.b16 %v3092, %v3088
        %v3697 = vpack.c.b16 %v3093, %v3089
        %v3698 = vpack.c.b16 %v3098, %v3094
        %v3699 = vpack.c.b16 %v3099, %v3095
        %v3700 = vpack.c.b16 %v3100, %v3096
        %v3701 = vpack.c.b16 %v3101, %v3097
        %v3702 = vpack.c.b16 %v3106, %v3102
        %v3703 = vpack.c.b16 %v3107, %v3103
        %v3704 = vpack.c.b16 %v3108, %v3104
        %v3705 = vpack.c.b16 %v3109, %v3105
        %v3706 = vpack.c.b16 %v3114, %v3110
        %v3707 = vpack.c.b16 %v3115, %v3111
        %v3708 = vpack.c.b16 %v3116, %v3112
        %v3709 = vpack.c.b16 %v3117, %v3113
        %v3710 = vpack.c.b16 %v3122, %v3118
        %v3711 = vpack.c.b16 %v3123, %v3119
        %v3712 = vpack.c.b16 %v3124, %v3120
        %v3713 = vpack.c.b16 %v3125, %v3121
        %v3714 = vpack.c.b16 %v3130, %v3126
        %v3715 = vpack.c.b16 %v3131, %v3127
        %v3716 = vpack.c.b16 %v3132, %v3128
        %v3717 = vpack.c.b16 %v3133, %v3129
        %v3718 = vpack.c.b16 %v3138, %v3134
        %v3719 = vpack.c.b16 %v3139, %v3135
        %v3720 = vpack.c.b16 %v3140, %v3136
        %v3721 = vpack.c.b16 %v3141, %v3137
        %v3722 = vpack.c.b16 %v3146, %v3142
        %v3723 = vpack.c.b16 %v3147, %v3143
        %v3724 = vpack.c.b16 %v3148, %v3144
        %v3725 = vpack.c.b16 %v3149, %v3145
        %v3726 = vpack.c.b16 %v3154, %v3150
        %v3727 = vpack.c.b16 %v3155, %v3151
        %v3728 = vpack.c.b16 %v3156, %v3152
        %v3729 = vpack.c.b16 %v3157, %v3153
        %v3730 = vpack.c.b16 %v3162, %v3158
        %v3731 = vpack.c.b16 %v3163, %v3159
        %v3732 = vpack.c.b16 %v3164, %v3160
        %v3733 = vpack.c.b16 %v3165, %v3161
        %v3734 = vpack.c.b16 %v3170, %v3166
        %v3735 = vpack.c.b16 %v3171, %v3167
        %v3736 = vpack.c.b16 %v3172, %v3168
        %v3737 = vpack.c.b16 %v3173, %v3169
        %v3738 = vpack.c.b16 %v3178, %v3174
        %v3739 = vpack.c.b16 %v3179, %v3175
        %v3740 = vpack.c.b16 %v3180, %v3176
        %v3741 = vpack.c.b16 %v3181, %v3177
        %v3742 = vpack.c.b16 %v3186, %v3182
        %v3743 = vpack.c.b16 %v3187, %v3183
        %v3744 = vpack.c.b16 %v3188, %v3184
        %v3745 = vpack.c.b16 %v3189, %v3185
        %v3746 = vpack.c.b16 %v3194, %v3190
        %v3747 = vpack.c.b16 %v3195, %v3191
        %v3748 = vpack.c.b16 %v3196, %v3192
        %v3749 = vpack.c.b16 %v3197, %v3193
        %v3750 = vpack.c.b16 %v3202, %v3198
        %v3751 = vpack.c.b16 %v3203, %v3199
        %v3752 = vpack.c.b16 %v3204, %v3200
        %v3753 = vpack.c.b16 %v3205, %v3201
        %v3754 = vpack.c.b16 %v3210, %v3206
        %v3755 = vpack.c.b16 %v3211, %v3207
        %v3756 = vpack.c.b16 %v3212, %v3208
        %v3757 = vpack.c.b16 %v3213, %v3209
        %v3758 = vpack.c.b16 %v3218, %v3214
        %v3759 = vpack.c.b16 %v3219, %v3215
        %v3760 = vpack.c.b16 %v3220, %v3216
        %v3761 = vpack.c.b16 %v3221, %v3217
        %v3762 = vpack.c.b16 %v3226, %v3222
        %v3763 = vpack.c.b16 %v3227, %v3223
        %v3764 = vpack.c.b16 %v3228, %v3224
        %v3765 = vpack.c.b16 %v3229, %v3225
        %v3766 = vpack.c.b16 %v3234, %v3230
        %v3767 = vpack.c.b16 %v3235, %v3231
        %v3768 = vpack.c.b16 %v3236, %v3232
        %v3769 = vpack.c.b16 %v3237, %v3233
        %v3770 = vpack.c.b16 %v3242, %v3238
        %v3771 = vpack.c.b16 %v3243, %v3239
        %v3772 = vpack.c.b16 %v3244, %v3240
        %v3773 = vpack.c.b16 %v3245, %v3241
        %v3774 = vpack.c.b16 %v3250, %v3246
        %v3775 = vpack.c.b16 %v3251, %v3247
        %v3776 = vpack.c.b16 %v3252, %v3248
        %v3777 = vpack.c.b16 %v3253, %v3249
        %v3778 = vpack.c.b16 %v3258, %v3254
        %v3779 = vpack.c.b16 %v3259, %v3255
        %v3780 = vpack.c.b16 %v3260, %v3256
        %v3781 = vpack.c.b16 %v3261, %v3257
        %v3782 = vpack.c.b16 %v3266, %v3262
        %v3783 = vpack.c.b16 %v3267, %v3263
        %v3784 = vpack.c.b16 %v3268, %v3264
        %v3785 = vpack.c.b16 %v3269, %v3265
        %v3786 = vpack.c.b16 %v3274, %v3270
        %v3787 = vpack.c.b16 %v3275, %v3271
        %v3788 = vpack.c.b16 %v3276, %v3272
        %v3789 = vpack.c.b16 %v3277, %v3273
        %v3790 = vpack.c.b16 %v3282, %v3278
        %v3791 = vpack.c.b16 %v3283, %v3279
        %v3792 = vpack.c.b16 %v3284, %v3280
        %v3793 = vpack.c.b16 %v3285, %v3281
        %v3794 = vpack.c.b16 %v3290, %v3286
        %v3795 = vpack.c.b16 %v3291, %v3287
        %v3796 = vpack.c.b16 %v3292, %v3288
        %v3797 = vpack.c.b16 %v3293, %v3289
        %v3798 = vpack.c.b16 %v3298, %v3294
        %v3799 = vpack.c.b16 %v3299, %v3295
        %v3800 = vpack.c.b16 %v3300, %v3296
        %v3801 = vpack.c.b16 %v3301, %v3297
        %v3802 = vpack.c.b16 %v3306, %v3302
        %v3803 = vpack.c.b16 %v3307, %v3303
        %v3804 = vpack.c.b16 %v3308, %v3304
        %v3805 = vpack.c.b16 %v3309, %v3305
        %v3806 = vpack.c.b16 %v3314, %v3310
        %v3807 = vpack.c.b16 %v3315, %v3311
        %v3808 = vpack.c.b16 %v3316, %v3312
        %v3809 = vpack.c.b16 %v3317, %v3313
        %v3810 = vpack.c.b16 %v3322, %v3318
        %v3811 = vpack.c.b16 %v3323, %v3319
        %v3812 = vpack.c.b16 %v3324, %v3320
        %v3813 = vpack.c.b16 %v3325, %v3321
        %v3814 = vpack.c.b16 %v3330, %v3326
        %v3815 = vpack.c.b16 %v3331, %v3327
        %v3816 = vpack.c.b16 %v3332, %v3328
        %v3817 = vpack.c.b16 %v3333, %v3329
        %v3818 = vpack.c.b16 %v3338, %v3334
        %v3819 = vpack.c.b16 %v3339, %v3335
        %v3820 = vpack.c.b16 %v3340, %v3336
        %v3821 = vpack.c.b16 %v3341, %v3337
        %v3822 = vpack.c.b16 %v3346, %v3342
        %v3823 = vpack.c.b16 %v3347, %v3343
        %v3824 = vpack.c.b16 %v3348, %v3344
        %v3825 = vpack.c.b16 %v3349, %v3345
        %v3826 = vpack.c.b16 %v3354, %v3350
        %v3827 = vpack.c.b16 %v3355, %v3351
        %v3828 = vpack.c.b16 %v3356, %v3352
        %v3829 = vpack.c.b16 %v3357, %v3353
        %v3830 = vpack.c.b16 %v3362, %v3358
        %v3831 = vpack.c.b16 %v3363, %v3359
        %v3832 = vpack.c.b16 %v3364, %v3360
        %v3833 = vpack.c.b16 %v3365, %v3361
        %v3834 = vpack.c.b16 %v3370, %v3366
        %v3835 = vpack.c.b16 %v3371, %v3367
        %v3836 = vpack.c.b16 %v3372, %v3368
        %v3837 = vpack.c.b16 %v3373, %v3369
        %v3838 = vpack.c.b16 %v3378, %v3374
        %v3839 = vpack.c.b16 %v3379, %v3375
        %v3840 = vpack.c.b16 %v3380, %v3376
        %v3841 = vpack.c.b16 %v3381, %v3377
        %v3842 = vpack.c.b16 %v3386, %v3382
        %v3843 = vpack.c.b16 %v3387, %v3383
        %v3844 = vpack.c.b16 %v3388, %v3384
        %v3845 = vpack.c.b16 %v3389, %v3385
        %v3846 = vpack.c.b16 %v3394, %v3390
        %v3847 = vpack.c.b16 %v3395, %v3391
        %v3848 = vpack.c.b16 %v3396, %v3392
        %v3849 = vpack.c.b16 %v3397, %v3393
        %v3850 = vpack.c.b16 %v3402, %v3398
        %v3851 = vpack.c.b16 %v3403, %v3399
        %v3852 = vpack.c.b16 %v3404, %v3400
        %v3853 = vpack.c.b16 %v3405, %v3401
        %v3854 = vpack.c.b16 %v3410, %v3406
        %v3855 = vpack.c.b16 %v3411, %v3407
        %v3856 = vpack.c.b16 %v3412, %v3408
        %v3857 = vpack.c.b16 %v3413, %v3409
        %v3858 = vpack.c.b16 %v3418, %v3414
        %v3859 = vpack.c.b16 %v3419, %v3415
        %v3860 = vpack.c.b16 %v3420, %v3416
        %v3861 = vpack.c.b16 %v3421, %v3417
        %v3862 = vpack.c.b16 %v3426, %v3422
        %v3863 = vpack.c.b16 %v3427, %v3423
        %v3864 = vpack.c.b16 %v3428, %v3424
        %v3865 = vpack.c.b16 %v3429, %v3425
        %v3866 = vpack.c.b16 %v3434, %v3430
        %v3867 = vpack.c.b16 %v3435, %v3431
        %v3868 = vpack.c.b16 %v3436, %v3432
        %v3869 = vpack.c.b16 %v3437, %v3433
        %v3870 = vpack.c.b16 %v3442, %v3438
        %v3871 = vpack.c.b16 %v3443, %v3439
        %v3872 = vpack.c.b16 %v3444, %v3440
        %v3873 = vpack.c.b16 %v3445, %v3441
        %v3874 = vpack.c.b16 %v3450, %v3446
        %v3875 = vpack.c.b16 %v3451, %v3447
        %v3876 = vpack.c.b16 %v3452, %v3448
        %v3877 = vpack.c.b16 %v3453, %v3449
        %v3878 = vpack.c.b16 %v3458, %v3454
        %v3879 = vpack.c.b16 %v3459, %v3455
        %v3880 = vpack.c.b16 %v3460, %v3456
        %v3881 = vpack.c.b16 %v3461, %v3457
        %v3882 = vpack.c.b16 %v3466, %v3462
        %v3883 = vpack.c.b16 %v3467, %v3463
        %v3884 = vpack.c.b16 %v3468, %v3464
        %v3885 = vpack.c.b16 %v3469, %v3465
        %v3886 = vpack.c.b16 %v3474, %v3470
        %v3887 = vpack.c.b16 %v3475, %v3471
        %v3888 = vpack.c.b16 %v3476, %v3472
        %v3889 = vpack.c.b16 %v3477, %v3473
        %v3890 = vpack.c.b16 %v3482, %v3478
        %v3891 = vpack.c.b16 %v3483, %v3479
        %v3892 = vpack.c.b16 %v3484, %v3480
        %v3893 = vpack.c.b16 %v3485, %v3481
        %v3894 = vpack.c.b16 %v3490, %v3486
        %v3895 = vpack.c.b16 %v3491, %v3487
        %v3896 = vpack.c.b16 %v3492, %v3488
        %v3897 = vpack.c.b16 %v3493, %v3489
        %v3898 = vpack.c.b16 %v3498, %v3494
        %v3899 = vpack.c.b16 %v3499, %v3495
        %v3900 = vpack.c.b16 %v3500, %v3496
        %v3901 = vpack.c.b16 %v3501, %v3497
        %v3902 = vpack.c.b16 %v3506, %v3502
        %v3903 = vpack.c.b16 %v3507, %v3503
        %v3904 = vpack.c.b16 %v3508, %v3504
        %v3905 = vpack.c.b16 %v3509, %v3505
        %v3906 = vpack.c.b16 %v3514, %v3510
        %v3907 = vpack.c.b16 %v3515, %v3511
        %v3908 = vpack.c.b16 %v3516, %v3512
        %v3909 = vpack.c.b16 %v3517, %v3513
        %v3910 = vpack.c.b16 %v3522, %v3518
        %v3911 = vpack.c.b16 %v3523, %v3519
        %v3912 = vpack.c.b16 %v3524, %v3520
        %v3913 = vpack.c.b16 %v3525, %v3521
        %v3914 = vpack.c.b16 %v3530, %v3526
        %v3915 = vpack.c.b16 %v3531, %v3527
        %v3916 = vpack.c.b16 %v3532, %v3528
        %v3917 = vpack.c.b16 %v3533, %v3529
        %4302 = vmatprep.subr.bf16.mxu0 %v3535
        %4303 = vmatpush1.bf16.msra.mxu0 %v3534
        %4304 = vmatprep.subr.bf16.mxu0 %v3539
        %4305 = vmatpush1.bf16.msra.mxu0 %v3538
        %4306 = vmatprep.subr.bf16.mxu0 %v3543
        %4307 = vmatpush1.bf16.msra.mxu0 %v3542
        %4308 = vmatprep.subr.bf16.mxu0 %v3547
        %4309 = vmatpush1.bf16.msra.mxu0 %v3546
        %4310 = vmatprep.subr.bf16.mxu0 %v3551
        %4311 = vmatpush1.bf16.msra.mxu0 %v3550
        %4312 = vmatprep.subr.bf16.mxu0 %v3555
        %4313 = vmatpush1.bf16.msra.mxu0 %v3554
        %4314 = vmatprep.subr.bf16.mxu0 %v3559
        %4315 = vmatpush1.bf16.msra.mxu0 %v3558
        %4316 = vmatprep.subr.bf16.mxu0 %v3563
        %4317 = vmatpush1.bf16.msra.mxu0 %v3562
        %4318 = vmatprep.subr.bf16.mxu0 %v3567
        %4319 = vmatpush1.bf16.msra.mxu0 %v3566
        %4320 = vmatprep.subr.bf16.mxu0 %v3571
        %4321 = vmatpush1.bf16.msra.mxu0 %v3570
        %4322 = vmatprep.subr.bf16.mxu0 %v3575
        %4323 = vmatpush1.bf16.msra.mxu0 %v3574
        %4324 = vmatprep.subr.bf16.mxu0 %v3579
        %4325 = vmatpush1.bf16.msra.mxu0 %v3578
        %4326 = vmatprep.subr.bf16.mxu0 %v3583
        %4327 = vmatpush1.bf16.msra.mxu0 %v3582
        %4328 = vmatprep.subr.bf16.mxu0 %v3587
        %4329 = vmatpush1.bf16.msra.mxu0 %v3586
        %4330 = vmatprep.subr.bf16.mxu0 %v3591
        %4331 = vmatpush1.bf16.msra.mxu0 %v3590
        %4332 = vmatprep.subr.bf16.mxu0 %v3595
        %4333 = vmatpush1.bf16.msra.mxu0 %v3594
        %4334 = vmatprep.mubr.bf16.mxu0 %v1999
        %4335 = vmatmul.mubr.bf16.gmra.mrb[0].mxu0 %v1998
        %v4336 = vpop.f32.mrb[0].mxu0
        %v4337 = vadd.f32 %v1405, %v4336
        %v4338 = vpop.f32.mrb[0].mxu0
        %v4339 = vadd.f32 %v1409, %v4338
        %v4340 = vpop.f32.mrb[0].mxu0
        %v4341 = vadd.f32 %v1405, %v4340
        %v4342 = vpop.f32.mrb[0].mxu0
        %v4343 = vadd.f32 %v1409, %v4342
        %4344 = vmatprep.mubr.bf16.mxu0 %v2011
        %4345 = vmatmul.mubr.bf16.gmra.mrb[0].mxu0 %v2010
        %v4346 = vpop.f32.mrb[0].mxu0
        %v4347 = vadd.f32 %v1405, %v4346
        %v4348 = vpop.f32.mrb[0].mxu0
        %v4349 = vadd.f32 %v1409, %v4348
        %v4350 = vpop.f32.mrb[0].mxu0
        %v4351 = vadd.f32 %v1405, %v4350
        %v4352 = vpop.f32.mrb[0].mxu0
        %v4353 = vadd.f32 %v1409, %v4352
        %4354 = vmatprep.mubr.bf16.mxu0 %v2023
        %4355 = vmatmul.mubr.bf16.gmra.mrb[0].mxu0 %v2022
        %v4356 = vpop.f32.mrb[0].mxu0
        %v4357 = vadd.f32 %v1405, %v4356
        %v4358 = vpop.f32.mrb[0].mxu0
        %v4359 = vadd.f32 %v1409, %v4358
        %v4360 = vpop.f32.mrb[0].mxu0
        %v4361 = vadd.f32 %v1405, %v4360
        %v4362 = vpop.f32.mrb[0].mxu0
        %v4363 = vadd.f32 %v1409, %v4362
        %4364 = vmatprep.mubr.bf16.mxu0 %v2035
        %4365 = vmatmul.mubr.bf16.gmra.mrb[0].mxu0 %v2034
        %v4366 = vpop.f32.mrb[0].mxu0
        %v4367 = vadd.f32 %v1405, %v4366
        %v4368 = vpop.f32.mrb[0].mxu0
        %v4369 = vadd.f32 %v1409, %v4368
        %v4370 = vpop.f32.mrb[0].mxu0
        %v4371 = vadd.f32 %v1405, %v4370
        %v4372 = vpop.f32.mrb[0].mxu0
        %v4373 = vadd.f32 %v1409, %v4372
        %4374 = vmatprep.mubr.bf16.mxu0 %v2047
        %4375 = vmatmul.mubr.bf16.gmra.mrb[0].mxu0 %v2046
        %v4376 = vpop.f32.mrb[0].mxu0
        %v4377 = vadd.f32 %v1405, %v4376
        %v4378 = vpop.f32.mrb[0].mxu0
        %v4379 = vadd.f32 %v1409, %v4378
        %v4380 = vpop.f32.mrb[0].mxu0
        %v4381 = vadd.f32 %v1405, %v4380
        %v4382 = vpop.f32.mrb[0].mxu0
        %v4383 = vadd.f32 %v1409, %v4382
        %4384 = vmatprep.mubr.bf16.mxu0 %v2059
        %4385 = vmatmul.mubr.bf16.gmra.mrb[0].mxu0 %v2058
        %v4386 = vpop.f32.mrb[0].mxu0
        %v4387 = vadd.f32 %v1405, %v4386
        %v4388 = vpop.f32.mrb[0].mxu0
        %v4389 = vadd.f32 %v1409, %v4388
        %v4390 = vpop.f32.mrb[0].mxu0
        %v4391 = vadd.f32 %v1405, %v4390
        %v4392 = vpop.f32.mrb[0].mxu0
        %v4393 = vadd.f32 %v1409, %v4392
        %4394 = vmatprep.mubr.bf16.mxu0 %v2071
        %4395 = vmatmul.mubr.bf16.gmra.mrb[0].mxu0 %v2070
        %v4396 = vpop.f32.mrb[0].mxu0
        %v4397 = vadd.f32 %v1405, %v4396
        %v4398 = vpop.f32.mrb[0].mxu0
        %v4399 = vadd.f32 %v1409, %v4398
        %v4400 = vpop.f32.mrb[0].mxu0
        %v4401 = vadd.f32 %v1405, %v4400
        %v4402 = vpop.f32.mrb[0].mxu0
        %v4403 = vadd.f32 %v1409, %v4402
        %4404 = vmatprep.mubr.bf16.mxu0 %v2083
        %4405 = vmatmul.mubr.bf16.gmra.mrb[0].mxu0 %v2082
        %v4406 = vpop.f32.mrb[0].mxu0
        %v4407 = vadd.f32 %v1405, %v4406
        %v4408 = vpop.f32.mrb[0].mxu0
        %v4409 = vadd.f32 %v1409, %v4408
        %v4410 = vpop.f32.mrb[0].mxu0
        %v4411 = vadd.f32 %v1405, %v4410
        %v4412 = vpop.f32.mrb[0].mxu0
        %v4413 = vadd.f32 %v1409, %v4412
        %4414 = vmatprep.mubr.bf16.mxu0 %v2095
        %4415 = vmatmul.mubr.bf16.gmra.mrb[0].mxu0 %v2094
        %v4416 = vpop.f32.mrb[0].mxu0
        %v4417 = vadd.f32 %v1405, %v4416
        %v4418 = vpop.f32.mrb[0].mxu0
        %v4419 = vadd.f32 %v1409, %v4418
        %v4420 = vpop.f32.mrb[0].mxu0
        %v4421 = vadd.f32 %v1405, %v4420
        %v4422 = vpop.f32.mrb[0].mxu0
        %v4423 = vadd.f32 %v1409, %v4422
        %4424 = vmatprep.mubr.bf16.mxu0 %v2107
        %4425 = vmatmul.mubr.bf16.gmra.mrb[0].mxu0 %v2106
        %v4426 = vpop.f32.mrb[0].mxu0
        %v4427 = vadd.f32 %v1405, %v4426
        %v4428 = vpop.f32.mrb[0].mxu0
        %v4429 = vadd.f32 %v1409, %v4428
        %v4430 = vpop.f32.mrb[0].mxu0
        %v4431 = vadd.f32 %v1405, %v4430
        %v4432 = vpop.f32.mrb[0].mxu0
        %v4433 = vadd.f32 %v1409, %v4432
        %4434 = vmatprep.mubr.bf16.mxu0 %v2119
        %4435 = vmatmul.mubr.bf16.gmra.mrb[0].mxu0 %v2118
        %v4436 = vpop.f32.mrb[0].mxu0
        %v4437 = vadd.f32 %v1405, %v4436
        %v4438 = vpop.f32.mrb[0].mxu0
        %v4439 = vadd.f32 %v1409, %v4438
        %v4440 = vpop.f32.mrb[0].mxu0
        %v4441 = vadd.f32 %v1405, %v4440
        %v4442 = vpop.f32.mrb[0].mxu0
        %v4443 = vadd.f32 %v1409, %v4442
        %4444 = vmatprep.mubr.bf16.mxu0 %v2131
        %4445 = vmatmul.mubr.bf16.gmra.mrb[0].mxu0 %v2130
        %v4446 = vpop.f32.mrb[0].mxu0
        %v4447 = vadd.f32 %v1405, %v4446
        %v4448 = vpop.f32.mrb[0].mxu0
        %v4449 = vadd.f32 %v1409, %v4448
        %v4450 = vpop.f32.mrb[0].mxu0
        %v4451 = vadd.f32 %v1405, %v4450
        %v4452 = vpop.f32.mrb[0].mxu0
        %v4453 = vadd.f32 %v1409, %v4452
        %4454 = vmatprep.mubr.bf16.mxu0 %v2143
        %4455 = vmatmul.mubr.bf16.gmra.mrb[0].mxu0 %v2142
        %v4456 = vpop.f32.mrb[0].mxu0
        %v4457 = vadd.f32 %v1405, %v4456
        %v4458 = vpop.f32.mrb[0].mxu0
        %v4459 = vadd.f32 %v1409, %v4458
        %v4460 = vpop.f32.mrb[0].mxu0
        %v4461 = vadd.f32 %v1405, %v4460
        %v4462 = vpop.f32.mrb[0].mxu0
        %v4463 = vadd.f32 %v1409, %v4462
        %4464 = vmatprep.mubr.bf16.mxu0 %v2155
        %4465 = vmatmul.mubr.bf16.gmra.mrb[0].mxu0 %v2154
        %v4466 = vpop.f32.mrb[0].mxu0
        %v4467 = vadd.f32 %v1405, %v4466
        %v4468 = vpop.f32.mrb[0].mxu0
        %v4469 = vadd.f32 %v1409, %v4468
        %v4470 = vpop.f32.mrb[0].mxu0
        %v4471 = vadd.f32 %v1405, %v4470
        %v4472 = vpop.f32.mrb[0].mxu0
        %v4473 = vadd.f32 %v1409, %v4472
        %4474 = vmatprep.mubr.bf16.mxu0 %v2167
        %4475 = vmatmul.mubr.bf16.gmra.mrb[0].mxu0 %v2166
        %v4476 = vpop.f32.mrb[0].mxu0
        %v4477 = vadd.f32 %v1405, %v4476
        %v4478 = vpop.f32.mrb[0].mxu0
        %v4479 = vadd.f32 %v1409, %v4478
        %v4480 = vpop.f32.mrb[0].mxu0
        %v4481 = vadd.f32 %v1405, %v4480
        %v4482 = vpop.f32.mrb[0].mxu0
        %v4483 = vadd.f32 %v1409, %v4482
        %4484 = vmatprep.mubr.bf16.mxu0 %v2179
        %4485 = vmatmul.mubr.bf16.gmra.mrb[0].mxu0 %v2178
        %v4486 = vpop.f32.mrb[0].mxu0
        %v4487 = vadd.f32 %v1405, %v4486
        %v4488 = vpop.f32.mrb[0].mxu0
        %v4489 = vadd.f32 %v1409, %v4488
        %v4490 = vpop.f32.mrb[0].mxu0
        %v4491 = vadd.f32 %v1405, %v4490
        %v4492 = vpop.f32.mrb[0].mxu0
        %v4493 = vadd.f32 %v1409, %v4492
        %4494 = vdwg.mxu0
        %4495 = vmatprep.subr.bf16.mxu0 %v3599
        %4496 = vmatpush1.bf16.msra.mxu0 %v3598
        %4497 = vmatprep.subr.bf16.mxu0 %v3603
        %4498 = vmatpush1.bf16.msra.mxu0 %v3602
        %4499 = vmatprep.subr.bf16.mxu0 %v3607
        %4500 = vmatpush1.bf16.msra.mxu0 %v3606
        %4501 = vmatprep.subr.bf16.mxu0 %v3611
        %4502 = vmatpush1.bf16.msra.mxu0 %v3610
        %4503 = vmatprep.subr.bf16.mxu0 %v3615
        %4504 = vmatpush1.bf16.msra.mxu0 %v3614
        %4505 = vmatprep.subr.bf16.mxu0 %v3619
        %4506 = vmatpush1.bf16.msra.mxu0 %v3618
        %4507 = vmatprep.subr.bf16.mxu0 %v3623
        %4508 = vmatpush1.bf16.msra.mxu0 %v3622
        %4509 = vmatprep.subr.bf16.mxu0 %v3627
        %4510 = vmatpush1.bf16.msra.mxu0 %v3626
        %4511 = vmatprep.subr.bf16.mxu0 %v3631
        %4512 = vmatpush1.bf16.msra.mxu0 %v3630
        %4513 = vmatprep.subr.bf16.mxu0 %v3635
        %4514 = vmatpush1.bf16.msra.mxu0 %v3634
        %4515 = vmatprep.subr.bf16.mxu0 %v3639
        %4516 = vmatpush1.bf16.msra.mxu0 %v3638
        %4517 = vmatprep.subr.bf16.mxu0 %v3643
        %4518 = vmatpush1.bf16.msra.mxu0 %v3642
        %4519 = vmatprep.subr.bf16.mxu0 %v3647
        %4520 = vmatpush1.bf16.msra.mxu0 %v3646
        %4521 = vmatprep.subr.bf16.mxu0 %v3651
        %4522 = vmatpush1.bf16.msra.mxu0 %v3650
        %4523 = vmatprep.subr.bf16.mxu0 %v3655
        %4524 = vmatpush1.bf16.msra.mxu0 %v3654
        %4525 = vmatprep.subr.bf16.mxu0 %v3659
        %4526 = vmatpush1.bf16.msra.mxu0 %v3658
        %4527 = vmatprep.mubr.bf16.mxu0 %v2001
        %4528 = vmatmul.mubr.bf16.gmra.mrb[0].mxu0 %v2000
        %v4529 = vpop.f32.mrb[0].mxu0
        %v4530 = vadd.f32 %v4337, %v4529
        %v4531 = vpop.f32.mrb[0].mxu0
        %v4532 = vadd.f32 %v4339, %v4531
        %v4533 = vpop.f32.mrb[0].mxu0
        %v4534 = vadd.f32 %v4341, %v4533
        %v4535 = vpop.f32.mrb[0].mxu0
        %v4536 = vadd.f32 %v4343, %v4535
        %4537 = vmatprep.mubr.bf16.mxu0 %v2013
        %4538 = vmatmul.mubr.bf16.gmra.mrb[0].mxu0 %v2012
        %v4539 = vpop.f32.mrb[0].mxu0
        %v4540 = vadd.f32 %v4347, %v4539
        %v4541 = vpop.f32.mrb[0].mxu0
        %v4542 = vadd.f32 %v4349, %v4541
        %v4543 = vpop.f32.mrb[0].mxu0
        %v4544 = vadd.f32 %v4351, %v4543
        %v4545 = vpop.f32.mrb[0].mxu0
        %v4546 = vadd.f32 %v4353, %v4545
        %4547 = vmatprep.mubr.bf16.mxu0 %v2025
        %4548 = vmatmul.mubr.bf16.gmra.mrb[0].mxu0 %v2024
        %v4549 = vpop.f32.mrb[0].mxu0
        %v4550 = vadd.f32 %v4357, %v4549
        %v4551 = vpop.f32.mrb[0].mxu0
        %v4552 = vadd.f32 %v4359, %v4551
        %v4553 = vpop.f32.mrb[0].mxu0
        %v4554 = vadd.f32 %v4361, %v4553
        %v4555 = vpop.f32.mrb[0].mxu0
        %v4556 = vadd.f32 %v4363, %v4555
        %4557 = vmatprep.mubr.bf16.mxu0 %v2037
        %4558 = vmatmul.mubr.bf16.gmra.mrb[0].mxu0 %v2036
        %v4559 = vpop.f32.mrb[0].mxu0
        %v4560 = vadd.f32 %v4367, %v4559
        %v4561 = vpop.f32.mrb[0].mxu0
        %v4562 = vadd.f32 %v4369, %v4561
        %v4563 = vpop.f32.mrb[0].mxu0
        %v4564 = vadd.f32 %v4371, %v4563
        %v4565 = vpop.f32.mrb[0].mxu0
        %v4566 = vadd.f32 %v4373, %v4565
        %4567 = vmatprep.mubr.bf16.mxu0 %v2049
        %4568 = vmatmul.mubr.bf16.gmra.mrb[0].mxu0 %v2048
        %v4569 = vpop.f32.mrb[0].mxu0
        %v4570 = vadd.f32 %v4377, %v4569
        %v4571 = vpop.f32.mrb[0].mxu0
        %v4572 = vadd.f32 %v4379, %v4571
        %v4573 = vpop.f32.mrb[0].mxu0
        %v4574 = vadd.f32 %v4381, %v4573
        %v4575 = vpop.f32.mrb[0].mxu0
        %v4576 = vadd.f32 %v4383, %v4575
        %4577 = vmatprep.mubr.bf16.mxu0 %v2061
        %4578 = vmatmul.mubr.bf16.gmra.mrb[0].mxu0 %v2060
        %v4579 = vpop.f32.mrb[0].mxu0
        %v4580 = vadd.f32 %v4387, %v4579
        %v4581 = vpop.f32.mrb[0].mxu0
        %v4582 = vadd.f32 %v4389, %v4581
        %v4583 = vpop.f32.mrb[0].mxu0
        %v4584 = vadd.f32 %v4391, %v4583
        %v4585 = vpop.f32.mrb[0].mxu0
        %v4586 = vadd.f32 %v4393, %v4585
        %4587 = vmatprep.mubr.bf16.mxu0 %v2073
        %4588 = vmatmul.mubr.bf16.gmra.mrb[0].mxu0 %v2072
        %v4589 = vpop.f32.mrb[0].mxu0
        %v4590 = vadd.f32 %v4397, %v4589
        %v4591 = vpop.f32.mrb[0].mxu0
        %v4592 = vadd.f32 %v4399, %v4591
        %v4593 = vpop.f32.mrb[0].mxu0
        %v4594 = vadd.f32 %v4401, %v4593
        %v4595 = vpop.f32.mrb[0].mxu0
        %v4596 = vadd.f32 %v4403, %v4595
        %4597 = vmatprep.mubr.bf16.mxu0 %v2085
        %4598 = vmatmul.mubr.bf16.gmra.mrb[0].mxu0 %v2084
        %v4599 = vpop.f32.mrb[0].mxu0
        %v4600 = vadd.f32 %v4407, %v4599
        %v4601 = vpop.f32.mrb[0].mxu0
        %v4602 = vadd.f32 %v4409, %v4601
        %v4603 = vpop.f32.mrb[0].mxu0
        %v4604 = vadd.f32 %v4411, %v4603
        %v4605 = vpop.f32.mrb[0].mxu0
        %v4606 = vadd.f32 %v4413, %v4605
        %4607 = vmatprep.mubr.bf16.mxu0 %v2097
        %4608 = vmatmul.mubr.bf16.gmra.mrb[0].mxu0 %v2096
        %v4609 = vpop.f32.mrb[0].mxu0
        %v4610 = vadd.f32 %v4417, %v4609
        %v4611 = vpop.f32.mrb[0].mxu0
        %v4612 = vadd.f32 %v4419, %v4611
        %v4613 = vpop.f32.mrb[0].mxu0
        %v4614 = vadd.f32 %v4421, %v4613
        %v4615 = vpop.f32.mrb[0].mxu0
        %v4616 = vadd.f32 %v4423, %v4615
        %4617 = vmatprep.mubr.bf16.mxu0 %v2109
        %4618 = vmatmul.mubr.bf16.gmra.mrb[0].mxu0 %v2108
        %v4619 = vpop.f32.mrb[0].mxu0
        %v4620 = vadd.f32 %v4427, %v4619
        %v4621 = vpop.f32.mrb[0].mxu0
        %v4622 = vadd.f32 %v4429, %v4621
        %v4623 = vpop.f32.mrb[0].mxu0
        %v4624 = vadd.f32 %v4431, %v4623
        %v4625 = vpop.f32.mrb[0].mxu0
        %v4626 = vadd.f32 %v4433, %v4625
        %4627 = vmatprep.mubr.bf16.mxu0 %v2121
        %4628 = vmatmul.mubr.bf16.gmra.mrb[0].mxu0 %v2120
        %v4629 = vpop.f32.mrb[0].mxu0
        %v4630 = vadd.f32 %v4437, %v4629
        %v4631 = vpop.f32.mrb[0].mxu0
        %v4632 = vadd.f32 %v4439, %v4631
        %v4633 = vpop.f32.mrb[0].mxu0
        %v4634 = vadd.f32 %v4441, %v4633
        %v4635 = vpop.f32.mrb[0].mxu0
        %v4636 = vadd.f32 %v4443, %v4635
        %4637 = vmatprep.mubr.bf16.mxu0 %v2133
        %4638 = vmatmul.mubr.bf16.gmra.mrb[0].mxu0 %v2132
        %v4639 = vpop.f32.mrb[0].mxu0
        %v4640 = vadd.f32 %v4447, %v4639
        %v4641 = vpop.f32.mrb[0].mxu0
        %v4642 = vadd.f32 %v4449, %v4641
        %v4643 = vpop.f32.mrb[0].mxu0
        %v4644 = vadd.f32 %v4451, %v4643
        %v4645 = vpop.f32.mrb[0].mxu0
        %v4646 = vadd.f32 %v4453, %v4645
        %4647 = vmatprep.mubr.bf16.mxu0 %v2145
        %4648 = vmatmul.mubr.bf16.gmra.mrb[0].mxu0 %v2144
        %v4649 = vpop.f32.mrb[0].mxu0
        %v4650 = vadd.f32 %v4457, %v4649
        %v4651 = vpop.f32.mrb[0].mxu0
        %v4652 = vadd.f32 %v4459, %v4651
        %v4653 = vpop.f32.mrb[0].mxu0
        %v4654 = vadd.f32 %v4461, %v4653
        %v4655 = vpop.f32.mrb[0].mxu0
        %v4656 = vadd.f32 %v4463, %v4655
        %4657 = vmatprep.mubr.bf16.mxu0 %v2157
        %4658 = vmatmul.mubr.bf16.gmra.mrb[0].mxu0 %v2156
        %v4659 = vpop.f32.mrb[0].mxu0
        %v4660 = vadd.f32 %v4467, %v4659
        %v4661 = vpop.f32.mrb[0].mxu0
        %v4662 = vadd.f32 %v4469, %v4661
        %v4663 = vpop.f32.mrb[0].mxu0
        %v4664 = vadd.f32 %v4471, %v4663
        %v4665 = vpop.f32.mrb[0].mxu0
        %v4666 = vadd.f32 %v4473, %v4665
        %4667 = vmatprep.mubr.bf16.mxu0 %v2169
        %4668 = vmatmul.mubr.bf16.gmra.mrb[0].mxu0 %v2168
        %v4669 = vpop.f32.mrb[0].mxu0
        %v4670 = vadd.f32 %v4477, %v4669
        %v4671 = vpop.f32.mrb[0].mxu0
        %v4672 = vadd.f32 %v4479, %v4671
        %v4673 = vpop.f32.mrb[0].mxu0
        %v4674 = vadd.f32 %v4481, %v4673
        %v4675 = vpop.f32.mrb[0].mxu0
        %v4676 = vadd.f32 %v4483, %v4675
        %4677 = vmatprep.mubr.bf16.mxu0 %v2181
        %4678 = vmatmul.mubr.bf16.gmra.mrb[0].mxu0 %v2180
        %v4679 = vpop.f32.mrb[0].mxu0
        %v4680 = vadd.f32 %v4487, %v4679
        %v4681 = vpop.f32.mrb[0].mxu0
        %v4682 = vadd.f32 %v4489, %v4681
        %v4683 = vpop.f32.mrb[0].mxu0
        %v4684 = vadd.f32 %v4491, %v4683
        %v4685 = vpop.f32.mrb[0].mxu0
        %v4686 = vadd.f32 %v4493, %v4685
        %4687 = vdwg.mxu0
        %4688 = vmatprep.subr.bf16.mxu0 %v3663
        %4689 = vmatpush1.bf16.msra.mxu0 %v3662
        %4690 = vmatprep.subr.bf16.mxu0 %v3667
        %4691 = vmatpush1.bf16.msra.mxu0 %v3666
        %4692 = vmatprep.subr.bf16.mxu0 %v3671
        %4693 = vmatpush1.bf16.msra.mxu0 %v3670
        %4694 = vmatprep.subr.bf16.mxu0 %v3675
        %4695 = vmatpush1.bf16.msra.mxu0 %v3674
        %4696 = vmatprep.subr.bf16.mxu0 %v3679
        %4697 = vmatpush1.bf16.msra.mxu0 %v3678
        %4698 = vmatprep.subr.bf16.mxu0 %v3683
        %4699 = vmatpush1.bf16.msra.mxu0 %v3682
        %4700 = vmatprep.subr.bf16.mxu0 %v3687
        %4701 = vmatpush1.bf16.msra.mxu0 %v3686
        %4702 = vmatprep.subr.bf16.mxu0 %v3691
        %4703 = vmatpush1.bf16.msra.mxu0 %v3690
        %4704 = vmatprep.subr.bf16.mxu0 %v3695
        %4705 = vmatpush1.bf16.msra.mxu0 %v3694
        %4706 = vmatprep.subr.bf16.mxu0 %v3699
        %4707 = vmatpush1.bf16.msra.mxu0 %v3698
        %4708 = vmatprep.subr.bf16.mxu0 %v3703
        %4709 = vmatpush1.bf16.msra.mxu0 %v3702
        %4710 = vmatprep.subr.bf16.mxu0 %v3707
        %4711 = vmatpush1.bf16.msra.mxu0 %v3706
        %4712 = vmatprep.subr.bf16.mxu0 %v3711
        %4713 = vmatpush1.bf16.msra.mxu0 %v3710
        %4714 = vmatprep.subr.bf16.mxu0 %v3715
        %4715 = vmatpush1.bf16.msra.mxu0 %v3714
        %4716 = vmatprep.subr.bf16.mxu0 %v3719
        %4717 = vmatpush1.bf16.msra.mxu0 %v3718
        %4718 = vmatprep.subr.bf16.mxu0 %v3723
        %4719 = vmatpush1.bf16.msra.mxu0 %v3722
        %4720 = vmatprep.mubr.bf16.mxu0 %v2003
        %4721 = vmatmul.mubr.bf16.gmra.mrb[0].mxu0 %v2002
        %v4722 = vpop.f32.mrb[0].mxu0
        %v4723 = vadd.f32 %v4530, %v4722
        %v4724 = vpop.f32.mrb[0].mxu0
        %v4725 = vadd.f32 %v4532, %v4724
        %v4726 = vpop.f32.mrb[0].mxu0
        %v4727 = vadd.f32 %v4534, %v4726
        %v4728 = vpop.f32.mrb[0].mxu0
        %v4729 = vadd.f32 %v4536, %v4728
        %4730 = vmatprep.mubr.bf16.mxu0 %v2015
        %4731 = vmatmul.mubr.bf16.gmra.mrb[0].mxu0 %v2014
        %v4732 = vpop.f32.mrb[0].mxu0
        %v4733 = vadd.f32 %v4540, %v4732
        %v4734 = vpop.f32.mrb[0].mxu0
        %v4735 = vadd.f32 %v4542, %v4734
        %v4736 = vpop.f32.mrb[0].mxu0
        %v4737 = vadd.f32 %v4544, %v4736
        %v4738 = vpop.f32.mrb[0].mxu0
        %v4739 = vadd.f32 %v4546, %v4738
        %4740 = vmatprep.mubr.bf16.mxu0 %v2027
        %4741 = vmatmul.mubr.bf16.gmra.mrb[0].mxu0 %v2026
        %v4742 = vpop.f32.mrb[0].mxu0
        %v4743 = vadd.f32 %v4550, %v4742
        %v4744 = vpop.f32.mrb[0].mxu0
        %v4745 = vadd.f32 %v4552, %v4744
        %v4746 = vpop.f32.mrb[0].mxu0
        %v4747 = vadd.f32 %v4554, %v4746
        %v4748 = vpop.f32.mrb[0].mxu0
        %v4749 = vadd.f32 %v4556, %v4748
        %4750 = vmatprep.mubr.bf16.mxu0 %v2039
        %4751 = vmatmul.mubr.bf16.gmra.mrb[0].mxu0 %v2038
        %v4752 = vpop.f32.mrb[0].mxu0
        %v4753 = vadd.f32 %v4560, %v4752
        %v4754 = vpop.f32.mrb[0].mxu0
        %v4755 = vadd.f32 %v4562, %v4754
        %v4756 = vpop.f32.mrb[0].mxu0
        %v4757 = vadd.f32 %v4564, %v4756
        %v4758 = vpop.f32.mrb[0].mxu0
        %v4759 = vadd.f32 %v4566, %v4758
        %4760 = vmatprep.mubr.bf16.mxu0 %v2051
        %4761 = vmatmul.mubr.bf16.gmra.mrb[0].mxu0 %v2050
        %v4762 = vpop.f32.mrb[0].mxu0
        %v4763 = vadd.f32 %v4570, %v4762
        %v4764 = vpop.f32.mrb[0].mxu0
        %v4765 = vadd.f32 %v4572, %v4764
        %v4766 = vpop.f32.mrb[0].mxu0
        %v4767 = vadd.f32 %v4574, %v4766
        %v4768 = vpop.f32.mrb[0].mxu0
        %v4769 = vadd.f32 %v4576, %v4768
        %4770 = vmatprep.mubr.bf16.mxu0 %v2063
        %4771 = vmatmul.mubr.bf16.gmra.mrb[0].mxu0 %v2062
        %v4772 = vpop.f32.mrb[0].mxu0
        %v4773 = vadd.f32 %v4580, %v4772
        %v4774 = vpop.f32.mrb[0].mxu0
        %v4775 = vadd.f32 %v4582, %v4774
        %v4776 = vpop.f32.mrb[0].mxu0
        %v4777 = vadd.f32 %v4584, %v4776
        %v4778 = vpop.f32.mrb[0].mxu0
        %v4779 = vadd.f32 %v4586, %v4778
        %4780 = vmatprep.mubr.bf16.mxu0 %v2075
        %4781 = vmatmul.mubr.bf16.gmra.mrb[0].mxu0 %v2074
        %v4782 = vpop.f32.mrb[0].mxu0
        %v4783 = vadd.f32 %v4590, %v4782
        %v4784 = vpop.f32.mrb[0].mxu0
        %v4785 = vadd.f32 %v4592, %v4784
        %v4786 = vpop.f32.mrb[0].mxu0
        %v4787 = vadd.f32 %v4594, %v4786
        %v4788 = vpop.f32.mrb[0].mxu0
        %v4789 = vadd.f32 %v4596, %v4788
        %4790 = vmatprep.mubr.bf16.mxu0 %v2087
        %4791 = vmatmul.mubr.bf16.gmra.mrb[0].mxu0 %v2086
        %v4792 = vpop.f32.mrb[0].mxu0
        %v4793 = vadd.f32 %v4600, %v4792
        %v4794 = vpop.f32.mrb[0].mxu0
        %v4795 = vadd.f32 %v4602, %v4794
        %v4796 = vpop.f32.mrb[0].mxu0
        %v4797 = vadd.f32 %v4604, %v4796
        %v4798 = vpop.f32.mrb[0].mxu0
        %v4799 = vadd.f32 %v4606, %v4798
        %4800 = vmatprep.mubr.bf16.mxu0 %v2099
        %4801 = vmatmul.mubr.bf16.gmra.mrb[0].mxu0 %v2098
        %v4802 = vpop.f32.mrb[0].mxu0
        %v4803 = vadd.f32 %v4610, %v4802
        %v4804 = vpop.f32.mrb[0].mxu0
        %v4805 = vadd.f32 %v4612, %v4804
        %v4806 = vpop.f32.mrb[0].mxu0
        %v4807 = vadd.f32 %v4614, %v4806
        %v4808 = vpop.f32.mrb[0].mxu0
        %v4809 = vadd.f32 %v4616, %v4808
        %4810 = vmatprep.mubr.bf16.mxu0 %v2111
        %4811 = vmatmul.mubr.bf16.gmra.mrb[0].mxu0 %v2110
        %v4812 = vpop.f32.mrb[0].mxu0
        %v4813 = vadd.f32 %v4620, %v4812
        %v4814 = vpop.f32.mrb[0].mxu0
        %v4815 = vadd.f32 %v4622, %v4814
        %v4816 = vpop.f32.mrb[0].mxu0
        %v4817 = vadd.f32 %v4624, %v4816
        %v4818 = vpop.f32.mrb[0].mxu0
        %v4819 = vadd.f32 %v4626, %v4818
        %4820 = vmatprep.mubr.bf16.mxu0 %v2123
        %4821 = vmatmul.mubr.bf16.gmra.mrb[0].mxu0 %v2122
        %v4822 = vpop.f32.mrb[0].mxu0
        %v4823 = vadd.f32 %v4630, %v4822
        %v4824 = vpop.f32.mrb[0].mxu0
        %v4825 = vadd.f32 %v4632, %v4824
        %v4826 = vpop.f32.mrb[0].mxu0
        %v4827 = vadd.f32 %v4634, %v4826
        %v4828 = vpop.f32.mrb[0].mxu0
        %v4829 = vadd.f32 %v4636, %v4828
        %4830 = vmatprep.mubr.bf16.mxu0 %v2135
        %4831 = vmatmul.mubr.bf16.gmra.mrb[0].mxu0 %v2134
        %v4832 = vpop.f32.mrb[0].mxu0
        %v4833 = vadd.f32 %v4640, %v4832
        %v4834 = vpop.f32.mrb[0].mxu0
        %v4835 = vadd.f32 %v4642, %v4834
        %v4836 = vpop.f32.mrb[0].mxu0
        %v4837 = vadd.f32 %v4644, %v4836
        %v4838 = vpop.f32.mrb[0].mxu0
        %v4839 = vadd.f32 %v4646, %v4838
        %4840 = vmatprep.mubr.bf16.mxu0 %v2147
        %4841 = vmatmul.mubr.bf16.gmra.mrb[0].mxu0 %v2146
        %v4842 = vpop.f32.mrb[0].mxu0
        %v4843 = vadd.f32 %v4650, %v4842
        %v4844 = vpop.f32.mrb[0].mxu0
        %v4845 = vadd.f32 %v4652, %v4844
        %v4846 = vpop.f32.mrb[0].mxu0
        %v4847 = vadd.f32 %v4654, %v4846
        %v4848 = vpop.f32.mrb[0].mxu0
        %v4849 = vadd.f32 %v4656, %v4848
        %4850 = vmatprep.mubr.bf16.mxu0 %v2159
        %4851 = vmatmul.mubr.bf16.gmra.mrb[0].mxu0 %v2158
        %v4852 = vpop.f32.mrb[0].mxu0
        %v4853 = vadd.f32 %v4660, %v4852
        %v4854 = vpop.f32.mrb[0].mxu0
        %v4855 = vadd.f32 %v4662, %v4854
        %v4856 = vpop.f32.mrb[0].mxu0
        %v4857 = vadd.f32 %v4664, %v4856
        %v4858 = vpop.f32.mrb[0].mxu0
        %v4859 = vadd.f32 %v4666, %v4858
        %4860 = vmatprep.mubr.bf16.mxu0 %v2171
        %4861 = vmatmul.mubr.bf16.gmra.mrb[0].mxu0 %v2170
        %v4862 = vpop.f32.mrb[0].mxu0
        %v4863 = vadd.f32 %v4670, %v4862
        %v4864 = vpop.f32.mrb[0].mxu0
        %v4865 = vadd.f32 %v4672, %v4864
        %v4866 = vpop.f32.mrb[0].mxu0
        %v4867 = vadd.f32 %v4674, %v4866
        %v4868 = vpop.f32.mrb[0].mxu0
        %v4869 = vadd.f32 %v4676, %v4868
        %4870 = vmatprep.mubr.bf16.mxu0 %v2183
        %4871 = vmatmul.mubr.bf16.gmra.mrb[0].mxu0 %v2182
        %v4872 = vpop.f32.mrb[0].mxu0
        %v4873 = vadd.f32 %v4680, %v4872
        %v4874 = vpop.f32.mrb[0].mxu0
        %v4875 = vadd.f32 %v4682, %v4874
        %v4876 = vpop.f32.mrb[0].mxu0
        %v4877 = vadd.f32 %v4684, %v4876
        %v4878 = vpop.f32.mrb[0].mxu0
        %v4879 = vadd.f32 %v4686, %v4878
        %4880 = vdwg.mxu0
        %4881 = vmatprep.subr.bf16.mxu0 %v3727
        %4882 = vmatpush1.bf16.msra.mxu0 %v3726
        %4883 = vmatprep.subr.bf16.mxu0 %v3731
        %4884 = vmatpush1.bf16.msra.mxu0 %v3730
        %4885 = vmatprep.subr.bf16.mxu0 %v3735
        %4886 = vmatpush1.bf16.msra.mxu0 %v3734
        %4887 = vmatprep.subr.bf16.mxu0 %v3739
        %4888 = vmatpush1.bf16.msra.mxu0 %v3738
        %4889 = vmatprep.subr.bf16.mxu0 %v3743
        %4890 = vmatpush1.bf16.msra.mxu0 %v3742
        %4891 = vmatprep.subr.bf16.mxu0 %v3747
        %4892 = vmatpush1.bf16.msra.mxu0 %v3746
        %4893 = vmatprep.subr.bf16.mxu0 %v3751
        %4894 = vmatpush1.bf16.msra.mxu0 %v3750
        %4895 = vmatprep.subr.bf16.mxu0 %v3755
        %4896 = vmatpush1.bf16.msra.mxu0 %v3754
        %4897 = vmatprep.subr.bf16.mxu0 %v3759
        %4898 = vmatpush1.bf16.msra.mxu0 %v3758
        %4899 = vmatprep.subr.bf16.mxu0 %v3763
        %4900 = vmatpush1.bf16.msra.mxu0 %v3762
        %4901 = vmatprep.subr.bf16.mxu0 %v3767
        %4902 = vmatpush1.bf16.msra.mxu0 %v3766
        %4903 = vmatprep.subr.bf16.mxu0 %v3771
        %4904 = vmatpush1.bf16.msra.mxu0 %v3770
        %4905 = vmatprep.subr.bf16.mxu0 %v3775
        %4906 = vmatpush1.bf16.msra.mxu0 %v3774
        %4907 = vmatprep.subr.bf16.mxu0 %v3779
        %4908 = vmatpush1.bf16.msra.mxu0 %v3778
        %4909 = vmatprep.subr.bf16.mxu0 %v3783
        %4910 = vmatpush1.bf16.msra.mxu0 %v3782
        %4911 = vmatprep.subr.bf16.mxu0 %v3787
        %4912 = vmatpush1.bf16.msra.mxu0 %v3786
        %4913 = vmatprep.mubr.bf16.mxu0 %v2005
        %4914 = vmatmul.mubr.bf16.gmra.mrb[0].mxu0 %v2004
        %v4915 = vpop.f32.mrb[0].mxu0
        %v4916 = vadd.f32 %v4723, %v4915
        %v4917 = vpop.f32.mrb[0].mxu0
        %v4918 = vadd.f32 %v4725, %v4917
        %v4919 = vpop.f32.mrb[0].mxu0
        %v4920 = vadd.f32 %v4727, %v4919
        %v4921 = vpop.f32.mrb[0].mxu0
        %v4922 = vadd.f32 %v4729, %v4921
        %4923 = vmatprep.mubr.bf16.mxu0 %v2017
        %4924 = vmatmul.mubr.bf16.gmra.mrb[0].mxu0 %v2016
        %v4925 = vpop.f32.mrb[0].mxu0
        %v4926 = vadd.f32 %v4733, %v4925
        %v4927 = vpop.f32.mrb[0].mxu0
        %v4928 = vadd.f32 %v4735, %v4927
        %v4929 = vpop.f32.mrb[0].mxu0
        %v4930 = vadd.f32 %v4737, %v4929
        %v4931 = vpop.f32.mrb[0].mxu0
        %v4932 = vadd.f32 %v4739, %v4931
        %4933 = vmatprep.mubr.bf16.mxu0 %v2029
        %4934 = vmatmul.mubr.bf16.gmra.mrb[0].mxu0 %v2028
        %v4935 = vpop.f32.mrb[0].mxu0
        %v4936 = vadd.f32 %v4743, %v4935
        %v4937 = vpop.f32.mrb[0].mxu0
        %v4938 = vadd.f32 %v4745, %v4937
        %v4939 = vpop.f32.mrb[0].mxu0
        %v4940 = vadd.f32 %v4747, %v4939
        %v4941 = vpop.f32.mrb[0].mxu0
        %v4942 = vadd.f32 %v4749, %v4941
        %4943 = vmatprep.mubr.bf16.mxu0 %v2041
        %4944 = vmatmul.mubr.bf16.gmra.mrb[0].mxu0 %v2040
        %v4945 = vpop.f32.mrb[0].mxu0
        %v4946 = vadd.f32 %v4753, %v4945
        %v4947 = vpop.f32.mrb[0].mxu0
        %v4948 = vadd.f32 %v4755, %v4947
        %v4949 = vpop.f32.mrb[0].mxu0
        %v4950 = vadd.f32 %v4757, %v4949
        %v4951 = vpop.f32.mrb[0].mxu0
        %v4952 = vadd.f32 %v4759, %v4951
        %4953 = vmatprep.mubr.bf16.mxu0 %v2053
        %4954 = vmatmul.mubr.bf16.gmra.mrb[0].mxu0 %v2052
        %v4955 = vpop.f32.mrb[0].mxu0
        %v4956 = vadd.f32 %v4763, %v4955
        %v4957 = vpop.f32.mrb[0].mxu0
        %v4958 = vadd.f32 %v4765, %v4957
        %v4959 = vpop.f32.mrb[0].mxu0
        %v4960 = vadd.f32 %v4767, %v4959
        %v4961 = vpop.f32.mrb[0].mxu0
        %v4962 = vadd.f32 %v4769, %v4961
        %4963 = vmatprep.mubr.bf16.mxu0 %v2065
        %4964 = vmatmul.mubr.bf16.gmra.mrb[0].mxu0 %v2064
        %v4965 = vpop.f32.mrb[0].mxu0
        %v4966 = vadd.f32 %v4773, %v4965
        %v4967 = vpop.f32.mrb[0].mxu0
        %v4968 = vadd.f32 %v4775, %v4967
        %v4969 = vpop.f32.mrb[0].mxu0
        %v4970 = vadd.f32 %v4777, %v4969
        %v4971 = vpop.f32.mrb[0].mxu0
        %v4972 = vadd.f32 %v4779, %v4971
        %4973 = vmatprep.mubr.bf16.mxu0 %v2077
        %4974 = vmatmul.mubr.bf16.gmra.mrb[0].mxu0 %v2076
        %v4975 = vpop.f32.mrb[0].mxu0
        %v4976 = vadd.f32 %v4783, %v4975
        %v4977 = vpop.f32.mrb[0].mxu0
        %v4978 = vadd.f32 %v4785, %v4977
        %v4979 = vpop.f32.mrb[0].mxu0
        %v4980 = vadd.f32 %v4787, %v4979
        %v4981 = vpop.f32.mrb[0].mxu0
        %v4982 = vadd.f32 %v4789, %v4981
        %4983 = vmatprep.mubr.bf16.mxu0 %v2089
        %4984 = vmatmul.mubr.bf16.gmra.mrb[0].mxu0 %v2088
        %v4985 = vpop.f32.mrb[0].mxu0
        %v4986 = vadd.f32 %v4793, %v4985
        %v4987 = vpop.f32.mrb[0].mxu0
        %v4988 = vadd.f32 %v4795, %v4987
        %v4989 = vpop.f32.mrb[0].mxu0
        %v4990 = vadd.f32 %v4797, %v4989
        %v4991 = vpop.f32.mrb[0].mxu0
        %v4992 = vadd.f32 %v4799, %v4991
        %4993 = vmatprep.mubr.bf16.mxu0 %v2101
        %4994 = vmatmul.mubr.bf16.gmra.mrb[0].mxu0 %v2100
        %v4995 = vpop.f32.mrb[0].mxu0
        %v4996 = vadd.f32 %v4803, %v4995
        %v4997 = vpop.f32.mrb[0].mxu0
        %v4998 = vadd.f32 %v4805, %v4997
        %v4999 = vpop.f32.mrb[0].mxu0
        %v5000 = vadd.f32 %v4807, %v4999
        %v5001 = vpop.f32.mrb[0].mxu0
        %v5002 = vadd.f32 %v4809, %v5001
        %5003 = vmatprep.mubr.bf16.mxu0 %v2113
        %5004 = vmatmul.mubr.bf16.gmra.mrb[0].mxu0 %v2112
        %v5005 = vpop.f32.mrb[0].mxu0
        %v5006 = vadd.f32 %v4813, %v5005
        %v5007 = vpop.f32.mrb[0].mxu0
        %v5008 = vadd.f32 %v4815, %v5007
        %v5009 = vpop.f32.mrb[0].mxu0
        %v5010 = vadd.f32 %v4817, %v5009
        %v5011 = vpop.f32.mrb[0].mxu0
        %v5012 = vadd.f32 %v4819, %v5011
        %5013 = vmatprep.mubr.bf16.mxu0 %v2125
        %5014 = vmatmul.mubr.bf16.gmra.mrb[0].mxu0 %v2124
        %v5015 = vpop.f32.mrb[0].mxu0
        %v5016 = vadd.f32 %v4823, %v5015
        %v5017 = vpop.f32.mrb[0].mxu0
        %v5018 = vadd.f32 %v4825, %v5017
        %v5019 = vpop.f32.mrb[0].mxu0
        %v5020 = vadd.f32 %v4827, %v5019
        %v5021 = vpop.f32.mrb[0].mxu0
        %v5022 = vadd.f32 %v4829, %v5021
        %5023 = vmatprep.mubr.bf16.mxu0 %v2137
        %5024 = vmatmul.mubr.bf16.gmra.mrb[0].mxu0 %v2136
        %v5025 = vpop.f32.mrb[0].mxu0
        %v5026 = vadd.f32 %v4833, %v5025
        %v5027 = vpop.f32.mrb[0].mxu0
        %v5028 = vadd.f32 %v4835, %v5027
        %v5029 = vpop.f32.mrb[0].mxu0
        %v5030 = vadd.f32 %v4837, %v5029
        %v5031 = vpop.f32.mrb[0].mxu0
        %v5032 = vadd.f32 %v4839, %v5031
        %5033 = vmatprep.mubr.bf16.mxu0 %v2149
        %5034 = vmatmul.mubr.bf16.gmra.mrb[0].mxu0 %v2148
        %v5035 = vpop.f32.mrb[0].mxu0
        %v5036 = vadd.f32 %v4843, %v5035
        %v5037 = vpop.f32.mrb[0].mxu0
        %v5038 = vadd.f32 %v4845, %v5037
        %v5039 = vpop.f32.mrb[0].mxu0
        %v5040 = vadd.f32 %v4847, %v5039
        %v5041 = vpop.f32.mrb[0].mxu0
        %v5042 = vadd.f32 %v4849, %v5041
        %5043 = vmatprep.mubr.bf16.mxu0 %v2161
        %5044 = vmatmul.mubr.bf16.gmra.mrb[0].mxu0 %v2160
        %v5045 = vpop.f32.mrb[0].mxu0
        %v5046 = vadd.f32 %v4853, %v5045
        %v5047 = vpop.f32.mrb[0].mxu0
        %v5048 = vadd.f32 %v4855, %v5047
        %v5049 = vpop.f32.mrb[0].mxu0
        %v5050 = vadd.f32 %v4857, %v5049
        %v5051 = vpop.f32.mrb[0].mxu0
        %v5052 = vadd.f32 %v4859, %v5051
        %5053 = vmatprep.mubr.bf16.mxu0 %v2173
        %5054 = vmatmul.mubr.bf16.gmra.mrb[0].mxu0 %v2172
        %v5055 = vpop.f32.mrb[0].mxu0
        %v5056 = vadd.f32 %v4863, %v5055
        %v5057 = vpop.f32.mrb[0].mxu0
        %v5058 = vadd.f32 %v4865, %v5057
        %v5059 = vpop.f32.mrb[0].mxu0
        %v5060 = vadd.f32 %v4867, %v5059
        %v5061 = vpop.f32.mrb[0].mxu0
        %v5062 = vadd.f32 %v4869, %v5061
        %5063 = vmatprep.mubr.bf16.mxu0 %v2185
        %5064 = vmatmul.mubr.bf16.gmra.mrb[0].mxu0 %v2184
        %v5065 = vpop.f32.mrb[0].mxu0
        %v5066 = vadd.f32 %v4873, %v5065
        %v5067 = vpop.f32.mrb[0].mxu0
        %v5068 = vadd.f32 %v4875, %v5067
        %v5069 = vpop.f32.mrb[0].mxu0
        %v5070 = vadd.f32 %v4877, %v5069
        %v5071 = vpop.f32.mrb[0].mxu0
        %v5072 = vadd.f32 %v4879, %v5071
        %5073 = vdwg.mxu0
        %5074 = vmatprep.subr.bf16.mxu0 %v3791
        %5075 = vmatpush1.bf16.msra.mxu0 %v3790
        %5076 = vmatprep.subr.bf16.mxu0 %v3795
        %5077 = vmatpush1.bf16.msra.mxu0 %v3794
        %5078 = vmatprep.subr.bf16.mxu0 %v3799
        %5079 = vmatpush1.bf16.msra.mxu0 %v3798
        %5080 = vmatprep.subr.bf16.mxu0 %v3803
        %5081 = vmatpush1.bf16.msra.mxu0 %v3802
        %5082 = vmatprep.subr.bf16.mxu0 %v3807
        %5083 = vmatpush1.bf16.msra.mxu0 %v3806
        %5084 = vmatprep.subr.bf16.mxu0 %v3811
        %5085 = vmatpush1.bf16.msra.mxu0 %v3810
        %5086 = vmatprep.subr.bf16.mxu0 %v3815
        %5087 = vmatpush1.bf16.msra.mxu0 %v3814
        %5088 = vmatprep.subr.bf16.mxu0 %v3819
        %5089 = vmatpush1.bf16.msra.mxu0 %v3818
        %5090 = vmatprep.subr.bf16.mxu0 %v3823
        %5091 = vmatpush1.bf16.msra.mxu0 %v3822
        %5092 = vmatprep.subr.bf16.mxu0 %v3827
        %5093 = vmatpush1.bf16.msra.mxu0 %v3826
        %5094 = vmatprep.subr.bf16.mxu0 %v3831
        %5095 = vmatpush1.bf16.msra.mxu0 %v3830
        %5096 = vmatprep.subr.bf16.mxu0 %v3835
        %5097 = vmatpush1.bf16.msra.mxu0 %v3834
        %5098 = vmatprep.subr.bf16.mxu0 %v3839
        %5099 = vmatpush1.bf16.msra.mxu0 %v3838
        %5100 = vmatprep.subr.bf16.mxu0 %v3843
        %5101 = vmatpush1.bf16.msra.mxu0 %v3842
        %5102 = vmatprep.subr.bf16.mxu0 %v3847
        %5103 = vmatpush1.bf16.msra.mxu0 %v3846
        %5104 = vmatprep.subr.bf16.mxu0 %v3851
        %5105 = vmatpush1.bf16.msra.mxu0 %v3850
        %5106 = vmatprep.mubr.bf16.mxu0 %v2007
        %5107 = vmatmul.mubr.bf16.gmra.mrb[0].mxu0 %v2006
        %v5108 = vpop.f32.mrb[0].mxu0
        %v5109 = vadd.f32 %v4916, %v5108
        %v5110 = vpop.f32.mrb[0].mxu0
        %v5111 = vadd.f32 %v4918, %v5110
        %v5112 = vpop.f32.mrb[0].mxu0
        %v5113 = vadd.f32 %v4920, %v5112
        %v5114 = vpop.f32.mrb[0].mxu0
        %v5115 = vadd.f32 %v4922, %v5114
        %5116 = vmatprep.mubr.bf16.mxu0 %v2019
        %5117 = vmatmul.mubr.bf16.gmra.mrb[0].mxu0 %v2018
        %v5118 = vpop.f32.mrb[0].mxu0
        %v5119 = vadd.f32 %v4926, %v5118
        %v5120 = vpop.f32.mrb[0].mxu0
        %v5121 = vadd.f32 %v4928, %v5120
        %v5122 = vpop.f32.mrb[0].mxu0
        %v5123 = vadd.f32 %v4930, %v5122
        %v5124 = vpop.f32.mrb[0].mxu0
        %v5125 = vadd.f32 %v4932, %v5124
        %5126 = vmatprep.mubr.bf16.mxu0 %v2031
        %5127 = vmatmul.mubr.bf16.gmra.mrb[0].mxu0 %v2030
        %v5128 = vpop.f32.mrb[0].mxu0
        %v5129 = vadd.f32 %v4936, %v5128
        %v5130 = vpop.f32.mrb[0].mxu0
        %v5131 = vadd.f32 %v4938, %v5130
        %v5132 = vpop.f32.mrb[0].mxu0
        %v5133 = vadd.f32 %v4940, %v5132
        %v5134 = vpop.f32.mrb[0].mxu0
        %v5135 = vadd.f32 %v4942, %v5134
        %5136 = vmatprep.mubr.bf16.mxu0 %v2043
        %5137 = vmatmul.mubr.bf16.gmra.mrb[0].mxu0 %v2042
        %v5138 = vpop.f32.mrb[0].mxu0
        %v5139 = vadd.f32 %v4946, %v5138
        %v5140 = vpop.f32.mrb[0].mxu0
        %v5141 = vadd.f32 %v4948, %v5140
        %v5142 = vpop.f32.mrb[0].mxu0
        %v5143 = vadd.f32 %v4950, %v5142
        %v5144 = vpop.f32.mrb[0].mxu0
        %v5145 = vadd.f32 %v4952, %v5144
        %5146 = vmatprep.mubr.bf16.mxu0 %v2055
        %5147 = vmatmul.mubr.bf16.gmra.mrb[0].mxu0 %v2054
        %v5148 = vpop.f32.mrb[0].mxu0
        %v5149 = vadd.f32 %v4956, %v5148
        %v5150 = vpop.f32.mrb[0].mxu0
        %v5151 = vadd.f32 %v4958, %v5150
        %v5152 = vpop.f32.mrb[0].mxu0
        %v5153 = vadd.f32 %v4960, %v5152
        %v5154 = vpop.f32.mrb[0].mxu0
        %v5155 = vadd.f32 %v4962, %v5154
        %5156 = vmatprep.mubr.bf16.mxu0 %v2067
        %5157 = vmatmul.mubr.bf16.gmra.mrb[0].mxu0 %v2066
        %v5158 = vpop.f32.mrb[0].mxu0
        %v5159 = vadd.f32 %v4966, %v5158
        %v5160 = vpop.f32.mrb[0].mxu0
        %v5161 = vadd.f32 %v4968, %v5160
        %v5162 = vpop.f32.mrb[0].mxu0
        %v5163 = vadd.f32 %v4970, %v5162
        %v5164 = vpop.f32.mrb[0].mxu0
        %v5165 = vadd.f32 %v4972, %v5164
        %5166 = vmatprep.mubr.bf16.mxu0 %v2079
        %5167 = vmatmul.mubr.bf16.gmra.mrb[0].mxu0 %v2078
        %v5168 = vpop.f32.mrb[0].mxu0
        %v5169 = vadd.f32 %v4976, %v5168
        %v5170 = vpop.f32.mrb[0].mxu0
        %v5171 = vadd.f32 %v4978, %v5170
        %v5172 = vpop.f32.mrb[0].mxu0
        %v5173 = vadd.f32 %v4980, %v5172
        %v5174 = vpop.f32.mrb[0].mxu0
        %v5175 = vadd.f32 %v4982, %v5174
        %5176 = vmatprep.mubr.bf16.mxu0 %v2091
        %5177 = vmatmul.mubr.bf16.gmra.mrb[0].mxu0 %v2090
        %v5178 = vpop.f32.mrb[0].mxu0
        %v5179 = vadd.f32 %v4986, %v5178
        %v5180 = vpop.f32.mrb[0].mxu0
        %v5181 = vadd.f32 %v4988, %v5180
        %v5182 = vpop.f32.mrb[0].mxu0
        %v5183 = vadd.f32 %v4990, %v5182
        %v5184 = vpop.f32.mrb[0].mxu0
        %v5185 = vadd.f32 %v4992, %v5184
        %5186 = vmatprep.mubr.bf16.mxu0 %v2103
        %5187 = vmatmul.mubr.bf16.gmra.mrb[0].mxu0 %v2102
        %v5188 = vpop.f32.mrb[0].mxu0
        %v5189 = vadd.f32 %v4996, %v5188
        %v5190 = vpop.f32.mrb[0].mxu0
        %v5191 = vadd.f32 %v4998, %v5190
        %v5192 = vpop.f32.mrb[0].mxu0
        %v5193 = vadd.f32 %v5000, %v5192
        %v5194 = vpop.f32.mrb[0].mxu0
        %v5195 = vadd.f32 %v5002, %v5194
        %5196 = vmatprep.mubr.bf16.mxu0 %v2115
        %5197 = vmatmul.mubr.bf16.gmra.mrb[0].mxu0 %v2114
        %v5198 = vpop.f32.mrb[0].mxu0
        %v5199 = vadd.f32 %v5006, %v5198
        %v5200 = vpop.f32.mrb[0].mxu0
        %v5201 = vadd.f32 %v5008, %v5200
        %v5202 = vpop.f32.mrb[0].mxu0
        %v5203 = vadd.f32 %v5010, %v5202
        %v5204 = vpop.f32.mrb[0].mxu0
        %v5205 = vadd.f32 %v5012, %v5204
        %5206 = vmatprep.mubr.bf16.mxu0 %v2127
        %5207 = vmatmul.mubr.bf16.gmra.mrb[0].mxu0 %v2126
        %v5208 = vpop.f32.mrb[0].mxu0
        %v5209 = vadd.f32 %v5016, %v5208
        %v5210 = vpop.f32.mrb[0].mxu0
        %v5211 = vadd.f32 %v5018, %v5210
        %v5212 = vpop.f32.mrb[0].mxu0
        %v5213 = vadd.f32 %v5020, %v5212
        %v5214 = vpop.f32.mrb[0].mxu0
        %v5215 = vadd.f32 %v5022, %v5214
        %5216 = vmatprep.mubr.bf16.mxu0 %v2139
        %5217 = vmatmul.mubr.bf16.gmra.mrb[0].mxu0 %v2138
        %v5218 = vpop.f32.mrb[0].mxu0
        %v5219 = vadd.f32 %v5026, %v5218
        %v5220 = vpop.f32.mrb[0].mxu0
        %v5221 = vadd.f32 %v5028, %v5220
        %v5222 = vpop.f32.mrb[0].mxu0
        %v5223 = vadd.f32 %v5030, %v5222
        %v5224 = vpop.f32.mrb[0].mxu0
        %v5225 = vadd.f32 %v5032, %v5224
        %5226 = vmatprep.mubr.bf16.mxu0 %v2151
        %5227 = vmatmul.mubr.bf16.gmra.mrb[0].mxu0 %v2150
        %v5228 = vpop.f32.mrb[0].mxu0
        %v5229 = vadd.f32 %v5036, %v5228
        %v5230 = vpop.f32.mrb[0].mxu0
        %v5231 = vadd.f32 %v5038, %v5230
        %v5232 = vpop.f32.mrb[0].mxu0
        %v5233 = vadd.f32 %v5040, %v5232
        %v5234 = vpop.f32.mrb[0].mxu0
        %v5235 = vadd.f32 %v5042, %v5234
        %5236 = vmatprep.mubr.bf16.mxu0 %v2163
        %5237 = vmatmul.mubr.bf16.gmra.mrb[0].mxu0 %v2162
        %v5238 = vpop.f32.mrb[0].mxu0
        %v5239 = vadd.f32 %v5046, %v5238
        %v5240 = vpop.f32.mrb[0].mxu0
        %v5241 = vadd.f32 %v5048, %v5240
        %v5242 = vpop.f32.mrb[0].mxu0
        %v5243 = vadd.f32 %v5050, %v5242
        %v5244 = vpop.f32.mrb[0].mxu0
        %v5245 = vadd.f32 %v5052, %v5244
        %5246 = vmatprep.mubr.bf16.mxu0 %v2175
        %5247 = vmatmul.mubr.bf16.gmra.mrb[0].mxu0 %v2174
        %v5248 = vpop.f32.mrb[0].mxu0
        %v5249 = vadd.f32 %v5056, %v5248
        %v5250 = vpop.f32.mrb[0].mxu0
        %v5251 = vadd.f32 %v5058, %v5250
        %v5252 = vpop.f32.mrb[0].mxu0
        %v5253 = vadd.f32 %v5060, %v5252
        %v5254 = vpop.f32.mrb[0].mxu0
        %v5255 = vadd.f32 %v5062, %v5254
        %5256 = vmatprep.mubr.bf16.mxu0 %v2187
        %5257 = vmatmul.mubr.bf16.gmra.mrb[0].mxu0 %v2186
        %v5258 = vpop.f32.mrb[0].mxu0
        %v5259 = vadd.f32 %v5066, %v5258
        %v5260 = vpop.f32.mrb[0].mxu0
        %v5261 = vadd.f32 %v5068, %v5260
        %v5262 = vpop.f32.mrb[0].mxu0
        %v5263 = vadd.f32 %v5070, %v5262
        %v5264 = vpop.f32.mrb[0].mxu0
        %v5265 = vadd.f32 %v5072, %v5264
        %5266 = vdwg.mxu0
        %5267 = vmatprep.subr.bf16.mxu0 %v3855
        %5268 = vmatpush1.bf16.msra.mxu0 %v3854
        %5269 = vmatprep.subr.bf16.mxu0 %v3859
        %5270 = vmatpush1.bf16.msra.mxu0 %v3858
        %5271 = vmatprep.subr.bf16.mxu0 %v3863
        %5272 = vmatpush1.bf16.msra.mxu0 %v3862
        %5273 = vmatprep.subr.bf16.mxu0 %v3867
        %5274 = vmatpush1.bf16.msra.mxu0 %v3866
        %5275 = vmatprep.subr.bf16.mxu0 %v3871
        %5276 = vmatpush1.bf16.msra.mxu0 %v3870
        %5277 = vmatprep.subr.bf16.mxu0 %v3875
        %5278 = vmatpush1.bf16.msra.mxu0 %v3874
        %5279 = vmatprep.subr.bf16.mxu0 %v3879
        %5280 = vmatpush1.bf16.msra.mxu0 %v3878
        %5281 = vmatprep.subr.bf16.mxu0 %v3883
        %5282 = vmatpush1.bf16.msra.mxu0 %v3882
        %5283 = vmatprep.subr.bf16.mxu0 %v3887
        %5284 = vmatpush1.bf16.msra.mxu0 %v3886
        %5285 = vmatprep.subr.bf16.mxu0 %v3891
        %5286 = vmatpush1.bf16.msra.mxu0 %v3890
        %5287 = vmatprep.subr.bf16.mxu0 %v3895
        %5288 = vmatpush1.bf16.msra.mxu0 %v3894
        %5289 = vmatprep.subr.bf16.mxu0 %v3899
        %5290 = vmatpush1.bf16.msra.mxu0 %v3898
        %5291 = vmatprep.subr.bf16.mxu0 %v3903
        %5292 = vmatpush1.bf16.msra.mxu0 %v3902
        %5293 = vmatprep.subr.bf16.mxu0 %v3907
        %5294 = vmatpush1.bf16.msra.mxu0 %v3906
        %5295 = vmatprep.subr.bf16.mxu0 %v3911
        %5296 = vmatpush1.bf16.msra.mxu0 %v3910
        %5297 = vmatprep.subr.bf16.mxu0 %v3915
        %5298 = vmatpush1.bf16.msra.mxu0 %v3914
        %5299 = vmatprep.mubr.bf16.mxu0 %v2009
        %5300 = vmatmul.mubr.bf16.gmra.mrb[0].mxu0 %v2008
        %v5301 = vpop.f32.mrb[0].mxu0
        %v5302 = vadd.f32 %v5109, %v5301
        %v5303 = vpop.f32.mrb[0].mxu0
        %v5304 = vadd.f32 %v5111, %v5303
        %v5305 = vpop.f32.mrb[0].mxu0
        %v5306 = vadd.f32 %v5113, %v5305
        %v5307 = vpop.f32.mrb[0].mxu0
        %v5308 = vadd.f32 %v5115, %v5307
        %5309 = vmatprep.mubr.bf16.mxu0 %v2021
        %5310 = vmatmul.mubr.bf16.gmra.mrb[0].mxu0 %v2020
        %v5311 = vpop.f32.mrb[0].mxu0
        %v5312 = vadd.f32 %v5119, %v5311
        %v5313 = vpop.f32.mrb[0].mxu0
        %v5314 = vadd.f32 %v5121, %v5313
        %v5315 = vpop.f32.mrb[0].mxu0
        %v5316 = vadd.f32 %v5123, %v5315
        %v5317 = vpop.f32.mrb[0].mxu0
        %v5318 = vadd.f32 %v5125, %v5317
        %5319 = vmatprep.mubr.bf16.mxu0 %v2033
        %5320 = vmatmul.mubr.bf16.gmra.mrb[0].mxu0 %v2032
        %v5321 = vpop.f32.mrb[0].mxu0
        %v5322 = vadd.f32 %v5129, %v5321
        %v5323 = vpop.f32.mrb[0].mxu0
        %v5324 = vadd.f32 %v5131, %v5323
        %v5325 = vpop.f32.mrb[0].mxu0
        %v5326 = vadd.f32 %v5133, %v5325
        %v5327 = vpop.f32.mrb[0].mxu0
        %v5328 = vadd.f32 %v5135, %v5327
        %5329 = vmatprep.mubr.bf16.mxu0 %v2045
        %5330 = vmatmul.mubr.bf16.gmra.mrb[0].mxu0 %v2044
        %v5331 = vpop.f32.mrb[0].mxu0
        %v5332 = vadd.f32 %v5139, %v5331
        %v5333 = vpop.f32.mrb[0].mxu0
        %v5334 = vadd.f32 %v5141, %v5333
        %v5335 = vpop.f32.mrb[0].mxu0
        %v5336 = vadd.f32 %v5143, %v5335
        %v5337 = vpop.f32.mrb[0].mxu0
        %v5338 = vadd.f32 %v5145, %v5337
        %5339 = vmatprep.mubr.bf16.mxu0 %v2057
        %5340 = vmatmul.mubr.bf16.gmra.mrb[0].mxu0 %v2056
        %v5341 = vpop.f32.mrb[0].mxu0
        %v5342 = vadd.f32 %v5149, %v5341
        %v5343 = vpop.f32.mrb[0].mxu0
        %v5344 = vadd.f32 %v5151, %v5343
        %v5345 = vpop.f32.mrb[0].mxu0
        %v5346 = vadd.f32 %v5153, %v5345
        %v5347 = vpop.f32.mrb[0].mxu0
        %v5348 = vadd.f32 %v5155, %v5347
        %5349 = vmatprep.mubr.bf16.mxu0 %v2069
        %5350 = vmatmul.mubr.bf16.gmra.mrb[0].mxu0 %v2068
        %v5351 = vpop.f32.mrb[0].mxu0
        %v5352 = vadd.f32 %v5159, %v5351
        %v5353 = vpop.f32.mrb[0].mxu0
        %v5354 = vadd.f32 %v5161, %v5353
        %v5355 = vpop.f32.mrb[0].mxu0
        %v5356 = vadd.f32 %v5163, %v5355
        %v5357 = vpop.f32.mrb[0].mxu0
        %v5358 = vadd.f32 %v5165, %v5357
        %5359 = vmatprep.mubr.bf16.mxu0 %v2081
        %5360 = vmatmul.mubr.bf16.gmra.mrb[0].mxu0 %v2080
        %v5361 = vpop.f32.mrb[0].mxu0
        %v5362 = vadd.f32 %v5169, %v5361
        %v5363 = vpop.f32.mrb[0].mxu0
        %v5364 = vadd.f32 %v5171, %v5363
        %v5365 = vpop.f32.mrb[0].mxu0
        %v5366 = vadd.f32 %v5173, %v5365
        %v5367 = vpop.f32.mrb[0].mxu0
        %v5368 = vadd.f32 %v5175, %v5367
        %5369 = vmatprep.mubr.bf16.mxu0 %v2093
        %5370 = vmatmul.mubr.bf16.gmra.mrb[0].mxu0 %v2092
        %v5371 = vpop.f32.mrb[0].mxu0
        %v5372 = vadd.f32 %v5179, %v5371
        %v5373 = vpop.f32.mrb[0].mxu0
        %v5374 = vadd.f32 %v5181, %v5373
        %v5375 = vpop.f32.mrb[0].mxu0
        %v5376 = vadd.f32 %v5183, %v5375
        %v5377 = vpop.f32.mrb[0].mxu0
        %v5378 = vadd.f32 %v5185, %v5377
        %5379 = vmatprep.mubr.bf16.mxu0 %v2105
        %5380 = vmatmul.mubr.bf16.gmra.mrb[0].mxu0 %v2104
        %v5381 = vpop.f32.mrb[0].mxu0
        %v5382 = vadd.f32 %v5189, %v5381
        %v5383 = vpop.f32.mrb[0].mxu0
        %v5384 = vadd.f32 %v5191, %v5383
        %v5385 = vpop.f32.mrb[0].mxu0
        %v5386 = vadd.f32 %v5193, %v5385
        %v5387 = vpop.f32.mrb[0].mxu0
        %v5388 = vadd.f32 %v5195, %v5387
        %5389 = vmatprep.mubr.bf16.mxu0 %v2117
        %5390 = vmatmul.mubr.bf16.gmra.mrb[0].mxu0 %v2116
        %v5391 = vpop.f32.mrb[0].mxu0
        %v5392 = vadd.f32 %v5199, %v5391
        %v5393 = vpop.f32.mrb[0].mxu0
        %v5394 = vadd.f32 %v5201, %v5393
        %v5395 = vpop.f32.mrb[0].mxu0
        %v5396 = vadd.f32 %v5203, %v5395
        %v5397 = vpop.f32.mrb[0].mxu0
        %v5398 = vadd.f32 %v5205, %v5397
        %5399 = vmatprep.mubr.bf16.mxu0 %v2129
        %5400 = vmatmul.mubr.bf16.gmra.mrb[0].mxu0 %v2128
        %v5401 = vpop.f32.mrb[0].mxu0
        %v5402 = vadd.f32 %v5209, %v5401
        %v5403 = vpop.f32.mrb[0].mxu0
        %v5404 = vadd.f32 %v5211, %v5403
        %v5405 = vpop.f32.mrb[0].mxu0
        %v5406 = vadd.f32 %v5213, %v5405
        %v5407 = vpop.f32.mrb[0].mxu0
        %v5408 = vadd.f32 %v5215, %v5407
        %5409 = vmatprep.mubr.bf16.mxu0 %v2141
        %5410 = vmatmul.mubr.bf16.gmra.mrb[0].mxu0 %v2140
        %v5411 = vpop.f32.mrb[0].mxu0
        %v5412 = vadd.f32 %v5219, %v5411
        %v5413 = vpop.f32.mrb[0].mxu0
        %v5414 = vadd.f32 %v5221, %v5413
        %v5415 = vpop.f32.mrb[0].mxu0
        %v5416 = vadd.f32 %v5223, %v5415
        %v5417 = vpop.f32.mrb[0].mxu0
        %v5418 = vadd.f32 %v5225, %v5417
        %5419 = vmatprep.mubr.bf16.mxu0 %v2153
        %5420 = vmatmul.mubr.bf16.gmra.mrb[0].mxu0 %v2152
        %v5421 = vpop.f32.mrb[0].mxu0
        %v5422 = vadd.f32 %v5229, %v5421
        %v5423 = vpop.f32.mrb[0].mxu0
        %v5424 = vadd.f32 %v5231, %v5423
        %v5425 = vpop.f32.mrb[0].mxu0
        %v5426 = vadd.f32 %v5233, %v5425
        %v5427 = vpop.f32.mrb[0].mxu0
        %v5428 = vadd.f32 %v5235, %v5427
        %5429 = vmatprep.mubr.bf16.mxu0 %v2165
        %5430 = vmatmul.mubr.bf16.gmra.mrb[0].mxu0 %v2164
        %v5431 = vpop.f32.mrb[0].mxu0
        %v5432 = vadd.f32 %v5239, %v5431
        %v5433 = vpop.f32.mrb[0].mxu0
        %v5434 = vadd.f32 %v5241, %v5433
        %v5435 = vpop.f32.mrb[0].mxu0
        %v5436 = vadd.f32 %v5243, %v5435
        %v5437 = vpop.f32.mrb[0].mxu0
        %v5438 = vadd.f32 %v5245, %v5437
        %5439 = vmatprep.mubr.bf16.mxu0 %v2177
        %5440 = vmatmul.mubr.bf16.gmra.mrb[0].mxu0 %v2176
        %v5441 = vpop.f32.mrb[0].mxu0
        %v5442 = vadd.f32 %v5249, %v5441
        %v5443 = vpop.f32.mrb[0].mxu0
        %v5444 = vadd.f32 %v5251, %v5443
        %v5445 = vpop.f32.mrb[0].mxu0
        %v5446 = vadd.f32 %v5253, %v5445
        %v5447 = vpop.f32.mrb[0].mxu0
        %v5448 = vadd.f32 %v5255, %v5447
        %5449 = vmatprep.mubr.bf16.mxu0 %v2189
        %5450 = vmatmul.mubr.bf16.gmra.mrb[0].mxu0 %v2188
        %v5451 = vpop.f32.mrb[0].mxu0
        %v5452 = vadd.f32 %v5259, %v5451
        %v5453 = vpop.f32.mrb[0].mxu0
        %v5454 = vadd.f32 %v5261, %v5453
        %v5455 = vpop.f32.mrb[0].mxu0
        %v5456 = vadd.f32 %v5263, %v5455
        %v5457 = vpop.f32.mrb[0].mxu0
        %v5458 = vadd.f32 %v5265, %v5457
        %5459 = vdwg.mxu0
        %5460 = vmatprep.subr.bf16.mxu0 %v3537
        %5461 = vmatpush1.bf16.msra.mxu0 %v3536
        %5462 = vmatprep.subr.bf16.mxu0 %v3541
        %5463 = vmatpush1.bf16.msra.mxu0 %v3540
        %5464 = vmatprep.subr.bf16.mxu0 %v3545
        %5465 = vmatpush1.bf16.msra.mxu0 %v3544
        %5466 = vmatprep.subr.bf16.mxu0 %v3549
        %5467 = vmatpush1.bf16.msra.mxu0 %v3548
        %5468 = vmatprep.subr.bf16.mxu0 %v3553
        %5469 = vmatpush1.bf16.msra.mxu0 %v3552
        %5470 = vmatprep.subr.bf16.mxu0 %v3557
        %5471 = vmatpush1.bf16.msra.mxu0 %v3556
        %5472 = vmatprep.subr.bf16.mxu0 %v3561
        %5473 = vmatpush1.bf16.msra.mxu0 %v3560
        %5474 = vmatprep.subr.bf16.mxu0 %v3565
        %5475 = vmatpush1.bf16.msra.mxu0 %v3564
        %5476 = vmatprep.subr.bf16.mxu0 %v3569
        %5477 = vmatpush1.bf16.msra.mxu0 %v3568
        %5478 = vmatprep.subr.bf16.mxu0 %v3573
        %5479 = vmatpush1.bf16.msra.mxu0 %v3572
        %5480 = vmatprep.subr.bf16.mxu0 %v3577
        %5481 = vmatpush1.bf16.msra.mxu0 %v3576
        %5482 = vmatprep.subr.bf16.mxu0 %v3581
        %5483 = vmatpush1.bf16.msra.mxu0 %v3580
        %5484 = vmatprep.subr.bf16.mxu0 %v3585
        %5485 = vmatpush1.bf16.msra.mxu0 %v3584
        %5486 = vmatprep.subr.bf16.mxu0 %v3589
        %5487 = vmatpush1.bf16.msra.mxu0 %v3588
        %5488 = vmatprep.subr.bf16.mxu0 %v3593
        %5489 = vmatpush1.bf16.msra.mxu0 %v3592
        %5490 = vmatprep.subr.bf16.mxu0 %v3597
        %5491 = vmatpush1.bf16.msra.mxu0 %v3596
        %5492 = vmatprep.mubr.bf16.mxu0 %v1999
        %5493 = vmatmul.mubr.bf16.gmra.mrb[0].mxu0 %v1998
        %v5494 = vpop.f32.mrb[0].mxu0
        %v5495 = vadd.f32 %v1413, %v5494
        %v5496 = vpop.f32.mrb[0].mxu0
        %v5497 = vadd.f32 %v1417, %v5496
        %v5498 = vpop.f32.mrb[0].mxu0
        %v5499 = vadd.f32 %v1413, %v5498
        %v5500 = vpop.f32.mrb[0].mxu0
        %v5501 = vadd.f32 %v1417, %v5500
        %5502 = vmatprep.mubr.bf16.mxu0 %v2011
        %5503 = vmatmul.mubr.bf16.gmra.mrb[0].mxu0 %v2010
        %v5504 = vpop.f32.mrb[0].mxu0
        %v5505 = vadd.f32 %v1413, %v5504
        %v5506 = vpop.f32.mrb[0].mxu0
        %v5507 = vadd.f32 %v1417, %v5506
        %v5508 = vpop.f32.mrb[0].mxu0
        %v5509 = vadd.f32 %v1413, %v5508
        %v5510 = vpop.f32.mrb[0].mxu0
        %v5511 = vadd.f32 %v1417, %v5510
        %5512 = vmatprep.mubr.bf16.mxu0 %v2023
        %5513 = vmatmul.mubr.bf16.gmra.mrb[0].mxu0 %v2022
        %v5514 = vpop.f32.mrb[0].mxu0
        %v5515 = vadd.f32 %v1413, %v5514
        %v5516 = vpop.f32.mrb[0].mxu0
        %v5517 = vadd.f32 %v1417, %v5516
        %v5518 = vpop.f32.mrb[0].mxu0
        %v5519 = vadd.f32 %v1413, %v5518
        %v5520 = vpop.f32.mrb[0].mxu0
        %v5521 = vadd.f32 %v1417, %v5520
        %5522 = vmatprep.mubr.bf16.mxu0 %v2035
        %5523 = vmatmul.mubr.bf16.gmra.mrb[0].mxu0 %v2034
        %v5524 = vpop.f32.mrb[0].mxu0
        %v5525 = vadd.f32 %v1413, %v5524
        %v5526 = vpop.f32.mrb[0].mxu0
        %v5527 = vadd.f32 %v1417, %v5526
        %v5528 = vpop.f32.mrb[0].mxu0
        %v5529 = vadd.f32 %v1413, %v5528
        %v5530 = vpop.f32.mrb[0].mxu0
        %v5531 = vadd.f32 %v1417, %v5530
        %5532 = vmatprep.mubr.bf16.mxu0 %v2047
        %5533 = vmatmul.mubr.bf16.gmra.mrb[0].mxu0 %v2046
        %v5534 = vpop.f32.mrb[0].mxu0
        %v5535 = vadd.f32 %v1413, %v5534
        %v5536 = vpop.f32.mrb[0].mxu0
        %v5537 = vadd.f32 %v1417, %v5536
        %v5538 = vpop.f32.mrb[0].mxu0
        %v5539 = vadd.f32 %v1413, %v5538
        %v5540 = vpop.f32.mrb[0].mxu0
        %v5541 = vadd.f32 %v1417, %v5540
        %5542 = vmatprep.mubr.bf16.mxu0 %v2059
        %5543 = vmatmul.mubr.bf16.gmra.mrb[0].mxu0 %v2058
        %v5544 = vpop.f32.mrb[0].mxu0
        %v5545 = vadd.f32 %v1413, %v5544
        %v5546 = vpop.f32.mrb[0].mxu0
        %v5547 = vadd.f32 %v1417, %v5546
        %v5548 = vpop.f32.mrb[0].mxu0
        %v5549 = vadd.f32 %v1413, %v5548
        %v5550 = vpop.f32.mrb[0].mxu0
        %v5551 = vadd.f32 %v1417, %v5550
        %5552 = vmatprep.mubr.bf16.mxu0 %v2071
        %5553 = vmatmul.mubr.bf16.gmra.mrb[0].mxu0 %v2070
        %v5554 = vpop.f32.mrb[0].mxu0
        %v5555 = vadd.f32 %v1413, %v5554
        %v5556 = vpop.f32.mrb[0].mxu0
        %v5557 = vadd.f32 %v1417, %v5556
        %v5558 = vpop.f32.mrb[0].mxu0
        %v5559 = vadd.f32 %v1413, %v5558
        %v5560 = vpop.f32.mrb[0].mxu0
        %v5561 = vadd.f32 %v1417, %v5560
        %5562 = vmatprep.mubr.bf16.mxu0 %v2083
        %5563 = vmatmul.mubr.bf16.gmra.mrb[0].mxu0 %v2082
        %v5564 = vpop.f32.mrb[0].mxu0
        %v5565 = vadd.f32 %v1413, %v5564
        %v5566 = vpop.f32.mrb[0].mxu0
        %v5567 = vadd.f32 %v1417, %v5566
        %v5568 = vpop.f32.mrb[0].mxu0
        %v5569 = vadd.f32 %v1413, %v5568
        %v5570 = vpop.f32.mrb[0].mxu0
        %v5571 = vadd.f32 %v1417, %v5570
        %5572 = vmatprep.mubr.bf16.mxu0 %v2095
        %5573 = vmatmul.mubr.bf16.gmra.mrb[0].mxu0 %v2094
        %v5574 = vpop.f32.mrb[0].mxu0
        %v5575 = vadd.f32 %v1413, %v5574
        %v5576 = vpop.f32.mrb[0].mxu0
        %v5577 = vadd.f32 %v1417, %v5576
        %v5578 = vpop.f32.mrb[0].mxu0
        %v5579 = vadd.f32 %v1413, %v5578
        %v5580 = vpop.f32.mrb[0].mxu0
        %v5581 = vadd.f32 %v1417, %v5580
        %5582 = vmatprep.mubr.bf16.mxu0 %v2107
        %5583 = vmatmul.mubr.bf16.gmra.mrb[0].mxu0 %v2106
        %v5584 = vpop.f32.mrb[0].mxu0
        %v5585 = vadd.f32 %v1413, %v5584
        %v5586 = vpop.f32.mrb[0].mxu0
        %v5587 = vadd.f32 %v1417, %v5586
        %v5588 = vpop.f32.mrb[0].mxu0
        %v5589 = vadd.f32 %v1413, %v5588
        %v5590 = vpop.f32.mrb[0].mxu0
        %v5591 = vadd.f32 %v1417, %v5590
        %5592 = vmatprep.mubr.bf16.mxu0 %v2119
        %5593 = vmatmul.mubr.bf16.gmra.mrb[0].mxu0 %v2118
        %v5594 = vpop.f32.mrb[0].mxu0
        %v5595 = vadd.f32 %v1413, %v5594
        %v5596 = vpop.f32.mrb[0].mxu0
        %v5597 = vadd.f32 %v1417, %v5596
        %v5598 = vpop.f32.mrb[0].mxu0
        %v5599 = vadd.f32 %v1413, %v5598
        %v5600 = vpop.f32.mrb[0].mxu0
        %v5601 = vadd.f32 %v1417, %v5600
        %5602 = vmatprep.mubr.bf16.mxu0 %v2131
        %5603 = vmatmul.mubr.bf16.gmra.mrb[0].mxu0 %v2130
        %v5604 = vpop.f32.mrb[0].mxu0
        %v5605 = vadd.f32 %v1413, %v5604
        %v5606 = vpop.f32.mrb[0].mxu0
        %v5607 = vadd.f32 %v1417, %v5606
        %v5608 = vpop.f32.mrb[0].mxu0
        %v5609 = vadd.f32 %v1413, %v5608
        %v5610 = vpop.f32.mrb[0].mxu0
        %v5611 = vadd.f32 %v1417, %v5610
        %5612 = vmatprep.mubr.bf16.mxu0 %v2143
        %5613 = vmatmul.mubr.bf16.gmra.mrb[0].mxu0 %v2142
        %v5614 = vpop.f32.mrb[0].mxu0
        %v5615 = vadd.f32 %v1413, %v5614
        %v5616 = vpop.f32.mrb[0].mxu0
        %v5617 = vadd.f32 %v1417, %v5616
        %v5618 = vpop.f32.mrb[0].mxu0
        %v5619 = vadd.f32 %v1413, %v5618
        %v5620 = vpop.f32.mrb[0].mxu0
        %v5621 = vadd.f32 %v1417, %v5620
        %5622 = vmatprep.mubr.bf16.mxu0 %v2155
        %5623 = vmatmul.mubr.bf16.gmra.mrb[0].mxu0 %v2154
        %v5624 = vpop.f32.mrb[0].mxu0
        %v5625 = vadd.f32 %v1413, %v5624
        %v5626 = vpop.f32.mrb[0].mxu0
        %v5627 = vadd.f32 %v1417, %v5626
        %v5628 = vpop.f32.mrb[0].mxu0
        %v5629 = vadd.f32 %v1413, %v5628
        %v5630 = vpop.f32.mrb[0].mxu0
        %v5631 = vadd.f32 %v1417, %v5630
        %5632 = vmatprep.mubr.bf16.mxu0 %v2167
        %5633 = vmatmul.mubr.bf16.gmra.mrb[0].mxu0 %v2166
        %v5634 = vpop.f32.mrb[0].mxu0
        %v5635 = vadd.f32 %v1413, %v5634
        %v5636 = vpop.f32.mrb[0].mxu0
        %v5637 = vadd.f32 %v1417, %v5636
        %v5638 = vpop.f32.mrb[0].mxu0
        %v5639 = vadd.f32 %v1413, %v5638
        %v5640 = vpop.f32.mrb[0].mxu0
        %v5641 = vadd.f32 %v1417, %v5640
        %5642 = vmatprep.mubr.bf16.mxu0 %v2179
        %5643 = vmatmul.mubr.bf16.gmra.mrb[0].mxu0 %v2178
        %v5644 = vpop.f32.mrb[0].mxu0
        %v5645 = vadd.f32 %v1413, %v5644
        %v5646 = vpop.f32.mrb[0].mxu0
        %v5647 = vadd.f32 %v1417, %v5646
        %v5648 = vpop.f32.mrb[0].mxu0
        %v5649 = vadd.f32 %v1413, %v5648
        %v5650 = vpop.f32.mrb[0].mxu0
        %v5651 = vadd.f32 %v1417, %v5650
        %5652 = vdwg.mxu0
        %5653 = vmatprep.subr.bf16.mxu0 %v3601
        %5654 = vmatpush1.bf16.msra.mxu0 %v3600
        %5655 = vmatprep.subr.bf16.mxu0 %v3605
        %5656 = vmatpush1.bf16.msra.mxu0 %v3604
        %5657 = vmatprep.subr.bf16.mxu0 %v3609
        %5658 = vmatpush1.bf16.msra.mxu0 %v3608
        %5659 = vmatprep.subr.bf16.mxu0 %v3613
        %5660 = vmatpush1.bf16.msra.mxu0 %v3612
        %5661 = vmatprep.subr.bf16.mxu0 %v3617
        %5662 = vmatpush1.bf16.msra.mxu0 %v3616
        %5663 = vmatprep.subr.bf16.mxu0 %v3621
        %5664 = vmatpush1.bf16.msra.mxu0 %v3620
        %5665 = vmatprep.subr.bf16.mxu0 %v3625
        %5666 = vmatpush1.bf16.msra.mxu0 %v3624
        %5667 = vmatprep.subr.bf16.mxu0 %v3629
        %5668 = vmatpush1.bf16.msra.mxu0 %v3628
        %5669 = vmatprep.subr.bf16.mxu0 %v3633
        %5670 = vmatpush1.bf16.msra.mxu0 %v3632
        %5671 = vmatprep.subr.bf16.mxu0 %v3637
        %5672 = vmatpush1.bf16.msra.mxu0 %v3636
        %5673 = vmatprep.subr.bf16.mxu0 %v3641
        %5674 = vmatpush1.bf16.msra.mxu0 %v3640
        %5675 = vmatprep.subr.bf16.mxu0 %v3645
        %5676 = vmatpush1.bf16.msra.mxu0 %v3644
        %5677 = vmatprep.subr.bf16.mxu0 %v3649
        %5678 = vmatpush1.bf16.msra.mxu0 %v3648
        %5679 = vmatprep.subr.bf16.mxu0 %v3653
        %5680 = vmatpush1.bf16.msra.mxu0 %v3652
        %5681 = vmatprep.subr.bf16.mxu0 %v3657
        %5682 = vmatpush1.bf16.msra.mxu0 %v3656
        %5683 = vmatprep.subr.bf16.mxu0 %v3661
        %5684 = vmatpush1.bf16.msra.mxu0 %v3660
        %5685 = vmatprep.mubr.bf16.mxu0 %v2001
        %5686 = vmatmul.mubr.bf16.gmra.mrb[0].mxu0 %v2000
        %v5687 = vpop.f32.mrb[0].mxu0
        %v5688 = vadd.f32 %v5495, %v5687
        %v5689 = vpop.f32.mrb[0].mxu0
        %v5690 = vadd.f32 %v5497, %v5689
        %v5691 = vpop.f32.mrb[0].mxu0
        %v5692 = vadd.f32 %v5499, %v5691
        %v5693 = vpop.f32.mrb[0].mxu0
        %v5694 = vadd.f32 %v5501, %v5693
        %5695 = vmatprep.mubr.bf16.mxu0 %v2013
        %5696 = vmatmul.mubr.bf16.gmra.mrb[0].mxu0 %v2012
        %v5697 = vpop.f32.mrb[0].mxu0
        %v5698 = vadd.f32 %v5505, %v5697
        %v5699 = vpop.f32.mrb[0].mxu0
        %v5700 = vadd.f32 %v5507, %v5699
        %v5701 = vpop.f32.mrb[0].mxu0
        %v5702 = vadd.f32 %v5509, %v5701
        %v5703 = vpop.f32.mrb[0].mxu0
        %v5704 = vadd.f32 %v5511, %v5703
        %5705 = vmatprep.mubr.bf16.mxu0 %v2025
        %5706 = vmatmul.mubr.bf16.gmra.mrb[0].mxu0 %v2024
        %v5707 = vpop.f32.mrb[0].mxu0
        %v5708 = vadd.f32 %v5515, %v5707
        %v5709 = vpop.f32.mrb[0].mxu0
        %v5710 = vadd.f32 %v5517, %v5709
        %v5711 = vpop.f32.mrb[0].mxu0
        %v5712 = vadd.f32 %v5519, %v5711
        %v5713 = vpop.f32.mrb[0].mxu0
        %v5714 = vadd.f32 %v5521, %v5713
        %5715 = vmatprep.mubr.bf16.mxu0 %v2037
        %5716 = vmatmul.mubr.bf16.gmra.mrb[0].mxu0 %v2036
        %v5717 = vpop.f32.mrb[0].mxu0
        %v5718 = vadd.f32 %v5525, %v5717
        %v5719 = vpop.f32.mrb[0].mxu0
        %v5720 = vadd.f32 %v5527, %v5719
        %v5721 = vpop.f32.mrb[0].mxu0
        %v5722 = vadd.f32 %v5529, %v5721
        %v5723 = vpop.f32.mrb[0].mxu0
        %v5724 = vadd.f32 %v5531, %v5723
        %5725 = vmatprep.mubr.bf16.mxu0 %v2049
        %5726 = vmatmul.mubr.bf16.gmra.mrb[0].mxu0 %v2048
        %v5727 = vpop.f32.mrb[0].mxu0
        %v5728 = vadd.f32 %v5535, %v5727
        %v5729 = vpop.f32.mrb[0].mxu0
        %v5730 = vadd.f32 %v5537, %v5729
        %v5731 = vpop.f32.mrb[0].mxu0
        %v5732 = vadd.f32 %v5539, %v5731
        %v5733 = vpop.f32.mrb[0].mxu0
        %v5734 = vadd.f32 %v5541, %v5733
        %5735 = vmatprep.mubr.bf16.mxu0 %v2061
        %5736 = vmatmul.mubr.bf16.gmra.mrb[0].mxu0 %v2060
        %v5737 = vpop.f32.mrb[0].mxu0
        %v5738 = vadd.f32 %v5545, %v5737
        %v5739 = vpop.f32.mrb[0].mxu0
        %v5740 = vadd.f32 %v5547, %v5739
        %v5741 = vpop.f32.mrb[0].mxu0
        %v5742 = vadd.f32 %v5549, %v5741
        %v5743 = vpop.f32.mrb[0].mxu0
        %v5744 = vadd.f32 %v5551, %v5743
        %5745 = vmatprep.mubr.bf16.mxu0 %v2073
        %5746 = vmatmul.mubr.bf16.gmra.mrb[0].mxu0 %v2072
        %v5747 = vpop.f32.mrb[0].mxu0
        %v5748 = vadd.f32 %v5555, %v5747
        %v5749 = vpop.f32.mrb[0].mxu0
        %v5750 = vadd.f32 %v5557, %v5749
        %v5751 = vpop.f32.mrb[0].mxu0
        %v5752 = vadd.f32 %v5559, %v5751
        %v5753 = vpop.f32.mrb[0].mxu0
        %v5754 = vadd.f32 %v5561, %v5753
        %5755 = vmatprep.mubr.bf16.mxu0 %v2085
        %5756 = vmatmul.mubr.bf16.gmra.mrb[0].mxu0 %v2084
        %v5757 = vpop.f32.mrb[0].mxu0
        %v5758 = vadd.f32 %v5565, %v5757
        %v5759 = vpop.f32.mrb[0].mxu0
        %v5760 = vadd.f32 %v5567, %v5759
        %v5761 = vpop.f32.mrb[0].mxu0
        %v5762 = vadd.f32 %v5569, %v5761
        %v5763 = vpop.f32.mrb[0].mxu0
        %v5764 = vadd.f32 %v5571, %v5763
        %5765 = vmatprep.mubr.bf16.mxu0 %v2097
        %5766 = vmatmul.mubr.bf16.gmra.mrb[0].mxu0 %v2096
        %v5767 = vpop.f32.mrb[0].mxu0
        %v5768 = vadd.f32 %v5575, %v5767
        %v5769 = vpop.f32.mrb[0].mxu0
        %v5770 = vadd.f32 %v5577, %v5769
        %v5771 = vpop.f32.mrb[0].mxu0
        %v5772 = vadd.f32 %v5579, %v5771
        %v5773 = vpop.f32.mrb[0].mxu0
        %v5774 = vadd.f32 %v5581, %v5773
        %5775 = vmatprep.mubr.bf16.mxu0 %v2109
        %5776 = vmatmul.mubr.bf16.gmra.mrb[0].mxu0 %v2108
        %v5777 = vpop.f32.mrb[0].mxu0
        %v5778 = vadd.f32 %v5585, %v5777
        %v5779 = vpop.f32.mrb[0].mxu0
        %v5780 = vadd.f32 %v5587, %v5779
        %v5781 = vpop.f32.mrb[0].mxu0
        %v5782 = vadd.f32 %v5589, %v5781
        %v5783 = vpop.f32.mrb[0].mxu0
        %v5784 = vadd.f32 %v5591, %v5783
        %5785 = vmatprep.mubr.bf16.mxu0 %v2121
        %5786 = vmatmul.mubr.bf16.gmra.mrb[0].mxu0 %v2120
        %v5787 = vpop.f32.mrb[0].mxu0
        %v5788 = vadd.f32 %v5595, %v5787
        %v5789 = vpop.f32.mrb[0].mxu0
        %v5790 = vadd.f32 %v5597, %v5789
        %v5791 = vpop.f32.mrb[0].mxu0
        %v5792 = vadd.f32 %v5599, %v5791
        %v5793 = vpop.f32.mrb[0].mxu0
        %v5794 = vadd.f32 %v5601, %v5793
        %5795 = vmatprep.mubr.bf16.mxu0 %v2133
        %5796 = vmatmul.mubr.bf16.gmra.mrb[0].mxu0 %v2132
        %v5797 = vpop.f32.mrb[0].mxu0
        %v5798 = vadd.f32 %v5605, %v5797
        %v5799 = vpop.f32.mrb[0].mxu0
        %v5800 = vadd.f32 %v5607, %v5799
        %v5801 = vpop.f32.mrb[0].mxu0
        %v5802 = vadd.f32 %v5609, %v5801
        %v5803 = vpop.f32.mrb[0].mxu0
        %v5804 = vadd.f32 %v5611, %v5803
        %5805 = vmatprep.mubr.bf16.mxu0 %v2145
        %5806 = vmatmul.mubr.bf16.gmra.mrb[0].mxu0 %v2144
        %v5807 = vpop.f32.mrb[0].mxu0
        %v5808 = vadd.f32 %v5615, %v5807
        %v5809 = vpop.f32.mrb[0].mxu0
        %v5810 = vadd.f32 %v5617, %v5809
        %v5811 = vpop.f32.mrb[0].mxu0
        %v5812 = vadd.f32 %v5619, %v5811
        %v5813 = vpop.f32.mrb[0].mxu0
        %v5814 = vadd.f32 %v5621, %v5813
        %5815 = vmatprep.mubr.bf16.mxu0 %v2157
        %5816 = vmatmul.mubr.bf16.gmra.mrb[0].mxu0 %v2156
        %v5817 = vpop.f32.mrb[0].mxu0
        %v5818 = vadd.f32 %v5625, %v5817
        %v5819 = vpop.f32.mrb[0].mxu0
        %v5820 = vadd.f32 %v5627, %v5819
        %v5821 = vpop.f32.mrb[0].mxu0
        %v5822 = vadd.f32 %v5629, %v5821
        %v5823 = vpop.f32.mrb[0].mxu0
        %v5824 = vadd.f32 %v5631, %v5823
        %5825 = vmatprep.mubr.bf16.mxu0 %v2169
        %5826 = vmatmul.mubr.bf16.gmra.mrb[0].mxu0 %v2168
        %v5827 = vpop.f32.mrb[0].mxu0
        %v5828 = vadd.f32 %v5635, %v5827
        %v5829 = vpop.f32.mrb[0].mxu0
        %v5830 = vadd.f32 %v5637, %v5829
        %v5831 = vpop.f32.mrb[0].mxu0
        %v5832 = vadd.f32 %v5639, %v5831
        %v5833 = vpop.f32.mrb[0].mxu0
        %v5834 = vadd.f32 %v5641, %v5833
        %5835 = vmatprep.mubr.bf16.mxu0 %v2181
        %5836 = vmatmul.mubr.bf16.gmra.mrb[0].mxu0 %v2180
        %v5837 = vpop.f32.mrb[0].mxu0
        %v5838 = vadd.f32 %v5645, %v5837
        %v5839 = vpop.f32.mrb[0].mxu0
        %v5840 = vadd.f32 %v5647, %v5839
        %v5841 = vpop.f32.mrb[0].mxu0
        %v5842 = vadd.f32 %v5649, %v5841
        %v5843 = vpop.f32.mrb[0].mxu0
        %v5844 = vadd.f32 %v5651, %v5843
        %5845 = vdwg.mxu0
        %5846 = vmatprep.subr.bf16.mxu0 %v3665
        %5847 = vmatpush1.bf16.msra.mxu0 %v3664
        %5848 = vmatprep.subr.bf16.mxu0 %v3669
        %5849 = vmatpush1.bf16.msra.mxu0 %v3668
        %5850 = vmatprep.subr.bf16.mxu0 %v3673
        %5851 = vmatpush1.bf16.msra.mxu0 %v3672
        %5852 = vmatprep.subr.bf16.mxu0 %v3677
        %5853 = vmatpush1.bf16.msra.mxu0 %v3676
        %5854 = vmatprep.subr.bf16.mxu0 %v3681
        %5855 = vmatpush1.bf16.msra.mxu0 %v3680
        %5856 = vmatprep.subr.bf16.mxu0 %v3685
        %5857 = vmatpush1.bf16.msra.mxu0 %v3684
        %5858 = vmatprep.subr.bf16.mxu0 %v3689
        %5859 = vmatpush1.bf16.msra.mxu0 %v3688
        %5860 = vmatprep.subr.bf16.mxu0 %v3693
        %5861 = vmatpush1.bf16.msra.mxu0 %v3692
        %5862 = vmatprep.subr.bf16.mxu0 %v3697
        %5863 = vmatpush1.bf16.msra.mxu0 %v3696
        %5864 = vmatprep.subr.bf16.mxu0 %v3701
        %5865 = vmatpush1.bf16.msra.mxu0 %v3700
        %5866 = vmatprep.subr.bf16.mxu0 %v3705
        %5867 = vmatpush1.bf16.msra.mxu0 %v3704
        %5868 = vmatprep.subr.bf16.mxu0 %v3709
        %5869 = vmatpush1.bf16.msra.mxu0 %v3708
        %5870 = vmatprep.subr.bf16.mxu0 %v3713
        %5871 = vmatpush1.bf16.msra.mxu0 %v3712
        %5872 = vmatprep.subr.bf16.mxu0 %v3717
        %5873 = vmatpush1.bf16.msra.mxu0 %v3716
        %5874 = vmatprep.subr.bf16.mxu0 %v3721
        %5875 = vmatpush1.bf16.msra.mxu0 %v3720
        %5876 = vmatprep.subr.bf16.mxu0 %v3725
        %5877 = vmatpush1.bf16.msra.mxu0 %v3724
        %5878 = vmatprep.mubr.bf16.mxu0 %v2003
        %5879 = vmatmul.mubr.bf16.gmra.mrb[0].mxu0 %v2002
        %v5880 = vpop.f32.mrb[0].mxu0
        %v5881 = vadd.f32 %v5688, %v5880
        %v5882 = vpop.f32.mrb[0].mxu0
        %v5883 = vadd.f32 %v5690, %v5882
        %v5884 = vpop.f32.mrb[0].mxu0
        %v5885 = vadd.f32 %v5692, %v5884
        %v5886 = vpop.f32.mrb[0].mxu0
        %v5887 = vadd.f32 %v5694, %v5886
        %5888 = vmatprep.mubr.bf16.mxu0 %v2015
        %5889 = vmatmul.mubr.bf16.gmra.mrb[0].mxu0 %v2014
        %v5890 = vpop.f32.mrb[0].mxu0
        %v5891 = vadd.f32 %v5698, %v5890
        %v5892 = vpop.f32.mrb[0].mxu0
        %v5893 = vadd.f32 %v5700, %v5892
        %v5894 = vpop.f32.mrb[0].mxu0
        %v5895 = vadd.f32 %v5702, %v5894
        %v5896 = vpop.f32.mrb[0].mxu0
        %v5897 = vadd.f32 %v5704, %v5896
        %5898 = vmatprep.mubr.bf16.mxu0 %v2027
        %5899 = vmatmul.mubr.bf16.gmra.mrb[0].mxu0 %v2026
        %v5900 = vpop.f32.mrb[0].mxu0
        %v5901 = vadd.f32 %v5708, %v5900
        %v5902 = vpop.f32.mrb[0].mxu0
        %v5903 = vadd.f32 %v5710, %v5902
        %v5904 = vpop.f32.mrb[0].mxu0
        %v5905 = vadd.f32 %v5712, %v5904
        %v5906 = vpop.f32.mrb[0].mxu0
        %v5907 = vadd.f32 %v5714, %v5906
        %5908 = vmatprep.mubr.bf16.mxu0 %v2039
        %5909 = vmatmul.mubr.bf16.gmra.mrb[0].mxu0 %v2038
        %v5910 = vpop.f32.mrb[0].mxu0
        %v5911 = vadd.f32 %v5718, %v5910
        %v5912 = vpop.f32.mrb[0].mxu0
        %v5913 = vadd.f32 %v5720, %v5912
        %v5914 = vpop.f32.mrb[0].mxu0
        %v5915 = vadd.f32 %v5722, %v5914
        %v5916 = vpop.f32.mrb[0].mxu0
        %v5917 = vadd.f32 %v5724, %v5916
        %5918 = vmatprep.mubr.bf16.mxu0 %v2051
        %5919 = vmatmul.mubr.bf16.gmra.mrb[0].mxu0 %v2050
        %v5920 = vpop.f32.mrb[0].mxu0
        %v5921 = vadd.f32 %v5728, %v5920
        %v5922 = vpop.f32.mrb[0].mxu0
        %v5923 = vadd.f32 %v5730, %v5922
        %v5924 = vpop.f32.mrb[0].mxu0
        %v5925 = vadd.f32 %v5732, %v5924
        %v5926 = vpop.f32.mrb[0].mxu0
        %v5927 = vadd.f32 %v5734, %v5926
        %5928 = vmatprep.mubr.bf16.mxu0 %v2063
        %5929 = vmatmul.mubr.bf16.gmra.mrb[0].mxu0 %v2062
        %v5930 = vpop.f32.mrb[0].mxu0
        %v5931 = vadd.f32 %v5738, %v5930
        %v5932 = vpop.f32.mrb[0].mxu0
        %v5933 = vadd.f32 %v5740, %v5932
        %v5934 = vpop.f32.mrb[0].mxu0
        %v5935 = vadd.f32 %v5742, %v5934
        %v5936 = vpop.f32.mrb[0].mxu0
        %v5937 = vadd.f32 %v5744, %v5936
        %5938 = vmatprep.mubr.bf16.mxu0 %v2075
        %5939 = vmatmul.mubr.bf16.gmra.mrb[0].mxu0 %v2074
        %v5940 = vpop.f32.mrb[0].mxu0
        %v5941 = vadd.f32 %v5748, %v5940
        %v5942 = vpop.f32.mrb[0].mxu0
        %v5943 = vadd.f32 %v5750, %v5942
        %v5944 = vpop.f32.mrb[0].mxu0
        %v5945 = vadd.f32 %v5752, %v5944
        %v5946 = vpop.f32.mrb[0].mxu0
        %v5947 = vadd.f32 %v5754, %v5946
        %5948 = vmatprep.mubr.bf16.mxu0 %v2087
        %5949 = vmatmul.mubr.bf16.gmra.mrb[0].mxu0 %v2086
        %v5950 = vpop.f32.mrb[0].mxu0
        %v5951 = vadd.f32 %v5758, %v5950
        %v5952 = vpop.f32.mrb[0].mxu0
        %v5953 = vadd.f32 %v5760, %v5952
        %v5954 = vpop.f32.mrb[0].mxu0
        %v5955 = vadd.f32 %v5762, %v5954
        %v5956 = vpop.f32.mrb[0].mxu0
        %v5957 = vadd.f32 %v5764, %v5956
        %5958 = vmatprep.mubr.bf16.mxu0 %v2099
        %5959 = vmatmul.mubr.bf16.gmra.mrb[0].mxu0 %v2098
        %v5960 = vpop.f32.mrb[0].mxu0
        %v5961 = vadd.f32 %v5768, %v5960
        %v5962 = vpop.f32.mrb[0].mxu0
        %v5963 = vadd.f32 %v5770, %v5962
        %v5964 = vpop.f32.mrb[0].mxu0
        %v5965 = vadd.f32 %v5772, %v5964
        %v5966 = vpop.f32.mrb[0].mxu0
        %v5967 = vadd.f32 %v5774, %v5966
        %5968 = vmatprep.mubr.bf16.mxu0 %v2111
        %5969 = vmatmul.mubr.bf16.gmra.mrb[0].mxu0 %v2110
        %v5970 = vpop.f32.mrb[0].mxu0
        %v5971 = vadd.f32 %v5778, %v5970
        %v5972 = vpop.f32.mrb[0].mxu0
        %v5973 = vadd.f32 %v5780, %v5972
        %v5974 = vpop.f32.mrb[0].mxu0
        %v5975 = vadd.f32 %v5782, %v5974
        %v5976 = vpop.f32.mrb[0].mxu0
        %v5977 = vadd.f32 %v5784, %v5976
        %5978 = vmatprep.mubr.bf16.mxu0 %v2123
        %5979 = vmatmul.mubr.bf16.gmra.mrb[0].mxu0 %v2122
        %v5980 = vpop.f32.mrb[0].mxu0
        %v5981 = vadd.f32 %v5788, %v5980
        %v5982 = vpop.f32.mrb[0].mxu0
        %v5983 = vadd.f32 %v5790, %v5982
        %v5984 = vpop.f32.mrb[0].mxu0
        %v5985 = vadd.f32 %v5792, %v5984
        %v5986 = vpop.f32.mrb[0].mxu0
        %v5987 = vadd.f32 %v5794, %v5986
        %5988 = vmatprep.mubr.bf16.mxu0 %v2135
        %5989 = vmatmul.mubr.bf16.gmra.mrb[0].mxu0 %v2134
        %v5990 = vpop.f32.mrb[0].mxu0
        %v5991 = vadd.f32 %v5798, %v5990
        %v5992 = vpop.f32.mrb[0].mxu0
        %v5993 = vadd.f32 %v5800, %v5992
        %v5994 = vpop.f32.mrb[0].mxu0
        %v5995 = vadd.f32 %v5802, %v5994
        %v5996 = vpop.f32.mrb[0].mxu0
        %v5997 = vadd.f32 %v5804, %v5996
        %5998 = vmatprep.mubr.bf16.mxu0 %v2147
        %5999 = vmatmul.mubr.bf16.gmra.mrb[0].mxu0 %v2146
        %v6000 = vpop.f32.mrb[0].mxu0
        %v6001 = vadd.f32 %v5808, %v6000
        %v6002 = vpop.f32.mrb[0].mxu0
        %v6003 = vadd.f32 %v5810, %v6002
        %v6004 = vpop.f32.mrb[0].mxu0
        %v6005 = vadd.f32 %v5812, %v6004
        %v6006 = vpop.f32.mrb[0].mxu0
        %v6007 = vadd.f32 %v5814, %v6006
        %6008 = vmatprep.mubr.bf16.mxu0 %v2159
        %6009 = vmatmul.mubr.bf16.gmra.mrb[0].mxu0 %v2158
        %v6010 = vpop.f32.mrb[0].mxu0
        %v6011 = vadd.f32 %v5818, %v6010
        %v6012 = vpop.f32.mrb[0].mxu0
        %v6013 = vadd.f32 %v5820, %v6012
        %v6014 = vpop.f32.mrb[0].mxu0
        %v6015 = vadd.f32 %v5822, %v6014
        %v6016 = vpop.f32.mrb[0].mxu0
        %v6017 = vadd.f32 %v5824, %v6016
        %6018 = vmatprep.mubr.bf16.mxu0 %v2171
        %6019 = vmatmul.mubr.bf16.gmra.mrb[0].mxu0 %v2170
        %v6020 = vpop.f32.mrb[0].mxu0
        %v6021 = vadd.f32 %v5828, %v6020
        %v6022 = vpop.f32.mrb[0].mxu0
        %v6023 = vadd.f32 %v5830, %v6022
        %v6024 = vpop.f32.mrb[0].mxu0
        %v6025 = vadd.f32 %v5832, %v6024
        %v6026 = vpop.f32.mrb[0].mxu0
        %v6027 = vadd.f32 %v5834, %v6026
        %6028 = vmatprep.mubr.bf16.mxu0 %v2183
        %6029 = vmatmul.mubr.bf16.gmra.mrb[0].mxu0 %v2182
        %v6030 = vpop.f32.mrb[0].mxu0
        %v6031 = vadd.f32 %v5838, %v6030
        %v6032 = vpop.f32.mrb[0].mxu0
        %v6033 = vadd.f32 %v5840, %v6032
        %v6034 = vpop.f32.mrb[0].mxu0
        %v6035 = vadd.f32 %v5842, %v6034
        %v6036 = vpop.f32.mrb[0].mxu0
        %v6037 = vadd.f32 %v5844, %v6036
        %6038 = vdwg.mxu0
        %6039 = vmatprep.subr.bf16.mxu0 %v3729
        %6040 = vmatpush1.bf16.msra.mxu0 %v3728
        %6041 = vmatprep.subr.bf16.mxu0 %v3733
        %6042 = vmatpush1.bf16.msra.mxu0 %v3732
        %6043 = vmatprep.subr.bf16.mxu0 %v3737
        %6044 = vmatpush1.bf16.msra.mxu0 %v3736
        %6045 = vmatprep.subr.bf16.mxu0 %v3741
        %6046 = vmatpush1.bf16.msra.mxu0 %v3740
        %6047 = vmatprep.subr.bf16.mxu0 %v3745
        %6048 = vmatpush1.bf16.msra.mxu0 %v3744
        %6049 = vmatprep.subr.bf16.mxu0 %v3749
        %6050 = vmatpush1.bf16.msra.mxu0 %v3748
        %6051 = vmatprep.subr.bf16.mxu0 %v3753
        %6052 = vmatpush1.bf16.msra.mxu0 %v3752
        %6053 = vmatprep.subr.bf16.mxu0 %v3757
        %6054 = vmatpush1.bf16.msra.mxu0 %v3756
        %6055 = vmatprep.subr.bf16.mxu0 %v3761
        %6056 = vmatpush1.bf16.msra.mxu0 %v3760
        %6057 = vmatprep.subr.bf16.mxu0 %v3765
        %6058 = vmatpush1.bf16.msra.mxu0 %v3764
        %6059 = vmatprep.subr.bf16.mxu0 %v3769
        %6060 = vmatpush1.bf16.msra.mxu0 %v3768
        %6061 = vmatprep.subr.bf16.mxu0 %v3773
        %6062 = vmatpush1.bf16.msra.mxu0 %v3772
        %6063 = vmatprep.subr.bf16.mxu0 %v3777
        %6064 = vmatpush1.bf16.msra.mxu0 %v3776
        %6065 = vmatprep.subr.bf16.mxu0 %v3781
        %6066 = vmatpush1.bf16.msra.mxu0 %v3780
        %6067 = vmatprep.subr.bf16.mxu0 %v3785
        %6068 = vmatpush1.bf16.msra.mxu0 %v3784
        %6069 = vmatprep.subr.bf16.mxu0 %v3789
        %6070 = vmatpush1.bf16.msra.mxu0 %v3788
        %6071 = vmatprep.mubr.bf16.mxu0 %v2005
        %6072 = vmatmul.mubr.bf16.gmra.mrb[0].mxu0 %v2004
        %v6073 = vpop.f32.mrb[0].mxu0
        %v6074 = vadd.f32 %v5881, %v6073
        %v6075 = vpop.f32.mrb[0].mxu0
        %v6076 = vadd.f32 %v5883, %v6075
        %v6077 = vpop.f32.mrb[0].mxu0
        %v6078 = vadd.f32 %v5885, %v6077
        %v6079 = vpop.f32.mrb[0].mxu0
        %v6080 = vadd.f32 %v5887, %v6079
        %6081 = vmatprep.mubr.bf16.mxu0 %v2017
        %6082 = vmatmul.mubr.bf16.gmra.mrb[0].mxu0 %v2016
        %v6083 = vpop.f32.mrb[0].mxu0
        %v6084 = vadd.f32 %v5891, %v6083
        %v6085 = vpop.f32.mrb[0].mxu0
        %v6086 = vadd.f32 %v5893, %v6085
        %v6087 = vpop.f32.mrb[0].mxu0
        %v6088 = vadd.f32 %v5895, %v6087
        %v6089 = vpop.f32.mrb[0].mxu0
        %v6090 = vadd.f32 %v5897, %v6089
        %6091 = vmatprep.mubr.bf16.mxu0 %v2029
        %6092 = vmatmul.mubr.bf16.gmra.mrb[0].mxu0 %v2028
        %v6093 = vpop.f32.mrb[0].mxu0
        %v6094 = vadd.f32 %v5901, %v6093
        %v6095 = vpop.f32.mrb[0].mxu0
        %v6096 = vadd.f32 %v5903, %v6095
        %v6097 = vpop.f32.mrb[0].mxu0
        %v6098 = vadd.f32 %v5905, %v6097
        %v6099 = vpop.f32.mrb[0].mxu0
        %v6100 = vadd.f32 %v5907, %v6099
        %6101 = vmatprep.mubr.bf16.mxu0 %v2041
        %6102 = vmatmul.mubr.bf16.gmra.mrb[0].mxu0 %v2040
        %v6103 = vpop.f32.mrb[0].mxu0
        %v6104 = vadd.f32 %v5911, %v6103
        %v6105 = vpop.f32.mrb[0].mxu0
        %v6106 = vadd.f32 %v5913, %v6105
        %v6107 = vpop.f32.mrb[0].mxu0
        %v6108 = vadd.f32 %v5915, %v6107
        %v6109 = vpop.f32.mrb[0].mxu0
        %v6110 = vadd.f32 %v5917, %v6109
        %6111 = vmatprep.mubr.bf16.mxu0 %v2053
        %6112 = vmatmul.mubr.bf16.gmra.mrb[0].mxu0 %v2052
        %v6113 = vpop.f32.mrb[0].mxu0
        %v6114 = vadd.f32 %v5921, %v6113
        %v6115 = vpop.f32.mrb[0].mxu0
        %v6116 = vadd.f32 %v5923, %v6115
        %v6117 = vpop.f32.mrb[0].mxu0
        %v6118 = vadd.f32 %v5925, %v6117
        %v6119 = vpop.f32.mrb[0].mxu0
        %v6120 = vadd.f32 %v5927, %v6119
        %6121 = vmatprep.mubr.bf16.mxu0 %v2065
        %6122 = vmatmul.mubr.bf16.gmra.mrb[0].mxu0 %v2064
        %v6123 = vpop.f32.mrb[0].mxu0
        %v6124 = vadd.f32 %v5931, %v6123
        %v6125 = vpop.f32.mrb[0].mxu0
        %v6126 = vadd.f32 %v5933, %v6125
        %v6127 = vpop.f32.mrb[0].mxu0
        %v6128 = vadd.f32 %v5935, %v6127
        %v6129 = vpop.f32.mrb[0].mxu0
        %v6130 = vadd.f32 %v5937, %v6129
        %6131 = vmatprep.mubr.bf16.mxu0 %v2077
        %6132 = vmatmul.mubr.bf16.gmra.mrb[0].mxu0 %v2076
        %v6133 = vpop.f32.mrb[0].mxu0
        %v6134 = vadd.f32 %v5941, %v6133
        %v6135 = vpop.f32.mrb[0].mxu0
        %v6136 = vadd.f32 %v5943, %v6135
        %v6137 = vpop.f32.mrb[0].mxu0
        %v6138 = vadd.f32 %v5945, %v6137
        %v6139 = vpop.f32.mrb[0].mxu0
        %v6140 = vadd.f32 %v5947, %v6139
        %6141 = vmatprep.mubr.bf16.mxu0 %v2089
        %6142 = vmatmul.mubr.bf16.gmra.mrb[0].mxu0 %v2088
        %v6143 = vpop.f32.mrb[0].mxu0
        %v6144 = vadd.f32 %v5951, %v6143
        %v6145 = vpop.f32.mrb[0].mxu0
        %v6146 = vadd.f32 %v5953, %v6145
        %v6147 = vpop.f32.mrb[0].mxu0
        %v6148 = vadd.f32 %v5955, %v6147
        %v6149 = vpop.f32.mrb[0].mxu0
        %v6150 = vadd.f32 %v5957, %v6149
        %6151 = vmatprep.mubr.bf16.mxu0 %v2101
        %6152 = vmatmul.mubr.bf16.gmra.mrb[0].mxu0 %v2100
        %v6153 = vpop.f32.mrb[0].mxu0
        %v6154 = vadd.f32 %v5961, %v6153
        %v6155 = vpop.f32.mrb[0].mxu0
        %v6156 = vadd.f32 %v5963, %v6155
        %v6157 = vpop.f32.mrb[0].mxu0
        %v6158 = vadd.f32 %v5965, %v6157
        %v6159 = vpop.f32.mrb[0].mxu0
        %v6160 = vadd.f32 %v5967, %v6159
        %6161 = vmatprep.mubr.bf16.mxu0 %v2113
        %6162 = vmatmul.mubr.bf16.gmra.mrb[0].mxu0 %v2112
        %v6163 = vpop.f32.mrb[0].mxu0
        %v6164 = vadd.f32 %v5971, %v6163
        %v6165 = vpop.f32.mrb[0].mxu0
        %v6166 = vadd.f32 %v5973, %v6165
        %v6167 = vpop.f32.mrb[0].mxu0
        %v6168 = vadd.f32 %v5975, %v6167
        %v6169 = vpop.f32.mrb[0].mxu0
        %v6170 = vadd.f32 %v5977, %v6169
        %6171 = vmatprep.mubr.bf16.mxu0 %v2125
        %6172 = vmatmul.mubr.bf16.gmra.mrb[0].mxu0 %v2124
        %v6173 = vpop.f32.mrb[0].mxu0
        %v6174 = vadd.f32 %v5981, %v6173
        %v6175 = vpop.f32.mrb[0].mxu0
        %v6176 = vadd.f32 %v5983, %v6175
        %v6177 = vpop.f32.mrb[0].mxu0
        %v6178 = vadd.f32 %v5985, %v6177
        %v6179 = vpop.f32.mrb[0].mxu0
        %v6180 = vadd.f32 %v5987, %v6179
        %6181 = vmatprep.mubr.bf16.mxu0 %v2137
        %6182 = vmatmul.mubr.bf16.gmra.mrb[0].mxu0 %v2136
        %v6183 = vpop.f32.mrb[0].mxu0
        %v6184 = vadd.f32 %v5991, %v6183
        %v6185 = vpop.f32.mrb[0].mxu0
        %v6186 = vadd.f32 %v5993, %v6185
        %v6187 = vpop.f32.mrb[0].mxu0
        %v6188 = vadd.f32 %v5995, %v6187
        %v6189 = vpop.f32.mrb[0].mxu0
        %v6190 = vadd.f32 %v5997, %v6189
        %6191 = vmatprep.mubr.bf16.mxu0 %v2149
        %6192 = vmatmul.mubr.bf16.gmra.mrb[0].mxu0 %v2148
        %v6193 = vpop.f32.mrb[0].mxu0
        %v6194 = vadd.f32 %v6001, %v6193
        %v6195 = vpop.f32.mrb[0].mxu0
        %v6196 = vadd.f32 %v6003, %v6195
        %v6197 = vpop.f32.mrb[0].mxu0
        %v6198 = vadd.f32 %v6005, %v6197
        %v6199 = vpop.f32.mrb[0].mxu0
        %v6200 = vadd.f32 %v6007, %v6199
        %6201 = vmatprep.mubr.bf16.mxu0 %v2161
        %6202 = vmatmul.mubr.bf16.gmra.mrb[0].mxu0 %v2160
        %v6203 = vpop.f32.mrb[0].mxu0
        %v6204 = vadd.f32 %v6011, %v6203
        %v6205 = vpop.f32.mrb[0].mxu0
        %v6206 = vadd.f32 %v6013, %v6205
        %v6207 = vpop.f32.mrb[0].mxu0
        %v6208 = vadd.f32 %v6015, %v6207
        %v6209 = vpop.f32.mrb[0].mxu0
        %v6210 = vadd.f32 %v6017, %v6209
        %6211 = vmatprep.mubr.bf16.mxu0 %v2173
        %6212 = vmatmul.mubr.bf16.gmra.mrb[0].mxu0 %v2172
        %v6213 = vpop.f32.mrb[0].mxu0
        %v6214 = vadd.f32 %v6021, %v6213
        %v6215 = vpop.f32.mrb[0].mxu0
        %v6216 = vadd.f32 %v6023, %v6215
        %v6217 = vpop.f32.mrb[0].mxu0
        %v6218 = vadd.f32 %v6025, %v6217
        %v6219 = vpop.f32.mrb[0].mxu0
        %v6220 = vadd.f32 %v6027, %v6219
        %6221 = vmatprep.mubr.bf16.mxu0 %v2185
        %6222 = vmatmul.mubr.bf16.gmra.mrb[0].mxu0 %v2184
        %v6223 = vpop.f32.mrb[0].mxu0
        %v6224 = vadd.f32 %v6031, %v6223
        %v6225 = vpop.f32.mrb[0].mxu0
        %v6226 = vadd.f32 %v6033, %v6225
        %v6227 = vpop.f32.mrb[0].mxu0
        %v6228 = vadd.f32 %v6035, %v6227
        %v6229 = vpop.f32.mrb[0].mxu0
        %v6230 = vadd.f32 %v6037, %v6229
        %6231 = vdwg.mxu0
        %6232 = vmatprep.subr.bf16.mxu0 %v3793
        %6233 = vmatpush1.bf16.msra.mxu0 %v3792
        %6234 = vmatprep.subr.bf16.mxu0 %v3797
        %6235 = vmatpush1.bf16.msra.mxu0 %v3796
        %6236 = vmatprep.subr.bf16.mxu0 %v3801
        %6237 = vmatpush1.bf16.msra.mxu0 %v3800
        %6238 = vmatprep.subr.bf16.mxu0 %v3805
        %6239 = vmatpush1.bf16.msra.mxu0 %v3804
        %6240 = vmatprep.subr.bf16.mxu0 %v3809
        %6241 = vmatpush1.bf16.msra.mxu0 %v3808
        %6242 = vmatprep.subr.bf16.mxu0 %v3813
        %6243 = vmatpush1.bf16.msra.mxu0 %v3812
        %6244 = vmatprep.subr.bf16.mxu0 %v3817
        %6245 = vmatpush1.bf16.msra.mxu0 %v3816
        %6246 = vmatprep.subr.bf16.mxu0 %v3821
        %6247 = vmatpush1.bf16.msra.mxu0 %v3820
        %6248 = vmatprep.subr.bf16.mxu0 %v3825
        %6249 = vmatpush1.bf16.msra.mxu0 %v3824
        %6250 = vmatprep.subr.bf16.mxu0 %v3829
        %6251 = vmatpush1.bf16.msra.mxu0 %v3828
        %6252 = vmatprep.subr.bf16.mxu0 %v3833
        %6253 = vmatpush1.bf16.msra.mxu0 %v3832
        %6254 = vmatprep.subr.bf16.mxu0 %v3837
        %6255 = vmatpush1.bf16.msra.mxu0 %v3836
        %6256 = vmatprep.subr.bf16.mxu0 %v3841
        %6257 = vmatpush1.bf16.msra.mxu0 %v3840
        %6258 = vmatprep.subr.bf16.mxu0 %v3845
        %6259 = vmatpush1.bf16.msra.mxu0 %v3844
        %6260 = vmatprep.subr.bf16.mxu0 %v3849
        %6261 = vmatpush1.bf16.msra.mxu0 %v3848
        %6262 = vmatprep.subr.bf16.mxu0 %v3853
        %6263 = vmatpush1.bf16.msra.mxu0 %v3852
        %6264 = vmatprep.mubr.bf16.mxu0 %v2007
        %6265 = vmatmul.mubr.bf16.gmra.mrb[0].mxu0 %v2006
        %v6266 = vpop.f32.mrb[0].mxu0
        %v6267 = vadd.f32 %v6074, %v6266
        %v6268 = vpop.f32.mrb[0].mxu0
        %v6269 = vadd.f32 %v6076, %v6268
        %v6270 = vpop.f32.mrb[0].mxu0
        %v6271 = vadd.f32 %v6078, %v6270
        %v6272 = vpop.f32.mrb[0].mxu0
        %v6273 = vadd.f32 %v6080, %v6272
        %6274 = vmatprep.mubr.bf16.mxu0 %v2019
        %6275 = vmatmul.mubr.bf16.gmra.mrb[0].mxu0 %v2018
        %v6276 = vpop.f32.mrb[0].mxu0
        %v6277 = vadd.f32 %v6084, %v6276
        %v6278 = vpop.f32.mrb[0].mxu0
        %v6279 = vadd.f32 %v6086, %v6278
        %v6280 = vpop.f32.mrb[0].mxu0
        %v6281 = vadd.f32 %v6088, %v6280
        %v6282 = vpop.f32.mrb[0].mxu0
        %v6283 = vadd.f32 %v6090, %v6282
        %6284 = vmatprep.mubr.bf16.mxu0 %v2031
        %6285 = vmatmul.mubr.bf16.gmra.mrb[0].mxu0 %v2030
        %v6286 = vpop.f32.mrb[0].mxu0
        %v6287 = vadd.f32 %v6094, %v6286
        %v6288 = vpop.f32.mrb[0].mxu0
        %v6289 = vadd.f32 %v6096, %v6288
        %v6290 = vpop.f32.mrb[0].mxu0
        %v6291 = vadd.f32 %v6098, %v6290
        %v6292 = vpop.f32.mrb[0].mxu0
        %v6293 = vadd.f32 %v6100, %v6292
        %6294 = vmatprep.mubr.bf16.mxu0 %v2043
        %6295 = vmatmul.mubr.bf16.gmra.mrb[0].mxu0 %v2042
        %v6296 = vpop.f32.mrb[0].mxu0
        %v6297 = vadd.f32 %v6104, %v6296
        %v6298 = vpop.f32.mrb[0].mxu0
        %v6299 = vadd.f32 %v6106, %v6298
        %v6300 = vpop.f32.mrb[0].mxu0
        %v6301 = vadd.f32 %v6108, %v6300
        %v6302 = vpop.f32.mrb[0].mxu0
        %v6303 = vadd.f32 %v6110, %v6302
        %6304 = vmatprep.mubr.bf16.mxu0 %v2055
        %6305 = vmatmul.mubr.bf16.gmra.mrb[0].mxu0 %v2054
        %v6306 = vpop.f32.mrb[0].mxu0
        %v6307 = vadd.f32 %v6114, %v6306
        %v6308 = vpop.f32.mrb[0].mxu0
        %v6309 = vadd.f32 %v6116, %v6308
        %v6310 = vpop.f32.mrb[0].mxu0
        %v6311 = vadd.f32 %v6118, %v6310
        %v6312 = vpop.f32.mrb[0].mxu0
        %v6313 = vadd.f32 %v6120, %v6312
        %6314 = vmatprep.mubr.bf16.mxu0 %v2067
        %6315 = vmatmul.mubr.bf16.gmra.mrb[0].mxu0 %v2066
        %v6316 = vpop.f32.mrb[0].mxu0
        %v6317 = vadd.f32 %v6124, %v6316
        %v6318 = vpop.f32.mrb[0].mxu0
        %v6319 = vadd.f32 %v6126, %v6318
        %v6320 = vpop.f32.mrb[0].mxu0
        %v6321 = vadd.f32 %v6128, %v6320
        %v6322 = vpop.f32.mrb[0].mxu0
        %v6323 = vadd.f32 %v6130, %v6322
        %6324 = vmatprep.mubr.bf16.mxu0 %v2079
        %6325 = vmatmul.mubr.bf16.gmra.mrb[0].mxu0 %v2078
        %v6326 = vpop.f32.mrb[0].mxu0
        %v6327 = vadd.f32 %v6134, %v6326
        %v6328 = vpop.f32.mrb[0].mxu0
        %v6329 = vadd.f32 %v6136, %v6328
        %v6330 = vpop.f32.mrb[0].mxu0
        %v6331 = vadd.f32 %v6138, %v6330
        %v6332 = vpop.f32.mrb[0].mxu0
        %v6333 = vadd.f32 %v6140, %v6332
        %6334 = vmatprep.mubr.bf16.mxu0 %v2091
        %6335 = vmatmul.mubr.bf16.gmra.mrb[0].mxu0 %v2090
        %v6336 = vpop.f32.mrb[0].mxu0
        %v6337 = vadd.f32 %v6144, %v6336
        %v6338 = vpop.f32.mrb[0].mxu0
        %v6339 = vadd.f32 %v6146, %v6338
        %v6340 = vpop.f32.mrb[0].mxu0
        %v6341 = vadd.f32 %v6148, %v6340
        %v6342 = vpop.f32.mrb[0].mxu0
        %v6343 = vadd.f32 %v6150, %v6342
        %6344 = vmatprep.mubr.bf16.mxu0 %v2103
        %6345 = vmatmul.mubr.bf16.gmra.mrb[0].mxu0 %v2102
        %v6346 = vpop.f32.mrb[0].mxu0
        %v6347 = vadd.f32 %v6154, %v6346
        %v6348 = vpop.f32.mrb[0].mxu0
        %v6349 = vadd.f32 %v6156, %v6348
        %v6350 = vpop.f32.mrb[0].mxu0
        %v6351 = vadd.f32 %v6158, %v6350
        %v6352 = vpop.f32.mrb[0].mxu0
        %v6353 = vadd.f32 %v6160, %v6352
        %6354 = vmatprep.mubr.bf16.mxu0 %v2115
        %6355 = vmatmul.mubr.bf16.gmra.mrb[0].mxu0 %v2114
        %v6356 = vpop.f32.mrb[0].mxu0
        %v6357 = vadd.f32 %v6164, %v6356
        %v6358 = vpop.f32.mrb[0].mxu0
        %v6359 = vadd.f32 %v6166, %v6358
        %v6360 = vpop.f32.mrb[0].mxu0
        %v6361 = vadd.f32 %v6168, %v6360
        %v6362 = vpop.f32.mrb[0].mxu0
        %v6363 = vadd.f32 %v6170, %v6362
        %6364 = vmatprep.mubr.bf16.mxu0 %v2127
        %6365 = vmatmul.mubr.bf16.gmra.mrb[0].mxu0 %v2126
        %v6366 = vpop.f32.mrb[0].mxu0
        %v6367 = vadd.f32 %v6174, %v6366
        %v6368 = vpop.f32.mrb[0].mxu0
        %v6369 = vadd.f32 %v6176, %v6368
        %v6370 = vpop.f32.mrb[0].mxu0
        %v6371 = vadd.f32 %v6178, %v6370
        %v6372 = vpop.f32.mrb[0].mxu0
        %v6373 = vadd.f32 %v6180, %v6372
        %6374 = vmatprep.mubr.bf16.mxu0 %v2139
        %6375 = vmatmul.mubr.bf16.gmra.mrb[0].mxu0 %v2138
        %v6376 = vpop.f32.mrb[0].mxu0
        %v6377 = vadd.f32 %v6184, %v6376
        %v6378 = vpop.f32.mrb[0].mxu0
        %v6379 = vadd.f32 %v6186, %v6378
        %v6380 = vpop.f32.mrb[0].mxu0
        %v6381 = vadd.f32 %v6188, %v6380
        %v6382 = vpop.f32.mrb[0].mxu0
        %v6383 = vadd.f32 %v6190, %v6382
        %6384 = vmatprep.mubr.bf16.mxu0 %v2151
        %6385 = vmatmul.mubr.bf16.gmra.mrb[0].mxu0 %v2150
        %v6386 = vpop.f32.mrb[0].mxu0
        %v6387 = vadd.f32 %v6194, %v6386
        %v6388 = vpop.f32.mrb[0].mxu0
        %v6389 = vadd.f32 %v6196, %v6388
        %v6390 = vpop.f32.mrb[0].mxu0
        %v6391 = vadd.f32 %v6198, %v6390
        %v6392 = vpop.f32.mrb[0].mxu0
        %v6393 = vadd.f32 %v6200, %v6392
        %6394 = vmatprep.mubr.bf16.mxu0 %v2163
        %6395 = vmatmul.mubr.bf16.gmra.mrb[0].mxu0 %v2162
        %v6396 = vpop.f32.mrb[0].mxu0
        %v6397 = vadd.f32 %v6204, %v6396
        %v6398 = vpop.f32.mrb[0].mxu0
        %v6399 = vadd.f32 %v6206, %v6398
        %v6400 = vpop.f32.mrb[0].mxu0
        %v6401 = vadd.f32 %v6208, %v6400
        %v6402 = vpop.f32.mrb[0].mxu0
        %v6403 = vadd.f32 %v6210, %v6402
        %6404 = vmatprep.mubr.bf16.mxu0 %v2175
        %6405 = vmatmul.mubr.bf16.gmra.mrb[0].mxu0 %v2174
        %v6406 = vpop.f32.mrb[0].mxu0
        %v6407 = vadd.f32 %v6214, %v6406
        %v6408 = vpop.f32.mrb[0].mxu0
        %v6409 = vadd.f32 %v6216, %v6408
        %v6410 = vpop.f32.mrb[0].mxu0
        %v6411 = vadd.f32 %v6218, %v6410
        %v6412 = vpop.f32.mrb[0].mxu0
        %v6413 = vadd.f32 %v6220, %v6412
        %6414 = vmatprep.mubr.bf16.mxu0 %v2187
        %6415 = vmatmul.mubr.bf16.gmra.mrb[0].mxu0 %v2186
        %v6416 = vpop.f32.mrb[0].mxu0
        %v6417 = vadd.f32 %v6224, %v6416
        %v6418 = vpop.f32.mrb[0].mxu0
        %v6419 = vadd.f32 %v6226, %v6418
        %v6420 = vpop.f32.mrb[0].mxu0
        %v6421 = vadd.f32 %v6228, %v6420
        %v6422 = vpop.f32.mrb[0].mxu0
        %v6423 = vadd.f32 %v6230, %v6422
        %6424 = vdwg.mxu0
        %6425 = vmatprep.subr.bf16.mxu0 %v3857
        %6426 = vmatpush1.bf16.msra.mxu0 %v3856
        %6427 = vmatprep.subr.bf16.mxu0 %v3861
        %6428 = vmatpush1.bf16.msra.mxu0 %v3860
        %6429 = vmatprep.subr.bf16.mxu0 %v3865
        %6430 = vmatpush1.bf16.msra.mxu0 %v3864
        %6431 = vmatprep.subr.bf16.mxu0 %v3869
        %6432 = vmatpush1.bf16.msra.mxu0 %v3868
        %6433 = vmatprep.subr.bf16.mxu0 %v3873
        %6434 = vmatpush1.bf16.msra.mxu0 %v3872
        %6435 = vmatprep.subr.bf16.mxu0 %v3877
        %6436 = vmatpush1.bf16.msra.mxu0 %v3876
        %6437 = vmatprep.subr.bf16.mxu0 %v3881
        %6438 = vmatpush1.bf16.msra.mxu0 %v3880
        %6439 = vmatprep.subr.bf16.mxu0 %v3885
        %6440 = vmatpush1.bf16.msra.mxu0 %v3884
        %6441 = vmatprep.subr.bf16.mxu0 %v3889
        %6442 = vmatpush1.bf16.msra.mxu0 %v3888
        %6443 = vmatprep.subr.bf16.mxu0 %v3893
        %6444 = vmatpush1.bf16.msra.mxu0 %v3892
        %6445 = vmatprep.subr.bf16.mxu0 %v3897
        %6446 = vmatpush1.bf16.msra.mxu0 %v3896
        %6447 = vmatprep.subr.bf16.mxu0 %v3901
        %6448 = vmatpush1.bf16.msra.mxu0 %v3900
        %6449 = vmatprep.subr.bf16.mxu0 %v3905
        %6450 = vmatpush1.bf16.msra.mxu0 %v3904
        %6451 = vmatprep.subr.bf16.mxu0 %v3909
        %6452 = vmatpush1.bf16.msra.mxu0 %v3908
        %6453 = vmatprep.subr.bf16.mxu0 %v3913
        %6454 = vmatpush1.bf16.msra.mxu0 %v3912
        %6455 = vmatprep.subr.bf16.mxu0 %v3917
        %6456 = vmatpush1.bf16.msra.mxu0 %v3916
        %6457 = vmatprep.mubr.bf16.mxu0 %v2009
        %6458 = vmatmul.mubr.bf16.gmra.mrb[0].mxu0 %v2008
        %v6459 = vpop.f32.mrb[0].mxu0
        %v6460 = vadd.f32 %v6267, %v6459
        %v6461 = vpop.f32.mrb[0].mxu0
        %v6462 = vadd.f32 %v6269, %v6461
        %v6463 = vpop.f32.mrb[0].mxu0
        %v6464 = vadd.f32 %v6271, %v6463
        %v6465 = vpop.f32.mrb[0].mxu0
        %v6466 = vadd.f32 %v6273, %v6465
        %6467 = vmatprep.mubr.bf16.mxu0 %v2021
        %6468 = vmatmul.mubr.bf16.gmra.mrb[0].mxu0 %v2020
        %v6469 = vpop.f32.mrb[0].mxu0
        %v6470 = vadd.f32 %v6277, %v6469
        %v6471 = vpop.f32.mrb[0].mxu0
        %v6472 = vadd.f32 %v6279, %v6471
        %v6473 = vpop.f32.mrb[0].mxu0
        %v6474 = vadd.f32 %v6281, %v6473
        %v6475 = vpop.f32.mrb[0].mxu0
        %v6476 = vadd.f32 %v6283, %v6475
        %6477 = vmatprep.mubr.bf16.mxu0 %v2033
        %6478 = vmatmul.mubr.bf16.gmra.mrb[0].mxu0 %v2032
        %v6479 = vpop.f32.mrb[0].mxu0
        %v6480 = vadd.f32 %v6287, %v6479
        %v6481 = vpop.f32.mrb[0].mxu0
        %v6482 = vadd.f32 %v6289, %v6481
        %v6483 = vpop.f32.mrb[0].mxu0
        %v6484 = vadd.f32 %v6291, %v6483
        %v6485 = vpop.f32.mrb[0].mxu0
        %v6486 = vadd.f32 %v6293, %v6485
        %6487 = vmatprep.mubr.bf16.mxu0 %v2045
        %6488 = vmatmul.mubr.bf16.gmra.mrb[0].mxu0 %v2044
        %v6489 = vpop.f32.mrb[0].mxu0
        %v6490 = vadd.f32 %v6297, %v6489
        %v6491 = vpop.f32.mrb[0].mxu0
        %v6492 = vadd.f32 %v6299, %v6491
        %v6493 = vpop.f32.mrb[0].mxu0
        %v6494 = vadd.f32 %v6301, %v6493
        %v6495 = vpop.f32.mrb[0].mxu0
        %v6496 = vadd.f32 %v6303, %v6495
        %6497 = vmatprep.mubr.bf16.mxu0 %v2057
        %6498 = vmatmul.mubr.bf16.gmra.mrb[0].mxu0 %v2056
        %v6499 = vpop.f32.mrb[0].mxu0
        %v6500 = vadd.f32 %v6307, %v6499
        %v6501 = vpop.f32.mrb[0].mxu0
        %v6502 = vadd.f32 %v6309, %v6501
        %v6503 = vpop.f32.mrb[0].mxu0
        %v6504 = vadd.f32 %v6311, %v6503
        %v6505 = vpop.f32.mrb[0].mxu0
        %v6506 = vadd.f32 %v6313, %v6505
        %6507 = vmatprep.mubr.bf16.mxu0 %v2069
        %6508 = vmatmul.mubr.bf16.gmra.mrb[0].mxu0 %v2068
        %v6509 = vpop.f32.mrb[0].mxu0
        %v6510 = vadd.f32 %v6317, %v6509
        %v6511 = vpop.f32.mrb[0].mxu0
        %v6512 = vadd.f32 %v6319, %v6511
        %v6513 = vpop.f32.mrb[0].mxu0
        %v6514 = vadd.f32 %v6321, %v6513
        %v6515 = vpop.f32.mrb[0].mxu0
        %v6516 = vadd.f32 %v6323, %v6515
        %6517 = vmatprep.mubr.bf16.mxu0 %v2081
        %6518 = vmatmul.mubr.bf16.gmra.mrb[0].mxu0 %v2080
        %v6519 = vpop.f32.mrb[0].mxu0
        %v6520 = vadd.f32 %v6327, %v6519
        %v6521 = vpop.f32.mrb[0].mxu0
        %v6522 = vadd.f32 %v6329, %v6521
        %v6523 = vpop.f32.mrb[0].mxu0
        %v6524 = vadd.f32 %v6331, %v6523
        %v6525 = vpop.f32.mrb[0].mxu0
        %v6526 = vadd.f32 %v6333, %v6525
        %6527 = vmatprep.mubr.bf16.mxu0 %v2093
        %6528 = vmatmul.mubr.bf16.gmra.mrb[0].mxu0 %v2092
        %v6529 = vpop.f32.mrb[0].mxu0
        %v6530 = vadd.f32 %v6337, %v6529
        %v6531 = vpop.f32.mrb[0].mxu0
        %v6532 = vadd.f32 %v6339, %v6531
        %v6533 = vpop.f32.mrb[0].mxu0
        %v6534 = vadd.f32 %v6341, %v6533
        %v6535 = vpop.f32.mrb[0].mxu0
        %v6536 = vadd.f32 %v6343, %v6535
        %6537 = vmatprep.mubr.bf16.mxu0 %v2105
        %6538 = vmatmul.mubr.bf16.gmra.mrb[0].mxu0 %v2104
        %v6539 = vpop.f32.mrb[0].mxu0
        %v6540 = vadd.f32 %v6347, %v6539
        %v6541 = vpop.f32.mrb[0].mxu0
        %v6542 = vadd.f32 %v6349, %v6541
        %v6543 = vpop.f32.mrb[0].mxu0
        %v6544 = vadd.f32 %v6351, %v6543
        %v6545 = vpop.f32.mrb[0].mxu0
        %v6546 = vadd.f32 %v6353, %v6545
        %6547 = vmatprep.mubr.bf16.mxu0 %v2117
        %6548 = vmatmul.mubr.bf16.gmra.mrb[0].mxu0 %v2116
        %v6549 = vpop.f32.mrb[0].mxu0
        %v6550 = vadd.f32 %v6357, %v6549
        %v6551 = vpop.f32.mrb[0].mxu0
        %v6552 = vadd.f32 %v6359, %v6551
        %v6553 = vpop.f32.mrb[0].mxu0
        %v6554 = vadd.f32 %v6361, %v6553
        %v6555 = vpop.f32.mrb[0].mxu0
        %v6556 = vadd.f32 %v6363, %v6555
        %6557 = vmatprep.mubr.bf16.mxu0 %v2129
        %6558 = vmatmul.mubr.bf16.gmra.mrb[0].mxu0 %v2128
        %v6559 = vpop.f32.mrb[0].mxu0
        %v6560 = vadd.f32 %v6367, %v6559
        %v6561 = vpop.f32.mrb[0].mxu0
        %v6562 = vadd.f32 %v6369, %v6561
        %v6563 = vpop.f32.mrb[0].mxu0
        %v6564 = vadd.f32 %v6371, %v6563
        %v6565 = vpop.f32.mrb[0].mxu0
        %v6566 = vadd.f32 %v6373, %v6565
        %6567 = vmatprep.mubr.bf16.mxu0 %v2141
        %6568 = vmatmul.mubr.bf16.gmra.mrb[0].mxu0 %v2140
        %v6569 = vpop.f32.mrb[0].mxu0
        %v6570 = vadd.f32 %v6377, %v6569
        %v6571 = vpop.f32.mrb[0].mxu0
        %v6572 = vadd.f32 %v6379, %v6571
        %v6573 = vpop.f32.mrb[0].mxu0
        %v6574 = vadd.f32 %v6381, %v6573
        %v6575 = vpop.f32.mrb[0].mxu0
        %v6576 = vadd.f32 %v6383, %v6575
        %6577 = vmatprep.mubr.bf16.mxu0 %v2153
        %6578 = vmatmul.mubr.bf16.gmra.mrb[0].mxu0 %v2152
        %v6579 = vpop.f32.mrb[0].mxu0
        %v6580 = vadd.f32 %v6387, %v6579
        %v6581 = vpop.f32.mrb[0].mxu0
        %v6582 = vadd.f32 %v6389, %v6581
        %v6583 = vpop.f32.mrb[0].mxu0
        %v6584 = vadd.f32 %v6391, %v6583
        %v6585 = vpop.f32.mrb[0].mxu0
        %v6586 = vadd.f32 %v6393, %v6585
        %6587 = vmatprep.mubr.bf16.mxu0 %v2165
        %6588 = vmatmul.mubr.bf16.gmra.mrb[0].mxu0 %v2164
        %v6589 = vpop.f32.mrb[0].mxu0
        %v6590 = vadd.f32 %v6397, %v6589
        %v6591 = vpop.f32.mrb[0].mxu0
        %v6592 = vadd.f32 %v6399, %v6591
        %v6593 = vpop.f32.mrb[0].mxu0
        %v6594 = vadd.f32 %v6401, %v6593
        %v6595 = vpop.f32.mrb[0].mxu0
        %v6596 = vadd.f32 %v6403, %v6595
        %6597 = vmatprep.mubr.bf16.mxu0 %v2177
        %6598 = vmatmul.mubr.bf16.gmra.mrb[0].mxu0 %v2176
        %v6599 = vpop.f32.mrb[0].mxu0
        %v6600 = vadd.f32 %v6407, %v6599
        %v6601 = vpop.f32.mrb[0].mxu0
        %v6602 = vadd.f32 %v6409, %v6601
        %v6603 = vpop.f32.mrb[0].mxu0
        %v6604 = vadd.f32 %v6411, %v6603
        %v6605 = vpop.f32.mrb[0].mxu0
        %v6606 = vadd.f32 %v6413, %v6605
        %6607 = vmatprep.mubr.bf16.mxu0 %v2189
        %6608 = vmatmul.mubr.bf16.gmra.mrb[0].mxu0 %v2188
        %v6609 = vpop.f32.mrb[0].mxu0
        %v6610 = vadd.f32 %v6417, %v6609
        %v6611 = vpop.f32.mrb[0].mxu0
        %v6612 = vadd.f32 %v6419, %v6611
        %v6613 = vpop.f32.mrb[0].mxu0
        %v6614 = vadd.f32 %v6421, %v6613
        %v6615 = vpop.f32.mrb[0].mxu0
        %v6616 = vadd.f32 %v6423, %v6615
        %6617 = vdwg.mxu0
        %v6618 = vmax.f32 %v5302, 0.0
        %v6619 = vmax.f32 %v5304, 0.0
        %v6620 = vmax.f32 %v6460, 0.0
        %v6621 = vmax.f32 %v6462, 0.0
        %v6622 = vmax.f32 %v5306, 0.0
        %v6623 = vmax.f32 %v5308, 0.0
        %v6624 = vmax.f32 %v6464, 0.0
        %v6625 = vmax.f32 %v6466, 0.0
        %v6626 = vmax.f32 %v5312, 0.0
        %v6627 = vmax.f32 %v5314, 0.0
        %v6628 = vmax.f32 %v6470, 0.0
        %v6629 = vmax.f32 %v6472, 0.0
        %v6630 = vmax.f32 %v5316, 0.0
        %v6631 = vmax.f32 %v5318, 0.0
        %v6632 = vmax.f32 %v6474, 0.0
        %v6633 = vmax.f32 %v6476, 0.0
        %v6634 = vmax.f32 %v5322, 0.0
        %v6635 = vmax.f32 %v5324, 0.0
        %v6636 = vmax.f32 %v6480, 0.0
        %v6637 = vmax.f32 %v6482, 0.0
        %v6638 = vmax.f32 %v5326, 0.0
        %v6639 = vmax.f32 %v5328, 0.0
        %v6640 = vmax.f32 %v6484, 0.0
        %v6641 = vmax.f32 %v6486, 0.0
        %v6642 = vmax.f32 %v5332, 0.0
        %v6643 = vmax.f32 %v5334, 0.0
        %v6644 = vmax.f32 %v6490, 0.0
        %v6645 = vmax.f32 %v6492, 0.0
        %v6646 = vmax.f32 %v5336, 0.0
        %v6647 = vmax.f32 %v5338, 0.0
        %v6648 = vmax.f32 %v6494, 0.0
        %v6649 = vmax.f32 %v6496, 0.0
        %v6650 = vmax.f32 %v5342, 0.0
        %v6651 = vmax.f32 %v5344, 0.0
        %v6652 = vmax.f32 %v6500, 0.0
        %v6653 = vmax.f32 %v6502, 0.0
        %v6654 = vmax.f32 %v5346, 0.0
        %v6655 = vmax.f32 %v5348, 0.0
        %v6656 = vmax.f32 %v6504, 0.0
        %v6657 = vmax.f32 %v6506, 0.0
        %v6658 = vmax.f32 %v5352, 0.0
        %v6659 = vmax.f32 %v5354, 0.0
        %v6660 = vmax.f32 %v6510, 0.0
        %v6661 = vmax.f32 %v6512, 0.0
        %v6662 = vmax.f32 %v5356, 0.0
        %v6663 = vmax.f32 %v5358, 0.0
        %v6664 = vmax.f32 %v6514, 0.0
        %v6665 = vmax.f32 %v6516, 0.0
        %v6666 = vmax.f32 %v5362, 0.0
        %v6667 = vmax.f32 %v5364, 0.0
        %v6668 = vmax.f32 %v6520, 0.0
        %v6669 = vmax.f32 %v6522, 0.0
        %v6670 = vmax.f32 %v5366, 0.0
        %v6671 = vmax.f32 %v5368, 0.0
        %v6672 = vmax.f32 %v6524, 0.0
        %v6673 = vmax.f32 %v6526, 0.0
        %v6674 = vmax.f32 %v5372, 0.0
        %v6675 = vmax.f32 %v5374, 0.0
        %v6676 = vmax.f32 %v6530, 0.0
        %v6677 = vmax.f32 %v6532, 0.0
        %v6678 = vmax.f32 %v5376, 0.0
        %v6679 = vmax.f32 %v5378, 0.0
        %v6680 = vmax.f32 %v6534, 0.0
        %v6681 = vmax.f32 %v6536, 0.0
        %v6682 = vmax.f32 %v5382, 0.0
        %v6683 = vmax.f32 %v5384, 0.0
        %v6684 = vmax.f32 %v6540, 0.0
        %v6685 = vmax.f32 %v6542, 0.0
        %v6686 = vmax.f32 %v5386, 0.0
        %v6687 = vmax.f32 %v5388, 0.0
        %v6688 = vmax.f32 %v6544, 0.0
        %v6689 = vmax.f32 %v6546, 0.0
        %v6690 = vmax.f32 %v5392, 0.0
        %v6691 = vmax.f32 %v5394, 0.0
        %v6692 = vmax.f32 %v6550, 0.0
        %v6693 = vmax.f32 %v6552, 0.0
        %v6694 = vmax.f32 %v5396, 0.0
        %v6695 = vmax.f32 %v5398, 0.0
        %v6696 = vmax.f32 %v6554, 0.0
        %v6697 = vmax.f32 %v6556, 0.0
        %v6698 = vmax.f32 %v5402, 0.0
        %v6699 = vmax.f32 %v5404, 0.0
        %v6700 = vmax.f32 %v6560, 0.0
        %v6701 = vmax.f32 %v6562, 0.0
        %v6702 = vmax.f32 %v5406, 0.0
        %v6703 = vmax.f32 %v5408, 0.0
        %v6704 = vmax.f32 %v6564, 0.0
        %v6705 = vmax.f32 %v6566, 0.0
        %v6706 = vmax.f32 %v5412, 0.0
        %v6707 = vmax.f32 %v5414, 0.0
        %v6708 = vmax.f32 %v6570, 0.0
        %v6709 = vmax.f32 %v6572, 0.0
        %v6710 = vmax.f32 %v5416, 0.0
        %v6711 = vmax.f32 %v5418, 0.0
        %v6712 = vmax.f32 %v6574, 0.0
        %v6713 = vmax.f32 %v6576, 0.0
        %v6714 = vmax.f32 %v5422, 0.0
        %v6715 = vmax.f32 %v5424, 0.0
        %v6716 = vmax.f32 %v6580, 0.0
        %v6717 = vmax.f32 %v6582, 0.0
        %v6718 = vmax.f32 %v5426, 0.0
        %v6719 = vmax.f32 %v5428, 0.0
        %v6720 = vmax.f32 %v6584, 0.0
        %v6721 = vmax.f32 %v6586, 0.0
        %v6722 = vmax.f32 %v5432, 0.0
        %v6723 = vmax.f32 %v5434, 0.0
        %v6724 = vmax.f32 %v6590, 0.0
        %v6725 = vmax.f32 %v6592, 0.0
        %v6726 = vmax.f32 %v5436, 0.0
        %v6727 = vmax.f32 %v5438, 0.0
        %v6728 = vmax.f32 %v6594, 0.0
        %v6729 = vmax.f32 %v6596, 0.0
        %v6730 = vmax.f32 %v5442, 0.0
        %v6731 = vmax.f32 %v5444, 0.0
        %v6732 = vmax.f32 %v6600, 0.0
        %v6733 = vmax.f32 %v6602, 0.0
        %v6734 = vmax.f32 %v5446, 0.0
        %v6735 = vmax.f32 %v5448, 0.0
        %v6736 = vmax.f32 %v6604, 0.0
        %v6737 = vmax.f32 %v6606, 0.0
        %v6738 = vmax.f32 %v5452, 0.0
        %v6739 = vmax.f32 %v5454, 0.0
        %v6740 = vmax.f32 %v6610, 0.0
        %v6741 = vmax.f32 %v6612, 0.0
        %v6742 = vmax.f32 %v5456, 0.0
        %v6743 = vmax.f32 %v5458, 0.0
        %v6744 = vmax.f32 %v6614, 0.0
        %v6745 = vmax.f32 %v6616, 0.0
        %v6746 = vpack.c.bf16 %v6622, %v6618
        %v6747 = vpack.c.bf16 %v6623, %v6619
        %v6748 = vpack.c.bf16 %v6624, %v6620
        %v6749 = vpack.c.bf16 %v6625, %v6621
        %v6750 = vpack.c.bf16 %v6630, %v6626
        %v6751 = vpack.c.bf16 %v6631, %v6627
        %v6752 = vpack.c.bf16 %v6632, %v6628
        %v6753 = vpack.c.bf16 %v6633, %v6629
        %v6754 = vpack.c.bf16 %v6638, %v6634
        %v6755 = vpack.c.bf16 %v6639, %v6635
        %v6756 = vpack.c.bf16 %v6640, %v6636
        %v6757 = vpack.c.bf16 %v6641, %v6637
        %v6758 = vpack.c.bf16 %v6646, %v6642
        %v6759 = vpack.c.bf16 %v6647, %v6643
        %v6760 = vpack.c.bf16 %v6648, %v6644
        %v6761 = vpack.c.bf16 %v6649, %v6645
        %v6762 = vpack.c.bf16 %v6654, %v6650
        %v6763 = vpack.c.bf16 %v6655, %v6651
        %v6764 = vpack.c.bf16 %v6656, %v6652
        %v6765 = vpack.c.bf16 %v6657, %v6653
        %v6766 = vpack.c.bf16 %v6662, %v6658
        %v6767 = vpack.c.bf16 %v6663, %v6659
        %v6768 = vpack.c.bf16 %v6664, %v6660
        %v6769 = vpack.c.bf16 %v6665, %v6661
        %v6770 = vpack.c.bf16 %v6670, %v6666
        %v6771 = vpack.c.bf16 %v6671, %v6667
        %v6772 = vpack.c.bf16 %v6672, %v6668
        %v6773 = vpack.c.bf16 %v6673, %v6669
        %v6774 = vpack.c.bf16 %v6678, %v6674
        %v6775 = vpack.c.bf16 %v6679, %v6675
        %v6776 = vpack.c.bf16 %v6680, %v6676
        %v6777 = vpack.c.bf16 %v6681, %v6677
        %v6778 = vpack.c.bf16 %v6686, %v6682
        %v6779 = vpack.c.bf16 %v6687, %v6683
        %v6780 = vpack.c.bf16 %v6688, %v6684
        %v6781 = vpack.c.bf16 %v6689, %v6685
        %v6782 = vpack.c.bf16 %v6694, %v6690
        %v6783 = vpack.c.bf16 %v6695, %v6691
        %v6784 = vpack.c.bf16 %v6696, %v6692
        %v6785 = vpack.c.bf16 %v6697, %v6693
        %v6786 = vpack.c.bf16 %v6702, %v6698
        %v6787 = vpack.c.bf16 %v6703, %v6699
        %v6788 = vpack.c.bf16 %v6704, %v6700
        %v6789 = vpack.c.bf16 %v6705, %v6701
        %v6790 = vpack.c.bf16 %v6710, %v6706
        %v6791 = vpack.c.bf16 %v6711, %v6707
        %v6792 = vpack.c.bf16 %v6712, %v6708
        %v6793 = vpack.c.bf16 %v6713, %v6709
        %v6794 = vpack.c.bf16 %v6718, %v6714
        %v6795 = vpack.c.bf16 %v6719, %v6715
        %v6796 = vpack.c.bf16 %v6720, %v6716
        %v6797 = vpack.c.bf16 %v6721, %v6717
        %v6798 = vpack.c.bf16 %v6726, %v6722
        %v6799 = vpack.c.bf16 %v6727, %v6723
        %v6800 = vpack.c.bf16 %v6728, %v6724
        %v6801 = vpack.c.bf16 %v6729, %v6725
        %v6802 = vpack.c.bf16 %v6734, %v6730
        %v6803 = vpack.c.bf16 %v6735, %v6731
        %v6804 = vpack.c.bf16 %v6736, %v6732
        %v6805 = vpack.c.bf16 %v6737, %v6733
        %v6806 = vpack.c.bf16 %v6742, %v6738
        %v6807 = vpack.c.bf16 %v6743, %v6739
        %v6808 = vpack.c.bf16 %v6744, %v6740
        %v6809 = vpack.c.bf16 %v6745, %v6741
        %v6810 = vld [vmem:[#allocation10] sm:$0xf]
        %v6811 = vld [vmem:[#allocation10 + $0x4] sm:$0xf]
        %v6812 = vld [vmem:[#allocation10 + $0x8] sm:$0xf]
        %v6813 = vld [vmem:[#allocation10 + $0xc] sm:$0xf]
        %v6814 = vld [vmem:[#allocation10 + $0x10] sm:$0xf]
        %v6815 = vld [vmem:[#allocation10 + $0x14] sm:$0xf]
        %v6816 = vld [vmem:[#allocation10 + $0x18] sm:$0xf]
        %v6817 = vld [vmem:[#allocation10 + $0x1c] sm:$0xf]
        %v6818 = vld [vmem:[#allocation10 + $0x20] sm:$0xf]
        %v6819 = vld [vmem:[#allocation10 + $0x24] sm:$0xf]
        %v6820 = vld [vmem:[#allocation10 + $0x28] sm:$0xf]
        %v6821 = vld [vmem:[#allocation10 + $0x2c] sm:$0xf]
        %v6822 = vld [vmem:[#allocation10 + $0x30] sm:$0xf]
        %v6823 = vld [vmem:[#allocation10 + $0x34] sm:$0xf]
        %v6824 = vld [vmem:[#allocation10 + $0x38] sm:$0xf]
        %v6825 = vld [vmem:[#allocation10 + $0x3c] sm:$0xf]
        %v6826 = vld [vmem:[#allocation10 + $0x40] sm:$0xf]
        %v6827 = vld [vmem:[#allocation10 + $0x44] sm:$0xf]
        %v6828 = vld [vmem:[#allocation10 + $0x48] sm:$0xf]
        %v6829 = vld [vmem:[#allocation10 + $0x4c] sm:$0xf]
        %v6830 = vld [vmem:[#allocation10 + $0x50] sm:$0xf]
        %v6831 = vld [vmem:[#allocation10 + $0x54] sm:$0xf]
        %v6832 = vld [vmem:[#allocation10 + $0x58] sm:$0xf]
        %v6833 = vld [vmem:[#allocation10 + $0x5c] sm:$0xf]
        %v6834 = vld [vmem:[#allocation10 + $0x60] sm:$0xf]
        %v6835 = vld [vmem:[#allocation10 + $0x64] sm:$0xf]
        %v6836 = vld [vmem:[#allocation10 + $0x68] sm:$0xf]
        %v6837 = vld [vmem:[#allocation10 + $0x6c] sm:$0xf]
        %v6838 = vld [vmem:[#allocation10 + $0x70] sm:$0xf]
        %v6839 = vld [vmem:[#allocation10 + $0x74] sm:$0xf]
        %v6840 = vld [vmem:[#allocation10 + $0x78] sm:$0xf]
        %v6841 = vld [vmem:[#allocation10 + $0x7c] sm:$0xf]
        %v6842 = vld [vmem:[#allocation10 + $0x80] sm:$0xf]
        %v6843 = vld [vmem:[#allocation10 + $0x84] sm:$0xf]
        %v6844 = vld [vmem:[#allocation10 + $0x88] sm:$0xf]
        %v6845 = vld [vmem:[#allocation10 + $0x8c] sm:$0xf]
        %v6846 = vld [vmem:[#allocation10 + $0x90] sm:$0xf]
        %v6847 = vld [vmem:[#allocation10 + $0x94] sm:$0xf]
        %v6848 = vld [vmem:[#allocation10 + $0x98] sm:$0xf]
        %v6849 = vld [vmem:[#allocation10 + $0x9c] sm:$0xf]
        %v6850 = vld [vmem:[#allocation10 + $0xa0] sm:$0xf]
        %v6851 = vld [vmem:[#allocation10 + $0xa4] sm:$0xf]
        %v6852 = vld [vmem:[#allocation10 + $0xa8] sm:$0xf]
        %v6853 = vld [vmem:[#allocation10 + $0xac] sm:$0xf]
        %v6854 = vld [vmem:[#allocation10 + $0xb0] sm:$0xf]
        %v6855 = vld [vmem:[#allocation10 + $0xb4] sm:$0xf]
        %v6856 = vld [vmem:[#allocation10 + $0xb8] sm:$0xf]
        %v6857 = vld [vmem:[#allocation10 + $0xbc] sm:$0xf]
        %v6858 = vld [vmem:[#allocation10 + $0xc0] sm:$0xf]
        %v6859 = vld [vmem:[#allocation10 + $0xc4] sm:$0xf]
        %v6860 = vld [vmem:[#allocation10 + $0xc8] sm:$0xf]
        %v6861 = vld [vmem:[#allocation10 + $0xcc] sm:$0xf]
        %v6862 = vld [vmem:[#allocation10 + $0xd0] sm:$0xf]
        %v6863 = vld [vmem:[#allocation10 + $0xd4] sm:$0xf]
        %v6864 = vld [vmem:[#allocation10 + $0xd8] sm:$0xf]
        %v6865 = vld [vmem:[#allocation10 + $0xdc] sm:$0xf]
        %v6866 = vld [vmem:[#allocation10 + $0xe0] sm:$0xf]
        %v6867 = vld [vmem:[#allocation10 + $0xe4] sm:$0xf]
        %v6868 = vld [vmem:[#allocation10 + $0xe8] sm:$0xf]
        %v6869 = vld [vmem:[#allocation10 + $0xec] sm:$0xf]
        %v6870 = vld [vmem:[#allocation10 + $0xf0] sm:$0xf]
        %v6871 = vld [vmem:[#allocation10 + $0xf4] sm:$0xf]
        %v6872 = vld [vmem:[#allocation10 + $0xf8] sm:$0xf]
        %v6873 = vld [vmem:[#allocation10 + $0xfc] sm:$0xf]
        %v6874 = vld [vmem:[#allocation11] sm:$0x1]
        %v6876 = vlaneseq
        %v6877 = vshrl.u32 %v6876, 7
        %v6878 = vsub.s32 0, %v6877
        %v6879 = vrot.slane %v6874, %v6878
        %v6945 = vunpack.c.l.b16 %v6810
        %v6946 = vunpack.c.l.b16 %v6811
        %v6947 = vunpack.c.l.b16 %v6812
        %v6948 = vunpack.c.l.b16 %v6813
        %v6949 = vunpack.c.l.b16 %v6814
        %v6950 = vunpack.c.l.b16 %v6815
        %v6951 = vunpack.c.l.b16 %v6816
        %v6952 = vunpack.c.l.b16 %v6817
        %v6953 = vunpack.c.l.b16 %v6818
        %v6954 = vunpack.c.l.b16 %v6819
        %v6955 = vunpack.c.l.b16 %v6820
        %v6956 = vunpack.c.l.b16 %v6821
        %v6957 = vunpack.c.l.b16 %v6822
        %v6958 = vunpack.c.l.b16 %v6823
        %v6959 = vunpack.c.l.b16 %v6824
        %v6960 = vunpack.c.l.b16 %v6825
        %v6961 = vunpack.c.l.b16 %v6826
        %v6962 = vunpack.c.l.b16 %v6827
        %v6963 = vunpack.c.l.b16 %v6828
        %v6964 = vunpack.c.l.b16 %v6829
        %v6965 = vunpack.c.l.b16 %v6830
        %v6966 = vunpack.c.l.b16 %v6831
        %v6967 = vunpack.c.l.b16 %v6832
        %v6968 = vunpack.c.l.b16 %v6833
        %v6969 = vunpack.c.l.b16 %v6834
        %v6970 = vunpack.c.l.b16 %v6835
        %v6971 = vunpack.c.l.b16 %v6836
        %v6972 = vunpack.c.l.b16 %v6837
        %v6973 = vunpack.c.l.b16 %v6838
        %v6974 = vunpack.c.l.b16 %v6839
        %v6975 = vunpack.c.l.b16 %v6840
        %v6976 = vunpack.c.l.b16 %v6841
        %v6977 = vunpack.c.l.b16 %v6842
        %v6978 = vunpack.c.l.b16 %v6843
        %v6979 = vunpack.c.l.b16 %v6844
        %v6980 = vunpack.c.l.b16 %v6845
        %v6981 = vunpack.c.l.b16 %v6846
        %v6982 = vunpack.c.l.b16 %v6847
        %v6983 = vunpack.c.l.b16 %v6848
        %v6984 = vunpack.c.l.b16 %v6849
        %v6985 = vunpack.c.l.b16 %v6850
        %v6986 = vunpack.c.l.b16 %v6851
        %v6987 = vunpack.c.l.b16 %v6852
        %v6988 = vunpack.c.l.b16 %v6853
        %v6989 = vunpack.c.l.b16 %v6854
        %v6990 = vunpack.c.l.b16 %v6855
        %v6991 = vunpack.c.l.b16 %v6856
        %v6992 = vunpack.c.l.b16 %v6857
        %v6993 = vunpack.c.l.b16 %v6858
        %v6994 = vunpack.c.l.b16 %v6859
        %v6995 = vunpack.c.l.b16 %v6860
        %v6996 = vunpack.c.l.b16 %v6861
        %v6997 = vunpack.c.l.b16 %v6862
        %v6998 = vunpack.c.l.b16 %v6863
        %v6999 = vunpack.c.l.b16 %v6864
        %v7000 = vunpack.c.l.b16 %v6865
        %v7001 = vunpack.c.l.b16 %v6866
        %v7002 = vunpack.c.l.b16 %v6867
        %v7003 = vunpack.c.l.b16 %v6868
        %v7004 = vunpack.c.l.b16 %v6869
        %v7005 = vunpack.c.l.b16 %v6870
        %v7006 = vunpack.c.l.b16 %v6871
        %v7007 = vunpack.c.l.b16 %v6872
        %v7008 = vunpack.c.l.b16 %v6873
        %v7009 = vpack.c.b16 %v6946, %v6945
        %v7010 = vpack.c.b16 %v6948, %v6947
        %v7011 = vpack.c.b16 %v6950, %v6949
        %v7012 = vpack.c.b16 %v6952, %v6951
        %v7013 = vpack.c.b16 %v6954, %v6953
        %v7014 = vpack.c.b16 %v6956, %v6955
        %v7015 = vpack.c.b16 %v6958, %v6957
        %v7016 = vpack.c.b16 %v6960, %v6959
        %v7017 = vpack.c.b16 %v6962, %v6961
        %v7018 = vpack.c.b16 %v6964, %v6963
        %v7019 = vpack.c.b16 %v6966, %v6965
        %v7020 = vpack.c.b16 %v6968, %v6967
        %v7021 = vpack.c.b16 %v6970, %v6969
        %v7022 = vpack.c.b16 %v6972, %v6971
        %v7023 = vpack.c.b16 %v6974, %v6973
        %v7024 = vpack.c.b16 %v6976, %v6975
        %v7025 = vpack.c.b16 %v6978, %v6977
        %v7026 = vpack.c.b16 %v6980, %v6979
        %v7027 = vpack.c.b16 %v6982, %v6981
        %v7028 = vpack.c.b16 %v6984, %v6983
        %v7029 = vpack.c.b16 %v6986, %v6985
        %v7030 = vpack.c.b16 %v6988, %v6987
        %v7031 = vpack.c.b16 %v6990, %v6989
        %v7032 = vpack.c.b16 %v6992, %v6991
        %v7033 = vpack.c.b16 %v6994, %v6993
        %v7034 = vpack.c.b16 %v6996, %v6995
        %v7035 = vpack.c.b16 %v6998, %v6997
        %v7036 = vpack.c.b16 %v7000, %v6999
        %v7037 = vpack.c.b16 %v7002, %v7001
        %v7038 = vpack.c.b16 %v7004, %v7003
        %v7039 = vpack.c.b16 %v7006, %v7005
        %v7040 = vpack.c.b16 %v7008, %v7007
        %7073 = vmatprep.subr.bf16.mxu0 0
        %7074 = vmatpush1.bf16.msra.mxu0 %v7009
        %7075 = vmatprep.subr.bf16.mxu0 0
        %7076 = vmatpush1.bf16.msra.mxu0 %v7010
        %7077 = vmatprep.subr.bf16.mxu0 0
        %7078 = vmatpush1.bf16.msra.mxu0 %v7011
        %7079 = vmatprep.subr.bf16.mxu0 0
        %7080 = vmatpush1.bf16.msra.mxu0 %v7012
        %7081 = vmatprep.subr.bf16.mxu0 0
        %7082 = vmatpush1.bf16.msra.mxu0 %v7013
        %7083 = vmatprep.subr.bf16.mxu0 0
        %7084 = vmatpush1.bf16.msra.mxu0 %v7014
        %7085 = vmatprep.subr.bf16.mxu0 0
        %7086 = vmatpush1.bf16.msra.mxu0 %v7015
        %7087 = vmatprep.subr.bf16.mxu0 0
        %7088 = vmatpush1.bf16.msra.mxu0 %v7016
        %7089 = vmatprep.subr.bf16.mxu0 0
        %7090 = vmatpush1.bf16.msra.mxu0 %v7017
        %7091 = vmatprep.subr.bf16.mxu0 0
        %7092 = vmatpush1.bf16.msra.mxu0 %v7018
        %7093 = vmatprep.subr.bf16.mxu0 0
        %7094 = vmatpush1.bf16.msra.mxu0 %v7019
        %7095 = vmatprep.subr.bf16.mxu0 0
        %7096 = vmatpush1.bf16.msra.mxu0 %v7020
        %7097 = vmatprep.subr.bf16.mxu0 0
        %7098 = vmatpush1.bf16.msra.mxu0 %v7021
        %7099 = vmatprep.subr.bf16.mxu0 0
        %7100 = vmatpush1.bf16.msra.mxu0 %v7022
        %7101 = vmatprep.subr.bf16.mxu0 0
        %7102 = vmatpush1.bf16.msra.mxu0 %v7023
        %7103 = vmatprep.subr.bf16.mxu0 0
        %7104 = vmatpush1.bf16.msra.mxu0 %v7024
        %7105 = vmatprep.mubr.bf16.mxu0 %v6747
        %7106 = vmatmul.mubr.bf16.gmra.mrb[0].mxu0 %v6746
        %v7107 = vpop.f32.mrb[0].mxu0
        %v7108 = vadd.f32 %v6879, %v7107
        %v7109 = vpop.f32.mrb[0].mxu0
        %v7110 = vpop.f32.mrb[0].mxu0
        %v7111 = vadd.f32 %v6879, %v7110
        %v7112 = vpop.f32.mrb[0].mxu0
        %7113 = vmatprep.mubr.bf16.mxu0 %v6751
        %7114 = vmatmul.mubr.bf16.gmra.mrb[0].mxu0 %v6750
        %v7115 = vpop.f32.mrb[0].mxu0
        %v7116 = vadd.f32 %v6879, %v7115
        %v7117 = vpop.f32.mrb[0].mxu0
        %v7118 = vpop.f32.mrb[0].mxu0
        %v7119 = vadd.f32 %v6879, %v7118
        %v7120 = vpop.f32.mrb[0].mxu0
        %7121 = vmatprep.mubr.bf16.mxu0 %v6755
        %7122 = vmatmul.mubr.bf16.gmra.mrb[0].mxu0 %v6754
        %v7123 = vpop.f32.mrb[0].mxu0
        %v7124 = vadd.f32 %v6879, %v7123
        %v7125 = vpop.f32.mrb[0].mxu0
        %v7126 = vpop.f32.mrb[0].mxu0
        %v7127 = vadd.f32 %v6879, %v7126
        %v7128 = vpop.f32.mrb[0].mxu0
        %7129 = vmatprep.mubr.bf16.mxu0 %v6759
        %7130 = vmatmul.mubr.bf16.gmra.mrb[0].mxu0 %v6758
        %v7131 = vpop.f32.mrb[0].mxu0
        %v7132 = vadd.f32 %v6879, %v7131
        %v7133 = vpop.f32.mrb[0].mxu0
        %v7134 = vpop.f32.mrb[0].mxu0
        %v7135 = vadd.f32 %v6879, %v7134
        %v7136 = vpop.f32.mrb[0].mxu0
        %7137 = vmatprep.mubr.bf16.mxu0 %v6763
        %7138 = vmatmul.mubr.bf16.gmra.mrb[0].mxu0 %v6762
        %v7139 = vpop.f32.mrb[0].mxu0
        %v7140 = vadd.f32 %v6879, %v7139
        %v7141 = vpop.f32.mrb[0].mxu0
        %v7142 = vpop.f32.mrb[0].mxu0
        %v7143 = vadd.f32 %v6879, %v7142
        %v7144 = vpop.f32.mrb[0].mxu0
        %7145 = vmatprep.mubr.bf16.mxu0 %v6767
        %7146 = vmatmul.mubr.bf16.gmra.mrb[0].mxu0 %v6766
        %v7147 = vpop.f32.mrb[0].mxu0
        %v7148 = vadd.f32 %v6879, %v7147
        %v7149 = vpop.f32.mrb[0].mxu0
        %v7150 = vpop.f32.mrb[0].mxu0
        %v7151 = vadd.f32 %v6879, %v7150
        %v7152 = vpop.f32.mrb[0].mxu0
        %7153 = vmatprep.mubr.bf16.mxu0 %v6771
        %7154 = vmatmul.mubr.bf16.gmra.mrb[0].mxu0 %v6770
        %v7155 = vpop.f32.mrb[0].mxu0
        %v7156 = vadd.f32 %v6879, %v7155
        %v7157 = vpop.f32.mrb[0].mxu0
        %v7158 = vpop.f32.mrb[0].mxu0
        %v7159 = vadd.f32 %v6879, %v7158
        %v7160 = vpop.f32.mrb[0].mxu0
        %7161 = vmatprep.mubr.bf16.mxu0 %v6775
        %7162 = vmatmul.mubr.bf16.gmra.mrb[0].mxu0 %v6774
        %v7163 = vpop.f32.mrb[0].mxu0
        %v7164 = vadd.f32 %v6879, %v7163
        %v7165 = vpop.f32.mrb[0].mxu0
        %v7166 = vpop.f32.mrb[0].mxu0
        %v7167 = vadd.f32 %v6879, %v7166
        %v7168 = vpop.f32.mrb[0].mxu0
        %7169 = vmatprep.mubr.bf16.mxu0 %v6779
        %7170 = vmatmul.mubr.bf16.gmra.mrb[0].mxu0 %v6778
        %v7171 = vpop.f32.mrb[0].mxu0
        %v7172 = vadd.f32 %v6879, %v7171
        %v7173 = vpop.f32.mrb[0].mxu0
        %v7174 = vpop.f32.mrb[0].mxu0
        %v7175 = vadd.f32 %v6879, %v7174
        %v7176 = vpop.f32.mrb[0].mxu0
        %7177 = vmatprep.mubr.bf16.mxu0 %v6783
        %7178 = vmatmul.mubr.bf16.gmra.mrb[0].mxu0 %v6782
        %v7179 = vpop.f32.mrb[0].mxu0
        %v7180 = vadd.f32 %v6879, %v7179
        %v7181 = vpop.f32.mrb[0].mxu0
        %v7182 = vpop.f32.mrb[0].mxu0
        %v7183 = vadd.f32 %v6879, %v7182
        %v7184 = vpop.f32.mrb[0].mxu0
        %7185 = vmatprep.mubr.bf16.mxu0 %v6787
        %7186 = vmatmul.mubr.bf16.gmra.mrb[0].mxu0 %v6786
        %v7187 = vpop.f32.mrb[0].mxu0
        %v7188 = vadd.f32 %v6879, %v7187
        %v7189 = vpop.f32.mrb[0].mxu0
        %v7190 = vpop.f32.mrb[0].mxu0
        %v7191 = vadd.f32 %v6879, %v7190
        %v7192 = vpop.f32.mrb[0].mxu0
        %7193 = vmatprep.mubr.bf16.mxu0 %v6791
        %7194 = vmatmul.mubr.bf16.gmra.mrb[0].mxu0 %v6790
        %v7195 = vpop.f32.mrb[0].mxu0
        %v7196 = vadd.f32 %v6879, %v7195
        %v7197 = vpop.f32.mrb[0].mxu0
        %v7198 = vpop.f32.mrb[0].mxu0
        %v7199 = vadd.f32 %v6879, %v7198
        %v7200 = vpop.f32.mrb[0].mxu0
        %7201 = vmatprep.mubr.bf16.mxu0 %v6795
        %7202 = vmatmul.mubr.bf16.gmra.mrb[0].mxu0 %v6794
        %v7203 = vpop.f32.mrb[0].mxu0
        %v7204 = vadd.f32 %v6879, %v7203
        %v7205 = vpop.f32.mrb[0].mxu0
        %v7206 = vpop.f32.mrb[0].mxu0
        %v7207 = vadd.f32 %v6879, %v7206
        %v7208 = vpop.f32.mrb[0].mxu0
        %7209 = vmatprep.mubr.bf16.mxu0 %v6799
        %7210 = vmatmul.mubr.bf16.gmra.mrb[0].mxu0 %v6798
        %v7211 = vpop.f32.mrb[0].mxu0
        %v7212 = vadd.f32 %v6879, %v7211
        %v7213 = vpop.f32.mrb[0].mxu0
        %v7214 = vpop.f32.mrb[0].mxu0
        %v7215 = vadd.f32 %v6879, %v7214
        %v7216 = vpop.f32.mrb[0].mxu0
        %7217 = vmatprep.mubr.bf16.mxu0 %v6803
        %7218 = vmatmul.mubr.bf16.gmra.mrb[0].mxu0 %v6802
        %v7219 = vpop.f32.mrb[0].mxu0
        %v7220 = vadd.f32 %v6879, %v7219
        %v7221 = vpop.f32.mrb[0].mxu0
        %v7222 = vpop.f32.mrb[0].mxu0
        %v7223 = vadd.f32 %v6879, %v7222
        %v7224 = vpop.f32.mrb[0].mxu0
        %7225 = vmatprep.mubr.bf16.mxu0 %v6807
        %7226 = vmatmul.mubr.bf16.gmra.mrb[0].mxu0 %v6806
        %v7227 = vpop.f32.mrb[0].mxu0
        %v7228 = vadd.f32 %v6879, %v7227
        %v7229 = vpop.f32.mrb[0].mxu0
        %v7230 = vpop.f32.mrb[0].mxu0
        %v7231 = vadd.f32 %v6879, %v7230
        %v7232 = vpop.f32.mrb[0].mxu0
        %7233 = vdwg.mxu0
        %7234 = vmatprep.subr.bf16.mxu0 0
        %7235 = vmatpush1.bf16.msra.mxu0 %v7025
        %7236 = vmatprep.subr.bf16.mxu0 0
        %7237 = vmatpush1.bf16.msra.mxu0 %v7026
        %7238 = vmatprep.subr.bf16.mxu0 0
        %7239 = vmatpush1.bf16.msra.mxu0 %v7027
        %7240 = vmatprep.subr.bf16.mxu0 0
        %7241 = vmatpush1.bf16.msra.mxu0 %v7028
        %7242 = vmatprep.subr.bf16.mxu0 0
        %7243 = vmatpush1.bf16.msra.mxu0 %v7029
        %7244 = vmatprep.subr.bf16.mxu0 0
        %7245 = vmatpush1.bf16.msra.mxu0 %v7030
        %7246 = vmatprep.subr.bf16.mxu0 0
        %7247 = vmatpush1.bf16.msra.mxu0 %v7031
        %7248 = vmatprep.subr.bf16.mxu0 0
        %7249 = vmatpush1.bf16.msra.mxu0 %v7032
        %7250 = vmatprep.subr.bf16.mxu0 0
        %7251 = vmatpush1.bf16.msra.mxu0 %v7033
        %7252 = vmatprep.subr.bf16.mxu0 0
        %7253 = vmatpush1.bf16.msra.mxu0 %v7034
        %7254 = vmatprep.subr.bf16.mxu0 0
        %7255 = vmatpush1.bf16.msra.mxu0 %v7035
        %7256 = vmatprep.subr.bf16.mxu0 0
        %7257 = vmatpush1.bf16.msra.mxu0 %v7036
        %7258 = vmatprep.subr.bf16.mxu0 0
        %7259 = vmatpush1.bf16.msra.mxu0 %v7037
        %7260 = vmatprep.subr.bf16.mxu0 0
        %7261 = vmatpush1.bf16.msra.mxu0 %v7038
        %7262 = vmatprep.subr.bf16.mxu0 0
        %7263 = vmatpush1.bf16.msra.mxu0 %v7039
        %7264 = vmatprep.subr.bf16.mxu0 0
        %7265 = vmatpush1.bf16.msra.mxu0 %v7040
        %7266 = vmatprep.mubr.bf16.mxu0 %v6749
        %7267 = vmatmul.mubr.bf16.gmra.mrb[0].mxu0 %v6748
        %v7268 = vpop.f32.mrb[0].mxu0
        %v7269 = vadd.f32 %v7108, %v7268
        %v7270 = vpop.f32.mrb[0].mxu0
        %v7271 = vpop.f32.mrb[0].mxu0
        %v7272 = vadd.f32 %v7111, %v7271
        %v7273 = vpop.f32.mrb[0].mxu0
        %7274 = vmatprep.mubr.bf16.mxu0 %v6753
        %7275 = vmatmul.mubr.bf16.gmra.mrb[0].mxu0 %v6752
        %v7276 = vpop.f32.mrb[0].mxu0
        %v7277 = vadd.f32 %v7116, %v7276
        %v7278 = vpop.f32.mrb[0].mxu0
        %v7279 = vpop.f32.mrb[0].mxu0
        %v7280 = vadd.f32 %v7119, %v7279
        %v7281 = vpop.f32.mrb[0].mxu0
        %7282 = vmatprep.mubr.bf16.mxu0 %v6757
        %7283 = vmatmul.mubr.bf16.gmra.mrb[0].mxu0 %v6756
        %v7284 = vpop.f32.mrb[0].mxu0
        %v7285 = vadd.f32 %v7124, %v7284
        %v7286 = vpop.f32.mrb[0].mxu0
        %v7287 = vpop.f32.mrb[0].mxu0
        %v7288 = vadd.f32 %v7127, %v7287
        %v7289 = vpop.f32.mrb[0].mxu0
        %7290 = vmatprep.mubr.bf16.mxu0 %v6761
        %7291 = vmatmul.mubr.bf16.gmra.mrb[0].mxu0 %v6760
        %v7292 = vpop.f32.mrb[0].mxu0
        %v7293 = vadd.f32 %v7132, %v7292
        %v7294 = vpop.f32.mrb[0].mxu0
        %v7295 = vpop.f32.mrb[0].mxu0
        %v7296 = vadd.f32 %v7135, %v7295
        %v7297 = vpop.f32.mrb[0].mxu0
        %7298 = vmatprep.mubr.bf16.mxu0 %v6765
        %7299 = vmatmul.mubr.bf16.gmra.mrb[0].mxu0 %v6764
        %v7300 = vpop.f32.mrb[0].mxu0
        %v7301 = vadd.f32 %v7140, %v7300
        %v7302 = vpop.f32.mrb[0].mxu0
        %v7303 = vpop.f32.mrb[0].mxu0
        %v7304 = vadd.f32 %v7143, %v7303
        %v7305 = vpop.f32.mrb[0].mxu0
        %7306 = vmatprep.mubr.bf16.mxu0 %v6769
        %7307 = vmatmul.mubr.bf16.gmra.mrb[0].mxu0 %v6768
        %v7308 = vpop.f32.mrb[0].mxu0
        %v7309 = vadd.f32 %v7148, %v7308
        %v7310 = vpop.f32.mrb[0].mxu0
        %v7311 = vpop.f32.mrb[0].mxu0
        %v7312 = vadd.f32 %v7151, %v7311
        %v7313 = vpop.f32.mrb[0].mxu0
        %7314 = vmatprep.mubr.bf16.mxu0 %v6773
        %7315 = vmatmul.mubr.bf16.gmra.mrb[0].mxu0 %v6772
        %v7316 = vpop.f32.mrb[0].mxu0
        %v7317 = vadd.f32 %v7156, %v7316
        %v7318 = vpop.f32.mrb[0].mxu0
        %v7319 = vpop.f32.mrb[0].mxu0
        %v7320 = vadd.f32 %v7159, %v7319
        %v7321 = vpop.f32.mrb[0].mxu0
        %7322 = vmatprep.mubr.bf16.mxu0 %v6777
        %7323 = vmatmul.mubr.bf16.gmra.mrb[0].mxu0 %v6776
        %v7324 = vpop.f32.mrb[0].mxu0
        %v7325 = vadd.f32 %v7164, %v7324
        %v7326 = vpop.f32.mrb[0].mxu0
        %v7327 = vpop.f32.mrb[0].mxu0
        %v7328 = vadd.f32 %v7167, %v7327
        %v7329 = vpop.f32.mrb[0].mxu0
        %7330 = vmatprep.mubr.bf16.mxu0 %v6781
        %7331 = vmatmul.mubr.bf16.gmra.mrb[0].mxu0 %v6780
        %v7332 = vpop.f32.mrb[0].mxu0
        %v7333 = vadd.f32 %v7172, %v7332
        %v7334 = vpop.f32.mrb[0].mxu0
        %v7335 = vpop.f32.mrb[0].mxu0
        %v7336 = vadd.f32 %v7175, %v7335
        %v7337 = vpop.f32.mrb[0].mxu0
        %7338 = vmatprep.mubr.bf16.mxu0 %v6785
        %7339 = vmatmul.mubr.bf16.gmra.mrb[0].mxu0 %v6784
        %v7340 = vpop.f32.mrb[0].mxu0
        %v7341 = vadd.f32 %v7180, %v7340
        %v7342 = vpop.f32.mrb[0].mxu0
        %v7343 = vpop.f32.mrb[0].mxu0
        %v7344 = vadd.f32 %v7183, %v7343
        %v7345 = vpop.f32.mrb[0].mxu0
        %7346 = vmatprep.mubr.bf16.mxu0 %v6789
        %7347 = vmatmul.mubr.bf16.gmra.mrb[0].mxu0 %v6788
        %v7348 = vpop.f32.mrb[0].mxu0
        %v7349 = vadd.f32 %v7188, %v7348
        %v7350 = vpop.f32.mrb[0].mxu0
        %v7351 = vpop.f32.mrb[0].mxu0
        %v7352 = vadd.f32 %v7191, %v7351
        %v7353 = vpop.f32.mrb[0].mxu0
        %7354 = vmatprep.mubr.bf16.mxu0 %v6793
        %7355 = vmatmul.mubr.bf16.gmra.mrb[0].mxu0 %v6792
        %v7356 = vpop.f32.mrb[0].mxu0
        %v7357 = vadd.f32 %v7196, %v7356
        %v7358 = vpop.f32.mrb[0].mxu0
        %v7359 = vpop.f32.mrb[0].mxu0
        %v7360 = vadd.f32 %v7199, %v7359
        %v7361 = vpop.f32.mrb[0].mxu0
        %7362 = vmatprep.mubr.bf16.mxu0 %v6797
        %7363 = vmatmul.mubr.bf16.gmra.mrb[0].mxu0 %v6796
        %v7364 = vpop.f32.mrb[0].mxu0
        %v7365 = vadd.f32 %v7204, %v7364
        %v7366 = vpop.f32.mrb[0].mxu0
        %v7367 = vpop.f32.mrb[0].mxu0
        %v7368 = vadd.f32 %v7207, %v7367
        %v7369 = vpop.f32.mrb[0].mxu0
        %7370 = vmatprep.mubr.bf16.mxu0 %v6801
        %7371 = vmatmul.mubr.bf16.gmra.mrb[0].mxu0 %v6800
        %v7372 = vpop.f32.mrb[0].mxu0
        %v7373 = vadd.f32 %v7212, %v7372
        %v7374 = vpop.f32.mrb[0].mxu0
        %v7375 = vpop.f32.mrb[0].mxu0
        %v7376 = vadd.f32 %v7215, %v7375
        %v7377 = vpop.f32.mrb[0].mxu0
        %7378 = vmatprep.mubr.bf16.mxu0 %v6805
        %7379 = vmatmul.mubr.bf16.gmra.mrb[0].mxu0 %v6804
        %v7380 = vpop.f32.mrb[0].mxu0
        %v7381 = vadd.f32 %v7220, %v7380
        %v7382 = vpop.f32.mrb[0].mxu0
        %v7383 = vpop.f32.mrb[0].mxu0
        %v7384 = vadd.f32 %v7223, %v7383
        %v7385 = vpop.f32.mrb[0].mxu0
        %7386 = vmatprep.mubr.bf16.mxu0 %v6809
        %7387 = vmatmul.mubr.bf16.gmra.mrb[0].mxu0 %v6808
        %v7388 = vpop.f32.mrb[0].mxu0
        %v7389 = vadd.f32 %v7228, %v7388
        %v7390 = vpop.f32.mrb[0].mxu0
        %v7391 = vpop.f32.mrb[0].mxu0
        %v7392 = vadd.f32 %v7231, %v7391
        %v7393 = vpop.f32.mrb[0].mxu0
        %7394 = vdwg.mxu0
        %v7395 = vmax.f32 %v7269, 0.0
        %v7396 = vmax.f32 %v7272, 0.0
        %v7397 = vmax.f32 %v7277, 0.0
        %v7398 = vmax.f32 %v7280, 0.0
        %v7399 = vmax.f32 %v7285, 0.0
        %v7400 = vmax.f32 %v7288, 0.0
        %v7401 = vmax.f32 %v7293, 0.0
        %v7402 = vmax.f32 %v7296, 0.0
        %v7403 = vmax.f32 %v7301, 0.0
        %v7404 = vmax.f32 %v7304, 0.0
        %v7405 = vmax.f32 %v7309, 0.0
        %v7406 = vmax.f32 %v7312, 0.0
        %v7407 = vmax.f32 %v7317, 0.0
        %v7408 = vmax.f32 %v7320, 0.0
        %v7409 = vmax.f32 %v7325, 0.0
        %v7410 = vmax.f32 %v7328, 0.0
        %v7411 = vmax.f32 %v7333, 0.0
        %v7412 = vmax.f32 %v7336, 0.0
        %v7413 = vmax.f32 %v7341, 0.0
        %v7414 = vmax.f32 %v7344, 0.0
        %v7415 = vmax.f32 %v7349, 0.0
        %v7416 = vmax.f32 %v7352, 0.0
        %v7417 = vmax.f32 %v7357, 0.0
        %v7418 = vmax.f32 %v7360, 0.0
        %v7419 = vmax.f32 %v7365, 0.0
        %v7420 = vmax.f32 %v7368, 0.0
        %v7421 = vmax.f32 %v7373, 0.0
        %v7422 = vmax.f32 %v7376, 0.0
        %v7423 = vmax.f32 %v7381, 0.0
        %v7424 = vmax.f32 %v7384, 0.0
        %v7425 = vmax.f32 %v7389, 0.0
        %v7426 = vmax.f32 %v7392, 0.0
        %v7427 = vld [vmem:[#allocation13] sm:$0x1]
        %v7429 = vlaneseq
        %v7430 = vshrl.u32 %v7429, 7
        %v7431 = vsub.s32 0, %v7430
        %v7432 = vrot.slane %v7427, %v7431
        %v7434 = vmul.f32 %v7395, %v7432
        %v7435 = vmul.f32 %v7396, %v7432
        %v7436 = vmul.f32 %v7397, %v7432
        %v7437 = vmul.f32 %v7398, %v7432
        %v7438 = vmul.f32 %v7399, %v7432
        %v7439 = vmul.f32 %v7400, %v7432
        %v7440 = vmul.f32 %v7401, %v7432
        %v7441 = vmul.f32 %v7402, %v7432
        %v7442 = vmul.f32 %v7403, %v7432
        %v7443 = vmul.f32 %v7404, %v7432
        %v7444 = vmul.f32 %v7405, %v7432
        %v7445 = vmul.f32 %v7406, %v7432
        %v7446 = vmul.f32 %v7407, %v7432
        %v7447 = vmul.f32 %v7408, %v7432
        %v7448 = vmul.f32 %v7409, %v7432
        %v7449 = vmul.f32 %v7410, %v7432
        %v7450 = vmul.f32 %v7411, %v7432
        %v7451 = vmul.f32 %v7412, %v7432
        %v7452 = vmul.f32 %v7413, %v7432
        %v7453 = vmul.f32 %v7414, %v7432
        %v7454 = vmul.f32 %v7415, %v7432
        %v7455 = vmul.f32 %v7416, %v7432
        %v7456 = vmul.f32 %v7417, %v7432
        %v7457 = vmul.f32 %v7418, %v7432
        %v7458 = vmul.f32 %v7419, %v7432
        %v7459 = vmul.f32 %v7420, %v7432
        %v7460 = vmul.f32 %v7421, %v7432
        %v7461 = vmul.f32 %v7422, %v7432
        %v7462 = vmul.f32 %v7423, %v7432
        %v7463 = vmul.f32 %v7424, %v7432
        %v7464 = vmul.f32 %v7425, %v7432
        %v7465 = vmul.f32 %v7426, %v7432
        %7466 = vadd.xlane.f32.xlu0 %v7434
        %v7467 = vpop.xlane.xlu0 %7466
        %7468 = vadd.xlane.f32.xlu0 %v7435
        %v7469 = vpop.xlane.xlu0 %7468
        %7470 = vadd.xlane.f32.xlu0 %v7436
        %v7471 = vpop.xlane.xlu0 %7470
        %7472 = vadd.xlane.f32.xlu0 %v7437
        %v7473 = vpop.xlane.xlu0 %7472
        %7474 = vadd.xlane.f32.xlu0 %v7438
        %v7475 = vpop.xlane.xlu0 %7474
        %7476 = vadd.xlane.f32.xlu0 %v7439
        %v7477 = vpop.xlane.xlu0 %7476
        %7478 = vadd.xlane.f32.xlu0 %v7440
        %v7479 = vpop.xlane.xlu0 %7478
        %7480 = vadd.xlane.f32.xlu0 %v7441
        %v7481 = vpop.xlane.xlu0 %7480
        %7482 = vadd.xlane.f32.xlu0 %v7442
        %v7483 = vpop.xlane.xlu0 %7482
        %7484 = vadd.xlane.f32.xlu0 %v7443
        %v7485 = vpop.xlane.xlu0 %7484
        %7486 = vadd.xlane.f32.xlu0 %v7444
        %v7487 = vpop.xlane.xlu0 %7486
        %7488 = vadd.xlane.f32.xlu0 %v7445
        %v7489 = vpop.xlane.xlu0 %7488
        %7490 = vadd.xlane.f32.xlu0 %v7446
        %v7491 = vpop.xlane.xlu0 %7490
        %7492 = vadd.xlane.f32.xlu0 %v7447
        %v7493 = vpop.xlane.xlu0 %7492
        %7494 = vadd.xlane.f32.xlu0 %v7448
        %v7495 = vpop.xlane.xlu0 %7494
        %7496 = vadd.xlane.f32.xlu0 %v7449
        %v7497 = vpop.xlane.xlu0 %7496
        %7498 = vadd.xlane.f32.xlu0 %v7450
        %v7499 = vpop.xlane.xlu0 %7498
        %7500 = vadd.xlane.f32.xlu0 %v7451
        %v7501 = vpop.xlane.xlu0 %7500
        %7502 = vadd.xlane.f32.xlu0 %v7452
        %v7503 = vpop.xlane.xlu0 %7502
        %7504 = vadd.xlane.f32.xlu0 %v7453
        %v7505 = vpop.xlane.xlu0 %7504
        %7506 = vadd.xlane.f32.xlu0 %v7454
        %v7507 = vpop.xlane.xlu0 %7506
        %7508 = vadd.xlane.f32.xlu0 %v7455
        %v7509 = vpop.xlane.xlu0 %7508
        %7510 = vadd.xlane.f32.xlu0 %v7456
        %v7511 = vpop.xlane.xlu0 %7510
        %7512 = vadd.xlane.f32.xlu0 %v7457
        %v7513 = vpop.xlane.xlu0 %7512
        %7514 = vadd.xlane.f32.xlu0 %v7458
        %v7515 = vpop.xlane.xlu0 %7514
        %7516 = vadd.xlane.f32.xlu0 %v7459
        %v7517 = vpop.xlane.xlu0 %7516
        %7518 = vadd.xlane.f32.xlu0 %v7460
        %v7519 = vpop.xlane.xlu0 %7518
        %7520 = vadd.xlane.f32.xlu0 %v7461
        %v7521 = vpop.xlane.xlu0 %7520
        %7522 = vadd.xlane.f32.xlu0 %v7462
        %v7523 = vpop.xlane.xlu0 %7522
        %7524 = vadd.xlane.f32.xlu0 %v7463
        %v7525 = vpop.xlane.xlu0 %7524
        %7526 = vadd.xlane.f32.xlu0 %v7464
        %v7527 = vpop.xlane.xlu0 %7526
        %7528 = vadd.xlane.f32.xlu0 %v7465
        %v7529 = vpop.xlane.xlu0 %7528
        %v7530 = vld [vmem:[#allocation2] sm:$0x1]
        %v7532 = vlaneseq
        %v7533 = vshrl.u32 %v7532, 7
        %v7534 = vsub.s32 0, %v7533
        %v7535 = vrot.slane %v7530, %v7534
        %v7537 = vadd.f32 %v7467, %v7535
        %v7538 = vadd.f32 %v7469, %v7535
        %v7539 = vadd.f32 %v7471, %v7535
        %v7540 = vadd.f32 %v7473, %v7535
        %v7541 = vadd.f32 %v7475, %v7535
        %v7542 = vadd.f32 %v7477, %v7535
        %v7543 = vadd.f32 %v7479, %v7535
        %v7544 = vadd.f32 %v7481, %v7535
        %v7545 = vadd.f32 %v7483, %v7535
        %v7546 = vadd.f32 %v7485, %v7535
        %v7547 = vadd.f32 %v7487, %v7535
        %v7548 = vadd.f32 %v7489, %v7535
        %v7549 = vadd.f32 %v7491, %v7535
        %v7550 = vadd.f32 %v7493, %v7535
        %v7551 = vadd.f32 %v7495, %v7535
        %v7552 = vadd.f32 %v7497, %v7535
        %v7553 = vadd.f32 %v7499, %v7535
        %v7554 = vadd.f32 %v7501, %v7535
        %v7555 = vadd.f32 %v7503, %v7535
        %v7556 = vadd.f32 %v7505, %v7535
        %v7557 = vadd.f32 %v7507, %v7535
        %v7558 = vadd.f32 %v7509, %v7535
        %v7559 = vadd.f32 %v7511, %v7535
        %v7560 = vadd.f32 %v7513, %v7535
        %v7561 = vadd.f32 %v7515, %v7535
        %v7562 = vadd.f32 %v7517, %v7535
        %v7563 = vadd.f32 %v7519, %v7535
        %v7564 = vadd.f32 %v7521, %v7535
        %v7565 = vadd.f32 %v7523, %v7535
        %v7566 = vadd.f32 %v7525, %v7535
        %v7567 = vadd.f32 %v7527, %v7535
        %v7568 = vadd.f32 %v7529, %v7535
        %v7569 = vxor.u32 %v7537, 2147483648
        %v7570 = vxor.u32 %v7538, 2147483648
        %v7571 = vxor.u32 %v7539, 2147483648
        %v7572 = vxor.u32 %v7540, 2147483648
        %v7573 = vxor.u32 %v7541, 2147483648
        %v7574 = vxor.u32 %v7542, 2147483648
        %v7575 = vxor.u32 %v7543, 2147483648
        %v7576 = vxor.u32 %v7544, 2147483648
        %v7577 = vxor.u32 %v7545, 2147483648
        %v7578 = vxor.u32 %v7546, 2147483648
        %v7579 = vxor.u32 %v7547, 2147483648
        %v7580 = vxor.u32 %v7548, 2147483648
        %v7581 = vxor.u32 %v7549, 2147483648
        %v7582 = vxor.u32 %v7550, 2147483648
        %v7583 = vxor.u32 %v7551, 2147483648
        %v7584 = vxor.u32 %v7552, 2147483648
        %v7585 = vxor.u32 %v7553, 2147483648
        %v7586 = vxor.u32 %v7554, 2147483648
        %v7587 = vxor.u32 %v7555, 2147483648
        %v7588 = vxor.u32 %v7556, 2147483648
        %v7589 = vxor.u32 %v7557, 2147483648
        %v7590 = vxor.u32 %v7558, 2147483648
        %v7591 = vxor.u32 %v7559, 2147483648
        %v7592 = vxor.u32 %v7560, 2147483648
        %v7593 = vxor.u32 %v7561, 2147483648
        %v7594 = vxor.u32 %v7562, 2147483648
        %v7595 = vxor.u32 %v7563, 2147483648
        %v7596 = vxor.u32 %v7564, 2147483648
        %v7597 = vxor.u32 %v7565, 2147483648
        %v7598 = vxor.u32 %v7566, 2147483648
        %v7599 = vxor.u32 %v7567, 2147483648
        %v7600 = vxor.u32 %v7568, 2147483648
        %v7601 = vmul.f32 %v7569, 1.442695
        %v7602 = vpow.pop %v7601
        %v7603 = vmul.f32 %v7570, 1.442695
        %v7604 = vpow.pop %v7603
        %v7605 = vmul.f32 %v7571, 1.442695
        %v7606 = vpow.pop %v7605
        %v7607 = vmul.f32 %v7572, 1.442695
        %v7608 = vpow.pop %v7607
        %v7609 = vmul.f32 %v7573, 1.442695
        %v7610 = vpow.pop %v7609
        %v7611 = vmul.f32 %v7574, 1.442695
        %v7612 = vpow.pop %v7611
        %v7613 = vmul.f32 %v7575, 1.442695
        %v7614 = vpow.pop %v7613
        %v7615 = vmul.f32 %v7576, 1.442695
        %v7616 = vpow.pop %v7615
        %v7617 = vmul.f32 %v7577, 1.442695
        %v7618 = vpow.pop %v7617
        %v7619 = vmul.f32 %v7578, 1.442695
        %v7620 = vpow.pop %v7619
        %v7621 = vmul.f32 %v7579, 1.442695
        %v7622 = vpow.pop %v7621
        %v7623 = vmul.f32 %v7580, 1.442695
        %v7624 = vpow.pop %v7623
        %v7625 = vmul.f32 %v7581, 1.442695
        %v7626 = vpow.pop %v7625
        %v7627 = vmul.f32 %v7582, 1.442695
        %v7628 = vpow.pop %v7627
        %v7629 = vmul.f32 %v7583, 1.442695
        %v7630 = vpow.pop %v7629
        %v7631 = vmul.f32 %v7584, 1.442695
        %v7632 = vpow.pop %v7631
        %v7633 = vmul.f32 %v7585, 1.442695
        %v7634 = vpow.pop %v7633
        %v7635 = vmul.f32 %v7586, 1.442695
        %v7636 = vpow.pop %v7635
        %v7637 = vmul.f32 %v7587, 1.442695
        %v7638 = vpow.pop %v7637
        %v7639 = vmul.f32 %v7588, 1.442695
        %v7640 = vpow.pop %v7639
        %v7641 = vmul.f32 %v7589, 1.442695
        %v7642 = vpow.pop %v7641
        %v7643 = vmul.f32 %v7590, 1.442695
        %v7644 = vpow.pop %v7643
        %v7645 = vmul.f32 %v7591, 1.442695
        %v7646 = vpow.pop %v7645
        %v7647 = vmul.f32 %v7592, 1.442695
        %v7648 = vpow.pop %v7647
        %v7649 = vmul.f32 %v7593, 1.442695
        %v7650 = vpow.pop %v7649
        %v7651 = vmul.f32 %v7594, 1.442695
        %v7652 = vpow.pop %v7651
        %v7653 = vmul.f32 %v7595, 1.442695
        %v7654 = vpow.pop %v7653
        %v7655 = vmul.f32 %v7596, 1.442695
        %v7656 = vpow.pop %v7655
        %v7657 = vmul.f32 %v7597, 1.442695
        %v7658 = vpow.pop %v7657
        %v7659 = vmul.f32 %v7598, 1.442695
        %v7660 = vpow.pop %v7659
        %v7661 = vmul.f32 %v7599, 1.442695
        %v7662 = vpow.pop %v7661
        %v7663 = vmul.f32 %v7600, 1.442695
        %v7664 = vpow.pop %v7663
        %v7665 = vadd.f32 %v7602, 1.0
        %v7666 = vadd.f32 %v7604, 1.0
        %v7667 = vadd.f32 %v7606, 1.0
        %v7668 = vadd.f32 %v7608, 1.0
        %v7669 = vadd.f32 %v7610, 1.0
        %v7670 = vadd.f32 %v7612, 1.0
        %v7671 = vadd.f32 %v7614, 1.0
        %v7672 = vadd.f32 %v7616, 1.0
        %v7673 = vadd.f32 %v7618, 1.0
        %v7674 = vadd.f32 %v7620, 1.0
        %v7675 = vadd.f32 %v7622, 1.0
        %v7676 = vadd.f32 %v7624, 1.0
        %v7677 = vadd.f32 %v7626, 1.0
        %v7678 = vadd.f32 %v7628, 1.0
        %v7679 = vadd.f32 %v7630, 1.0
        %v7680 = vadd.f32 %v7632, 1.0
        %v7681 = vadd.f32 %v7634, 1.0
        %v7682 = vadd.f32 %v7636, 1.0
        %v7683 = vadd.f32 %v7638, 1.0
        %v7684 = vadd.f32 %v7640, 1.0
        %v7685 = vadd.f32 %v7642, 1.0
        %v7686 = vadd.f32 %v7644, 1.0
        %v7687 = vadd.f32 %v7646, 1.0
        %v7688 = vadd.f32 %v7648, 1.0
        %v7689 = vadd.f32 %v7650, 1.0
        %v7690 = vadd.f32 %v7652, 1.0
        %v7691 = vadd.f32 %v7654, 1.0
        %v7692 = vadd.f32 %v7656, 1.0
        %v7693 = vadd.f32 %v7658, 1.0
        %v7694 = vadd.f32 %v7660, 1.0
        %v7695 = vadd.f32 %v7662, 1.0
        %v7696 = vadd.f32 %v7664, 1.0
        %v7697 = vrcp.pop %v7665
        %v7698 = vmul.f32 1.0, %v7697
        %v7699 = vrcp.pop %v7666
        %v7700 = vmul.f32 1.0, %v7699
        %v7701 = vrcp.pop %v7667
        %v7702 = vmul.f32 1.0, %v7701
        %v7703 = vrcp.pop %v7668
        %v7704 = vmul.f32 1.0, %v7703
        %v7705 = vrcp.pop %v7669
        %v7706 = vmul.f32 1.0, %v7705
        %v7707 = vrcp.pop %v7670
        %v7708 = vmul.f32 1.0, %v7707
        %v7709 = vrcp.pop %v7671
        %v7710 = vmul.f32 1.0, %v7709
        %v7711 = vrcp.pop %v7672
        %v7712 = vmul.f32 1.0, %v7711
        %v7713 = vrcp.pop %v7673
        %v7714 = vmul.f32 1.0, %v7713
        %v7715 = vrcp.pop %v7674
        %v7716 = vmul.f32 1.0, %v7715
        %v7717 = vrcp.pop %v7675
        %v7718 = vmul.f32 1.0, %v7717
        %v7719 = vrcp.pop %v7676
        %v7720 = vmul.f32 1.0, %v7719
        %v7721 = vrcp.pop %v7677
        %v7722 = vmul.f32 1.0, %v7721
        %v7723 = vrcp.pop %v7678
        %v7724 = vmul.f32 1.0, %v7723
        %v7725 = vrcp.pop %v7679
        %v7726 = vmul.f32 1.0, %v7725
        %v7727 = vrcp.pop %v7680
        %v7728 = vmul.f32 1.0, %v7727
        %v7729 = vrcp.pop %v7681
        %v7730 = vmul.f32 1.0, %v7729
        %v7731 = vrcp.pop %v7682
        %v7732 = vmul.f32 1.0, %v7731
        %v7733 = vrcp.pop %v7683
        %v7734 = vmul.f32 1.0, %v7733
        %v7735 = vrcp.pop %v7684
        %v7736 = vmul.f32 1.0, %v7735
        %v7737 = vrcp.pop %v7685
        %v7738 = vmul.f32 1.0, %v7737
        %v7739 = vrcp.pop %v7686
        %v7740 = vmul.f32 1.0, %v7739
        %v7741 = vrcp.pop %v7687
        %v7742 = vmul.f32 1.0, %v7741
        %v7743 = vrcp.pop %v7688
        %v7744 = vmul.f32 1.0, %v7743
        %v7745 = vrcp.pop %v7689
        %v7746 = vmul.f32 1.0, %v7745
        %v7747 = vrcp.pop %v7690
        %v7748 = vmul.f32 1.0, %v7747
        %v7749 = vrcp.pop %v7691
        %v7750 = vmul.f32 1.0, %v7749
        %v7751 = vrcp.pop %v7692
        %v7752 = vmul.f32 1.0, %v7751
        %v7753 = vrcp.pop %v7693
        %v7754 = vmul.f32 1.0, %v7753
        %v7755 = vrcp.pop %v7694
        %v7756 = vmul.f32 1.0, %v7755
        %v7757 = vrcp.pop %v7695
        %v7758 = vmul.f32 1.0, %v7757
        %v7759 = vrcp.pop %v7696
        %v7760 = vmul.f32 1.0, %v7759
        %vm7761 = vcmask 7168
        %7762 = vst.msk [vmem:[%s437] sm:$0xff] %vm7761, %v7698
        %7763 = vst.msk [vmem:[%s437 + $0x8] sm:$0xff] %vm7761, %v7700
        %7764 = vst.msk [vmem:[%s437 + $0x10] sm:$0xff] %vm7761, %v7702
        %7765 = vst.msk [vmem:[%s437 + $0x18] sm:$0xff] %vm7761, %v7704
        %7766 = vst.msk [vmem:[%s437 + $0x20] sm:$0xff] %vm7761, %v7706
        %7767 = vst.msk [vmem:[%s437 + $0x28] sm:$0xff] %vm7761, %v7708
        %7768 = vst.msk [vmem:[%s437 + $0x30] sm:$0xff] %vm7761, %v7710
        %7769 = vst.msk [vmem:[%s437 + $0x38] sm:$0xff] %vm7761, %v7712
        %7770 = vst.msk [vmem:[%s437 + $0x40] sm:$0xff] %vm7761, %v7714
        %7771 = vst.msk [vmem:[%s437 + $0x48] sm:$0xff] %vm7761, %v7716
        %7772 = vst.msk [vmem:[%s437 + $0x50] sm:$0xff] %vm7761, %v7718
        %7773 = vst.msk [vmem:[%s437 + $0x58] sm:$0xff] %vm7761, %v7720
        %7774 = vst.msk [vmem:[%s437 + $0x60] sm:$0xff] %vm7761, %v7722
        %7775 = vst.msk [vmem:[%s437 + $0x68] sm:$0xff] %vm7761, %v7724
        %7776 = vst.msk [vmem:[%s437 + $0x70] sm:$0xff] %vm7761, %v7726
        %7777 = vst.msk [vmem:[%s437 + $0x78] sm:$0xff] %vm7761, %v7728
        %7778 = vst.msk [vmem:[%s437 + $0x80] sm:$0xff] %vm7761, %v7730
        %7779 = vst.msk [vmem:[%s437 + $0x88] sm:$0xff] %vm7761, %v7732
        %7780 = vst.msk [vmem:[%s437 + $0x90] sm:$0xff] %vm7761, %v7734
        %7781 = vst.msk [vmem:[%s437 + $0x98] sm:$0xff] %vm7761, %v7736
        %7782 = vst.msk [vmem:[%s437 + $0xa0] sm:$0xff] %vm7761, %v7738
        %7783 = vst.msk [vmem:[%s437 + $0xa8] sm:$0xff] %vm7761, %v7740
        %7784 = vst.msk [vmem:[%s437 + $0xb0] sm:$0xff] %vm7761, %v7742
        %7785 = vst.msk [vmem:[%s437 + $0xb8] sm:$0xff] %vm7761, %v7744
        %7786 = vst.msk [vmem:[%s437 + $0xc0] sm:$0xff] %vm7761, %v7746
        %7787 = vst.msk [vmem:[%s437 + $0xc8] sm:$0xff] %vm7761, %v7748
        %7788 = vst.msk [vmem:[%s437 + $0xd0] sm:$0xff] %vm7761, %v7750
        %7789 = vst.msk [vmem:[%s437 + $0xd8] sm:$0xff] %vm7761, %v7752
        %7790 = vst.msk [vmem:[%s437 + $0xe0] sm:$0xff] %vm7761, %v7754
        %7791 = vst.msk [vmem:[%s437 + $0xe8] sm:$0xff] %vm7761, %v7756
        %7792 = vst.msk [vmem:[%s437 + $0xf0] sm:$0xff] %vm7761, %v7758
        %7793 = vst.msk [vmem:[%s437 + $0xf8] sm:$0xff] %vm7761, %v7760
        %s7794 = smul.u32 32, %s29
        %p7795 = scmp.lt.s32.totalorder %s7794, 63
        %s7796 = scalar_select %p7795, %s7794, 63
        %s7797 = smul.addr %s7796, 8
        %s7798 = scalar_lea.vmem %s8, %s7797
        // Predicated region
        $region81: #{tpu_custom_call.1} parent=51 // pred_check
          %p7799 = pneg %p225
        $region82: #{tpu_custom_call.1} parent=51 // pred_check_branch
          %7801 = sbr.rel (%p7799) target = $region84
        $region83: #{tpu_custom_call.1} parent=51 // pred_region
          %s7802 = smul.u32 32, %s29
        $region84: #{tpu_custom_call.1} parent=51 // pred_fallthru
          _
      $region52: #{tpu_custom_call.1} parent=5 // pred_fallthru
        _
      %p7803 = scmp.le.s32.totalorder 2, %s24
      // Predicated region
      $region85: #{tpu_custom_call.1} parent=5 // pred_check
        %p7804 = pneg %p7803
      $region86: #{tpu_custom_call.1} parent=5 // pred_check_branch
        %7806 = sbr.rel (%p7804) target = $region88
      $region87: #{tpu_custom_call.1} parent=5 // pred_region
        %s7807 = ssub.s32 %s24, 2
        // Predicated region
        $region89: #{tpu_custom_call.1} parent=87 // pred_check
          %p7808 = pneg %p231
        $region90: #{tpu_custom_call.1} parent=87 // pred_check_branch
          %7810 = sbr.rel (%p7808) target = $region92
        $region91: #{tpu_custom_call.1} parent=87 // pred_region
          %s7811 = smul.u32 32, %s30
          %p7812 = scmp.lt.s32.totalorder %s7811, 63
          %s7813 = scalar_select %p7812, %s7811, 63
          %s7814 = smul.addr %s7813, 8
          %s7815 = scalar_lea.vmem %s8, %s7814
        $region92: #{tpu_custom_call.1} parent=87 // pred_fallthru
          _
      $region88: #{tpu_custom_call.1} parent=5 // pred_fallthru
        _
    $region6: #{tpu_custom_call.1} parent=1 // loop_footer
      %s28 = sadd.s32 1, %s24
    $region7: #{tpu_custom_call.1} parent=1 // loop_footer_branch
      %23 = sbr.rel target = $region3
    $region8: #{tpu_custom_call.1} parent=1 // loop_exit
      _
    %7816 = vsyncpa [#allocation4], 1
    %s7817 = scalar_lea.sflag [#allocation4], 1
    %7818 = vsyncpa %s7817, 1
    %7819 = vsyncpa [#allocation6], 1
    %s7820 = scalar_lea.sflag [#allocation6], 1
    %7821 = vsyncpa %s7820, 1
    %7822 = vsyncpa [#allocation9], 1
    %7823 = vsyncpa [#allocation12], 1

</llo_original>
